<compile_context>
chip_gen: v7x
topology: tpu7x:2x2x1
jax: 0.10.0
libtpu: 0.0.40
codegen_flags: <defaults>
</compile_context>

<pallas_src>
import functools

import jax
import jax.numpy as jnp
from jax.experimental import pallas as pl
from jax.experimental.pallas import tpu as pltpu

# ----------------------- model hyperparameters (small) ----------------------
D_MODEL = 32
D_FF = 64
N_HEADS = 4
D_HEAD = D_MODEL // N_HEADS
N_DECODER_LAYERS = 2
LN_EPS = 1e-5


# ------------------------------ kernel helpers -------------------------------
def _layernorm(y, gamma, beta):
    mean = jnp.mean(y, axis=-1, keepdims=True)
    var = jnp.mean((y - mean) ** 2, axis=-1, keepdims=True)
    # rsqrt -> EUP slot instead of VALU sqrt + divide.
    return (y - mean) * jax.lax.rsqrt(var + LN_EPS) * gamma + beta


def _heads_attention(q3, k3, v3, mask, wo3, d_head):
    """Head-batched scaled-dot-product attention + output projection.

    q3: (H, Lq, dh)   k3, v3: (H, Lk, dh)   mask: (Lq, Lk) additive
    wo3: (H, dh, D)
    Returns (Lq, D) == concat_h(ctx_h) @ Wo, computed as sum_h ctx_h @ Wo[h]
    so no lane-axis concatenate / reshape is needed.
    """
    inv_sqrt_dh = 1.0 / (float(d_head) ** 0.5)
    scores = jnp.einsum("hqd,hkd->hqk", q3, k3,
                        preferred_element_type=jnp.float32)
    scores = scores * inv_sqrt_dh + mask          # mask broadcasts over heads
    scores = scores - jnp.max(scores, axis=-1, keepdims=True)
    p = jnp.exp(scores)
    p = p / jnp.sum(p, axis=-1, keepdims=True)
    ctx = jnp.einsum("hqk,hkd->hqd", p, v3, preferred_element_type=jnp.float32)
    out_h = jnp.einsum("hqd,hdf->hqf", ctx, wo3,
                       preferred_element_type=jnp.float32)
    return jnp.sum(out_h, axis=0)                 # (Lq, D)


# ------------------------------ fused decoder kernel -------------------------
def _decoder_kernel(xdec_ref, xenc_ref, smask_ref, cmask_ref,
                    wqkv_s_ref, wo_s_ref, g1_ref, b1_ref,
                    wq_c_ref, wkv_c_ref, wo_c_ref, g2_ref, b2_ref,
                    w1_ref, bias1_ref, w2_ref, bias2_ref, g3_ref, b3_ref,
                    out_ref, *, n_layers, n_heads, d_head):
    """One batch element: the full N-layer decoder, weights VMEM-resident."""
    x = xdec_ref[0]          # (Lq, D)
    xe = xenc_ref[0]         # (Lk, D)
    smask = smask_ref[0]     # (Lq, Lq) additive
    cmask = cmask_ref[0]     # (Lq, Lk) additive
    H, dh = n_heads, d_head
    Lq, D = x.shape
    Lk = xe.shape[0]

    # Encoder activations re-used by every layer's cross-attention.
    xe_b = jnp.broadcast_to(xe[None], (H, Lk, D))

    for l in range(n_layers):  # static unrolled layer loop
        # ----------------- self attention + residual + norm1 -----------------
        x_b = jnp.broadcast_to(x[None], (H, Lq, D))
        qkv = jnp.einsum("hld,hde->hle", x_b, wqkv_s_ref[l],
                         preferred_element_type=jnp.float32)    # (H, Lq, 3*dh)
        attn = _heads_attention(qkv[:, :, 0:dh],
                                qkv[:, :, dh:2 * dh],
                                qkv[:, :, 2 * dh:3 * dh],
                                smask, wo_s_ref[l], dh)
        x = _layernorm(attn + x, g1_ref[l], b1_ref[l])

        # ----------------- cross attention + residual + norm2 ----------------
        x_b = jnp.broadcast_to(x[None], (H, Lq, D))
        q3 = jnp.einsum("hld,hde->hle", x_b, wq_c_ref[l],
                        preferred_element_type=jnp.float32)     # (H, Lq, dh)
        kv = jnp.einsum("hld,hde->hle", xe_b, wkv_c_ref[l],
                        preferred_element_type=jnp.float32)     # (H, Lk, 2*dh)
        attn = _heads_attention(q3, kv[:, :, 0:dh], kv[:, :, dh:2 * dh],
                                cmask, wo_c_ref[l], dh)
        x = _layernorm(attn + x, g2_ref[l], b2_ref[l])

        # ----------------- FFN + residual + norm3 ----------------------------
        h = jnp.dot(x, w1_ref[l], preferred_element_type=jnp.float32) + bias1_ref[l]
        h = jnp.maximum(h, 0.0)
        y = jnp.dot(h, w2_ref[l], preferred_element_type=jnp.float32) + bias2_ref[l]
        # dropout == identity (inference)
        x = _layernorm(y + x, g3_ref[l], b3_ref[l])

    out_ref[0] = x


# ------------------------------ pallas_call wrapper ---------------------------
_WEIGHT_ORDER = ("wqkv_self", "wo_self", "g1", "b1",
                 "wq_enc", "wkv_enc", "wo_enc", "g2", "b2",
                 "w_ff1", "bias_ff1", "w_ff2", "bias_ff2", "g3", "b3")


def decoder_forward(dec_inputs, enc_outputs, dec_self_attn_mask,
                    dec_enc_attn_mask, packed):
    B, Lq, D = dec_inputs.shape
    Lk = enc_outputs.shape[1]
    weights = [packed[k] for k in _WEIGHT_ORDER]

    def batch_spec(shape):
        nd = len(shape)
        return pl.BlockSpec(shape, lambda b, nd=nd: (b,) + (0,) * (nd - 1))

    def shared_spec(arr):
        # Block == full array, same block index for every grid step -> the
        # weights are DMA'd once and stay resident in VMEM across the batch.
        nd = arr.ndim
        return pl.BlockSpec(arr.shape, lambda b, nd=nd: (0,) * nd)

    in_specs = ([batch_spec((1, Lq, D)),        # dec_inputs
                 batch_spec((1, Lk, D)),        # enc_outputs
                 batch_spec((1, Lq, Lq)),       # self-attn mask
                 batch_spec((1, Lq, Lk))]       # cross-attn mask
                + [shared_spec(w) for w in weights])

    kernel = functools.partial(_decoder_kernel, n_layers=N_DECODER_LAYERS,
                               n_heads=N_HEADS, d_head=D_HEAD)
    return pl.pallas_call(
        kernel,
        out_shape=jax.ShapeDtypeStruct((B, Lq, D), jnp.float32),
        grid=(B,),
        in_specs=in_specs,
        out_specs=pl.BlockSpec((1, Lq, D), lambda b: (b, 0, 0)),
        compiler_params=pltpu.CompilerParams(
            dimension_semantics=("parallel",)),   # v7x: one batch elem per TC
    )(dec_inputs, enc_outputs, dec_self_attn_mask, dec_enc_attn_mask, *weights)


# ------------------------------ pure-JAX reference ----------------------------
def _ln_ref(y, g, b):
    m = jnp.mean(y, -1, keepdims=True)
    v = jnp.mean((y - m) ** 2, -1, keepdims=True)
    return (y - m) / jnp.sqrt(v + LN_EPS) * g + b


def _mha_ref(xq, xkv, mask, wq, wk, wv, wo):
    B, Lq, D = xq.shape
    Lk = xkv.shape[1]
    q = (xq @ wq).reshape(B, Lq, N_HEADS, D_HEAD).transpose(0, 2, 1, 3)
    k = (xkv @ wk).reshape(B, Lk, N_HEADS, D_HEAD).transpose(0, 2, 1, 3)
    v = (xkv @ wv).reshape(B, Lk, N_HEADS, D_HEAD).transpose(0, 2, 1, 3)
    scores = jnp.einsum("bhqd,bhkd->bhqk", q, k) / jnp.sqrt(jnp.float32(D_HEAD))
    scores = scores + mask[:, None]
    attn = jax.nn.softmax(scores, axis=-1)
    ctx = jnp.einsum("bhqk,bhkd->bhqd", attn, v).transpose(0, 2, 1, 3)
    return ctx.reshape(B, Lq, D) @ wo


def decoder_ref(dec_inputs, enc_outputs, self_mask, enc_mask, params):
    x = dec_inputs
    for p in params:
        x1 = _ln_ref(_mha_ref(x, x, self_mask, p["wq_self"], p["wk_self"],
                              p["wv_self"], p["wo_self"]) + x, p["g1"], p["b1"])
        x2 = _ln_ref(_mha_ref(x1, enc_outputs, enc_mask, p["wq_enc"],
                              p["wk_enc"], p["wv_enc"], p["wo_enc"]) + x1,
                     p["g2"], p["b2"])
        h = jnp.maximum(x2 @ p["w_ff1"] + p["bias_ff1"], 0.0)
        y = h @ p["w_ff2"] + p["bias_ff2"]
        x = _ln_ref(y + x2, p["g3"], p["b3"])
    return x


# ---------------------------------- params ------------------------------------
def make_params(key):
    params = []
    for _ in range(N_DECODER_LAYERS):
        keys = jax.random.split(key, 11)
        key = keys[-1]
        std = 0.05
        p = {
            "wq_self": std * jax.random.normal(keys[0], (D_MODEL, D_MODEL), jnp.float32),
            "wk_self": std * jax.random.normal(keys[1], (D_MODEL, D_MODEL), jnp.float32),
            "wv_self": std * jax.random.normal(keys[2], (D_MODEL, D_MODEL), jnp.float32),
            "wo_self": std * jax.random.normal(keys[3], (D_MODEL, D_MODEL), jnp.float32),
            "wq_enc":  std * jax.random.normal(keys[4], (D_MODEL, D_MODEL), jnp.float32),
            "wk_enc":  std * jax.random.normal(keys[5], (D_MODEL, D_MODEL), jnp.float32),
            "wv_enc":  std * jax.random.normal(keys[6], (D_MODEL, D_MODEL), jnp.float32),
            "wo_enc":  std * jax.random.normal(keys[7], (D_MODEL, D_MODEL), jnp.float32),
            "w_ff1":   std * jax.random.normal(keys[8], (D_MODEL, D_FF), jnp.float32),
            "bias_ff1": jnp.zeros((1, D_FF), jnp.float32),
            "w_ff2":   std * jax.random.normal(keys[9], (D_FF, D_MODEL), jnp.float32),
            "bias_ff2": jnp.zeros((1, D_MODEL), jnp.float32),
            "g1": jnp.ones((1, D_MODEL), jnp.float32),
            "b1": jnp.zeros((1, D_MODEL), jnp.float32),
            "g2": jnp.ones((1, D_MODEL), jnp.float32),
            "b2": jnp.zeros((1, D_MODEL), jnp.float32),
            "g3": jnp.ones((1, D_MODEL), jnp.float32),
            "b3": jnp.zeros((1, D_MODEL), jnp.float32),
        }
        params.append(p)
    return params


def _split_in_heads(w):
    # (D_in, D_out) -> (H, D_in, D_out//H): head h uses output columns
    # [h*d_head, (h+1)*d_head).  Done on the host; free.
    d_in, d_out = w.shape
    return w.reshape(d_in, N_HEADS, d_out // N_HEADS).transpose(1, 0, 2)


def _split_out_heads(w):
    # Output projection (D, D) -> (H, d_head, D): head h consumes input rows
    # [h*d_head, (h+1)*d_head).
    return w.reshape(N_HEADS, D_HEAD, w.shape[1])


def pack_params(params):
    """Host-side repack: head-split, QKV-fused, stacked over layers."""
    def stack(fn):
        return jnp.stack([fn(p) for p in params], axis=0)

    return {
        "wqkv_self": stack(lambda p: jnp.concatenate(
            [_split_in_heads(p["wq_self"]), _split_in_heads(p["wk_self"]),
             _split_in_heads(p["wv_self"])], axis=-1)),      # (NL, H, D, 3*dh)
        "wo_self": stack(lambda p: _split_out_heads(p["wo_self"])),  # (NL, H, dh, D)
        "g1": stack(lambda p: p["g1"]), "b1": stack(lambda p: p["b1"]),
        "wq_enc": stack(lambda p: _split_in_heads(p["wq_enc"])),      # (NL, H, D, dh)
        "wkv_enc": stack(lambda p: jnp.concatenate(
            [_split_in_heads(p["wk_enc"]), _split_in_heads(p["wv_enc"])],
            axis=-1)),                                        # (NL, H, D, 2*dh)
        "wo_enc": stack(lambda p: _split_out_heads(p["wo_enc"])),
        "g2": stack(lambda p: p["g2"]), "b2": stack(lambda p: p["b2"]),
        "w_ff1": stack(lambda p: p["w_ff1"]),
        "bias_ff1": stack(lambda p: p["bias_ff1"]),
        "w_ff2": stack(lambda p: p["w_ff2"]),
        "bias_ff2": stack(lambda p: p["bias_ff2"]),
        "g3": stack(lambda p: p["g3"]), "b3": stack(lambda p: p["b3"]),
    }


# ------------------------------------ main -------------------------------------
if __name__ == "__main__":
    B, TGT, SRC = 2, 8, 8
    key = jax.random.PRNGKey(0)
    k1, k2, k3 = jax.random.split(key, 3)

    dec_inputs = jax.random.normal(k1, (B, TGT, D_MODEL), jnp.float32)
    enc_outputs = jax.random.normal(k2, (B, SRC, D_MODEL), jnp.float32)

    # causal additive mask for decoder self-attention; zero mask for cross-attn
    causal = jnp.where(
        jnp.arange(TGT)[:, None] >= jnp.arange(TGT)[None, :], 0.0, -1e9
    ).astype(jnp.float32)
    dec_self_attn_mask = jnp.broadcast_to(causal, (B, TGT, TGT))
    dec_enc_attn_mask = jnp.zeros((B, TGT, SRC), jnp.float32)

    params = make_params(k3)
    packed = pack_params(params)

    out = decoder_forward(dec_inputs, enc_outputs, dec_self_attn_mask,
                          dec_enc_attn_mask, packed)
    out = jax.block_until_ready(out)

    ref = decoder_ref(dec_inputs, enc_outputs, dec_self_attn_mask,
                      dec_enc_attn_mask, params)
    assert out.shape == (B, TGT, D_MODEL)
    assert jnp.allclose(out, ref, atol=1e-3, rtol=1e-3), \
        f"max err {jnp.max(jnp.abs(out - ref))}"
    print("KERNEL_OK")
</pallas_src>

<mosaic_0001>
module attributes {stable_mosaic.version = 11 : i64} {
  func.func @_decoder_kernel(%arg0: i32, %arg1: memref<1x8x32xf32, #tpu.memory_space<vmem>>, %arg2: memref<1x8x32xf32, #tpu.memory_space<vmem>>, %arg3: memref<1x8x8xf32, #tpu.memory_space<vmem>>, %arg4: memref<1x8x8xf32, #tpu.memory_space<vmem>>, %arg5: memref<2x4x32x24xf32, #tpu.memory_space<vmem>>, %arg6: memref<2x4x8x32xf32, #tpu.memory_space<vmem>>, %arg7: memref<2x1x32xf32, #tpu.memory_space<vmem>>, %arg8: memref<2x1x32xf32, #tpu.memory_space<vmem>>, %arg9: memref<2x4x32x8xf32, #tpu.memory_space<vmem>>, %arg10: memref<2x4x32x16xf32, #tpu.memory_space<vmem>>, %arg11: memref<2x4x8x32xf32, #tpu.memory_space<vmem>>, %arg12: memref<2x1x32xf32, #tpu.memory_space<vmem>>, %arg13: memref<2x1x32xf32, #tpu.memory_space<vmem>>, %arg14: memref<2x32x64xf32, #tpu.memory_space<vmem>>, %arg15: memref<2x1x64xf32, #tpu.memory_space<vmem>>, %arg16: memref<2x64x32xf32, #tpu.memory_space<vmem>>, %arg17: memref<2x1x32xf32, #tpu.memory_space<vmem>>, %arg18: memref<2x1x32xf32, #tpu.memory_space<vmem>>, %arg19: memref<2x1x32xf32, #tpu.memory_space<vmem>>, %arg20: memref<1x8x32xf32, #tpu.memory_space<vmem>>) attributes {dimension_semantics = [#tpu.dimension_semantics<parallel>], iteration_bounds = array<i64: 2>, scalar_prefetch = 0 : i64, scratch_operands = 0 : i64, tpu.core_type = #tpu.core_type<tc>, window_params = [{transform_indices = @transform_0, window_bounds = array<i64: 1, 8, 32>}, {transform_indices = @transform_1, window_bounds = array<i64: 1, 8, 32>}, {transform_indices = @transform_2, window_bounds = array<i64: 1, 8, 8>}, {transform_indices = @transform_3, window_bounds = array<i64: 1, 8, 8>}, {pipeline_mode = #tpu.pipeline_mode<synchronous>, transform_indices = @transform_4, window_bounds = array<i64: 2, 4, 32, 24>}, {pipeline_mode = #tpu.pipeline_mode<synchronous>, transform_indices = @transform_5, window_bounds = array<i64: 2, 4, 8, 32>}, {pipeline_mode = #tpu.pipeline_mode<synchronous>, transform_indices = @transform_6, window_bounds = array<i64: 2, 1, 32>}, {pipeline_mode = #tpu.pipeline_mode<synchronous>, transform_indices = @transform_7, window_bounds = array<i64: 2, 1, 32>}, {pipeline_mode = #tpu.pipeline_mode<synchronous>, transform_indices = @transform_8, window_bounds = array<i64: 2, 4, 32, 8>}, {pipeline_mode = #tpu.pipeline_mode<synchronous>, transform_indices = @transform_9, window_bounds = array<i64: 2, 4, 32, 16>}, {pipeline_mode = #tpu.pipeline_mode<synchronous>, transform_indices = @transform_10, window_bounds = array<i64: 2, 4, 8, 32>}, {pipeline_mode = #tpu.pipeline_mode<synchronous>, transform_indices = @transform_11, window_bounds = array<i64: 2, 1, 32>}, {pipeline_mode = #tpu.pipeline_mode<synchronous>, transform_indices = @transform_12, window_bounds = array<i64: 2, 1, 32>}, {pipeline_mode = #tpu.pipeline_mode<synchronous>, transform_indices = @transform_13, window_bounds = array<i64: 2, 32, 64>}, {pipeline_mode = #tpu.pipeline_mode<synchronous>, transform_indices = @transform_14, window_bounds = array<i64: 2, 1, 64>}, {pipeline_mode = #tpu.pipeline_mode<synchronous>, transform_indices = @transform_15, window_bounds = array<i64: 2, 64, 32>}, {pipeline_mode = #tpu.pipeline_mode<synchronous>, transform_indices = @transform_16, window_bounds = array<i64: 2, 1, 32>}, {pipeline_mode = #tpu.pipeline_mode<synchronous>, transform_indices = @transform_17, window_bounds = array<i64: 2, 1, 32>}, {pipeline_mode = #tpu.pipeline_mode<synchronous>, transform_indices = @transform_18, window_bounds = array<i64: 2, 1, 32>}, {transform_indices = @transform_19, window_bounds = array<i64: 1, 8, 32>}]} {
    %c0 = arith.constant 0 : index
    %c0_0 = arith.constant 0 : index
    %c0_1 = arith.constant 0 : index
    %0 = vector.load %arg1[%c0, %c0_0, %c0_1] : memref<1x8x32xf32, #tpu.memory_space<vmem>>, vector<1x8x32xf32>
    %1 = vector.shape_cast %0 : vector<1x8x32xf32> to vector<8x32xf32>
    %c0_2 = arith.constant 0 : index
    %c0_3 = arith.constant 0 : index
    %c0_4 = arith.constant 0 : index
    %2 = vector.load %arg2[%c0_2, %c0_3, %c0_4] : memref<1x8x32xf32, #tpu.memory_space<vmem>>, vector<1x8x32xf32>
    %3 = vector.shape_cast %2 : vector<1x8x32xf32> to vector<8x32xf32>
    %c0_5 = arith.constant 0 : index
    %c0_6 = arith.constant 0 : index
    %c0_7 = arith.constant 0 : index
    %4 = vector.load %arg3[%c0_5, %c0_6, %c0_7] : memref<1x8x8xf32, #tpu.memory_space<vmem>>, vector<1x8x8xf32>
    %5 = vector.shape_cast %4 : vector<1x8x8xf32> to vector<8x8xf32>
    %c0_8 = arith.constant 0 : index
    %c0_9 = arith.constant 0 : index
    %c0_10 = arith.constant 0 : index
    %6 = vector.load %arg4[%c0_8, %c0_9, %c0_10] : memref<1x8x8xf32, #tpu.memory_space<vmem>>, vector<1x8x8xf32>
    %7 = vector.shape_cast %6 : vector<1x8x8xf32> to vector<8x8xf32>
    %8 = vector.shape_cast %3 : vector<8x32xf32> to vector<1x8x32xf32>
    %9 = vector.shape_cast %8 : vector<1x8x32xf32> to vector<1x8x32xf32>
    %10 = vector.broadcast %9 : vector<1x8x32xf32> to vector<4x8x32xf32>
    %11 = vector.shape_cast %1 : vector<8x32xf32> to vector<1x8x32xf32>
    %12 = vector.shape_cast %11 : vector<1x8x32xf32> to vector<1x8x32xf32>
    %13 = vector.broadcast %12 : vector<1x8x32xf32> to vector<4x8x32xf32>
    %c0_11 = arith.constant 0 : index
    %c0_12 = arith.constant 0 : index
    %c0_13 = arith.constant 0 : index
    %c0_14 = arith.constant 0 : index
    %14 = vector.load %arg5[%c0_11, %c0_12, %c0_13, %c0_14] : memref<2x4x32x24xf32, #tpu.memory_space<vmem>>, vector<1x4x32x24xf32>
    %15 = vector.shape_cast %14 : vector<1x4x32x24xf32> to vector<4x32x24xf32>
    "tpu.trace_start"() <{level = 10 : i32, message = "hld,hde->hle"}> : () -> ()
    %cst = arith.constant dense<0.000000e+00> : vector<4x8x24xf32>
    %16 = tpu.matmul %13, %15, %cst {dimension_numbers = #tpu.dot_dimension_numbers<[2], [1], [1], [2], [0, 0, 0, 1, 1, 2], [0], [0]>} : vector<4x8x32xf32>, vector<4x32x24xf32>, vector<4x8x24xf32> -> vector<4x8x24xf32>
    "tpu.trace_stop"() : () -> ()
    %17 = vector.extract_strided_slice %16 {offsets = [0, 0, 0], sizes = [4, 8, 8], strides = [1, 1, 1]} : vector<4x8x24xf32> to vector<4x8x8xf32>
    %18 = vector.extract_strided_slice %16 {offsets = [0, 0, 8], sizes = [4, 8, 8], strides = [1, 1, 1]} : vector<4x8x24xf32> to vector<4x8x8xf32>
    %19 = vector.extract_strided_slice %16 {offsets = [0, 0, 16], sizes = [4, 8, 8], strides = [1, 1, 1]} : vector<4x8x24xf32> to vector<4x8x8xf32>
    %c0_15 = arith.constant 0 : index
    %c0_16 = arith.constant 0 : index
    %c0_17 = arith.constant 0 : index
    %c0_18 = arith.constant 0 : index
    %20 = vector.load %arg6[%c0_15, %c0_16, %c0_17, %c0_18] : memref<2x4x8x32xf32, #tpu.memory_space<vmem>>, vector<1x4x8x32xf32>
    %21 = vector.shape_cast %20 : vector<1x4x8x32xf32> to vector<4x8x32xf32>
    "tpu.trace_start"() <{level = 10 : i32, message = "hqd,hkd->hqk"}> : () -> ()
    %cst_19 = arith.constant dense<0.000000e+00> : vector<4x8x8xf32>
    %22 = tpu.matmul %17, %18, %cst_19 {dimension_numbers = #tpu.dot_dimension_numbers<[2], [2], [1], [1], [0, 0, 0, 1, 1, 1], [0], [0]>} : vector<4x8x8xf32>, vector<4x8x8xf32>, vector<4x8x8xf32> -> vector<4x8x8xf32>
    "tpu.trace_stop"() : () -> ()
    %cst_20 = arith.constant 0.353553385 : f32
    %23 = vector.broadcast %cst_20 : f32 to vector<4x8x8xf32>
    %24 = arith.mulf %22, %23 : vector<4x8x8xf32>
    %25 = vector.shape_cast %5 : vector<8x8xf32> to vector<1x8x8xf32>
    %26 = vector.broadcast %25 : vector<1x8x8xf32> to vector<4x8x8xf32>
    %27 = arith.addf %24, %26 : vector<4x8x8xf32>
    %cst_21 = arith.constant dense<0xFF800000> : vector<4x8xf32>
    %28 = vector.multi_reduction <maximumf>, %27, %cst_21 [2] : vector<4x8x8xf32> to vector<4x8xf32>
    %29 = vector.shape_cast %28 : vector<4x8xf32> to vector<4x8x1xf32>
    %30 = vector.broadcast %29 : vector<4x8x1xf32> to vector<4x8x8xf32>
    %31 = arith.subf %27, %30 : vector<4x8x8xf32>
    %32 = math.exp %31 : vector<4x8x8xf32>
    %cst_22 = arith.constant dense<0.000000e+00> : vector<4x8xf32>
    %33 = vector.multi_reduction <add>, %32, %cst_22 [2] : vector<4x8x8xf32> to vector<4x8xf32>
    %34 = vector.shape_cast %33 : vector<4x8xf32> to vector<4x8x1xf32>
    %35 = vector.broadcast %34 : vector<4x8x1xf32> to vector<4x8x8xf32>
    %36 = arith.divf %32, %35 : vector<4x8x8xf32>
    "tpu.trace_start"() <{level = 10 : i32, message = "hqk,hkd->hqd"}> : () -> ()
    %cst_23 = arith.constant dense<0.000000e+00> : vector<4x8x8xf32>
    %37 = tpu.matmul %36, %19, %cst_23 {dimension_numbers = #tpu.dot_dimension_numbers<[2], [1], [1], [2], [0, 0, 0, 1, 1, 2], [0], [0]>} : vector<4x8x8xf32>, vector<4x8x8xf32>, vector<4x8x8xf32> -> vector<4x8x8xf32>
    "tpu.trace_stop"() : () -> ()
    "tpu.trace_start"() <{level = 10 : i32, message = "hqd,hdf->hqf"}> : () -> ()
    %cst_24 = arith.constant dense<0.000000e+00> : vector<4x8x32xf32>
    %38 = tpu.matmul %37, %21, %cst_24 {dimension_numbers = #tpu.dot_dimension_numbers<[2], [1], [1], [2], [0, 0, 0, 1, 1, 2], [0], [0]>} : vector<4x8x8xf32>, vector<4x8x32xf32>, vector<4x8x32xf32> -> vector<4x8x32xf32>
    "tpu.trace_stop"() : () -> ()
    %cst_25 = arith.constant dense<0.000000e+00> : vector<8x32xf32>
    %39 = vector.multi_reduction <add>, %38, %cst_25 [0] : vector<4x8x32xf32> to vector<8x32xf32>
    %40 = arith.addf %39, %1 : vector<8x32xf32>
    %c0_26 = arith.constant 0 : index
    %c0_27 = arith.constant 0 : index
    %c0_28 = arith.constant 0 : index
    %41 = vector.load %arg7[%c0_26, %c0_27, %c0_28] : memref<2x1x32xf32, #tpu.memory_space<vmem>>, vector<1x1x32xf32>
    %42 = vector.shape_cast %41 : vector<1x1x32xf32> to vector<1x32xf32>
    %c0_29 = arith.constant 0 : index
    %c0_30 = arith.constant 0 : index
    %c0_31 = arith.constant 0 : index
    %43 = vector.load %arg8[%c0_29, %c0_30, %c0_31] : memref<2x1x32xf32, #tpu.memory_space<vmem>>, vector<1x1x32xf32>
    %44 = vector.shape_cast %43 : vector<1x1x32xf32> to vector<1x32xf32>
    %cst_32 = arith.constant dense<0.000000e+00> : vector<8xf32>
    %45 = vector.multi_reduction <add>, %40, %cst_32 [1] : vector<8x32xf32> to vector<8xf32>
    %46 = vector.shape_cast %45 : vector<8xf32> to vector<8x1xf32>
    %cst_33 = arith.constant 3.200000e+01 : f32
    %47 = vector.broadcast %cst_33 : f32 to vector<8x1xf32>
    %48 = arith.divf %46, %47 : vector<8x1xf32>
    %49 = vector.broadcast %48 : vector<8x1xf32> to vector<8x32xf32>
    %50 = arith.subf %40, %49 : vector<8x32xf32>
    %51 = arith.mulf %50, %50 : vector<8x32xf32>
    %cst_34 = arith.constant dense<0.000000e+00> : vector<8xf32>
    %52 = vector.multi_reduction <add>, %51, %cst_34 [1] : vector<8x32xf32> to vector<8xf32>
    %53 = vector.shape_cast %52 : vector<8xf32> to vector<8x1xf32>
    %cst_35 = arith.constant 3.200000e+01 : f32
    %54 = vector.broadcast %cst_35 : f32 to vector<8x1xf32>
    %55 = arith.divf %53, %54 : vector<8x1xf32>
    %56 = vector.broadcast %48 : vector<8x1xf32> to vector<8x32xf32>
    %57 = arith.subf %40, %56 : vector<8x32xf32>
    %cst_36 = arith.constant 9.99999974E-6 : f32
    %58 = vector.broadcast %cst_36 : f32 to vector<8x1xf32>
    %59 = arith.addf %55, %58 : vector<8x1xf32>
    %60 = math.rsqrt %59 : vector<8x1xf32>
    %61 = vector.broadcast %60 : vector<8x1xf32> to vector<8x32xf32>
    %62 = arith.mulf %57, %61 : vector<8x32xf32>
    %63 = vector.broadcast %42 : vector<1x32xf32> to vector<8x32xf32>
    %64 = arith.mulf %62, %63 : vector<8x32xf32>
    %65 = vector.broadcast %44 : vector<1x32xf32> to vector<8x32xf32>
    %66 = arith.addf %64, %65 : vector<8x32xf32>
    %67 = vector.shape_cast %66 : vector<8x32xf32> to vector<1x8x32xf32>
    %68 = vector.shape_cast %67 : vector<1x8x32xf32> to vector<1x8x32xf32>
    %69 = vector.broadcast %68 : vector<1x8x32xf32> to vector<4x8x32xf32>
    %c0_37 = arith.constant 0 : index
    %c0_38 = arith.constant 0 : index
    %c0_39 = arith.constant 0 : index
    %c0_40 = arith.constant 0 : index
    %70 = vector.load %arg9[%c0_37, %c0_38, %c0_39, %c0_40] : memref<2x4x32x8xf32, #tpu.memory_space<vmem>>, vector<1x4x32x8xf32>
    %71 = vector.shape_cast %70 : vector<1x4x32x8xf32> to vector<4x32x8xf32>
    "tpu.trace_start"() <{level = 10 : i32, message = "hld,hde->hle"}> : () -> ()
    %cst_41 = arith.constant dense<0.000000e+00> : vector<4x8x8xf32>
    %72 = tpu.matmul %69, %71, %cst_41 {dimension_numbers = #tpu.dot_dimension_numbers<[2], [1], [1], [2], [0, 0, 0, 1, 1, 2], [0], [0]>} : vector<4x8x32xf32>, vector<4x32x8xf32>, vector<4x8x8xf32> -> vector<4x8x8xf32>
    "tpu.trace_stop"() : () -> ()
    %c0_42 = arith.constant 0 : index
    %c0_43 = arith.constant 0 : index
    %c0_44 = arith.constant 0 : index
    %c0_45 = arith.constant 0 : index
    %73 = vector.load %arg10[%c0_42, %c0_43, %c0_44, %c0_45] : memref<2x4x32x16xf32, #tpu.memory_space<vmem>>, vector<1x4x32x16xf32>
    %74 = vector.shape_cast %73 : vector<1x4x32x16xf32> to vector<4x32x16xf32>
    "tpu.trace_start"() <{level = 10 : i32, message = "hld,hde->hle"}> : () -> ()
    %cst_46 = arith.constant dense<0.000000e+00> : vector<4x8x16xf32>
    %75 = tpu.matmul %10, %74, %cst_46 {dimension_numbers = #tpu.dot_dimension_numbers<[2], [1], [1], [2], [0, 0, 0, 1, 1, 2], [0], [0]>} : vector<4x8x32xf32>, vector<4x32x16xf32>, vector<4x8x16xf32> -> vector<4x8x16xf32>
    "tpu.trace_stop"() : () -> ()
    %76 = vector.extract_strided_slice %75 {offsets = [0, 0, 0], sizes = [4, 8, 8], strides = [1, 1, 1]} : vector<4x8x16xf32> to vector<4x8x8xf32>
    %77 = vector.extract_strided_slice %75 {offsets = [0, 0, 8], sizes = [4, 8, 8], strides = [1, 1, 1]} : vector<4x8x16xf32> to vector<4x8x8xf32>
    %c0_47 = arith.constant 0 : index
    %c0_48 = arith.constant 0 : index
    %c0_49 = arith.constant 0 : index
    %c0_50 = arith.constant 0 : index
    %78 = vector.load %arg11[%c0_47, %c0_48, %c0_49, %c0_50] : memref<2x4x8x32xf32, #tpu.memory_space<vmem>>, vector<1x4x8x32xf32>
    %79 = vector.shape_cast %78 : vector<1x4x8x32xf32> to vector<4x8x32xf32>
    "tpu.trace_start"() <{level = 10 : i32, message = "hqd,hkd->hqk"}> : () -> ()
    %cst_51 = arith.constant dense<0.000000e+00> : vector<4x8x8xf32>
    %80 = tpu.matmul %72, %76, %cst_51 {dimension_numbers = #tpu.dot_dimension_numbers<[2], [2], [1], [1], [0, 0, 0, 1, 1, 1], [0], [0]>} : vector<4x8x8xf32>, vector<4x8x8xf32>, vector<4x8x8xf32> -> vector<4x8x8xf32>
    "tpu.trace_stop"() : () -> ()
    %cst_52 = arith.constant 0.353553385 : f32
    %81 = vector.broadcast %cst_52 : f32 to vector<4x8x8xf32>
    %82 = arith.mulf %80, %81 : vector<4x8x8xf32>
    %83 = vector.shape_cast %7 : vector<8x8xf32> to vector<1x8x8xf32>
    %84 = vector.broadcast %83 : vector<1x8x8xf32> to vector<4x8x8xf32>
    %85 = arith.addf %82, %84 : vector<4x8x8xf32>
    %cst_53 = arith.constant dense<0xFF800000> : vector<4x8xf32>
    %86 = vector.multi_reduction <maximumf>, %85, %cst_53 [2] : vector<4x8x8xf32> to vector<4x8xf32>
    %87 = vector.shape_cast %86 : vector<4x8xf32> to vector<4x8x1xf32>
    %88 = vector.broadcast %87 : vector<4x8x1xf32> to vector<4x8x8xf32>
    %89 = arith.subf %85, %88 : vector<4x8x8xf32>
    %90 = math.exp %89 : vector<4x8x8xf32>
    %cst_54 = arith.constant dense<0.000000e+00> : vector<4x8xf32>
    %91 = vector.multi_reduction <add>, %90, %cst_54 [2] : vector<4x8x8xf32> to vector<4x8xf32>
    %92 = vector.shape_cast %91 : vector<4x8xf32> to vector<4x8x1xf32>
    %93 = vector.broadcast %92 : vector<4x8x1xf32> to vector<4x8x8xf32>
    %94 = arith.divf %90, %93 : vector<4x8x8xf32>
    "tpu.trace_start"() <{level = 10 : i32, message = "hqk,hkd->hqd"}> : () -> ()
    %cst_55 = arith.constant dense<0.000000e+00> : vector<4x8x8xf32>
    %95 = tpu.matmul %94, %77, %cst_55 {dimension_numbers = #tpu.dot_dimension_numbers<[2], [1], [1], [2], [0, 0, 0, 1, 1, 2], [0], [0]>} : vector<4x8x8xf32>, vector<4x8x8xf32>, vector<4x8x8xf32> -> vector<4x8x8xf32>
    "tpu.trace_stop"() : () -> ()
    "tpu.trace_start"() <{level = 10 : i32, message = "hqd,hdf->hqf"}> : () -> ()
    %cst_56 = arith.constant dense<0.000000e+00> : vector<4x8x32xf32>
    %96 = tpu.matmul %95, %79, %cst_56 {dimension_numbers = #tpu.dot_dimension_numbers<[2], [1], [1], [2], [0, 0, 0, 1, 1, 2], [0], [0]>} : vector<4x8x8xf32>, vector<4x8x32xf32>, vector<4x8x32xf32> -> vector<4x8x32xf32>
    "tpu.trace_stop"() : () -> ()
    %cst_57 = arith.constant dense<0.000000e+00> : vector<8x32xf32>
    %97 = vector.multi_reduction <add>, %96, %cst_57 [0] : vector<4x8x32xf32> to vector<8x32xf32>
    %98 = arith.addf %97, %66 : vector<8x32xf32>
    %c0_58 = arith.constant 0 : index
    %c0_59 = arith.constant 0 : index
    %c0_60 = arith.constant 0 : index
    %99 = vector.load %arg12[%c0_58, %c0_59, %c0_60] : memref<2x1x32xf32, #tpu.memory_space<vmem>>, vector<1x1x32xf32>
    %100 = vector.shape_cast %99 : vector<1x1x32xf32> to vector<1x32xf32>
    %c0_61 = arith.constant 0 : index
    %c0_62 = arith.constant 0 : index
    %c0_63 = arith.constant 0 : index
    %101 = vector.load %arg13[%c0_61, %c0_62, %c0_63] : memref<2x1x32xf32, #tpu.memory_space<vmem>>, vector<1x1x32xf32>
    %102 = vector.shape_cast %101 : vector<1x1x32xf32> to vector<1x32xf32>
    %cst_64 = arith.constant dense<0.000000e+00> : vector<8xf32>
    %103 = vector.multi_reduction <add>, %98, %cst_64 [1] : vector<8x32xf32> to vector<8xf32>
    %104 = vector.shape_cast %103 : vector<8xf32> to vector<8x1xf32>
    %cst_65 = arith.constant 3.200000e+01 : f32
    %105 = vector.broadcast %cst_65 : f32 to vector<8x1xf32>
    %106 = arith.divf %104, %105 : vector<8x1xf32>
    %107 = vector.broadcast %106 : vector<8x1xf32> to vector<8x32xf32>
    %108 = arith.subf %98, %107 : vector<8x32xf32>
    %109 = arith.mulf %108, %108 : vector<8x32xf32>
    %cst_66 = arith.constant dense<0.000000e+00> : vector<8xf32>
    %110 = vector.multi_reduction <add>, %109, %cst_66 [1] : vector<8x32xf32> to vector<8xf32>
    %111 = vector.shape_cast %110 : vector<8xf32> to vector<8x1xf32>
    %cst_67 = arith.constant 3.200000e+01 : f32
    %112 = vector.broadcast %cst_67 : f32 to vector<8x1xf32>
    %113 = arith.divf %111, %112 : vector<8x1xf32>
    %114 = vector.broadcast %106 : vector<8x1xf32> to vector<8x32xf32>
    %115 = arith.subf %98, %114 : vector<8x32xf32>
    %cst_68 = arith.constant 9.99999974E-6 : f32
    %116 = vector.broadcast %cst_68 : f32 to vector<8x1xf32>
    %117 = arith.addf %113, %116 : vector<8x1xf32>
    %118 = math.rsqrt %117 : vector<8x1xf32>
    %119 = vector.broadcast %118 : vector<8x1xf32> to vector<8x32xf32>
    %120 = arith.mulf %115, %119 : vector<8x32xf32>
    %121 = vector.broadcast %100 : vector<1x32xf32> to vector<8x32xf32>
    %122 = arith.mulf %120, %121 : vector<8x32xf32>
    %123 = vector.broadcast %102 : vector<1x32xf32> to vector<8x32xf32>
    %124 = arith.addf %122, %123 : vector<8x32xf32>
    %c0_69 = arith.constant 0 : index
    %c0_70 = arith.constant 0 : index
    %c0_71 = arith.constant 0 : index
    %125 = vector.load %arg14[%c0_69, %c0_70, %c0_71] : memref<2x32x64xf32, #tpu.memory_space<vmem>>, vector<1x32x64xf32>
    %126 = vector.shape_cast %125 : vector<1x32x64xf32> to vector<32x64xf32>
    %cst_72 = arith.constant dense<0.000000e+00> : vector<8x64xf32>
    %127 = tpu.matmul %124, %126, %cst_72 {dimension_numbers = #tpu.dot_dimension_numbers<[1], [0], [0], [1], [0, 0, 1, 1], [], []>} : vector<8x32xf32>, vector<32x64xf32>, vector<8x64xf32> -> vector<8x64xf32>
    %c0_73 = arith.constant 0 : index
    %c0_74 = arith.constant 0 : index
    %c0_75 = arith.constant 0 : index
    %128 = vector.load %arg15[%c0_73, %c0_74, %c0_75] : memref<2x1x64xf32, #tpu.memory_space<vmem>>, vector<1x1x64xf32>
    %129 = vector.shape_cast %128 : vector<1x1x64xf32> to vector<1x64xf32>
    %130 = vector.broadcast %129 : vector<1x64xf32> to vector<8x64xf32>
    %131 = arith.addf %127, %130 : vector<8x64xf32>
    %cst_76 = arith.constant 0.000000e+00 : f32
    %132 = vector.broadcast %cst_76 : f32 to vector<8x64xf32>
    %133 = arith.maximumf %131, %132 : vector<8x64xf32>
    %c0_77 = arith.constant 0 : index
    %c0_78 = arith.constant 0 : index
    %c0_79 = arith.constant 0 : index
    %134 = vector.load %arg16[%c0_77, %c0_78, %c0_79] : memref<2x64x32xf32, #tpu.memory_space<vmem>>, vector<1x64x32xf32>
    %135 = vector.shape_cast %134 : vector<1x64x32xf32> to vector<64x32xf32>
    %cst_80 = arith.constant dense<0.000000e+00> : vector<8x32xf32>
    %136 = tpu.matmul %133, %135, %cst_80 {dimension_numbers = #tpu.dot_dimension_numbers<[1], [0], [0], [1], [0, 0, 1, 1], [], []>} : vector<8x64xf32>, vector<64x32xf32>, vector<8x32xf32> -> vector<8x32xf32>
    %c0_81 = arith.constant 0 : index
    %c0_82 = arith.constant 0 : index
    %c0_83 = arith.constant 0 : index
    %137 = vector.load %arg17[%c0_81, %c0_82, %c0_83] : memref<2x1x32xf32, #tpu.memory_space<vmem>>, vector<1x1x32xf32>
    %138 = vector.shape_cast %137 : vector<1x1x32xf32> to vector<1x32xf32>
    %139 = vector.broadcast %138 : vector<1x32xf32> to vector<8x32xf32>
    %140 = arith.addf %136, %139 : vector<8x32xf32>
    %141 = arith.addf %140, %124 : vector<8x32xf32>
    %c0_84 = arith.constant 0 : index
    %c0_85 = arith.constant 0 : index
    %c0_86 = arith.constant 0 : index
    %142 = vector.load %arg18[%c0_84, %c0_85, %c0_86] : memref<2x1x32xf32, #tpu.memory_space<vmem>>, vector<1x1x32xf32>
    %143 = vector.shape_cast %142 : vector<1x1x32xf32> to vector<1x32xf32>
    %c0_87 = arith.constant 0 : index
    %c0_88 = arith.constant 0 : index
    %c0_89 = arith.constant 0 : index
    %144 = vector.load %arg19[%c0_87, %c0_88, %c0_89] : memref<2x1x32xf32, #tpu.memory_space<vmem>>, vector<1x1x32xf32>
    %145 = vector.shape_cast %144 : vector<1x1x32xf32> to vector<1x32xf32>
    %cst_90 = arith.constant dense<0.000000e+00> : vector<8xf32>
    %146 = vector.multi_reduction <add>, %141, %cst_90 [1] : vector<8x32xf32> to vector<8xf32>
    %147 = vector.shape_cast %146 : vector<8xf32> to vector<8x1xf32>
    %cst_91 = arith.constant 3.200000e+01 : f32
    %148 = vector.broadcast %cst_91 : f32 to vector<8x1xf32>
    %149 = arith.divf %147, %148 : vector<8x1xf32>
    %150 = vector.broadcast %149 : vector<8x1xf32> to vector<8x32xf32>
    %151 = arith.subf %141, %150 : vector<8x32xf32>
    %152 = arith.mulf %151, %151 : vector<8x32xf32>
    %cst_92 = arith.constant dense<0.000000e+00> : vector<8xf32>
    %153 = vector.multi_reduction <add>, %152, %cst_92 [1] : vector<8x32xf32> to vector<8xf32>
    %154 = vector.shape_cast %153 : vector<8xf32> to vector<8x1xf32>
    %cst_93 = arith.constant 3.200000e+01 : f32
    %155 = vector.broadcast %cst_93 : f32 to vector<8x1xf32>
    %156 = arith.divf %154, %155 : vector<8x1xf32>
    %157 = vector.broadcast %149 : vector<8x1xf32> to vector<8x32xf32>
    %158 = arith.subf %141, %157 : vector<8x32xf32>
    %cst_94 = arith.constant 9.99999974E-6 : f32
    %159 = vector.broadcast %cst_94 : f32 to vector<8x1xf32>
    %160 = arith.addf %156, %159 : vector<8x1xf32>
    %161 = math.rsqrt %160 : vector<8x1xf32>
    %162 = vector.broadcast %161 : vector<8x1xf32> to vector<8x32xf32>
    %163 = arith.mulf %158, %162 : vector<8x32xf32>
    %164 = vector.broadcast %143 : vector<1x32xf32> to vector<8x32xf32>
    %165 = arith.mulf %163, %164 : vector<8x32xf32>
    %166 = vector.broadcast %145 : vector<1x32xf32> to vector<8x32xf32>
    %167 = arith.addf %165, %166 : vector<8x32xf32>
    %168 = vector.shape_cast %167 : vector<8x32xf32> to vector<1x8x32xf32>
    %169 = vector.shape_cast %168 : vector<1x8x32xf32> to vector<1x8x32xf32>
    %170 = vector.broadcast %169 : vector<1x8x32xf32> to vector<4x8x32xf32>
    %c1 = arith.constant 1 : index
    %c0_95 = arith.constant 0 : index
    %c0_96 = arith.constant 0 : index
    %c0_97 = arith.constant 0 : index
    %171 = vector.load %arg5[%c1, %c0_95, %c0_96, %c0_97] : memref<2x4x32x24xf32, #tpu.memory_space<vmem>>, vector<1x4x32x24xf32>
    %172 = vector.shape_cast %171 : vector<1x4x32x24xf32> to vector<4x32x24xf32>
    "tpu.trace_start"() <{level = 10 : i32, message = "hld,hde->hle"}> : () -> ()
    %cst_98 = arith.constant dense<0.000000e+00> : vector<4x8x24xf32>
    %173 = tpu.matmul %170, %172, %cst_98 {dimension_numbers = #tpu.dot_dimension_numbers<[2], [1], [1], [2], [0, 0, 0, 1, 1, 2], [0], [0]>} : vector<4x8x32xf32>, vector<4x32x24xf32>, vector<4x8x24xf32> -> vector<4x8x24xf32>
    "tpu.trace_stop"() : () -> ()
    %174 = vector.extract_strided_slice %173 {offsets = [0, 0, 0], sizes = [4, 8, 8], strides = [1, 1, 1]} : vector<4x8x24xf32> to vector<4x8x8xf32>
    %175 = vector.extract_strided_slice %173 {offsets = [0, 0, 8], sizes = [4, 8, 8], strides = [1, 1, 1]} : vector<4x8x24xf32> to vector<4x8x8xf32>
    %176 = vector.extract_strided_slice %173 {offsets = [0, 0, 16], sizes = [4, 8, 8], strides = [1, 1, 1]} : vector<4x8x24xf32> to vector<4x8x8xf32>
    %c1_99 = arith.constant 1 : index
    %c0_100 = arith.constant 0 : index
    %c0_101 = arith.constant 0 : index
    %c0_102 = arith.constant 0 : index
    %177 = vector.load %arg6[%c1_99, %c0_100, %c0_101, %c0_102] : memref<2x4x8x32xf32, #tpu.memory_space<vmem>>, vector<1x4x8x32xf32>
    %178 = vector.shape_cast %177 : vector<1x4x8x32xf32> to vector<4x8x32xf32>
    "tpu.trace_start"() <{level = 10 : i32, message = "hqd,hkd->hqk"}> : () -> ()
    %cst_103 = arith.constant dense<0.000000e+00> : vector<4x8x8xf32>
    %179 = tpu.matmul %174, %175, %cst_103 {dimension_numbers = #tpu.dot_dimension_numbers<[2], [2], [1], [1], [0, 0, 0, 1, 1, 1], [0], [0]>} : vector<4x8x8xf32>, vector<4x8x8xf32>, vector<4x8x8xf32> -> vector<4x8x8xf32>
    "tpu.trace_stop"() : () -> ()
    %cst_104 = arith.constant 0.353553385 : f32
    %180 = vector.broadcast %cst_104 : f32 to vector<4x8x8xf32>
    %181 = arith.mulf %179, %180 : vector<4x8x8xf32>
    %182 = vector.shape_cast %5 : vector<8x8xf32> to vector<1x8x8xf32>
    %183 = vector.broadcast %182 : vector<1x8x8xf32> to vector<4x8x8xf32>
    %184 = arith.addf %181, %183 : vector<4x8x8xf32>
    %cst_105 = arith.constant dense<0xFF800000> : vector<4x8xf32>
    %185 = vector.multi_reduction <maximumf>, %184, %cst_105 [2] : vector<4x8x8xf32> to vector<4x8xf32>
    %186 = vector.shape_cast %185 : vector<4x8xf32> to vector<4x8x1xf32>
    %187 = vector.broadcast %186 : vector<4x8x1xf32> to vector<4x8x8xf32>
    %188 = arith.subf %184, %187 : vector<4x8x8xf32>
    %189 = math.exp %188 : vector<4x8x8xf32>
    %cst_106 = arith.constant dense<0.000000e+00> : vector<4x8xf32>
    %190 = vector.multi_reduction <add>, %189, %cst_106 [2] : vector<4x8x8xf32> to vector<4x8xf32>
    %191 = vector.shape_cast %190 : vector<4x8xf32> to vector<4x8x1xf32>
    %192 = vector.broadcast %191 : vector<4x8x1xf32> to vector<4x8x8xf32>
    %193 = arith.divf %189, %192 : vector<4x8x8xf32>
    "tpu.trace_start"() <{level = 10 : i32, message = "hqk,hkd->hqd"}> : () -> ()
    %cst_107 = arith.constant dense<0.000000e+00> : vector<4x8x8xf32>
    %194 = tpu.matmul %193, %176, %cst_107 {dimension_numbers = #tpu.dot_dimension_numbers<[2], [1], [1], [2], [0, 0, 0, 1, 1, 2], [0], [0]>} : vector<4x8x8xf32>, vector<4x8x8xf32>, vector<4x8x8xf32> -> vector<4x8x8xf32>
    "tpu.trace_stop"() : () -> ()
    "tpu.trace_start"() <{level = 10 : i32, message = "hqd,hdf->hqf"}> : () -> ()
    %cst_108 = arith.constant dense<0.000000e+00> : vector<4x8x32xf32>
    %195 = tpu.matmul %194, %178, %cst_108 {dimension_numbers = #tpu.dot_dimension_numbers<[2], [1], [1], [2], [0, 0, 0, 1, 1, 2], [0], [0]>} : vector<4x8x8xf32>, vector<4x8x32xf32>, vector<4x8x32xf32> -> vector<4x8x32xf32>
    "tpu.trace_stop"() : () -> ()
    %cst_109 = arith.constant dense<0.000000e+00> : vector<8x32xf32>
    %196 = vector.multi_reduction <add>, %195, %cst_109 [0] : vector<4x8x32xf32> to vector<8x32xf32>
    %197 = arith.addf %196, %167 : vector<8x32xf32>
    %c1_110 = arith.constant 1 : index
    %c0_111 = arith.constant 0 : index
    %c0_112 = arith.constant 0 : index
    %198 = vector.load %arg7[%c1_110, %c0_111, %c0_112] : memref<2x1x32xf32, #tpu.memory_space<vmem>>, vector<1x1x32xf32>
    %199 = vector.shape_cast %198 : vector<1x1x32xf32> to vector<1x32xf32>
    %c1_113 = arith.constant 1 : index
    %c0_114 = arith.constant 0 : index
    %c0_115 = arith.constant 0 : index
    %200 = vector.load %arg8[%c1_113, %c0_114, %c0_115] : memref<2x1x32xf32, #tpu.memory_space<vmem>>, vector<1x1x32xf32>
    %201 = vector.shape_cast %200 : vector<1x1x32xf32> to vector<1x32xf32>
    %cst_116 = arith.constant dense<0.000000e+00> : vector<8xf32>
    %202 = vector.multi_reduction <add>, %197, %cst_116 [1] : vector<8x32xf32> to vector<8xf32>
    %203 = vector.shape_cast %202 : vector<8xf32> to vector<8x1xf32>
    %cst_117 = arith.constant 3.200000e+01 : f32
    %204 = vector.broadcast %cst_117 : f32 to vector<8x1xf32>
    %205 = arith.divf %203, %204 : vector<8x1xf32>
    %206 = vector.broadcast %205 : vector<8x1xf32> to vector<8x32xf32>
    %207 = arith.subf %197, %206 : vector<8x32xf32>
    %208 = arith.mulf %207, %207 : vector<8x32xf32>
    %cst_118 = arith.constant dense<0.000000e+00> : vector<8xf32>
    %209 = vector.multi_reduction <add>, %208, %cst_118 [1] : vector<8x32xf32> to vector<8xf32>
    %210 = vector.shape_cast %209 : vector<8xf32> to vector<8x1xf32>
    %cst_119 = arith.constant 3.200000e+01 : f32
    %211 = vector.broadcast %cst_119 : f32 to vector<8x1xf32>
    %212 = arith.divf %210, %211 : vector<8x1xf32>
    %213 = vector.broadcast %205 : vector<8x1xf32> to vector<8x32xf32>
    %214 = arith.subf %197, %213 : vector<8x32xf32>
    %cst_120 = arith.constant 9.99999974E-6 : f32
    %215 = vector.broadcast %cst_120 : f32 to vector<8x1xf32>
    %216 = arith.addf %212, %215 : vector<8x1xf32>
    %217 = math.rsqrt %216 : vector<8x1xf32>
    %218 = vector.broadcast %217 : vector<8x1xf32> to vector<8x32xf32>
    %219 = arith.mulf %214, %218 : vector<8x32xf32>
    %220 = vector.broadcast %199 : vector<1x32xf32> to vector<8x32xf32>
    %221 = arith.mulf %219, %220 : vector<8x32xf32>
    %222 = vector.broadcast %201 : vector<1x32xf32> to vector<8x32xf32>
    %223 = arith.addf %221, %222 : vector<8x32xf32>
    %224 = vector.shape_cast %223 : vector<8x32xf32> to vector<1x8x32xf32>
    %225 = vector.shape_cast %224 : vector<1x8x32xf32> to vector<1x8x32xf32>
    %226 = vector.broadcast %225 : vector<1x8x32xf32> to vector<4x8x32xf32>
    %c1_121 = arith.constant 1 : index
    %c0_122 = arith.constant 0 : index
    %c0_123 = arith.constant 0 : index
    %c0_124 = arith.constant 0 : index
    %227 = vector.load %arg9[%c1_121, %c0_122, %c0_123, %c0_124] : memref<2x4x32x8xf32, #tpu.memory_space<vmem>>, vector<1x4x32x8xf32>
    %228 = vector.shape_cast %227 : vector<1x4x32x8xf32> to vector<4x32x8xf32>
    "tpu.trace_start"() <{level = 10 : i32, message = "hld,hde->hle"}> : () -> ()
    %cst_125 = arith.constant dense<0.000000e+00> : vector<4x8x8xf32>
    %229 = tpu.matmul %226, %228, %cst_125 {dimension_numbers = #tpu.dot_dimension_numbers<[2], [1], [1], [2], [0, 0, 0, 1, 1, 2], [0], [0]>} : vector<4x8x32xf32>, vector<4x32x8xf32>, vector<4x8x8xf32> -> vector<4x8x8xf32>
    "tpu.trace_stop"() : () -> ()
    %c1_126 = arith.constant 1 : index
    %c0_127 = arith.constant 0 : index
    %c0_128 = arith.constant 0 : index
    %c0_129 = arith.constant 0 : index
    %230 = vector.load %arg10[%c1_126, %c0_127, %c0_128, %c0_129] : memref<2x4x32x16xf32, #tpu.memory_space<vmem>>, vector<1x4x32x16xf32>
    %231 = vector.shape_cast %230 : vector<1x4x32x16xf32> to vector<4x32x16xf32>
    "tpu.trace_start"() <{level = 10 : i32, message = "hld,hde->hle"}> : () -> ()
    %cst_130 = arith.constant dense<0.000000e+00> : vector<4x8x16xf32>
    %232 = tpu.matmul %10, %231, %cst_130 {dimension_numbers = #tpu.dot_dimension_numbers<[2], [1], [1], [2], [0, 0, 0, 1, 1, 2], [0], [0]>} : vector<4x8x32xf32>, vector<4x32x16xf32>, vector<4x8x16xf32> -> vector<4x8x16xf32>
    "tpu.trace_stop"() : () -> ()
    %233 = vector.extract_strided_slice %232 {offsets = [0, 0, 0], sizes = [4, 8, 8], strides = [1, 1, 1]} : vector<4x8x16xf32> to vector<4x8x8xf32>
    %234 = vector.extract_strided_slice %232 {offsets = [0, 0, 8], sizes = [4, 8, 8], strides = [1, 1, 1]} : vector<4x8x16xf32> to vector<4x8x8xf32>
    %c1_131 = arith.constant 1 : index
    %c0_132 = arith.constant 0 : index
    %c0_133 = arith.constant 0 : index
    %c0_134 = arith.constant 0 : index
    %235 = vector.load %arg11[%c1_131, %c0_132, %c0_133, %c0_134] : memref<2x4x8x32xf32, #tpu.memory_space<vmem>>, vector<1x4x8x32xf32>
    %236 = vector.shape_cast %235 : vector<1x4x8x32xf32> to vector<4x8x32xf32>
    "tpu.trace_start"() <{level = 10 : i32, message = "hqd,hkd->hqk"}> : () -> ()
    %cst_135 = arith.constant dense<0.000000e+00> : vector<4x8x8xf32>
    %237 = tpu.matmul %229, %233, %cst_135 {dimension_numbers = #tpu.dot_dimension_numbers<[2], [2], [1], [1], [0, 0, 0, 1, 1, 1], [0], [0]>} : vector<4x8x8xf32>, vector<4x8x8xf32>, vector<4x8x8xf32> -> vector<4x8x8xf32>
    "tpu.trace_stop"() : () -> ()
    %cst_136 = arith.constant 0.353553385 : f32
    %238 = vector.broadcast %cst_136 : f32 to vector<4x8x8xf32>
    %239 = arith.mulf %237, %238 : vector<4x8x8xf32>
    %240 = vector.shape_cast %7 : vector<8x8xf32> to vector<1x8x8xf32>
    %241 = vector.broadcast %240 : vector<1x8x8xf32> to vector<4x8x8xf32>
    %242 = arith.addf %239, %241 : vector<4x8x8xf32>
    %cst_137 = arith.constant dense<0xFF800000> : vector<4x8xf32>
    %243 = vector.multi_reduction <maximumf>, %242, %cst_137 [2] : vector<4x8x8xf32> to vector<4x8xf32>
    %244 = vector.shape_cast %243 : vector<4x8xf32> to vector<4x8x1xf32>
    %245 = vector.broadcast %244 : vector<4x8x1xf32> to vector<4x8x8xf32>
    %246 = arith.subf %242, %245 : vector<4x8x8xf32>
    %247 = math.exp %246 : vector<4x8x8xf32>
    %cst_138 = arith.constant dense<0.000000e+00> : vector<4x8xf32>
    %248 = vector.multi_reduction <add>, %247, %cst_138 [2] : vector<4x8x8xf32> to vector<4x8xf32>
    %249 = vector.shape_cast %248 : vector<4x8xf32> to vector<4x8x1xf32>
    %250 = vector.broadcast %249 : vector<4x8x1xf32> to vector<4x8x8xf32>
    %251 = arith.divf %247, %250 : vector<4x8x8xf32>
    "tpu.trace_start"() <{level = 10 : i32, message = "hqk,hkd->hqd"}> : () -> ()
    %cst_139 = arith.constant dense<0.000000e+00> : vector<4x8x8xf32>
    %252 = tpu.matmul %251, %234, %cst_139 {dimension_numbers = #tpu.dot_dimension_numbers<[2], [1], [1], [2], [0, 0, 0, 1, 1, 2], [0], [0]>} : vector<4x8x8xf32>, vector<4x8x8xf32>, vector<4x8x8xf32> -> vector<4x8x8xf32>
    "tpu.trace_stop"() : () -> ()
    "tpu.trace_start"() <{level = 10 : i32, message = "hqd,hdf->hqf"}> : () -> ()
    %cst_140 = arith.constant dense<0.000000e+00> : vector<4x8x32xf32>
    %253 = tpu.matmul %252, %236, %cst_140 {dimension_numbers = #tpu.dot_dimension_numbers<[2], [1], [1], [2], [0, 0, 0, 1, 1, 2], [0], [0]>} : vector<4x8x8xf32>, vector<4x8x32xf32>, vector<4x8x32xf32> -> vector<4x8x32xf32>
    "tpu.trace_stop"() : () -> ()
    %cst_141 = arith.constant dense<0.000000e+00> : vector<8x32xf32>
    %254 = vector.multi_reduction <add>, %253, %cst_141 [0] : vector<4x8x32xf32> to vector<8x32xf32>
    %255 = arith.addf %254, %223 : vector<8x32xf32>
    %c1_142 = arith.constant 1 : index
    %c0_143 = arith.constant 0 : index
    %c0_144 = arith.constant 0 : index
    %256 = vector.load %arg12[%c1_142, %c0_143, %c0_144] : memref<2x1x32xf32, #tpu.memory_space<vmem>>, vector<1x1x32xf32>
    %257 = vector.shape_cast %256 : vector<1x1x32xf32> to vector<1x32xf32>
    %c1_145 = arith.constant 1 : index
    %c0_146 = arith.constant 0 : index
    %c0_147 = arith.constant 0 : index
    %258 = vector.load %arg13[%c1_145, %c0_146, %c0_147] : memref<2x1x32xf32, #tpu.memory_space<vmem>>, vector<1x1x32xf32>
    %259 = vector.shape_cast %258 : vector<1x1x32xf32> to vector<1x32xf32>
    %cst_148 = arith.constant dense<0.000000e+00> : vector<8xf32>
    %260 = vector.multi_reduction <add>, %255, %cst_148 [1] : vector<8x32xf32> to vector<8xf32>
    %261 = vector.shape_cast %260 : vector<8xf32> to vector<8x1xf32>
    %cst_149 = arith.constant 3.200000e+01 : f32
    %262 = vector.broadcast %cst_149 : f32 to vector<8x1xf32>
    %263 = arith.divf %261, %262 : vector<8x1xf32>
    %264 = vector.broadcast %263 : vector<8x1xf32> to vector<8x32xf32>
    %265 = arith.subf %255, %264 : vector<8x32xf32>
    %266 = arith.mulf %265, %265 : vector<8x32xf32>
    %cst_150 = arith.constant dense<0.000000e+00> : vector<8xf32>
    %267 = vector.multi_reduction <add>, %266, %cst_150 [1] : vector<8x32xf32> to vector<8xf32>
    %268 = vector.shape_cast %267 : vector<8xf32> to vector<8x1xf32>
    %cst_151 = arith.constant 3.200000e+01 : f32
    %269 = vector.broadcast %cst_151 : f32 to vector<8x1xf32>
    %270 = arith.divf %268, %269 : vector<8x1xf32>
    %271 = vector.broadcast %263 : vector<8x1xf32> to vector<8x32xf32>
    %272 = arith.subf %255, %271 : vector<8x32xf32>
    %cst_152 = arith.constant 9.99999974E-6 : f32
    %273 = vector.broadcast %cst_152 : f32 to vector<8x1xf32>
    %274 = arith.addf %270, %273 : vector<8x1xf32>
    %275 = math.rsqrt %274 : vector<8x1xf32>
    %276 = vector.broadcast %275 : vector<8x1xf32> to vector<8x32xf32>
    %277 = arith.mulf %272, %276 : vector<8x32xf32>
    %278 = vector.broadcast %257 : vector<1x32xf32> to vector<8x32xf32>
    %279 = arith.mulf %277, %278 : vector<8x32xf32>
    %280 = vector.broadcast %259 : vector<1x32xf32> to vector<8x32xf32>
    %281 = arith.addf %279, %280 : vector<8x32xf32>
    %c1_153 = arith.constant 1 : index
    %c0_154 = arith.constant 0 : index
    %c0_155 = arith.constant 0 : index
    %282 = vector.load %arg14[%c1_153, %c0_154, %c0_155] : memref<2x32x64xf32, #tpu.memory_space<vmem>>, vector<1x32x64xf32>
    %283 = vector.shape_cast %282 : vector<1x32x64xf32> to vector<32x64xf32>
    %cst_156 = arith.constant dense<0.000000e+00> : vector<8x64xf32>
    %284 = tpu.matmul %281, %283, %cst_156 {dimension_numbers = #tpu.dot_dimension_numbers<[1], [0], [0], [1], [0, 0, 1, 1], [], []>} : vector<8x32xf32>, vector<32x64xf32>, vector<8x64xf32> -> vector<8x64xf32>
    %c1_157 = arith.constant 1 : index
    %c0_158 = arith.constant 0 : index
    %c0_159 = arith.constant 0 : index
    %285 = vector.load %arg15[%c1_157, %c0_158, %c0_159] : memref<2x1x64xf32, #tpu.memory_space<vmem>>, vector<1x1x64xf32>
    %286 = vector.shape_cast %285 : vector<1x1x64xf32> to vector<1x64xf32>
    %287 = vector.broadcast %286 : vector<1x64xf32> to vector<8x64xf32>
    %288 = arith.addf %284, %287 : vector<8x64xf32>
    %cst_160 = arith.constant 0.000000e+00 : f32
    %289 = vector.broadcast %cst_160 : f32 to vector<8x64xf32>
    %290 = arith.maximumf %288, %289 : vector<8x64xf32>
    %c1_161 = arith.constant 1 : index
    %c0_162 = arith.constant 0 : index
    %c0_163 = arith.constant 0 : index
    %291 = vector.load %arg16[%c1_161, %c0_162, %c0_163] : memref<2x64x32xf32, #tpu.memory_space<vmem>>, vector<1x64x32xf32>
    %292 = vector.shape_cast %291 : vector<1x64x32xf32> to vector<64x32xf32>
    %cst_164 = arith.constant dense<0.000000e+00> : vector<8x32xf32>
    %293 = tpu.matmul %290, %292, %cst_164 {dimension_numbers = #tpu.dot_dimension_numbers<[1], [0], [0], [1], [0, 0, 1, 1], [], []>} : vector<8x64xf32>, vector<64x32xf32>, vector<8x32xf32> -> vector<8x32xf32>
    %c1_165 = arith.constant 1 : index
    %c0_166 = arith.constant 0 : index
    %c0_167 = arith.constant 0 : index
    %294 = vector.load %arg17[%c1_165, %c0_166, %c0_167] : memref<2x1x32xf32, #tpu.memory_space<vmem>>, vector<1x1x32xf32>
    %295 = vector.shape_cast %294 : vector<1x1x32xf32> to vector<1x32xf32>
    %296 = vector.broadcast %295 : vector<1x32xf32> to vector<8x32xf32>
    %297 = arith.addf %293, %296 : vector<8x32xf32>
    %298 = arith.addf %297, %281 : vector<8x32xf32>
    %c1_168 = arith.constant 1 : index
    %c0_169 = arith.constant 0 : index
    %c0_170 = arith.constant 0 : index
    %299 = vector.load %arg18[%c1_168, %c0_169, %c0_170] : memref<2x1x32xf32, #tpu.memory_space<vmem>>, vector<1x1x32xf32>
    %300 = vector.shape_cast %299 : vector<1x1x32xf32> to vector<1x32xf32>
    %c1_171 = arith.constant 1 : index
    %c0_172 = arith.constant 0 : index
    %c0_173 = arith.constant 0 : index
    %301 = vector.load %arg19[%c1_171, %c0_172, %c0_173] : memref<2x1x32xf32, #tpu.memory_space<vmem>>, vector<1x1x32xf32>
    %302 = vector.shape_cast %301 : vector<1x1x32xf32> to vector<1x32xf32>
    %cst_174 = arith.constant dense<0.000000e+00> : vector<8xf32>
    %303 = vector.multi_reduction <add>, %298, %cst_174 [1] : vector<8x32xf32> to vector<8xf32>
    %304 = vector.shape_cast %303 : vector<8xf32> to vector<8x1xf32>
    %cst_175 = arith.constant 3.200000e+01 : f32
    %305 = vector.broadcast %cst_175 : f32 to vector<8x1xf32>
    %306 = arith.divf %304, %305 : vector<8x1xf32>
    %307 = vector.broadcast %306 : vector<8x1xf32> to vector<8x32xf32>
    %308 = arith.subf %298, %307 : vector<8x32xf32>
    %309 = arith.mulf %308, %308 : vector<8x32xf32>
    %cst_176 = arith.constant dense<0.000000e+00> : vector<8xf32>
    %310 = vector.multi_reduction <add>, %309, %cst_176 [1] : vector<8x32xf32> to vector<8xf32>
    %311 = vector.shape_cast %310 : vector<8xf32> to vector<8x1xf32>
    %cst_177 = arith.constant 3.200000e+01 : f32
    %312 = vector.broadcast %cst_177 : f32 to vector<8x1xf32>
    %313 = arith.divf %311, %312 : vector<8x1xf32>
    %314 = vector.broadcast %306 : vector<8x1xf32> to vector<8x32xf32>
    %315 = arith.subf %298, %314 : vector<8x32xf32>
    %cst_178 = arith.constant 9.99999974E-6 : f32
    %316 = vector.broadcast %cst_178 : f32 to vector<8x1xf32>
    %317 = arith.addf %313, %316 : vector<8x1xf32>
    %318 = math.rsqrt %317 : vector<8x1xf32>
    %319 = vector.broadcast %318 : vector<8x1xf32> to vector<8x32xf32>
    %320 = arith.mulf %315, %319 : vector<8x32xf32>
    %321 = vector.broadcast %300 : vector<1x32xf32> to vector<8x32xf32>
    %322 = arith.mulf %320, %321 : vector<8x32xf32>
    %323 = vector.broadcast %302 : vector<1x32xf32> to vector<8x32xf32>
    %324 = arith.addf %322, %323 : vector<8x32xf32>
    %c0_179 = arith.constant 0 : index
    %c0_180 = arith.constant 0 : index
    %c0_181 = arith.constant 0 : index
    %325 = vector.load %arg20[%c0_179, %c0_180, %c0_181] : memref<1x8x32xf32, #tpu.memory_space<vmem>>, vector<1x8x32xf32>
    %326 = vector.shape_cast %325 : vector<1x8x32xf32> to vector<8x32xf32>
    %327 = vector.shape_cast %324 : vector<8x32xf32> to vector<1x8x32xf32>
    tpu.vector_store %arg20[%c0_179, %c0_180, %c0_181], %327 {strides = array<i32>} : memref<1x8x32xf32, #tpu.memory_space<vmem>>, vector<1x8x32xf32>,
    return
  }
  func.func @transform_0(%arg0: i32) -> (i32, i32, i32) {
    %c0_i32 = arith.constant 0 : i32
    %c0_i32_0 = arith.constant 0 : i32
    %c0_i32_1 = arith.constant 0 : i32
    return %arg0, %c0_i32, %c0_i32_0 : i32, i32, i32
  }
  func.func @transform_1(%arg0: i32) -> (i32, i32, i32) {
    %c0_i32 = arith.constant 0 : i32
    %c0_i32_0 = arith.constant 0 : i32
    %c0_i32_1 = arith.constant 0 : i32
    return %arg0, %c0_i32, %c0_i32_0 : i32, i32, i32
  }
  func.func @transform_2(%arg0: i32) -> (i32, i32, i32) {
    %c0_i32 = arith.constant 0 : i32
    %c0_i32_0 = arith.constant 0 : i32
    %c0_i32_1 = arith.constant 0 : i32
    return %arg0, %c0_i32, %c0_i32_0 : i32, i32, i32
  }
  func.func @transform_3(%arg0: i32) -> (i32, i32, i32) {
    %c0_i32 = arith.constant 0 : i32
    %c0_i32_0 = arith.constant 0 : i32
    %c0_i32_1 = arith.constant 0 : i32
    return %arg0, %c0_i32, %c0_i32_0 : i32, i32, i32
  }
  func.func @transform_4(%arg0: i32) -> (i32, i32, i32, i32) {
    %c0_i32 = arith.constant 0 : i32
    %c0_i32_0 = arith.constant 0 : i32
    %c0_i32_1 = arith.constant 0 : i32
    %c0_i32_2 = arith.constant 0 : i32
    %c0_i32_3 = arith.constant 0 : i32
    return %c0_i32, %c0_i32_0, %c0_i32_1, %c0_i32_2 : i32, i32, i32, i32
  }
  func.func @transform_5(%arg0: i32) -> (i32, i32, i32, i32) {
    %c0_i32 = arith.constant 0 : i32
    %c0_i32_0 = arith.constant 0 : i32
    %c0_i32_1 = arith.constant 0 : i32
    %c0_i32_2 = arith.constant 0 : i32
    %c0_i32_3 = arith.constant 0 : i32
    return %c0_i32, %c0_i32_0, %c0_i32_1, %c0_i32_2 : i32, i32, i32, i32
  }
  func.func @transform_6(%arg0: i32) -> (i32, i32, i32) {
    %c0_i32 = arith.constant 0 : i32
    %c0_i32_0 = arith.constant 0 : i32
    %c0_i32_1 = arith.constant 0 : i32
    %c0_i32_2 = arith.constant 0 : i32
    return %c0_i32, %c0_i32_0, %c0_i32_1 : i32, i32, i32
  }
  func.func @transform_7(%arg0: i32) -> (i32, i32, i32) {
    %c0_i32 = arith.constant 0 : i32
    %c0_i32_0 = arith.constant 0 : i32
    %c0_i32_1 = arith.constant 0 : i32
    %c0_i32_2 = arith.constant 0 : i32
    return %c0_i32, %c0_i32_0, %c0_i32_1 : i32, i32, i32
  }
  func.func @transform_8(%arg0: i32) -> (i32, i32, i32, i32) {
    %c0_i32 = arith.constant 0 : i32
    %c0_i32_0 = arith.constant 0 : i32
    %c0_i32_1 = arith.constant 0 : i32
    %c0_i32_2 = arith.constant 0 : i32
    %c0_i32_3 = arith.constant 0 : i32
    return %c0_i32, %c0_i32_0, %c0_i32_1, %c0_i32_2 : i32, i32, i32, i32
  }
  func.func @transform_9(%arg0: i32) -> (i32, i32, i32, i32) {
    %c0_i32 = arith.constant 0 : i32
    %c0_i32_0 = arith.constant 0 : i32
    %c0_i32_1 = arith.constant 0 : i32
    %c0_i32_2 = arith.constant 0 : i32
    %c0_i32_3 = arith.constant 0 : i32
    return %c0_i32, %c0_i32_0, %c0_i32_1, %c0_i32_2 : i32, i32, i32, i32
  }
  func.func @transform_10(%arg0: i32) -> (i32, i32, i32, i32) {
    %c0_i32 = arith.constant 0 : i32
    %c0_i32_0 = arith.constant 0 : i32
    %c0_i32_1 = arith.constant 0 : i32
    %c0_i32_2 = arith.constant 0 : i32
    %c0_i32_3 = arith.constant 0 : i32
    return %c0_i32, %c0_i32_0, %c0_i32_1, %c0_i32_2 : i32, i32, i32, i32
  }
  func.func @transform_11(%arg0: i32) -> (i32, i32, i32) {
    %c0_i32 = arith.constant 0 : i32
    %c0_i32_0 = arith.constant 0 : i32
    %c0_i32_1 = arith.constant 0 : i32
    %c0_i32_2 = arith.constant 0 : i32
    return %c0_i32, %c0_i32_0, %c0_i32_1 : i32, i32, i32
  }
  func.func @transform_12(%arg0: i32) -> (i32, i32, i32) {
    %c0_i32 = arith.constant 0 : i32
    %c0_i32_0 = arith.constant 0 : i32
    %c0_i32_1 = arith.constant 0 : i32
    %c0_i32_2 = arith.constant 0 : i32
    return %c0_i32, %c0_i32_0, %c0_i32_1 : i32, i32, i32
  }
  func.func @transform_13(%arg0: i32) -> (i32, i32, i32) {
    %c0_i32 = arith.constant 0 : i32
    %c0_i32_0 = arith.constant 0 : i32
    %c0_i32_1 = arith.constant 0 : i32
    %c0_i32_2 = arith.constant 0 : i32
    return %c0_i32, %c0_i32_0, %c0_i32_1 : i32, i32, i32
  }
  func.func @transform_14(%arg0: i32) -> (i32, i32, i32) {
    %c0_i32 = arith.constant 0 : i32
    %c0_i32_0 = arith.constant 0 : i32
    %c0_i32_1 = arith.constant 0 : i32
    %c0_i32_2 = arith.constant 0 : i32
    return %c0_i32, %c0_i32_0, %c0_i32_1 : i32, i32, i32
  }
  func.func @transform_15(%arg0: i32) -> (i32, i32, i32) {
    %c0_i32 = arith.constant 0 : i32
    %c0_i32_0 = arith.constant 0 : i32
    %c0_i32_1 = arith.constant 0 : i32
    %c0_i32_2 = arith.constant 0 : i32
    return %c0_i32, %c0_i32_0, %c0_i32_1 : i32, i32, i32
  }
  func.func @transform_16(%arg0: i32) -> (i32, i32, i32) {
    %c0_i32 = arith.constant 0 : i32
    %c0_i32_0 = arith.constant 0 : i32
    %c0_i32_1 = arith.constant 0 : i32
    %c0_i32_2 = arith.constant 0 : i32
    return %c0_i32, %c0_i32_0, %c0_i32_1 : i32, i32, i32
  }
  func.func @transform_17(%arg0: i32) -> (i32, i32, i32) {
    %c0_i32 = arith.constant 0 : i32
    %c0_i32_0 = arith.constant 0 : i32
    %c0_i32_1 = arith.constant 0 : i32
    %c0_i32_2 = arith.constant 0 : i32
    return %c0_i32, %c0_i32_0, %c0_i32_1 : i32, i32, i32
  }
  func.func @transform_18(%arg0: i32) -> (i32, i32, i32) {
    %c0_i32 = arith.constant 0 : i32
    %c0_i32_0 = arith.constant 0 : i32
    %c0_i32_1 = arith.constant 0 : i32
    %c0_i32_2 = arith.constant 0 : i32
    return %c0_i32, %c0_i32_0, %c0_i32_1 : i32, i32, i32
  }
  func.func @transform_19(%arg0: i32) -> (i32, i32, i32) {
    %c0_i32 = arith.constant 0 : i32
    %c0_i32_0 = arith.constant 0 : i32
    %c0_i32_1 = arith.constant 0 : i32
    return %arg0, %c0_i32, %c0_i32_0 : i32, i32, i32
  }
}

</mosaic_0001>

<llo_original>
// kernel: tpu_custom_call.1
$region0: #{tpu_custom_call.1}
  #allocation0 [shape = 'u32[]', space=smem, size = 0x4, offset = 0x4, fixed_abs, tag = 'smem constant byte address 0x4 - core index']
  #allocation1 [shape = 'u32[144,128]{1,0:T(1,128)}', space=vmem, size = 0x12000, scoped, tag = 'internal scratch']
  %s0 = inlined_call_operand.vmem [shape: f32[2,8,32], index: 0, kind: input, shape index: {}]
  %s1 = inlined_call_operand.vmem [shape: f32[2,8,32], index: 1, kind: input, shape index: {}]
  %s2 = inlined_call_operand.vmem [shape: f32[2,8,8], index: 2, kind: input, shape index: {}]
  %s3 = inlined_call_operand.vmem [shape: f32[2,8,8], index: 3, kind: input, shape index: {}]
  %s4 = inlined_call_operand.vmem [shape: f32[2,4,32,24], index: 4, kind: input, shape index: {}]
  %s5 = inlined_call_operand.vmem [shape: f32[2,4,8,32], index: 5, kind: input, shape index: {}]
  %s6 = inlined_call_operand.vmem [shape: f32[2,1,32], index: 6, kind: input, shape index: {}]
  %s7 = inlined_call_operand.vmem [shape: f32[2,1,32], index: 7, kind: input, shape index: {}]
  %s8 = inlined_call_operand.vmem [shape: f32[2,4,32,8], index: 8, kind: input, shape index: {}]
  %s9 = inlined_call_operand.vmem [shape: f32[2,4,32,16], index: 9, kind: input, shape index: {}]
  %s10 = inlined_call_operand.vmem [shape: f32[2,4,8,32], index: 10, kind: input, shape index: {}]
  %s11 = inlined_call_operand.vmem [shape: f32[2,1,32], index: 11, kind: input, shape index: {}]
  %s12 = inlined_call_operand.vmem [shape: f32[2,1,32], index: 12, kind: input, shape index: {}]
  %s13 = inlined_call_operand.vmem [shape: f32[2,32,64], index: 13, kind: input, shape index: {}]
  %s14 = inlined_call_operand.vmem [shape: f32[2,1,64], index: 14, kind: input, shape index: {}]
  %s15 = inlined_call_operand.vmem [shape: f32[2,64,32], index: 15, kind: input, shape index: {}]
  %s16 = inlined_call_operand.vmem [shape: f32[2,1,32], index: 16, kind: input, shape index: {}]
  %s17 = inlined_call_operand.vmem [shape: f32[2,1,32], index: 17, kind: input, shape index: {}]
  %s18 = inlined_call_operand.vmem [shape: f32[2,1,32], index: 18, kind: input, shape index: {}]
  %s19 = inlined_call_operand.hbm [shape: f32[2,8,32], index: 19, kind: output, shape index: {}]
  %s20 = sld [smem:[#allocation0]]
  $region109: #{tpu_custom_call.1} parent=0
    _
  %s22 = ssub.s32 1, %s20
  %s23 = scalar_select 0, %s22, %s20
  $region1: #{tpu_custom_call.1} parent=0
    #allocation2 [shape = 'u8[8192]{0}', space=vmem, size = 0x2000, scoped, tag = 'output window, operand 0']
    #allocation3 [shape = 's32[2]{0}', space=sflag, size = 0x8, scoped, tag = 'scoped memory for tpu_custom_call.1']
    %24 = vsyncpa [#allocation3], 0
    %s25 = scalar_lea.sflag [#allocation3], 1
    %26 = vsyncpa %s25, 0
    loop: start=0, step=1, limit=4
    $region2: #{tpu_custom_call.1} parent=1 // loop_pre_header
      _
    $region3: #{tpu_custom_call.1} parent=1 // loop_header
      %s28 = sphi 0, %s32
      %p29 = scmp.ge.s32.totalorder %s28, 4
      %s38 = sphi 0, %s40
      %s41 = sphi 0, %s38
      %s42 = sphi 0, %s41
      %s58 = sphi 0, %s42
      %s64 = sphi 0, %s66
      %s67 = sphi 0, %s64
      %s68 = sphi 0, %s67
      %s84 = sphi 0, %s68
      %s90 = sphi 0, %s92
      %s93 = sphi 0, %s90
      %s94 = sphi 0, %s93
      %s110 = sphi 0, %s94
      %s116 = sphi 0, %s118
      %s119 = sphi 0, %s116
      %s120 = sphi 0, %s119
      %s136 = sphi 0, %s120
      %s140 = sphi 0, %s140
      %s142 = sphi 0, %s140
      %s143 = sphi 0, %s142
      %s157 = sphi 0, %s143
      %s161 = sphi 0, %s161
      %s163 = sphi 0, %s161
      %s164 = sphi 0, %s163
      %s178 = sphi 0, %s164
      %s182 = sphi 0, %s182
      %s184 = sphi 0, %s182
      %s185 = sphi 0, %s184
      %s199 = sphi 0, %s185
      %s203 = sphi 0, %s203
      %s205 = sphi 0, %s203
      %s206 = sphi 0, %s205
      %s220 = sphi 0, %s206
      %s224 = sphi 0, %s224
      %s226 = sphi 0, %s224
      %s227 = sphi 0, %s226
      %s241 = sphi 0, %s227
      %s245 = sphi 0, %s245
      %s247 = sphi 0, %s245
      %s248 = sphi 0, %s247
      %s262 = sphi 0, %s248
      %s266 = sphi 0, %s266
      %s268 = sphi 0, %s266
      %s269 = sphi 0, %s268
      %s283 = sphi 0, %s269
      %s287 = sphi 0, %s287
      %s289 = sphi 0, %s287
      %s290 = sphi 0, %s289
      %s304 = sphi 0, %s290
      %s308 = sphi 0, %s308
      %s310 = sphi 0, %s308
      %s311 = sphi 0, %s310
      %s325 = sphi 0, %s311
      %s329 = sphi 0, %s329
      %s331 = sphi 0, %s329
      %s332 = sphi 0, %s331
      %s346 = sphi 0, %s332
      %s350 = sphi 0, %s350
      %s352 = sphi 0, %s350
      %s353 = sphi 0, %s352
      %s367 = sphi 0, %s353
      %s371 = sphi 0, %s371
      %s373 = sphi 0, %s371
      %s374 = sphi 0, %s373
      %s388 = sphi 0, %s374
      %s392 = sphi 0, %s392
      %s394 = sphi 0, %s392
      %s395 = sphi 0, %s394
      %s409 = sphi 0, %s395
      %s413 = sphi 0, %s413
      %s415 = sphi 0, %s413
      %s416 = sphi 0, %s415
      %s430 = sphi 0, %s416
      %s434 = sphi 0, %s434
      %s436 = sphi 0, %s434
      %s437 = sphi 0, %s436
      %s451 = sphi 0, %s437
      %s457 = sphi 0, %s459
      %s460 = sphi 0, %s457
      %s461 = sphi 0, %s460
      %s477 = sphi 0, %s461
    $region4: #{tpu_custom_call.1} parent=1 // loop_header_branch
      %31 = sbr.rel (%p29) target = $region8
    $region5: #{tpu_custom_call.1} parent=1 // loop_body
      %s33 = ssub.s32 %s28, 1
      %s34 = ssub.s32 %s28, 2
      %s35 = sadd.s32 %s28, 1
      %s36 = ssub.s32 %s28, %s35
      %p37 = scmp.eq.s32.totalorder %s36, 0
      %s39 = sadd.s32 %s38, 1
      %s40 = scalar_select %p37, %s38, %s39
      %p43 = pneg %p37
      %p44 = scmp.eq.s32.totalorder %s28, 1
      %p45 = por %p43, %p44
      %p46 = scmp.ne.s32.totalorder %s38, %s41
      %p47 = scmp.eq.s32.totalorder %s28, 0
      %p48 = por %p46, %p47
      %p49 = scmp.ne.s32.totalorder %s38, %s41
      %p50 = scmp.eq.s32.totalorder %s33, 1
      %p51 = por %p49, %p50
      %p52 = scmp.ne.s32.totalorder %s41, %s42
      %p53 = scmp.eq.s32.totalorder %s33, 0
      %p54 = por %p52, %p53
      %p55 = scmp.ne.s32.totalorder %s41, %s42
      %p56 = scmp.eq.s32.totalorder %s34, 1
      %p57 = por %p55, %p56
      %p59 = scmp.ne.s32.totalorder %s42, %s58
      %p60 = scmp.eq.s32.totalorder %s34, 0
      %p61 = por %p59, %p60
      %s62 = ssub.s32 %s28, %s35
      %p63 = scmp.eq.s32.totalorder %s62, 0
      %s65 = sadd.s32 %s64, 1
      %s66 = scalar_select %p63, %s64, %s65
      %p69 = pneg %p63
      %p70 = scmp.eq.s32.totalorder %s28, 1
      %p71 = por %p69, %p70
      %p72 = scmp.ne.s32.totalorder %s64, %s67
      %p73 = scmp.eq.s32.totalorder %s28, 0
      %p74 = por %p72, %p73
      %p75 = scmp.ne.s32.totalorder %s64, %s67
      %p76 = scmp.eq.s32.totalorder %s33, 1
      %p77 = por %p75, %p76
      %p78 = scmp.ne.s32.totalorder %s67, %s68
      %p79 = scmp.eq.s32.totalorder %s33, 0
      %p80 = por %p78, %p79
      %p81 = scmp.ne.s32.totalorder %s67, %s68
      %p82 = scmp.eq.s32.totalorder %s34, 1
      %p83 = por %p81, %p82
      %p85 = scmp.ne.s32.totalorder %s68, %s84
      %p86 = scmp.eq.s32.totalorder %s34, 0
      %p87 = por %p85, %p86
      %s88 = ssub.s32 %s28, %s35
      %p89 = scmp.eq.s32.totalorder %s88, 0
      %s91 = sadd.s32 %s90, 1
      %s92 = scalar_select %p89, %s90, %s91
      %p95 = pneg %p89
      %p96 = scmp.eq.s32.totalorder %s28, 1
      %p97 = por %p95, %p96
      %p98 = scmp.ne.s32.totalorder %s90, %s93
      %p99 = scmp.eq.s32.totalorder %s28, 0
      %p100 = por %p98, %p99
      %p101 = scmp.ne.s32.totalorder %s90, %s93
      %p102 = scmp.eq.s32.totalorder %s33, 1
      %p103 = por %p101, %p102
      %p104 = scmp.ne.s32.totalorder %s93, %s94
      %p105 = scmp.eq.s32.totalorder %s33, 0
      %p106 = por %p104, %p105
      %p107 = scmp.ne.s32.totalorder %s93, %s94
      %p108 = scmp.eq.s32.totalorder %s34, 1
      %p109 = por %p107, %p108
      %p111 = scmp.ne.s32.totalorder %s94, %s110
      %p112 = scmp.eq.s32.totalorder %s34, 0
      %p113 = por %p111, %p112
      %s114 = ssub.s32 %s28, %s35
      %p115 = scmp.eq.s32.totalorder %s114, 0
      %s117 = sadd.s32 %s116, 1
      %s118 = scalar_select %p115, %s116, %s117
      %p121 = pneg %p115
      %p122 = scmp.eq.s32.totalorder %s28, 1
      %p123 = por %p121, %p122
      %p124 = scmp.ne.s32.totalorder %s116, %s119
      %p125 = scmp.eq.s32.totalorder %s28, 0
      %p126 = por %p124, %p125
      %p127 = scmp.ne.s32.totalorder %s116, %s119
      %p128 = scmp.eq.s32.totalorder %s33, 1
      %p129 = por %p127, %p128
      %p130 = scmp.ne.s32.totalorder %s119, %s120
      %p131 = scmp.eq.s32.totalorder %s33, 0
      %p132 = por %p130, %p131
      %p133 = scmp.ne.s32.totalorder %s119, %s120
      %p134 = scmp.eq.s32.totalorder %s34, 1
      %p135 = por %p133, %p134
      %p137 = scmp.ne.s32.totalorder %s120, %s136
      %p138 = scmp.eq.s32.totalorder %s34, 0
      %p139 = por %p137, %p138
      %s141 = sadd.s32 %s140, 1
      %p144 = scmp.eq.s32.totalorder %s28, 1
      %p145 = scmp.ne.s32.totalorder %s140, %s142
      %p146 = scmp.eq.s32.totalorder %s28, 0
      %p147 = por %p145, %p146
      %p148 = scmp.ne.s32.totalorder %s140, %s142
      %p149 = scmp.eq.s32.totalorder %s33, 1
      %p150 = por %p148, %p149
      %p151 = scmp.ne.s32.totalorder %s142, %s143
      %p152 = scmp.eq.s32.totalorder %s33, 0
      %p153 = por %p151, %p152
      %p154 = scmp.ne.s32.totalorder %s142, %s143
      %p155 = scmp.eq.s32.totalorder %s34, 1
      %p156 = por %p154, %p155
      %p158 = scmp.ne.s32.totalorder %s143, %s157
      %p159 = scmp.eq.s32.totalorder %s34, 0
      %p160 = por %p158, %p159
      %s162 = sadd.s32 %s161, 1
      %p165 = scmp.eq.s32.totalorder %s28, 1
      %p166 = scmp.ne.s32.totalorder %s161, %s163
      %p167 = scmp.eq.s32.totalorder %s28, 0
      %p168 = por %p166, %p167
      %p169 = scmp.ne.s32.totalorder %s161, %s163
      %p170 = scmp.eq.s32.totalorder %s33, 1
      %p171 = por %p169, %p170
      %p172 = scmp.ne.s32.totalorder %s163, %s164
      %p173 = scmp.eq.s32.totalorder %s33, 0
      %p174 = por %p172, %p173
      %p175 = scmp.ne.s32.totalorder %s163, %s164
      %p176 = scmp.eq.s32.totalorder %s34, 1
      %p177 = por %p175, %p176
      %p179 = scmp.ne.s32.totalorder %s164, %s178
      %p180 = scmp.eq.s32.totalorder %s34, 0
      %p181 = por %p179, %p180
      %s183 = sadd.s32 %s182, 1
      %p186 = scmp.eq.s32.totalorder %s28, 1
      %p187 = scmp.ne.s32.totalorder %s182, %s184
      %p188 = scmp.eq.s32.totalorder %s28, 0
      %p189 = por %p187, %p188
      %p190 = scmp.ne.s32.totalorder %s182, %s184
      %p191 = scmp.eq.s32.totalorder %s33, 1
      %p192 = por %p190, %p191
      %p193 = scmp.ne.s32.totalorder %s184, %s185
      %p194 = scmp.eq.s32.totalorder %s33, 0
      %p195 = por %p193, %p194
      %p196 = scmp.ne.s32.totalorder %s184, %s185
      %p197 = scmp.eq.s32.totalorder %s34, 1
      %p198 = por %p196, %p197
      %p200 = scmp.ne.s32.totalorder %s185, %s199
      %p201 = scmp.eq.s32.totalorder %s34, 0
      %p202 = por %p200, %p201
      %s204 = sadd.s32 %s203, 1
      %p207 = scmp.eq.s32.totalorder %s28, 1
      %p208 = scmp.ne.s32.totalorder %s203, %s205
      %p209 = scmp.eq.s32.totalorder %s28, 0
      %p210 = por %p208, %p209
      %p211 = scmp.ne.s32.totalorder %s203, %s205
      %p212 = scmp.eq.s32.totalorder %s33, 1
      %p213 = por %p211, %p212
      %p214 = scmp.ne.s32.totalorder %s205, %s206
      %p215 = scmp.eq.s32.totalorder %s33, 0
      %p216 = por %p214, %p215
      %p217 = scmp.ne.s32.totalorder %s205, %s206
      %p218 = scmp.eq.s32.totalorder %s34, 1
      %p219 = por %p217, %p218
      %p221 = scmp.ne.s32.totalorder %s206, %s220
      %p222 = scmp.eq.s32.totalorder %s34, 0
      %p223 = por %p221, %p222
      %s225 = sadd.s32 %s224, 1
      %p228 = scmp.eq.s32.totalorder %s28, 1
      %p229 = scmp.ne.s32.totalorder %s224, %s226
      %p230 = scmp.eq.s32.totalorder %s28, 0
      %p231 = por %p229, %p230
      %p232 = scmp.ne.s32.totalorder %s224, %s226
      %p233 = scmp.eq.s32.totalorder %s33, 1
      %p234 = por %p232, %p233
      %p235 = scmp.ne.s32.totalorder %s226, %s227
      %p236 = scmp.eq.s32.totalorder %s33, 0
      %p237 = por %p235, %p236
      %p238 = scmp.ne.s32.totalorder %s226, %s227
      %p239 = scmp.eq.s32.totalorder %s34, 1
      %p240 = por %p238, %p239
      %p242 = scmp.ne.s32.totalorder %s227, %s241
      %p243 = scmp.eq.s32.totalorder %s34, 0
      %p244 = por %p242, %p243
      %s246 = sadd.s32 %s245, 1
      %p249 = scmp.eq.s32.totalorder %s28, 1
      %p250 = scmp.ne.s32.totalorder %s245, %s247
      %p251 = scmp.eq.s32.totalorder %s28, 0
      %p252 = por %p250, %p251
      %p253 = scmp.ne.s32.totalorder %s245, %s247
      %p254 = scmp.eq.s32.totalorder %s33, 1
      %p255 = por %p253, %p254
      %p256 = scmp.ne.s32.totalorder %s247, %s248
      %p257 = scmp.eq.s32.totalorder %s33, 0
      %p258 = por %p256, %p257
      %p259 = scmp.ne.s32.totalorder %s247, %s248
      %p260 = scmp.eq.s32.totalorder %s34, 1
      %p261 = por %p259, %p260
      %p263 = scmp.ne.s32.totalorder %s248, %s262
      %p264 = scmp.eq.s32.totalorder %s34, 0
      %p265 = por %p263, %p264
      %s267 = sadd.s32 %s266, 1
      %p270 = scmp.eq.s32.totalorder %s28, 1
      %p271 = scmp.ne.s32.totalorder %s266, %s268
      %p272 = scmp.eq.s32.totalorder %s28, 0
      %p273 = por %p271, %p272
      %p274 = scmp.ne.s32.totalorder %s266, %s268
      %p275 = scmp.eq.s32.totalorder %s33, 1
      %p276 = por %p274, %p275
      %p277 = scmp.ne.s32.totalorder %s268, %s269
      %p278 = scmp.eq.s32.totalorder %s33, 0
      %p279 = por %p277, %p278
      %p280 = scmp.ne.s32.totalorder %s268, %s269
      %p281 = scmp.eq.s32.totalorder %s34, 1
      %p282 = por %p280, %p281
      %p284 = scmp.ne.s32.totalorder %s269, %s283
      %p285 = scmp.eq.s32.totalorder %s34, 0
      %p286 = por %p284, %p285
      %s288 = sadd.s32 %s287, 1
      %p291 = scmp.eq.s32.totalorder %s28, 1
      %p292 = scmp.ne.s32.totalorder %s287, %s289
      %p293 = scmp.eq.s32.totalorder %s28, 0
      %p294 = por %p292, %p293
      %p295 = scmp.ne.s32.totalorder %s287, %s289
      %p296 = scmp.eq.s32.totalorder %s33, 1
      %p297 = por %p295, %p296
      %p298 = scmp.ne.s32.totalorder %s289, %s290
      %p299 = scmp.eq.s32.totalorder %s33, 0
      %p300 = por %p298, %p299
      %p301 = scmp.ne.s32.totalorder %s289, %s290
      %p302 = scmp.eq.s32.totalorder %s34, 1
      %p303 = por %p301, %p302
      %p305 = scmp.ne.s32.totalorder %s290, %s304
      %p306 = scmp.eq.s32.totalorder %s34, 0
      %p307 = por %p305, %p306
      %s309 = sadd.s32 %s308, 1
      %p312 = scmp.eq.s32.totalorder %s28, 1
      %p313 = scmp.ne.s32.totalorder %s308, %s310
      %p314 = scmp.eq.s32.totalorder %s28, 0
      %p315 = por %p313, %p314
      %p316 = scmp.ne.s32.totalorder %s308, %s310
      %p317 = scmp.eq.s32.totalorder %s33, 1
      %p318 = por %p316, %p317
      %p319 = scmp.ne.s32.totalorder %s310, %s311
      %p320 = scmp.eq.s32.totalorder %s33, 0
      %p321 = por %p319, %p320
      %p322 = scmp.ne.s32.totalorder %s310, %s311
      %p323 = scmp.eq.s32.totalorder %s34, 1
      %p324 = por %p322, %p323
      %p326 = scmp.ne.s32.totalorder %s311, %s325
      %p327 = scmp.eq.s32.totalorder %s34, 0
      %p328 = por %p326, %p327
      %s330 = sadd.s32 %s329, 1
      %p333 = scmp.eq.s32.totalorder %s28, 1
      %p334 = scmp.ne.s32.totalorder %s329, %s331
      %p335 = scmp.eq.s32.totalorder %s28, 0
      %p336 = por %p334, %p335
      %p337 = scmp.ne.s32.totalorder %s329, %s331
      %p338 = scmp.eq.s32.totalorder %s33, 1
      %p339 = por %p337, %p338
      %p340 = scmp.ne.s32.totalorder %s331, %s332
      %p341 = scmp.eq.s32.totalorder %s33, 0
      %p342 = por %p340, %p341
      %p343 = scmp.ne.s32.totalorder %s331, %s332
      %p344 = scmp.eq.s32.totalorder %s34, 1
      %p345 = por %p343, %p344
      %p347 = scmp.ne.s32.totalorder %s332, %s346
      %p348 = scmp.eq.s32.totalorder %s34, 0
      %p349 = por %p347, %p348
      %s351 = sadd.s32 %s350, 1
      %p354 = scmp.eq.s32.totalorder %s28, 1
      %p355 = scmp.ne.s32.totalorder %s350, %s352
      %p356 = scmp.eq.s32.totalorder %s28, 0
      %p357 = por %p355, %p356
      %p358 = scmp.ne.s32.totalorder %s350, %s352
      %p359 = scmp.eq.s32.totalorder %s33, 1
      %p360 = por %p358, %p359
      %p361 = scmp.ne.s32.totalorder %s352, %s353
      %p362 = scmp.eq.s32.totalorder %s33, 0
      %p363 = por %p361, %p362
      %p364 = scmp.ne.s32.totalorder %s352, %s353
      %p365 = scmp.eq.s32.totalorder %s34, 1
      %p366 = por %p364, %p365
      %p368 = scmp.ne.s32.totalorder %s353, %s367
      %p369 = scmp.eq.s32.totalorder %s34, 0
      %p370 = por %p368, %p369
      %s372 = sadd.s32 %s371, 1
      %p375 = scmp.eq.s32.totalorder %s28, 1
      %p376 = scmp.ne.s32.totalorder %s371, %s373
      %p377 = scmp.eq.s32.totalorder %s28, 0
      %p378 = por %p376, %p377
      %p379 = scmp.ne.s32.totalorder %s371, %s373
      %p380 = scmp.eq.s32.totalorder %s33, 1
      %p381 = por %p379, %p380
      %p382 = scmp.ne.s32.totalorder %s373, %s374
      %p383 = scmp.eq.s32.totalorder %s33, 0
      %p384 = por %p382, %p383
      %p385 = scmp.ne.s32.totalorder %s373, %s374
      %p386 = scmp.eq.s32.totalorder %s34, 1
      %p387 = por %p385, %p386
      %p389 = scmp.ne.s32.totalorder %s374, %s388
      %p390 = scmp.eq.s32.totalorder %s34, 0
      %p391 = por %p389, %p390
      %s393 = sadd.s32 %s392, 1
      %p396 = scmp.eq.s32.totalorder %s28, 1
      %p397 = scmp.ne.s32.totalorder %s392, %s394
      %p398 = scmp.eq.s32.totalorder %s28, 0
      %p399 = por %p397, %p398
      %p400 = scmp.ne.s32.totalorder %s392, %s394
      %p401 = scmp.eq.s32.totalorder %s33, 1
      %p402 = por %p400, %p401
      %p403 = scmp.ne.s32.totalorder %s394, %s395
      %p404 = scmp.eq.s32.totalorder %s33, 0
      %p405 = por %p403, %p404
      %p406 = scmp.ne.s32.totalorder %s394, %s395
      %p407 = scmp.eq.s32.totalorder %s34, 1
      %p408 = por %p406, %p407
      %p410 = scmp.ne.s32.totalorder %s395, %s409
      %p411 = scmp.eq.s32.totalorder %s34, 0
      %p412 = por %p410, %p411
      %s414 = sadd.s32 %s413, 1
      %p417 = scmp.eq.s32.totalorder %s28, 1
      %p418 = scmp.ne.s32.totalorder %s413, %s415
      %p419 = scmp.eq.s32.totalorder %s28, 0
      %p420 = por %p418, %p419
      %p421 = scmp.ne.s32.totalorder %s413, %s415
      %p422 = scmp.eq.s32.totalorder %s33, 1
      %p423 = por %p421, %p422
      %p424 = scmp.ne.s32.totalorder %s415, %s416
      %p425 = scmp.eq.s32.totalorder %s33, 0
      %p426 = por %p424, %p425
      %p427 = scmp.ne.s32.totalorder %s415, %s416
      %p428 = scmp.eq.s32.totalorder %s34, 1
      %p429 = por %p427, %p428
      %p431 = scmp.ne.s32.totalorder %s416, %s430
      %p432 = scmp.eq.s32.totalorder %s34, 0
      %p433 = por %p431, %p432
      %s435 = sadd.s32 %s434, 1
      %p438 = scmp.eq.s32.totalorder %s28, 1
      %p439 = scmp.ne.s32.totalorder %s434, %s436
      %p440 = scmp.eq.s32.totalorder %s28, 0
      %p441 = por %p439, %p440
      %p442 = scmp.ne.s32.totalorder %s434, %s436
      %p443 = scmp.eq.s32.totalorder %s33, 1
      %p444 = por %p442, %p443
      %p445 = scmp.ne.s32.totalorder %s436, %s437
      %p446 = scmp.eq.s32.totalorder %s33, 0
      %p447 = por %p445, %p446
      %p448 = scmp.ne.s32.totalorder %s436, %s437
      %p449 = scmp.eq.s32.totalorder %s34, 1
      %p450 = por %p448, %p449
      %p452 = scmp.ne.s32.totalorder %s437, %s451
      %p453 = scmp.eq.s32.totalorder %s34, 0
      %p454 = por %p452, %p453
      %s455 = ssub.s32 %s28, %s35
      %p456 = scmp.eq.s32.totalorder %s455, 0
      %s458 = sadd.s32 %s457, 1
      %s459 = scalar_select %p456, %s457, %s458
      %p462 = pneg %p456
      %p463 = scmp.eq.s32.totalorder %s28, 1
      %p464 = por %p462, %p463
      %p465 = scmp.ne.s32.totalorder %s457, %s460
      %p466 = scmp.eq.s32.totalorder %s28, 0
      %p467 = por %p465, %p466
      %p468 = scmp.ne.s32.totalorder %s457, %s460
      %p469 = scmp.eq.s32.totalorder %s33, 1
      %p470 = por %p468, %p469
      %p471 = scmp.ne.s32.totalorder %s460, %s461
      %p472 = scmp.eq.s32.totalorder %s33, 0
      %p473 = por %p471, %p472
      %p474 = scmp.ne.s32.totalorder %s460, %s461
      %p475 = scmp.eq.s32.totalorder %s34, 1
      %p476 = por %p474, %p475
      %p478 = scmp.ne.s32.totalorder %s461, %s477
      %p479 = scmp.eq.s32.totalorder %s34, 0
      %p480 = por %p478, %p479
      %p481 = scmp.le.s32.totalorder 1, %s28
      %p482 = scmp.lt.s32.totalorder %s28, 3
      %p483 = pnand %p481, %p482
      %p484 = pneg %p483
      // Predicated region
      $region9: #{tpu_custom_call.1} parent=5 // pred_check
        _
      $region10: #{tpu_custom_call.1} parent=5 // pred_check_branch
        %486 = sbr.rel (%p483) target = $region12
      $region11: #{tpu_custom_call.1} parent=5 // pred_region
        %s487 = ssub.s32 %s28, 1
        // Predicated region
        $region13: #{tpu_custom_call.1} parent=11 // pred_check
          %p488 = pneg %p153
        $region14: #{tpu_custom_call.1} parent=11 // pred_check_branch
          %490 = sbr.rel (%p488) target = $region16
        $region15: #{tpu_custom_call.1} parent=11 // pred_region
          _
        $region16: #{tpu_custom_call.1} parent=11 // pred_fallthru
          _
        // Predicated region
        $region17: #{tpu_custom_call.1} parent=11 // pred_check
          %p491 = pneg %p174
        $region18: #{tpu_custom_call.1} parent=11 // pred_check_branch
          %493 = sbr.rel (%p491) target = $region20
        $region19: #{tpu_custom_call.1} parent=11 // pred_region
          _
        $region20: #{tpu_custom_call.1} parent=11 // pred_fallthru
          _
        // Predicated region
        $region21: #{tpu_custom_call.1} parent=11 // pred_check
          %p494 = pneg %p195
        $region22: #{tpu_custom_call.1} parent=11 // pred_check_branch
          %496 = sbr.rel (%p494) target = $region24
        $region23: #{tpu_custom_call.1} parent=11 // pred_region
          _
        $region24: #{tpu_custom_call.1} parent=11 // pred_fallthru
          _
        // Predicated region
        $region25: #{tpu_custom_call.1} parent=11 // pred_check
          %p497 = pneg %p216
        $region26: #{tpu_custom_call.1} parent=11 // pred_check_branch
          %499 = sbr.rel (%p497) target = $region28
        $region27: #{tpu_custom_call.1} parent=11 // pred_region
          _
        $region28: #{tpu_custom_call.1} parent=11 // pred_fallthru
          _
        // Predicated region
        $region29: #{tpu_custom_call.1} parent=11 // pred_check
          %p500 = pneg %p237
        $region30: #{tpu_custom_call.1} parent=11 // pred_check_branch
          %502 = sbr.rel (%p500) target = $region32
        $region31: #{tpu_custom_call.1} parent=11 // pred_region
          _
        $region32: #{tpu_custom_call.1} parent=11 // pred_fallthru
          _
        // Predicated region
        $region33: #{tpu_custom_call.1} parent=11 // pred_check
          %p503 = pneg %p258
        $region34: #{tpu_custom_call.1} parent=11 // pred_check_branch
          %505 = sbr.rel (%p503) target = $region36
        $region35: #{tpu_custom_call.1} parent=11 // pred_region
          _
        $region36: #{tpu_custom_call.1} parent=11 // pred_fallthru
          _
        // Predicated region
        $region37: #{tpu_custom_call.1} parent=11 // pred_check
          %p506 = pneg %p279
        $region38: #{tpu_custom_call.1} parent=11 // pred_check_branch
          %508 = sbr.rel (%p506) target = $region40
        $region39: #{tpu_custom_call.1} parent=11 // pred_region
          _
        $region40: #{tpu_custom_call.1} parent=11 // pred_fallthru
          _
        // Predicated region
        $region41: #{tpu_custom_call.1} parent=11 // pred_check
          %p509 = pneg %p300
        $region42: #{tpu_custom_call.1} parent=11 // pred_check_branch
          %511 = sbr.rel (%p509) target = $region44
        $region43: #{tpu_custom_call.1} parent=11 // pred_region
          _
        $region44: #{tpu_custom_call.1} parent=11 // pred_fallthru
          _
        // Predicated region
        $region45: #{tpu_custom_call.1} parent=11 // pred_check
          %p512 = pneg %p321
        $region46: #{tpu_custom_call.1} parent=11 // pred_check_branch
          %514 = sbr.rel (%p512) target = $region48
        $region47: #{tpu_custom_call.1} parent=11 // pred_region
          _
        $region48: #{tpu_custom_call.1} parent=11 // pred_fallthru
          _
        // Predicated region
        $region49: #{tpu_custom_call.1} parent=11 // pred_check
          %p515 = pneg %p342
        $region50: #{tpu_custom_call.1} parent=11 // pred_check_branch
          %517 = sbr.rel (%p515) target = $region52
        $region51: #{tpu_custom_call.1} parent=11 // pred_region
          _
        $region52: #{tpu_custom_call.1} parent=11 // pred_fallthru
          _
        // Predicated region
        $region53: #{tpu_custom_call.1} parent=11 // pred_check
          %p518 = pneg %p363
        $region54: #{tpu_custom_call.1} parent=11 // pred_check_branch
          %520 = sbr.rel (%p518) target = $region56
        $region55: #{tpu_custom_call.1} parent=11 // pred_region
          _
        $region56: #{tpu_custom_call.1} parent=11 // pred_fallthru
          _
        // Predicated region
        $region57: #{tpu_custom_call.1} parent=11 // pred_check
          %p521 = pneg %p384
        $region58: #{tpu_custom_call.1} parent=11 // pred_check_branch
          %523 = sbr.rel (%p521) target = $region60
        $region59: #{tpu_custom_call.1} parent=11 // pred_region
          _
        $region60: #{tpu_custom_call.1} parent=11 // pred_fallthru
          _
        // Predicated region
        $region61: #{tpu_custom_call.1} parent=11 // pred_check
          %p524 = pneg %p405
        $region62: #{tpu_custom_call.1} parent=11 // pred_check_branch
          %526 = sbr.rel (%p524) target = $region64
        $region63: #{tpu_custom_call.1} parent=11 // pred_region
          _
        $region64: #{tpu_custom_call.1} parent=11 // pred_fallthru
          _
        // Predicated region
        $region65: #{tpu_custom_call.1} parent=11 // pred_check
          %p527 = pneg %p426
        $region66: #{tpu_custom_call.1} parent=11 // pred_check_branch
          %529 = sbr.rel (%p527) target = $region68
        $region67: #{tpu_custom_call.1} parent=11 // pred_region
          _
        $region68: #{tpu_custom_call.1} parent=11 // pred_fallthru
          _
        // Predicated region
        $region69: #{tpu_custom_call.1} parent=11 // pred_check
          %p530 = pneg %p447
        $region70: #{tpu_custom_call.1} parent=11 // pred_check_branch
          %532 = sbr.rel (%p530) target = $region72
        $region71: #{tpu_custom_call.1} parent=11 // pred_region
          _
        $region72: #{tpu_custom_call.1} parent=11 // pred_fallthru
          _
      $region12: #{tpu_custom_call.1} parent=5 // pred_fallthru
        _
      %p533 = scmp.lt.s32.totalorder %s28, 2
      // Predicated region
      $region73: #{tpu_custom_call.1} parent=5 // pred_check
        %p534 = pneg %p533
      $region74: #{tpu_custom_call.1} parent=5 // pred_check_branch
        %536 = sbr.rel (%p534) target = $region76
      $region75: #{tpu_custom_call.1} parent=5 // pred_region
        // Predicated region
        $region77: #{tpu_custom_call.1} parent=75 // pred_check
          %p537 = pneg %p48
        $region78: #{tpu_custom_call.1} parent=75 // pred_check_branch
          %539 = sbr.rel (%p537) target = $region80
        $region79: #{tpu_custom_call.1} parent=75 // pred_region
          %p540 = scmp.lt.s32.totalorder %s28, 1
          %s541 = scalar_select %p540, %s28, 1
          %s542 = smul.addr %s541, 8
          %s543 = scalar_lea.vmem %s0, %s542
        $region80: #{tpu_custom_call.1} parent=75 // pred_fallthru
          _
        // Predicated region
        $region81: #{tpu_custom_call.1} parent=75 // pred_check
          %p544 = pneg %p74
        $region82: #{tpu_custom_call.1} parent=75 // pred_check_branch
          %546 = sbr.rel (%p544) target = $region84
        $region83: #{tpu_custom_call.1} parent=75 // pred_region
          %p547 = scmp.lt.s32.totalorder %s28, 1
          %s548 = scalar_select %p547, %s28, 1
          %s549 = smul.addr %s548, 8
          %s550 = scalar_lea.vmem %s1, %s549
        $region84: #{tpu_custom_call.1} parent=75 // pred_fallthru
          _
        // Predicated region
        $region85: #{tpu_custom_call.1} parent=75 // pred_check
          %p551 = pneg %p100
        $region86: #{tpu_custom_call.1} parent=75 // pred_check_branch
          %553 = sbr.rel (%p551) target = $region88
        $region87: #{tpu_custom_call.1} parent=75 // pred_region
          %p554 = scmp.lt.s32.totalorder %s28, 1
          %s555 = scalar_select %p554, %s28, 1
          %s556 = smul.addr %s555, 8
          %s557 = scalar_lea.vmem %s2, %s556
        $region88: #{tpu_custom_call.1} parent=75 // pred_fallthru
          _
        // Predicated region
        $region89: #{tpu_custom_call.1} parent=75 // pred_check
          %p558 = pneg %p126
        $region90: #{tpu_custom_call.1} parent=75 // pred_check_branch
          %560 = sbr.rel (%p558) target = $region92
        $region91: #{tpu_custom_call.1} parent=75 // pred_region
          %p561 = scmp.lt.s32.totalorder %s28, 1
          %s562 = scalar_select %p561, %s28, 1
          %s563 = smul.addr %s562, 8
          %s564 = scalar_lea.vmem %s3, %s563
        $region92: #{tpu_custom_call.1} parent=75 // pred_fallthru
          _
      $region76: #{tpu_custom_call.1} parent=5 // pred_fallthru
        _
      %p565 = scmp.le.s32.totalorder 1, %s28
      %p566 = scmp.lt.s32.totalorder %s28, 3
      %p567 = pnand %p565, %p566
      %p568 = pneg %p567
      // Predicated region
      $region93: #{tpu_custom_call.1} parent=5 // pred_check
        _
      $region94: #{tpu_custom_call.1} parent=5 // pred_check_branch
        %570 = sbr.rel (%p567) target = $region96
      $region95: #{tpu_custom_call.1} parent=5 // pred_region
        %s571 = ssub.s32 %s28, 1
        %p572 = scmp.lt.s32.totalorder %s33, 1
        %s573 = scalar_select %p572, %s33, 1
        %s574 = smul.addr %s573, 8
        %s575 = scalar_lea.vmem %s0, %s574
        %p576 = pneg %p54
        %p577 = pneg %p51
        %p578 = scmp.lt.s32.totalorder %s33, 1
        %s579 = scalar_select %p578, %s33, 1
        %s580 = smul.addr %s579, 8
        %s581 = scalar_lea.vmem %s1, %s580
        %p582 = pneg %p80
        %p583 = pneg %p77
        %p584 = scmp.lt.s32.totalorder %s33, 1
        %s585 = scalar_select %p584, %s33, 1
        %s586 = smul.addr %s585, 8
        %s587 = scalar_lea.vmem %s2, %s586
        %p588 = pneg %p106
        %p589 = pneg %p103
        %p590 = scmp.lt.s32.totalorder %s33, 1
        %s591 = scalar_select %p590, %s33, 1
        %s592 = smul.addr %s591, 8
        %s593 = scalar_lea.vmem %s3, %s592
        %p594 = pneg %p132
        %p595 = pneg %p129
        %p596 = pneg %p153
        %p597 = pneg %p150
        %p598 = pneg %p174
        %p599 = pneg %p171
        %p600 = pneg %p195
        %p601 = pneg %p192
        %p602 = pneg %p216
        %p603 = pneg %p213
        %p604 = pneg %p237
        %p605 = pneg %p234
        %p606 = pneg %p258
        %p607 = pneg %p255
        %p608 = pneg %p279
        %p609 = pneg %p276
        %p610 = pneg %p300
        %p611 = pneg %p297
        %p612 = pneg %p321
        %p613 = pneg %p318
        %p614 = pneg %p342
        %p615 = pneg %p339
        %p616 = pneg %p363
        %p617 = pneg %p360
        %p618 = pneg %p384
        %p619 = pneg %p381
        %p620 = pneg %p405
        %p621 = pneg %p402
        %p622 = pneg %p426
        %p623 = pneg %p423
        %p624 = pneg %p447
        %p625 = pneg %p444
        %p626 = pneg %p473
        %p627 = pneg %p470
        %s628 = sand.u32 %s460, 1
        %s629 = scalar_lea.sflag [#allocation3], %s628
        %s630 = sand.u32 %s460, 1
        %s631 = smul.addr %s630, 8
        %s632 = scalar_lea.vmem [#allocation2], %s631
        %p633 = scmp.lt.s32.totalorder %s33, 1
        %s634 = scalar_select %p633, %s33, 1
        %s635 = smul.addr %s634, 8
        %s636 = scalar_lea.vmem %s0, %s635
        %p637 = scmp.lt.s32.totalorder %s33, 1
        %s638 = scalar_select %p637, %s33, 1
        %s639 = smul.addr %s638, 8
        %s640 = scalar_lea.vmem %s1, %s639
        %p641 = scmp.lt.s32.totalorder %s33, 1
        %s642 = scalar_select %p641, %s33, 1
        %s643 = smul.addr %s642, 8
        %s644 = scalar_lea.vmem %s2, %s643
        %p645 = scmp.lt.s32.totalorder %s33, 1
        %s646 = scalar_select %p645, %s33, 1
        %s647 = smul.addr %s646, 8
        %s648 = scalar_lea.vmem %s3, %s647
        %v649 = vld [vmem:[%s636] sm:$0xff]
        %v650 = vld [vmem:[%s640] sm:$0xff]
        %v651 = vld [vmem:[%s644] sm:$0xff]
        %v652 = vld [vmem:[%s648] sm:$0xff]
        %v653 = vld [vmem:[%s4] sm:$0xff]
        %v654 = vld [vmem:[%s4 + $0x8] sm:$0xff]
        %v655 = vld [vmem:[%s4 + $0x10] sm:$0xff]
        %v656 = vld [vmem:[%s4 + $0x18] sm:$0xff]
        %v657 = vld [vmem:[%s4 + $0x20] sm:$0xff]
        %v658 = vld [vmem:[%s4 + $0x28] sm:$0xff]
        %v659 = vld [vmem:[%s4 + $0x30] sm:$0xff]
        %v660 = vld [vmem:[%s4 + $0x38] sm:$0xff]
        %v661 = vld [vmem:[%s4 + $0x40] sm:$0xff]
        %v662 = vld [vmem:[%s4 + $0x48] sm:$0xff]
        %v663 = vld [vmem:[%s4 + $0x50] sm:$0xff]
        %v664 = vld [vmem:[%s4 + $0x58] sm:$0xff]
        %v665 = vld [vmem:[%s4 + $0x60] sm:$0xff]
        %v666 = vld [vmem:[%s4 + $0x68] sm:$0xff]
        %v667 = vld [vmem:[%s4 + $0x70] sm:$0xff]
        %v668 = vld [vmem:[%s4 + $0x78] sm:$0xff]
        %vm669 = vcmask 261120
        %v671 = vsel %vm669, %v649, 0
        %673 = vmatprep.subr.mxu0 0.0
        %674 = vmatpush1.msra.mxu0 %v653
        %675 = vmatprep.subr.mxu0 0.0
        %676 = vmatpush1.msra.mxu0 %v654
        %677 = vmatprep.subr.mxu0 0.0
        %678 = vmatpush1.msra.mxu0 %v655
        %679 = vmatprep.subr.mxu0 0.0
        %680 = vmatpush1.msra.mxu0 %v656
        %681 = vmatprep.subr.mxu0 0.0
        %682 = vmatpush1.msra.mxu0 0.0
        %683 = vmatprep.subr.mxu0 0.0
        %684 = vmatpush1.msra.mxu0 0.0
        %685 = vmatprep.subr.mxu0 0.0
        %686 = vmatpush1.msra.mxu0 0.0
        %687 = vmatprep.subr.mxu0 0.0
        %688 = vmatpush1.msra.mxu0 0.0
        %689 = vmatprep.subr.mxu0 0.0
        %690 = vmatpush1.msra.mxu0 0.0
        %691 = vmatprep.subr.mxu0 0.0
        %692 = vmatpush1.msra.mxu0 0.0
        %693 = vmatprep.subr.mxu0 0.0
        %694 = vmatpush1.msra.mxu0 0.0
        %695 = vmatprep.subr.mxu0 0.0
        %696 = vmatpush1.msra.mxu0 0.0
        %697 = vmatprep.subr.mxu0 0.0
        %698 = vmatpush1.msra.mxu0 0.0
        %699 = vmatprep.subr.mxu0 0.0
        %700 = vmatpush1.msra.mxu0 0.0
        %701 = vmatprep.subr.mxu0 0.0
        %702 = vmatpush1.msra.mxu0 0.0
        %703 = vmatprep.subr.mxu0 0.0
        %704 = vmatpush1.msra.mxu0 0.0
        %705 = vmatprep.subr.mxu0 0.0
        %706 = vmatpush1.msra.mxu0 0.0
        %707 = vmatprep.subr.mxu0 0.0
        %708 = vmatpush1.msra.mxu0 0.0
        %709 = vmatprep.subr.mxu0 0.0
        %710 = vmatpush1.msra.mxu0 0.0
        %711 = vmatprep.subr.mxu0 0.0
        %712 = vmatpush1.msra.mxu0 0.0
        %713 = vmatprep.subr.mxu0 0.0
        %714 = vmatpush1.msra.mxu0 0.0
        %715 = vmatprep.subr.mxu0 0.0
        %716 = vmatpush1.msra.mxu0 0.0
        %717 = vmatprep.subr.mxu0 0.0
        %718 = vmatpush1.msra.mxu0 0.0
        %719 = vmatprep.subr.mxu0 0.0
        %720 = vmatpush1.msra.mxu0 0.0
        %721 = vmatprep.subr.mxu0 0.0
        %722 = vmatpush1.msra.mxu0 0.0
        %723 = vmatprep.subr.mxu0 0.0
        %724 = vmatpush1.msra.mxu0 0.0
        %725 = vmatprep.subr.mxu0 0.0
        %726 = vmatpush1.msra.mxu0 0.0
        %727 = vmatprep.subr.mxu0 0.0
        %728 = vmatpush1.msra.mxu0 0.0
        %729 = vmatprep.subr.mxu0 0.0
        %730 = vmatpush1.msra.mxu0 0.0
        %731 = vmatprep.subr.mxu0 0.0
        %732 = vmatpush1.msra.mxu0 0.0
        %733 = vmatprep.subr.mxu0 0.0
        %734 = vmatpush1.msra.mxu0 0.0
        %735 = vmatprep.subr.mxu0 0.0
        %736 = vmatpush1.msra.mxu0 0.0
        %737 = vmatprep.mubr.f32.mxu0 0.0
        %738 = vmatmul.mubr.f32.gmra.mrb[0].mxu0 %v671
        %v739 = vpop.f32.mrb[0].mxu0
        %v740 = vadd.f32 0.0, %v739
        %v741 = vpop.f32.mrb[0].mxu0
        %742 = vdwg.mxu0
        %743 = vmatprep.subr.mxu0 0.0
        %744 = vmatpush1.msra.mxu0 %v657
        %745 = vmatprep.subr.mxu0 0.0
        %746 = vmatpush1.msra.mxu0 %v658
        %747 = vmatprep.subr.mxu0 0.0
        %748 = vmatpush1.msra.mxu0 %v659
        %749 = vmatprep.subr.mxu0 0.0
        %750 = vmatpush1.msra.mxu0 %v660
        %751 = vmatprep.subr.mxu0 0.0
        %752 = vmatpush1.msra.mxu0 0.0
        %753 = vmatprep.subr.mxu0 0.0
        %754 = vmatpush1.msra.mxu0 0.0
        %755 = vmatprep.subr.mxu0 0.0
        %756 = vmatpush1.msra.mxu0 0.0
        %757 = vmatprep.subr.mxu0 0.0
        %758 = vmatpush1.msra.mxu0 0.0
        %759 = vmatprep.subr.mxu0 0.0
        %760 = vmatpush1.msra.mxu0 0.0
        %761 = vmatprep.subr.mxu0 0.0
        %762 = vmatpush1.msra.mxu0 0.0
        %763 = vmatprep.subr.mxu0 0.0
        %764 = vmatpush1.msra.mxu0 0.0
        %765 = vmatprep.subr.mxu0 0.0
        %766 = vmatpush1.msra.mxu0 0.0
        %767 = vmatprep.subr.mxu0 0.0
        %768 = vmatpush1.msra.mxu0 0.0
        %769 = vmatprep.subr.mxu0 0.0
        %770 = vmatpush1.msra.mxu0 0.0
        %771 = vmatprep.subr.mxu0 0.0
        %772 = vmatpush1.msra.mxu0 0.0
        %773 = vmatprep.subr.mxu0 0.0
        %774 = vmatpush1.msra.mxu0 0.0
        %775 = vmatprep.subr.mxu0 0.0
        %776 = vmatpush1.msra.mxu0 0.0
        %777 = vmatprep.subr.mxu0 0.0
        %778 = vmatpush1.msra.mxu0 0.0
        %779 = vmatprep.subr.mxu0 0.0
        %780 = vmatpush1.msra.mxu0 0.0
        %781 = vmatprep.subr.mxu0 0.0
        %782 = vmatpush1.msra.mxu0 0.0
        %783 = vmatprep.subr.mxu0 0.0
        %784 = vmatpush1.msra.mxu0 0.0
        %785 = vmatprep.subr.mxu0 0.0
        %786 = vmatpush1.msra.mxu0 0.0
        %787 = vmatprep.subr.mxu0 0.0
        %788 = vmatpush1.msra.mxu0 0.0
        %789 = vmatprep.subr.mxu0 0.0
        %790 = vmatpush1.msra.mxu0 0.0
        %791 = vmatprep.subr.mxu0 0.0
        %792 = vmatpush1.msra.mxu0 0.0
        %793 = vmatprep.subr.mxu0 0.0
        %794 = vmatpush1.msra.mxu0 0.0
        %795 = vmatprep.subr.mxu0 0.0
        %796 = vmatpush1.msra.mxu0 0.0
        %797 = vmatprep.subr.mxu0 0.0
        %798 = vmatpush1.msra.mxu0 0.0
        %799 = vmatprep.subr.mxu0 0.0
        %800 = vmatpush1.msra.mxu0 0.0
        %801 = vmatprep.subr.mxu0 0.0
        %802 = vmatpush1.msra.mxu0 0.0
        %803 = vmatprep.subr.mxu0 0.0
        %804 = vmatpush1.msra.mxu0 0.0
        %805 = vmatprep.subr.mxu0 0.0
        %806 = vmatpush1.msra.mxu0 0.0
        %807 = vmatprep.mubr.f32.mxu0 0.0
        %808 = vmatmul.mubr.f32.gmra.mrb[0].mxu0 %v671
        %v809 = vpop.f32.mrb[0].mxu0
        %v810 = vadd.f32 0.0, %v809
        %v811 = vpop.f32.mrb[0].mxu0
        %812 = vdwg.mxu0
        %813 = vmatprep.subr.mxu0 0.0
        %814 = vmatpush1.msra.mxu0 %v661
        %815 = vmatprep.subr.mxu0 0.0
        %816 = vmatpush1.msra.mxu0 %v662
        %817 = vmatprep.subr.mxu0 0.0
        %818 = vmatpush1.msra.mxu0 %v663
        %819 = vmatprep.subr.mxu0 0.0
        %820 = vmatpush1.msra.mxu0 %v664
        %821 = vmatprep.subr.mxu0 0.0
        %822 = vmatpush1.msra.mxu0 0.0
        %823 = vmatprep.subr.mxu0 0.0
        %824 = vmatpush1.msra.mxu0 0.0
        %825 = vmatprep.subr.mxu0 0.0
        %826 = vmatpush1.msra.mxu0 0.0
        %827 = vmatprep.subr.mxu0 0.0
        %828 = vmatpush1.msra.mxu0 0.0
        %829 = vmatprep.subr.mxu0 0.0
        %830 = vmatpush1.msra.mxu0 0.0
        %831 = vmatprep.subr.mxu0 0.0
        %832 = vmatpush1.msra.mxu0 0.0
        %833 = vmatprep.subr.mxu0 0.0
        %834 = vmatpush1.msra.mxu0 0.0
        %835 = vmatprep.subr.mxu0 0.0
        %836 = vmatpush1.msra.mxu0 0.0
        %837 = vmatprep.subr.mxu0 0.0
        %838 = vmatpush1.msra.mxu0 0.0
        %839 = vmatprep.subr.mxu0 0.0
        %840 = vmatpush1.msra.mxu0 0.0
        %841 = vmatprep.subr.mxu0 0.0
        %842 = vmatpush1.msra.mxu0 0.0
        %843 = vmatprep.subr.mxu0 0.0
        %844 = vmatpush1.msra.mxu0 0.0
        %845 = vmatprep.subr.mxu0 0.0
        %846 = vmatpush1.msra.mxu0 0.0
        %847 = vmatprep.subr.mxu0 0.0
        %848 = vmatpush1.msra.mxu0 0.0
        %849 = vmatprep.subr.mxu0 0.0
        %850 = vmatpush1.msra.mxu0 0.0
        %851 = vmatprep.subr.mxu0 0.0
        %852 = vmatpush1.msra.mxu0 0.0
        %853 = vmatprep.subr.mxu0 0.0
        %854 = vmatpush1.msra.mxu0 0.0
        %855 = vmatprep.subr.mxu0 0.0
        %856 = vmatpush1.msra.mxu0 0.0
        %857 = vmatprep.subr.mxu0 0.0
        %858 = vmatpush1.msra.mxu0 0.0
        %859 = vmatprep.subr.mxu0 0.0
        %860 = vmatpush1.msra.mxu0 0.0
        %861 = vmatprep.subr.mxu0 0.0
        %862 = vmatpush1.msra.mxu0 0.0
        %863 = vmatprep.subr.mxu0 0.0
        %864 = vmatpush1.msra.mxu0 0.0
        %865 = vmatprep.subr.mxu0 0.0
        %866 = vmatpush1.msra.mxu0 0.0
        %867 = vmatprep.subr.mxu0 0.0
        %868 = vmatpush1.msra.mxu0 0.0
        %869 = vmatprep.subr.mxu0 0.0
        %870 = vmatpush1.msra.mxu0 0.0
        %871 = vmatprep.subr.mxu0 0.0
        %872 = vmatpush1.msra.mxu0 0.0
        %873 = vmatprep.subr.mxu0 0.0
        %874 = vmatpush1.msra.mxu0 0.0
        %875 = vmatprep.subr.mxu0 0.0
        %876 = vmatpush1.msra.mxu0 0.0
        %877 = vmatprep.mubr.f32.mxu0 0.0
        %878 = vmatmul.mubr.f32.gmra.mrb[0].mxu0 %v671
        %v879 = vpop.f32.mrb[0].mxu0
        %v880 = vadd.f32 0.0, %v879
        %v881 = vpop.f32.mrb[0].mxu0
        %882 = vdwg.mxu0
        %883 = vmatprep.subr.mxu0 0.0
        %884 = vmatpush1.msra.mxu0 %v665
        %885 = vmatprep.subr.mxu0 0.0
        %886 = vmatpush1.msra.mxu0 %v666
        %887 = vmatprep.subr.mxu0 0.0
        %888 = vmatpush1.msra.mxu0 %v667
        %889 = vmatprep.subr.mxu0 0.0
        %890 = vmatpush1.msra.mxu0 %v668
        %891 = vmatprep.subr.mxu0 0.0
        %892 = vmatpush1.msra.mxu0 0.0
        %893 = vmatprep.subr.mxu0 0.0
        %894 = vmatpush1.msra.mxu0 0.0
        %895 = vmatprep.subr.mxu0 0.0
        %896 = vmatpush1.msra.mxu0 0.0
        %897 = vmatprep.subr.mxu0 0.0
        %898 = vmatpush1.msra.mxu0 0.0
        %899 = vmatprep.subr.mxu0 0.0
        %900 = vmatpush1.msra.mxu0 0.0
        %901 = vmatprep.subr.mxu0 0.0
        %902 = vmatpush1.msra.mxu0 0.0
        %903 = vmatprep.subr.mxu0 0.0
        %904 = vmatpush1.msra.mxu0 0.0
        %905 = vmatprep.subr.mxu0 0.0
        %906 = vmatpush1.msra.mxu0 0.0
        %907 = vmatprep.subr.mxu0 0.0
        %908 = vmatpush1.msra.mxu0 0.0
        %909 = vmatprep.subr.mxu0 0.0
        %910 = vmatpush1.msra.mxu0 0.0
        %911 = vmatprep.subr.mxu0 0.0
        %912 = vmatpush1.msra.mxu0 0.0
        %913 = vmatprep.subr.mxu0 0.0
        %914 = vmatpush1.msra.mxu0 0.0
        %915 = vmatprep.subr.mxu0 0.0
        %916 = vmatpush1.msra.mxu0 0.0
        %917 = vmatprep.subr.mxu0 0.0
        %918 = vmatpush1.msra.mxu0 0.0
        %919 = vmatprep.subr.mxu0 0.0
        %920 = vmatpush1.msra.mxu0 0.0
        %921 = vmatprep.subr.mxu0 0.0
        %922 = vmatpush1.msra.mxu0 0.0
        %923 = vmatprep.subr.mxu0 0.0
        %924 = vmatpush1.msra.mxu0 0.0
        %925 = vmatprep.subr.mxu0 0.0
        %926 = vmatpush1.msra.mxu0 0.0
        %927 = vmatprep.subr.mxu0 0.0
        %928 = vmatpush1.msra.mxu0 0.0
        %929 = vmatprep.subr.mxu0 0.0
        %930 = vmatpush1.msra.mxu0 0.0
        %931 = vmatprep.subr.mxu0 0.0
        %932 = vmatpush1.msra.mxu0 0.0
        %933 = vmatprep.subr.mxu0 0.0
        %934 = vmatpush1.msra.mxu0 0.0
        %935 = vmatprep.subr.mxu0 0.0
        %936 = vmatpush1.msra.mxu0 0.0
        %937 = vmatprep.subr.mxu0 0.0
        %938 = vmatpush1.msra.mxu0 0.0
        %939 = vmatprep.subr.mxu0 0.0
        %940 = vmatpush1.msra.mxu0 0.0
        %941 = vmatprep.subr.mxu0 0.0
        %942 = vmatpush1.msra.mxu0 0.0
        %943 = vmatprep.subr.mxu0 0.0
        %944 = vmatpush1.msra.mxu0 0.0
        %945 = vmatprep.subr.mxu0 0.0
        %946 = vmatpush1.msra.mxu0 0.0
        %947 = vmatprep.mubr.f32.mxu0 0.0
        %948 = vmatmul.mubr.f32.gmra.mrb[0].mxu0 %v671
        %v949 = vpop.f32.mrb[0].mxu0
        %v950 = vadd.f32 0.0, %v949
        %v951 = vpop.f32.mrb[0].mxu0
        %952 = vdwg.mxu0
        %v953 = vld [vmem:[%s5] sm:$0xff]
        %v954 = vld [vmem:[%s5 + $0x8] sm:$0xff]
        %v955 = vld [vmem:[%s5 + $0x10] sm:$0xff]
        %v956 = vld [vmem:[%s5 + $0x18] sm:$0xff]
        %958 = vrot.lane.b32.xlu0 %v740, 120
        %v959 = vpop.permute.xlu0 %958
        %vm960 = vcmask 64512
        %v961 = vsel %vm960, %v740, 0
        %v963 = vsel %vm960, %v959, 0
        %965 = vmatprep.subr.mxu0 0.0
        %966 = vmatpush1.xpose.msra.mxu0 %v963
        %967 = vmatprep.subr.mxu0 0.0
        %968 = vmatpush1.xpose.msra.mxu0 0.0
        %969 = vmatprep.subr.mxu0 0.0
        %970 = vmatpush1.xpose.msra.mxu0 0.0
        %971 = vmatprep.subr.mxu0 0.0
        %972 = vmatpush1.xpose.msra.mxu0 0.0
        %973 = vmatprep.subr.mxu0 0.0
        %974 = vmatpush1.xpose.msra.mxu0 0.0
        %975 = vmatprep.subr.mxu0 0.0
        %976 = vmatpush1.xpose.msra.mxu0 0.0
        %977 = vmatprep.subr.mxu0 0.0
        %978 = vmatpush1.xpose.msra.mxu0 0.0
        %979 = vmatprep.subr.mxu0 0.0
        %980 = vmatpush1.xpose.msra.mxu0 0.0
        %981 = vmatprep.subr.mxu0 0.0
        %982 = vmatpush1.xpose.msra.mxu0 0.0
        %983 = vmatprep.subr.mxu0 0.0
        %984 = vmatpush1.xpose.msra.mxu0 0.0
        %985 = vmatprep.subr.mxu0 0.0
        %986 = vmatpush1.xpose.msra.mxu0 0.0
        %987 = vmatprep.subr.mxu0 0.0
        %988 = vmatpush1.xpose.msra.mxu0 0.0
        %989 = vmatprep.subr.mxu0 0.0
        %990 = vmatpush1.xpose.msra.mxu0 0.0
        %991 = vmatprep.subr.mxu0 0.0
        %992 = vmatpush1.xpose.msra.mxu0 0.0
        %993 = vmatprep.subr.mxu0 0.0
        %994 = vmatpush1.xpose.msra.mxu0 0.0
        %995 = vmatprep.subr.mxu0 0.0
        %996 = vmatpush1.xpose.msra.mxu0 0.0
        %997 = vmatprep.subr.mxu0 0.0
        %998 = vmatpush1.xpose.msra.mxu0 0.0
        %999 = vmatprep.subr.mxu0 0.0
        %1000 = vmatpush1.xpose.msra.mxu0 0.0
        %1001 = vmatprep.subr.mxu0 0.0
        %1002 = vmatpush1.xpose.msra.mxu0 0.0
        %1003 = vmatprep.subr.mxu0 0.0
        %1004 = vmatpush1.xpose.msra.mxu0 0.0
        %1005 = vmatprep.subr.mxu0 0.0
        %1006 = vmatpush1.xpose.msra.mxu0 0.0
        %1007 = vmatprep.subr.mxu0 0.0
        %1008 = vmatpush1.xpose.msra.mxu0 0.0
        %1009 = vmatprep.subr.mxu0 0.0
        %1010 = vmatpush1.xpose.msra.mxu0 0.0
        %1011 = vmatprep.subr.mxu0 0.0
        %1012 = vmatpush1.xpose.msra.mxu0 0.0
        %1013 = vmatprep.subr.mxu0 0.0
        %1014 = vmatpush1.xpose.msra.mxu0 0.0
        %1015 = vmatprep.subr.mxu0 0.0
        %1016 = vmatpush1.xpose.msra.mxu0 0.0
        %1017 = vmatprep.subr.mxu0 0.0
        %1018 = vmatpush1.xpose.msra.mxu0 0.0
        %1019 = vmatprep.subr.mxu0 0.0
        %1020 = vmatpush1.xpose.msra.mxu0 0.0
        %1021 = vmatprep.subr.mxu0 0.0
        %1022 = vmatpush1.xpose.msra.mxu0 0.0
        %1023 = vmatprep.subr.mxu0 0.0
        %1024 = vmatpush1.xpose.msra.mxu0 0.0
        %1025 = vmatprep.subr.mxu0 0.0
        %1026 = vmatpush1.xpose.msra.mxu0 0.0
        %1027 = vmatprep.subr.mxu0 0.0
        %1028 = vmatpush1.xpose.msra.mxu0 0.0
        %1029 = vmatprep.mubr.f32.mxu0 0.0
        %1030 = vmatmul.mubr.f32.gmra.mrb[0].mxu0 %v961
        %v1031 = vpop.f32.mrb[0].mxu0
        %v1032 = vadd.f32 0.0, %v1031
        %v1033 = vpop.f32.mrb[0].mxu0
        %1034 = vdwg.mxu0
        %1036 = vrot.lane.b32.xlu0 %v810, 120
        %v1037 = vpop.permute.xlu0 %1036
        %v1038 = vsel %vm960, %v810, 0
        %v1040 = vsel %vm960, %v1037, 0
        %1042 = vmatprep.subr.mxu0 0.0
        %1043 = vmatpush1.xpose.msra.mxu0 %v1040
        %1044 = vmatprep.subr.mxu0 0.0
        %1045 = vmatpush1.xpose.msra.mxu0 0.0
        %1046 = vmatprep.subr.mxu0 0.0
        %1047 = vmatpush1.xpose.msra.mxu0 0.0
        %1048 = vmatprep.subr.mxu0 0.0
        %1049 = vmatpush1.xpose.msra.mxu0 0.0
        %1050 = vmatprep.subr.mxu0 0.0
        %1051 = vmatpush1.xpose.msra.mxu0 0.0
        %1052 = vmatprep.subr.mxu0 0.0
        %1053 = vmatpush1.xpose.msra.mxu0 0.0
        %1054 = vmatprep.subr.mxu0 0.0
        %1055 = vmatpush1.xpose.msra.mxu0 0.0
        %1056 = vmatprep.subr.mxu0 0.0
        %1057 = vmatpush1.xpose.msra.mxu0 0.0
        %1058 = vmatprep.subr.mxu0 0.0
        %1059 = vmatpush1.xpose.msra.mxu0 0.0
        %1060 = vmatprep.subr.mxu0 0.0
        %1061 = vmatpush1.xpose.msra.mxu0 0.0
        %1062 = vmatprep.subr.mxu0 0.0
        %1063 = vmatpush1.xpose.msra.mxu0 0.0
        %1064 = vmatprep.subr.mxu0 0.0
        %1065 = vmatpush1.xpose.msra.mxu0 0.0
        %1066 = vmatprep.subr.mxu0 0.0
        %1067 = vmatpush1.xpose.msra.mxu0 0.0
        %1068 = vmatprep.subr.mxu0 0.0
        %1069 = vmatpush1.xpose.msra.mxu0 0.0
        %1070 = vmatprep.subr.mxu0 0.0
        %1071 = vmatpush1.xpose.msra.mxu0 0.0
        %1072 = vmatprep.subr.mxu0 0.0
        %1073 = vmatpush1.xpose.msra.mxu0 0.0
        %1074 = vmatprep.subr.mxu0 0.0
        %1075 = vmatpush1.xpose.msra.mxu0 0.0
        %1076 = vmatprep.subr.mxu0 0.0
        %1077 = vmatpush1.xpose.msra.mxu0 0.0
        %1078 = vmatprep.subr.mxu0 0.0
        %1079 = vmatpush1.xpose.msra.mxu0 0.0
        %1080 = vmatprep.subr.mxu0 0.0
        %1081 = vmatpush1.xpose.msra.mxu0 0.0
        %1082 = vmatprep.subr.mxu0 0.0
        %1083 = vmatpush1.xpose.msra.mxu0 0.0
        %1084 = vmatprep.subr.mxu0 0.0
        %1085 = vmatpush1.xpose.msra.mxu0 0.0
        %1086 = vmatprep.subr.mxu0 0.0
        %1087 = vmatpush1.xpose.msra.mxu0 0.0
        %1088 = vmatprep.subr.mxu0 0.0
        %1089 = vmatpush1.xpose.msra.mxu0 0.0
        %1090 = vmatprep.subr.mxu0 0.0
        %1091 = vmatpush1.xpose.msra.mxu0 0.0
        %1092 = vmatprep.subr.mxu0 0.0
        %1093 = vmatpush1.xpose.msra.mxu0 0.0
        %1094 = vmatprep.subr.mxu0 0.0
        %1095 = vmatpush1.xpose.msra.mxu0 0.0
        %1096 = vmatprep.subr.mxu0 0.0
        %1097 = vmatpush1.xpose.msra.mxu0 0.0
        %1098 = vmatprep.subr.mxu0 0.0
        %1099 = vmatpush1.xpose.msra.mxu0 0.0
        %1100 = vmatprep.subr.mxu0 0.0
        %1101 = vmatpush1.xpose.msra.mxu0 0.0
        %1102 = vmatprep.subr.mxu0 0.0
        %1103 = vmatpush1.xpose.msra.mxu0 0.0
        %1104 = vmatprep.subr.mxu0 0.0
        %1105 = vmatpush1.xpose.msra.mxu0 0.0
        %1106 = vmatprep.mubr.f32.mxu0 0.0
        %1107 = vmatmul.mubr.f32.gmra.mrb[0].mxu0 %v1038
        %v1108 = vpop.f32.mrb[0].mxu0
        %v1109 = vadd.f32 0.0, %v1108
        %v1110 = vpop.f32.mrb[0].mxu0
        %1111 = vdwg.mxu0
        %1113 = vrot.lane.b32.xlu0 %v880, 120
        %v1114 = vpop.permute.xlu0 %1113
        %v1115 = vsel %vm960, %v880, 0
        %v1117 = vsel %vm960, %v1114, 0
        %1119 = vmatprep.subr.mxu0 0.0
        %1120 = vmatpush1.xpose.msra.mxu0 %v1117
        %1121 = vmatprep.subr.mxu0 0.0
        %1122 = vmatpush1.xpose.msra.mxu0 0.0
        %1123 = vmatprep.subr.mxu0 0.0
        %1124 = vmatpush1.xpose.msra.mxu0 0.0
        %1125 = vmatprep.subr.mxu0 0.0
        %1126 = vmatpush1.xpose.msra.mxu0 0.0
        %1127 = vmatprep.subr.mxu0 0.0
        %1128 = vmatpush1.xpose.msra.mxu0 0.0
        %1129 = vmatprep.subr.mxu0 0.0
        %1130 = vmatpush1.xpose.msra.mxu0 0.0
        %1131 = vmatprep.subr.mxu0 0.0
        %1132 = vmatpush1.xpose.msra.mxu0 0.0
        %1133 = vmatprep.subr.mxu0 0.0
        %1134 = vmatpush1.xpose.msra.mxu0 0.0
        %1135 = vmatprep.subr.mxu0 0.0
        %1136 = vmatpush1.xpose.msra.mxu0 0.0
        %1137 = vmatprep.subr.mxu0 0.0
        %1138 = vmatpush1.xpose.msra.mxu0 0.0
        %1139 = vmatprep.subr.mxu0 0.0
        %1140 = vmatpush1.xpose.msra.mxu0 0.0
        %1141 = vmatprep.subr.mxu0 0.0
        %1142 = vmatpush1.xpose.msra.mxu0 0.0
        %1143 = vmatprep.subr.mxu0 0.0
        %1144 = vmatpush1.xpose.msra.mxu0 0.0
        %1145 = vmatprep.subr.mxu0 0.0
        %1146 = vmatpush1.xpose.msra.mxu0 0.0
        %1147 = vmatprep.subr.mxu0 0.0
        %1148 = vmatpush1.xpose.msra.mxu0 0.0
        %1149 = vmatprep.subr.mxu0 0.0
        %1150 = vmatpush1.xpose.msra.mxu0 0.0
        %1151 = vmatprep.subr.mxu0 0.0
        %1152 = vmatpush1.xpose.msra.mxu0 0.0
        %1153 = vmatprep.subr.mxu0 0.0
        %1154 = vmatpush1.xpose.msra.mxu0 0.0
        %1155 = vmatprep.subr.mxu0 0.0
        %1156 = vmatpush1.xpose.msra.mxu0 0.0
        %1157 = vmatprep.subr.mxu0 0.0
        %1158 = vmatpush1.xpose.msra.mxu0 0.0
        %1159 = vmatprep.subr.mxu0 0.0
        %1160 = vmatpush1.xpose.msra.mxu0 0.0
        %1161 = vmatprep.subr.mxu0 0.0
        %1162 = vmatpush1.xpose.msra.mxu0 0.0
        %1163 = vmatprep.subr.mxu0 0.0
        %1164 = vmatpush1.xpose.msra.mxu0 0.0
        %1165 = vmatprep.subr.mxu0 0.0
        %1166 = vmatpush1.xpose.msra.mxu0 0.0
        %1167 = vmatprep.subr.mxu0 0.0
        %1168 = vmatpush1.xpose.msra.mxu0 0.0
        %1169 = vmatprep.subr.mxu0 0.0
        %1170 = vmatpush1.xpose.msra.mxu0 0.0
        %1171 = vmatprep.subr.mxu0 0.0
        %1172 = vmatpush1.xpose.msra.mxu0 0.0
        %1173 = vmatprep.subr.mxu0 0.0
        %1174 = vmatpush1.xpose.msra.mxu0 0.0
        %1175 = vmatprep.subr.mxu0 0.0
        %1176 = vmatpush1.xpose.msra.mxu0 0.0
        %1177 = vmatprep.subr.mxu0 0.0
        %1178 = vmatpush1.xpose.msra.mxu0 0.0
        %1179 = vmatprep.subr.mxu0 0.0
        %1180 = vmatpush1.xpose.msra.mxu0 0.0
        %1181 = vmatprep.subr.mxu0 0.0
        %1182 = vmatpush1.xpose.msra.mxu0 0.0
        %1183 = vmatprep.mubr.f32.mxu0 0.0
        %1184 = vmatmul.mubr.f32.gmra.mrb[0].mxu0 %v1115
        %v1185 = vpop.f32.mrb[0].mxu0
        %v1186 = vadd.f32 0.0, %v1185
        %v1187 = vpop.f32.mrb[0].mxu0
        %1188 = vdwg.mxu0
        %1190 = vrot.lane.b32.xlu0 %v950, 120
        %v1191 = vpop.permute.xlu0 %1190
        %v1192 = vsel %vm960, %v950, 0
        %v1194 = vsel %vm960, %v1191, 0
        %1196 = vmatprep.subr.mxu0 0.0
        %1197 = vmatpush1.xpose.msra.mxu0 %v1194
        %1198 = vmatprep.subr.mxu0 0.0
        %1199 = vmatpush1.xpose.msra.mxu0 0.0
        %1200 = vmatprep.subr.mxu0 0.0
        %1201 = vmatpush1.xpose.msra.mxu0 0.0
        %1202 = vmatprep.subr.mxu0 0.0
        %1203 = vmatpush1.xpose.msra.mxu0 0.0
        %1204 = vmatprep.subr.mxu0 0.0
        %1205 = vmatpush1.xpose.msra.mxu0 0.0
        %1206 = vmatprep.subr.mxu0 0.0
        %1207 = vmatpush1.xpose.msra.mxu0 0.0
        %1208 = vmatprep.subr.mxu0 0.0
        %1209 = vmatpush1.xpose.msra.mxu0 0.0
        %1210 = vmatprep.subr.mxu0 0.0
        %1211 = vmatpush1.xpose.msra.mxu0 0.0
        %1212 = vmatprep.subr.mxu0 0.0
        %1213 = vmatpush1.xpose.msra.mxu0 0.0
        %1214 = vmatprep.subr.mxu0 0.0
        %1215 = vmatpush1.xpose.msra.mxu0 0.0
        %1216 = vmatprep.subr.mxu0 0.0
        %1217 = vmatpush1.xpose.msra.mxu0 0.0
        %1218 = vmatprep.subr.mxu0 0.0
        %1219 = vmatpush1.xpose.msra.mxu0 0.0
        %1220 = vmatprep.subr.mxu0 0.0
        %1221 = vmatpush1.xpose.msra.mxu0 0.0
        %1222 = vmatprep.subr.mxu0 0.0
        %1223 = vmatpush1.xpose.msra.mxu0 0.0
        %1224 = vmatprep.subr.mxu0 0.0
        %1225 = vmatpush1.xpose.msra.mxu0 0.0
        %1226 = vmatprep.subr.mxu0 0.0
        %1227 = vmatpush1.xpose.msra.mxu0 0.0
        %1228 = vmatprep.subr.mxu0 0.0
        %1229 = vmatpush1.xpose.msra.mxu0 0.0
        %1230 = vmatprep.subr.mxu0 0.0
        %1231 = vmatpush1.xpose.msra.mxu0 0.0
        %1232 = vmatprep.subr.mxu0 0.0
        %1233 = vmatpush1.xpose.msra.mxu0 0.0
        %1234 = vmatprep.subr.mxu0 0.0
        %1235 = vmatpush1.xpose.msra.mxu0 0.0
        %1236 = vmatprep.subr.mxu0 0.0
        %1237 = vmatpush1.xpose.msra.mxu0 0.0
        %1238 = vmatprep.subr.mxu0 0.0
        %1239 = vmatpush1.xpose.msra.mxu0 0.0
        %1240 = vmatprep.subr.mxu0 0.0
        %1241 = vmatpush1.xpose.msra.mxu0 0.0
        %1242 = vmatprep.subr.mxu0 0.0
        %1243 = vmatpush1.xpose.msra.mxu0 0.0
        %1244 = vmatprep.subr.mxu0 0.0
        %1245 = vmatpush1.xpose.msra.mxu0 0.0
        %1246 = vmatprep.subr.mxu0 0.0
        %1247 = vmatpush1.xpose.msra.mxu0 0.0
        %1248 = vmatprep.subr.mxu0 0.0
        %1249 = vmatpush1.xpose.msra.mxu0 0.0
        %1250 = vmatprep.subr.mxu0 0.0
        %1251 = vmatpush1.xpose.msra.mxu0 0.0
        %1252 = vmatprep.subr.mxu0 0.0
        %1253 = vmatpush1.xpose.msra.mxu0 0.0
        %1254 = vmatprep.subr.mxu0 0.0
        %1255 = vmatpush1.xpose.msra.mxu0 0.0
        %1256 = vmatprep.subr.mxu0 0.0
        %1257 = vmatpush1.xpose.msra.mxu0 0.0
        %1258 = vmatprep.subr.mxu0 0.0
        %1259 = vmatpush1.xpose.msra.mxu0 0.0
        %1260 = vmatprep.mubr.f32.mxu0 0.0
        %1261 = vmatmul.mubr.f32.gmra.mrb[0].mxu0 %v1192
        %v1262 = vpop.f32.mrb[0].mxu0
        %v1263 = vadd.f32 0.0, %v1262
        %v1264 = vpop.f32.mrb[0].mxu0
        %1265 = vdwg.mxu0
        %v1266 = vmul.f32 %v1032, 0.35355338
        %v1267 = vmul.f32 %v1109, 0.35355338
        %v1268 = vmul.f32 %v1186, 0.35355338
        %v1269 = vmul.f32 %v1263, 0.35355338
        %v1270 = vadd.f32 %v1266, %v651
        %v1271 = vadd.f32 %v1267, %v651
        %v1272 = vadd.f32 %v1268, %v651
        %v1273 = vadd.f32 %v1269, %v651
        %v1274 = vsel %vm960, %v1270, -inf
        %1275 = vmax.xlane.f32.xlu0 %v1274
        %v1276 = vpop.xlane.xlu0 %1275
        %v1277 = vsel %vm960, %v1271, -inf
        %1278 = vmax.xlane.f32.xlu0 %v1277
        %v1279 = vpop.xlane.xlu0 %1278
        %v1280 = vsel %vm960, %v1272, -inf
        %1281 = vmax.xlane.f32.xlu0 %v1280
        %v1282 = vpop.xlane.xlu0 %1281
        %v1283 = vsel %vm960, %v1273, -inf
        %1284 = vmax.xlane.f32.xlu0 %v1283
        %v1285 = vpop.xlane.xlu0 %1284
        %v1286 = vsub.f32 %v1270, %v1276
        %v1287 = vsub.f32 %v1271, %v1279
        %v1288 = vsub.f32 %v1272, %v1282
        %v1289 = vsub.f32 %v1273, %v1285
        %v1290 = vmul.f32 %v1286, 1.442695
        %v1291 = vpow.pop %v1290
        %v1292 = vmul.f32 %v1287, 1.442695
        %v1293 = vpow.pop %v1292
        %v1294 = vmul.f32 %v1288, 1.442695
        %v1295 = vpow.pop %v1294
        %v1296 = vmul.f32 %v1289, 1.442695
        %v1297 = vpow.pop %v1296
        %v1298 = vsel %vm960, %v1291, 0.0
        %1299 = vadd.xlane.f32.xlu0 %v1298
        %v1300 = vpop.xlane.xlu0 %1299
        %v1301 = vsel %vm960, %v1293, 0.0
        %1302 = vadd.xlane.f32.xlu0 %v1301
        %v1303 = vpop.xlane.xlu0 %1302
        %v1304 = vsel %vm960, %v1295, 0.0
        %1305 = vadd.xlane.f32.xlu0 %v1304
        %v1306 = vpop.xlane.xlu0 %1305
        %v1307 = vsel %vm960, %v1297, 0.0
        %1308 = vadd.xlane.f32.xlu0 %v1307
        %v1309 = vpop.xlane.xlu0 %1308
        %v1310 = vrcp.pop %v1300
        %v1311 = vmul.f32 %v1291, %v1310
        %v1312 = vrcp.pop %v1303
        %v1313 = vmul.f32 %v1293, %v1312
        %v1314 = vrcp.pop %v1306
        %v1315 = vmul.f32 %v1295, %v1314
        %v1316 = vrcp.pop %v1309
        %v1317 = vmul.f32 %v1297, %v1316
        %1318 = vrot.lane.b32.xlu0 %v740, 112
        %v1319 = vpop.permute.xlu0 %1318
        %v1322 = vsel %vm960, %v1311, 0
        %1324 = vmatprep.subr.mxu0 0.0
        %1325 = vmatpush1.msra.mxu0 %v1319
        %1326 = vmatprep.subr.mxu0 0.0
        %1327 = vmatpush1.msra.mxu0 0.0
        %1328 = vmatprep.subr.mxu0 0.0
        %1329 = vmatpush1.msra.mxu0 0.0
        %1330 = vmatprep.subr.mxu0 0.0
        %1331 = vmatpush1.msra.mxu0 0.0
        %1332 = vmatprep.subr.mxu0 0.0
        %1333 = vmatpush1.msra.mxu0 0.0
        %1334 = vmatprep.subr.mxu0 0.0
        %1335 = vmatpush1.msra.mxu0 0.0
        %1336 = vmatprep.subr.mxu0 0.0
        %1337 = vmatpush1.msra.mxu0 0.0
        %1338 = vmatprep.subr.mxu0 0.0
        %1339 = vmatpush1.msra.mxu0 0.0
        %1340 = vmatprep.subr.mxu0 0.0
        %1341 = vmatpush1.msra.mxu0 0.0
        %1342 = vmatprep.subr.mxu0 0.0
        %1343 = vmatpush1.msra.mxu0 0.0
        %1344 = vmatprep.subr.mxu0 0.0
        %1345 = vmatpush1.msra.mxu0 0.0
        %1346 = vmatprep.subr.mxu0 0.0
        %1347 = vmatpush1.msra.mxu0 0.0
        %1348 = vmatprep.subr.mxu0 0.0
        %1349 = vmatpush1.msra.mxu0 0.0
        %1350 = vmatprep.subr.mxu0 0.0
        %1351 = vmatpush1.msra.mxu0 0.0
        %1352 = vmatprep.subr.mxu0 0.0
        %1353 = vmatpush1.msra.mxu0 0.0
        %1354 = vmatprep.subr.mxu0 0.0
        %1355 = vmatpush1.msra.mxu0 0.0
        %1356 = vmatprep.subr.mxu0 0.0
        %1357 = vmatpush1.msra.mxu0 0.0
        %1358 = vmatprep.subr.mxu0 0.0
        %1359 = vmatpush1.msra.mxu0 0.0
        %1360 = vmatprep.subr.mxu0 0.0
        %1361 = vmatpush1.msra.mxu0 0.0
        %1362 = vmatprep.subr.mxu0 0.0
        %1363 = vmatpush1.msra.mxu0 0.0
        %1364 = vmatprep.subr.mxu0 0.0
        %1365 = vmatpush1.msra.mxu0 0.0
        %1366 = vmatprep.subr.mxu0 0.0
        %1367 = vmatpush1.msra.mxu0 0.0
        %1368 = vmatprep.subr.mxu0 0.0
        %1369 = vmatpush1.msra.mxu0 0.0
        %1370 = vmatprep.subr.mxu0 0.0
        %1371 = vmatpush1.msra.mxu0 0.0
        %1372 = vmatprep.subr.mxu0 0.0
        %1373 = vmatpush1.msra.mxu0 0.0
        %1374 = vmatprep.subr.mxu0 0.0
        %1375 = vmatpush1.msra.mxu0 0.0
        %1376 = vmatprep.subr.mxu0 0.0
        %1377 = vmatpush1.msra.mxu0 0.0
        %1378 = vmatprep.subr.mxu0 0.0
        %1379 = vmatpush1.msra.mxu0 0.0
        %1380 = vmatprep.subr.mxu0 0.0
        %1381 = vmatpush1.msra.mxu0 0.0
        %1382 = vmatprep.subr.mxu0 0.0
        %1383 = vmatpush1.msra.mxu0 0.0
        %1384 = vmatprep.subr.mxu0 0.0
        %1385 = vmatpush1.msra.mxu0 0.0
        %1386 = vmatprep.subr.mxu0 0.0
        %1387 = vmatpush1.msra.mxu0 0.0
        %1388 = vmatprep.mubr.f32.mxu0 0.0
        %1389 = vmatmul.mubr.f32.gmra.mrb[0].mxu0 %v1322
        %v1390 = vpop.f32.mrb[0].mxu0
        %v1391 = vadd.f32 0.0, %v1390
        %v1392 = vpop.f32.mrb[0].mxu0
        %1393 = vdwg.mxu0
        %1394 = vrot.lane.b32.xlu0 %v810, 112
        %v1395 = vpop.permute.xlu0 %1394
        %v1398 = vsel %vm960, %v1313, 0
        %1400 = vmatprep.subr.mxu0 0.0
        %1401 = vmatpush1.msra.mxu0 %v1395
        %1402 = vmatprep.subr.mxu0 0.0
        %1403 = vmatpush1.msra.mxu0 0.0
        %1404 = vmatprep.subr.mxu0 0.0
        %1405 = vmatpush1.msra.mxu0 0.0
        %1406 = vmatprep.subr.mxu0 0.0
        %1407 = vmatpush1.msra.mxu0 0.0
        %1408 = vmatprep.subr.mxu0 0.0
        %1409 = vmatpush1.msra.mxu0 0.0
        %1410 = vmatprep.subr.mxu0 0.0
        %1411 = vmatpush1.msra.mxu0 0.0
        %1412 = vmatprep.subr.mxu0 0.0
        %1413 = vmatpush1.msra.mxu0 0.0
        %1414 = vmatprep.subr.mxu0 0.0
        %1415 = vmatpush1.msra.mxu0 0.0
        %1416 = vmatprep.subr.mxu0 0.0
        %1417 = vmatpush1.msra.mxu0 0.0
        %1418 = vmatprep.subr.mxu0 0.0
        %1419 = vmatpush1.msra.mxu0 0.0
        %1420 = vmatprep.subr.mxu0 0.0
        %1421 = vmatpush1.msra.mxu0 0.0
        %1422 = vmatprep.subr.mxu0 0.0
        %1423 = vmatpush1.msra.mxu0 0.0
        %1424 = vmatprep.subr.mxu0 0.0
        %1425 = vmatpush1.msra.mxu0 0.0
        %1426 = vmatprep.subr.mxu0 0.0
        %1427 = vmatpush1.msra.mxu0 0.0
        %1428 = vmatprep.subr.mxu0 0.0
        %1429 = vmatpush1.msra.mxu0 0.0
        %1430 = vmatprep.subr.mxu0 0.0
        %1431 = vmatpush1.msra.mxu0 0.0
        %1432 = vmatprep.subr.mxu0 0.0
        %1433 = vmatpush1.msra.mxu0 0.0
        %1434 = vmatprep.subr.mxu0 0.0
        %1435 = vmatpush1.msra.mxu0 0.0
        %1436 = vmatprep.subr.mxu0 0.0
        %1437 = vmatpush1.msra.mxu0 0.0
        %1438 = vmatprep.subr.mxu0 0.0
        %1439 = vmatpush1.msra.mxu0 0.0
        %1440 = vmatprep.subr.mxu0 0.0
        %1441 = vmatpush1.msra.mxu0 0.0
        %1442 = vmatprep.subr.mxu0 0.0
        %1443 = vmatpush1.msra.mxu0 0.0
        %1444 = vmatprep.subr.mxu0 0.0
        %1445 = vmatpush1.msra.mxu0 0.0
        %1446 = vmatprep.subr.mxu0 0.0
        %1447 = vmatpush1.msra.mxu0 0.0
        %1448 = vmatprep.subr.mxu0 0.0
        %1449 = vmatpush1.msra.mxu0 0.0
        %1450 = vmatprep.subr.mxu0 0.0
        %1451 = vmatpush1.msra.mxu0 0.0
        %1452 = vmatprep.subr.mxu0 0.0
        %1453 = vmatpush1.msra.mxu0 0.0
        %1454 = vmatprep.subr.mxu0 0.0
        %1455 = vmatpush1.msra.mxu0 0.0
        %1456 = vmatprep.subr.mxu0 0.0
        %1457 = vmatpush1.msra.mxu0 0.0
        %1458 = vmatprep.subr.mxu0 0.0
        %1459 = vmatpush1.msra.mxu0 0.0
        %1460 = vmatprep.subr.mxu0 0.0
        %1461 = vmatpush1.msra.mxu0 0.0
        %1462 = vmatprep.subr.mxu0 0.0
        %1463 = vmatpush1.msra.mxu0 0.0
        %1464 = vmatprep.mubr.f32.mxu0 0.0
        %1465 = vmatmul.mubr.f32.gmra.mrb[0].mxu0 %v1398
        %v1466 = vpop.f32.mrb[0].mxu0
        %v1467 = vadd.f32 0.0, %v1466
        %v1468 = vpop.f32.mrb[0].mxu0
        %1469 = vdwg.mxu0
        %1470 = vrot.lane.b32.xlu0 %v880, 112
        %v1471 = vpop.permute.xlu0 %1470
        %v1474 = vsel %vm960, %v1315, 0
        %1476 = vmatprep.subr.mxu0 0.0
        %1477 = vmatpush1.msra.mxu0 %v1471
        %1478 = vmatprep.subr.mxu0 0.0
        %1479 = vmatpush1.msra.mxu0 0.0
        %1480 = vmatprep.subr.mxu0 0.0
        %1481 = vmatpush1.msra.mxu0 0.0
        %1482 = vmatprep.subr.mxu0 0.0
        %1483 = vmatpush1.msra.mxu0 0.0
        %1484 = vmatprep.subr.mxu0 0.0
        %1485 = vmatpush1.msra.mxu0 0.0
        %1486 = vmatprep.subr.mxu0 0.0
        %1487 = vmatpush1.msra.mxu0 0.0
        %1488 = vmatprep.subr.mxu0 0.0
        %1489 = vmatpush1.msra.mxu0 0.0
        %1490 = vmatprep.subr.mxu0 0.0
        %1491 = vmatpush1.msra.mxu0 0.0
        %1492 = vmatprep.subr.mxu0 0.0
        %1493 = vmatpush1.msra.mxu0 0.0
        %1494 = vmatprep.subr.mxu0 0.0
        %1495 = vmatpush1.msra.mxu0 0.0
        %1496 = vmatprep.subr.mxu0 0.0
        %1497 = vmatpush1.msra.mxu0 0.0
        %1498 = vmatprep.subr.mxu0 0.0
        %1499 = vmatpush1.msra.mxu0 0.0
        %1500 = vmatprep.subr.mxu0 0.0
        %1501 = vmatpush1.msra.mxu0 0.0
        %1502 = vmatprep.subr.mxu0 0.0
        %1503 = vmatpush1.msra.mxu0 0.0
        %1504 = vmatprep.subr.mxu0 0.0
        %1505 = vmatpush1.msra.mxu0 0.0
        %1506 = vmatprep.subr.mxu0 0.0
        %1507 = vmatpush1.msra.mxu0 0.0
        %1508 = vmatprep.subr.mxu0 0.0
        %1509 = vmatpush1.msra.mxu0 0.0
        %1510 = vmatprep.subr.mxu0 0.0
        %1511 = vmatpush1.msra.mxu0 0.0
        %1512 = vmatprep.subr.mxu0 0.0
        %1513 = vmatpush1.msra.mxu0 0.0
        %1514 = vmatprep.subr.mxu0 0.0
        %1515 = vmatpush1.msra.mxu0 0.0
        %1516 = vmatprep.subr.mxu0 0.0
        %1517 = vmatpush1.msra.mxu0 0.0
        %1518 = vmatprep.subr.mxu0 0.0
        %1519 = vmatpush1.msra.mxu0 0.0
        %1520 = vmatprep.subr.mxu0 0.0
        %1521 = vmatpush1.msra.mxu0 0.0
        %1522 = vmatprep.subr.mxu0 0.0
        %1523 = vmatpush1.msra.mxu0 0.0
        %1524 = vmatprep.subr.mxu0 0.0
        %1525 = vmatpush1.msra.mxu0 0.0
        %1526 = vmatprep.subr.mxu0 0.0
        %1527 = vmatpush1.msra.mxu0 0.0
        %1528 = vmatprep.subr.mxu0 0.0
        %1529 = vmatpush1.msra.mxu0 0.0
        %1530 = vmatprep.subr.mxu0 0.0
        %1531 = vmatpush1.msra.mxu0 0.0
        %1532 = vmatprep.subr.mxu0 0.0
        %1533 = vmatpush1.msra.mxu0 0.0
        %1534 = vmatprep.subr.mxu0 0.0
        %1535 = vmatpush1.msra.mxu0 0.0
        %1536 = vmatprep.subr.mxu0 0.0
        %1537 = vmatpush1.msra.mxu0 0.0
        %1538 = vmatprep.subr.mxu0 0.0
        %1539 = vmatpush1.msra.mxu0 0.0
        %1540 = vmatprep.mubr.f32.mxu0 0.0
        %1541 = vmatmul.mubr.f32.gmra.mrb[0].mxu0 %v1474
        %v1542 = vpop.f32.mrb[0].mxu0
        %v1543 = vadd.f32 0.0, %v1542
        %v1544 = vpop.f32.mrb[0].mxu0
        %1545 = vdwg.mxu0
        %1546 = vrot.lane.b32.xlu0 %v950, 112
        %v1547 = vpop.permute.xlu0 %1546
        %v1550 = vsel %vm960, %v1317, 0
        %1552 = vmatprep.subr.mxu0 0.0
        %1553 = vmatpush1.msra.mxu0 %v1547
        %1554 = vmatprep.subr.mxu0 0.0
        %1555 = vmatpush1.msra.mxu0 0.0
        %1556 = vmatprep.subr.mxu0 0.0
        %1557 = vmatpush1.msra.mxu0 0.0
        %1558 = vmatprep.subr.mxu0 0.0
        %1559 = vmatpush1.msra.mxu0 0.0
        %1560 = vmatprep.subr.mxu0 0.0
        %1561 = vmatpush1.msra.mxu0 0.0
        %1562 = vmatprep.subr.mxu0 0.0
        %1563 = vmatpush1.msra.mxu0 0.0
        %1564 = vmatprep.subr.mxu0 0.0
        %1565 = vmatpush1.msra.mxu0 0.0
        %1566 = vmatprep.subr.mxu0 0.0
        %1567 = vmatpush1.msra.mxu0 0.0
        %1568 = vmatprep.subr.mxu0 0.0
        %1569 = vmatpush1.msra.mxu0 0.0
        %1570 = vmatprep.subr.mxu0 0.0
        %1571 = vmatpush1.msra.mxu0 0.0
        %1572 = vmatprep.subr.mxu0 0.0
        %1573 = vmatpush1.msra.mxu0 0.0
        %1574 = vmatprep.subr.mxu0 0.0
        %1575 = vmatpush1.msra.mxu0 0.0
        %1576 = vmatprep.subr.mxu0 0.0
        %1577 = vmatpush1.msra.mxu0 0.0
        %1578 = vmatprep.subr.mxu0 0.0
        %1579 = vmatpush1.msra.mxu0 0.0
        %1580 = vmatprep.subr.mxu0 0.0
        %1581 = vmatpush1.msra.mxu0 0.0
        %1582 = vmatprep.subr.mxu0 0.0
        %1583 = vmatpush1.msra.mxu0 0.0
        %1584 = vmatprep.subr.mxu0 0.0
        %1585 = vmatpush1.msra.mxu0 0.0
        %1586 = vmatprep.subr.mxu0 0.0
        %1587 = vmatpush1.msra.mxu0 0.0
        %1588 = vmatprep.subr.mxu0 0.0
        %1589 = vmatpush1.msra.mxu0 0.0
        %1590 = vmatprep.subr.mxu0 0.0
        %1591 = vmatpush1.msra.mxu0 0.0
        %1592 = vmatprep.subr.mxu0 0.0
        %1593 = vmatpush1.msra.mxu0 0.0
        %1594 = vmatprep.subr.mxu0 0.0
        %1595 = vmatpush1.msra.mxu0 0.0
        %1596 = vmatprep.subr.mxu0 0.0
        %1597 = vmatpush1.msra.mxu0 0.0
        %1598 = vmatprep.subr.mxu0 0.0
        %1599 = vmatpush1.msra.mxu0 0.0
        %1600 = vmatprep.subr.mxu0 0.0
        %1601 = vmatpush1.msra.mxu0 0.0
        %1602 = vmatprep.subr.mxu0 0.0
        %1603 = vmatpush1.msra.mxu0 0.0
        %1604 = vmatprep.subr.mxu0 0.0
        %1605 = vmatpush1.msra.mxu0 0.0
        %1606 = vmatprep.subr.mxu0 0.0
        %1607 = vmatpush1.msra.mxu0 0.0
        %1608 = vmatprep.subr.mxu0 0.0
        %1609 = vmatpush1.msra.mxu0 0.0
        %1610 = vmatprep.subr.mxu0 0.0
        %1611 = vmatpush1.msra.mxu0 0.0
        %1612 = vmatprep.subr.mxu0 0.0
        %1613 = vmatpush1.msra.mxu0 0.0
        %1614 = vmatprep.subr.mxu0 0.0
        %1615 = vmatpush1.msra.mxu0 0.0
        %1616 = vmatprep.mubr.f32.mxu0 0.0
        %1617 = vmatmul.mubr.f32.gmra.mrb[0].mxu0 %v1550
        %v1618 = vpop.f32.mrb[0].mxu0
        %v1619 = vadd.f32 0.0, %v1618
        %v1620 = vpop.f32.mrb[0].mxu0
        %1621 = vdwg.mxu0
        %v1623 = vsel %vm960, %v1391, 0
        %1625 = vmatprep.subr.mxu0 0.0
        %1626 = vmatpush1.msra.mxu0 %v953
        %1627 = vmatprep.subr.mxu0 0.0
        %1628 = vmatpush1.msra.mxu0 0.0
        %1629 = vmatprep.subr.mxu0 0.0
        %1630 = vmatpush1.msra.mxu0 0.0
        %1631 = vmatprep.subr.mxu0 0.0
        %1632 = vmatpush1.msra.mxu0 0.0
        %1633 = vmatprep.subr.mxu0 0.0
        %1634 = vmatpush1.msra.mxu0 0.0
        %1635 = vmatprep.subr.mxu0 0.0
        %1636 = vmatpush1.msra.mxu0 0.0
        %1637 = vmatprep.subr.mxu0 0.0
        %1638 = vmatpush1.msra.mxu0 0.0
        %1639 = vmatprep.subr.mxu0 0.0
        %1640 = vmatpush1.msra.mxu0 0.0
        %1641 = vmatprep.subr.mxu0 0.0
        %1642 = vmatpush1.msra.mxu0 0.0
        %1643 = vmatprep.subr.mxu0 0.0
        %1644 = vmatpush1.msra.mxu0 0.0
        %1645 = vmatprep.subr.mxu0 0.0
        %1646 = vmatpush1.msra.mxu0 0.0
        %1647 = vmatprep.subr.mxu0 0.0
        %1648 = vmatpush1.msra.mxu0 0.0
        %1649 = vmatprep.subr.mxu0 0.0
        %1650 = vmatpush1.msra.mxu0 0.0
        %1651 = vmatprep.subr.mxu0 0.0
        %1652 = vmatpush1.msra.mxu0 0.0
        %1653 = vmatprep.subr.mxu0 0.0
        %1654 = vmatpush1.msra.mxu0 0.0
        %1655 = vmatprep.subr.mxu0 0.0
        %1656 = vmatpush1.msra.mxu0 0.0
        %1657 = vmatprep.subr.mxu0 0.0
        %1658 = vmatpush1.msra.mxu0 0.0
        %1659 = vmatprep.subr.mxu0 0.0
        %1660 = vmatpush1.msra.mxu0 0.0
        %1661 = vmatprep.subr.mxu0 0.0
        %1662 = vmatpush1.msra.mxu0 0.0
        %1663 = vmatprep.subr.mxu0 0.0
        %1664 = vmatpush1.msra.mxu0 0.0
        %1665 = vmatprep.subr.mxu0 0.0
        %1666 = vmatpush1.msra.mxu0 0.0
        %1667 = vmatprep.subr.mxu0 0.0
        %1668 = vmatpush1.msra.mxu0 0.0
        %1669 = vmatprep.subr.mxu0 0.0
        %1670 = vmatpush1.msra.mxu0 0.0
        %1671 = vmatprep.subr.mxu0 0.0
        %1672 = vmatpush1.msra.mxu0 0.0
        %1673 = vmatprep.subr.mxu0 0.0
        %1674 = vmatpush1.msra.mxu0 0.0
        %1675 = vmatprep.subr.mxu0 0.0
        %1676 = vmatpush1.msra.mxu0 0.0
        %1677 = vmatprep.subr.mxu0 0.0
        %1678 = vmatpush1.msra.mxu0 0.0
        %1679 = vmatprep.subr.mxu0 0.0
        %1680 = vmatpush1.msra.mxu0 0.0
        %1681 = vmatprep.subr.mxu0 0.0
        %1682 = vmatpush1.msra.mxu0 0.0
        %1683 = vmatprep.subr.mxu0 0.0
        %1684 = vmatpush1.msra.mxu0 0.0
        %1685 = vmatprep.subr.mxu0 0.0
        %1686 = vmatpush1.msra.mxu0 0.0
        %1687 = vmatprep.subr.mxu0 0.0
        %1688 = vmatpush1.msra.mxu0 0.0
        %1689 = vmatprep.mubr.f32.mxu0 0.0
        %1690 = vmatmul.mubr.f32.gmra.mrb[0].mxu0 %v1623
        %v1691 = vpop.f32.mrb[0].mxu0
        %v1692 = vadd.f32 0.0, %v1691
        %v1693 = vpop.f32.mrb[0].mxu0
        %1694 = vdwg.mxu0
        %v1696 = vsel %vm960, %v1467, 0
        %1698 = vmatprep.subr.mxu0 0.0
        %1699 = vmatpush1.msra.mxu0 %v954
        %1700 = vmatprep.subr.mxu0 0.0
        %1701 = vmatpush1.msra.mxu0 0.0
        %1702 = vmatprep.subr.mxu0 0.0
        %1703 = vmatpush1.msra.mxu0 0.0
        %1704 = vmatprep.subr.mxu0 0.0
        %1705 = vmatpush1.msra.mxu0 0.0
        %1706 = vmatprep.subr.mxu0 0.0
        %1707 = vmatpush1.msra.mxu0 0.0
        %1708 = vmatprep.subr.mxu0 0.0
        %1709 = vmatpush1.msra.mxu0 0.0
        %1710 = vmatprep.subr.mxu0 0.0
        %1711 = vmatpush1.msra.mxu0 0.0
        %1712 = vmatprep.subr.mxu0 0.0
        %1713 = vmatpush1.msra.mxu0 0.0
        %1714 = vmatprep.subr.mxu0 0.0
        %1715 = vmatpush1.msra.mxu0 0.0
        %1716 = vmatprep.subr.mxu0 0.0
        %1717 = vmatpush1.msra.mxu0 0.0
        %1718 = vmatprep.subr.mxu0 0.0
        %1719 = vmatpush1.msra.mxu0 0.0
        %1720 = vmatprep.subr.mxu0 0.0
        %1721 = vmatpush1.msra.mxu0 0.0
        %1722 = vmatprep.subr.mxu0 0.0
        %1723 = vmatpush1.msra.mxu0 0.0
        %1724 = vmatprep.subr.mxu0 0.0
        %1725 = vmatpush1.msra.mxu0 0.0
        %1726 = vmatprep.subr.mxu0 0.0
        %1727 = vmatpush1.msra.mxu0 0.0
        %1728 = vmatprep.subr.mxu0 0.0
        %1729 = vmatpush1.msra.mxu0 0.0
        %1730 = vmatprep.subr.mxu0 0.0
        %1731 = vmatpush1.msra.mxu0 0.0
        %1732 = vmatprep.subr.mxu0 0.0
        %1733 = vmatpush1.msra.mxu0 0.0
        %1734 = vmatprep.subr.mxu0 0.0
        %1735 = vmatpush1.msra.mxu0 0.0
        %1736 = vmatprep.subr.mxu0 0.0
        %1737 = vmatpush1.msra.mxu0 0.0
        %1738 = vmatprep.subr.mxu0 0.0
        %1739 = vmatpush1.msra.mxu0 0.0
        %1740 = vmatprep.subr.mxu0 0.0
        %1741 = vmatpush1.msra.mxu0 0.0
        %1742 = vmatprep.subr.mxu0 0.0
        %1743 = vmatpush1.msra.mxu0 0.0
        %1744 = vmatprep.subr.mxu0 0.0
        %1745 = vmatpush1.msra.mxu0 0.0
        %1746 = vmatprep.subr.mxu0 0.0
        %1747 = vmatpush1.msra.mxu0 0.0
        %1748 = vmatprep.subr.mxu0 0.0
        %1749 = vmatpush1.msra.mxu0 0.0
        %1750 = vmatprep.subr.mxu0 0.0
        %1751 = vmatpush1.msra.mxu0 0.0
        %1752 = vmatprep.subr.mxu0 0.0
        %1753 = vmatpush1.msra.mxu0 0.0
        %1754 = vmatprep.subr.mxu0 0.0
        %1755 = vmatpush1.msra.mxu0 0.0
        %1756 = vmatprep.subr.mxu0 0.0
        %1757 = vmatpush1.msra.mxu0 0.0
        %1758 = vmatprep.subr.mxu0 0.0
        %1759 = vmatpush1.msra.mxu0 0.0
        %1760 = vmatprep.subr.mxu0 0.0
        %1761 = vmatpush1.msra.mxu0 0.0
        %1762 = vmatprep.mubr.f32.mxu0 0.0
        %1763 = vmatmul.mubr.f32.gmra.mrb[0].mxu0 %v1696
        %v1764 = vpop.f32.mrb[0].mxu0
        %v1765 = vadd.f32 0.0, %v1764
        %v1766 = vpop.f32.mrb[0].mxu0
        %1767 = vdwg.mxu0
        %v1769 = vsel %vm960, %v1543, 0
        %1771 = vmatprep.subr.mxu0 0.0
        %1772 = vmatpush1.msra.mxu0 %v955
        %1773 = vmatprep.subr.mxu0 0.0
        %1774 = vmatpush1.msra.mxu0 0.0
        %1775 = vmatprep.subr.mxu0 0.0
        %1776 = vmatpush1.msra.mxu0 0.0
        %1777 = vmatprep.subr.mxu0 0.0
        %1778 = vmatpush1.msra.mxu0 0.0
        %1779 = vmatprep.subr.mxu0 0.0
        %1780 = vmatpush1.msra.mxu0 0.0
        %1781 = vmatprep.subr.mxu0 0.0
        %1782 = vmatpush1.msra.mxu0 0.0
        %1783 = vmatprep.subr.mxu0 0.0
        %1784 = vmatpush1.msra.mxu0 0.0
        %1785 = vmatprep.subr.mxu0 0.0
        %1786 = vmatpush1.msra.mxu0 0.0
        %1787 = vmatprep.subr.mxu0 0.0
        %1788 = vmatpush1.msra.mxu0 0.0
        %1789 = vmatprep.subr.mxu0 0.0
        %1790 = vmatpush1.msra.mxu0 0.0
        %1791 = vmatprep.subr.mxu0 0.0
        %1792 = vmatpush1.msra.mxu0 0.0
        %1793 = vmatprep.subr.mxu0 0.0
        %1794 = vmatpush1.msra.mxu0 0.0
        %1795 = vmatprep.subr.mxu0 0.0
        %1796 = vmatpush1.msra.mxu0 0.0
        %1797 = vmatprep.subr.mxu0 0.0
        %1798 = vmatpush1.msra.mxu0 0.0
        %1799 = vmatprep.subr.mxu0 0.0
        %1800 = vmatpush1.msra.mxu0 0.0
        %1801 = vmatprep.subr.mxu0 0.0
        %1802 = vmatpush1.msra.mxu0 0.0
        %1803 = vmatprep.subr.mxu0 0.0
        %1804 = vmatpush1.msra.mxu0 0.0
        %1805 = vmatprep.subr.mxu0 0.0
        %1806 = vmatpush1.msra.mxu0 0.0
        %1807 = vmatprep.subr.mxu0 0.0
        %1808 = vmatpush1.msra.mxu0 0.0
        %1809 = vmatprep.subr.mxu0 0.0
        %1810 = vmatpush1.msra.mxu0 0.0
        %1811 = vmatprep.subr.mxu0 0.0
        %1812 = vmatpush1.msra.mxu0 0.0
        %1813 = vmatprep.subr.mxu0 0.0
        %1814 = vmatpush1.msra.mxu0 0.0
        %1815 = vmatprep.subr.mxu0 0.0
        %1816 = vmatpush1.msra.mxu0 0.0
        %1817 = vmatprep.subr.mxu0 0.0
        %1818 = vmatpush1.msra.mxu0 0.0
        %1819 = vmatprep.subr.mxu0 0.0
        %1820 = vmatpush1.msra.mxu0 0.0
        %1821 = vmatprep.subr.mxu0 0.0
        %1822 = vmatpush1.msra.mxu0 0.0
        %1823 = vmatprep.subr.mxu0 0.0
        %1824 = vmatpush1.msra.mxu0 0.0
        %1825 = vmatprep.subr.mxu0 0.0
        %1826 = vmatpush1.msra.mxu0 0.0
        %1827 = vmatprep.subr.mxu0 0.0
        %1828 = vmatpush1.msra.mxu0 0.0
        %1829 = vmatprep.subr.mxu0 0.0
        %1830 = vmatpush1.msra.mxu0 0.0
        %1831 = vmatprep.subr.mxu0 0.0
        %1832 = vmatpush1.msra.mxu0 0.0
        %1833 = vmatprep.subr.mxu0 0.0
        %1834 = vmatpush1.msra.mxu0 0.0
        %1835 = vmatprep.mubr.f32.mxu0 0.0
        %1836 = vmatmul.mubr.f32.gmra.mrb[0].mxu0 %v1769
        %v1837 = vpop.f32.mrb[0].mxu0
        %v1838 = vadd.f32 0.0, %v1837
        %v1839 = vpop.f32.mrb[0].mxu0
        %1840 = vdwg.mxu0
        %v1842 = vsel %vm960, %v1619, 0
        %1844 = vmatprep.subr.mxu0 0.0
        %1845 = vmatpush1.msra.mxu0 %v956
        %1846 = vmatprep.subr.mxu0 0.0
        %1847 = vmatpush1.msra.mxu0 0.0
        %1848 = vmatprep.subr.mxu0 0.0
        %1849 = vmatpush1.msra.mxu0 0.0
        %1850 = vmatprep.subr.mxu0 0.0
        %1851 = vmatpush1.msra.mxu0 0.0
        %1852 = vmatprep.subr.mxu0 0.0
        %1853 = vmatpush1.msra.mxu0 0.0
        %1854 = vmatprep.subr.mxu0 0.0
        %1855 = vmatpush1.msra.mxu0 0.0
        %1856 = vmatprep.subr.mxu0 0.0
        %1857 = vmatpush1.msra.mxu0 0.0
        %1858 = vmatprep.subr.mxu0 0.0
        %1859 = vmatpush1.msra.mxu0 0.0
        %1860 = vmatprep.subr.mxu0 0.0
        %1861 = vmatpush1.msra.mxu0 0.0
        %1862 = vmatprep.subr.mxu0 0.0
        %1863 = vmatpush1.msra.mxu0 0.0
        %1864 = vmatprep.subr.mxu0 0.0
        %1865 = vmatpush1.msra.mxu0 0.0
        %1866 = vmatprep.subr.mxu0 0.0
        %1867 = vmatpush1.msra.mxu0 0.0
        %1868 = vmatprep.subr.mxu0 0.0
        %1869 = vmatpush1.msra.mxu0 0.0
        %1870 = vmatprep.subr.mxu0 0.0
        %1871 = vmatpush1.msra.mxu0 0.0
        %1872 = vmatprep.subr.mxu0 0.0
        %1873 = vmatpush1.msra.mxu0 0.0
        %1874 = vmatprep.subr.mxu0 0.0
        %1875 = vmatpush1.msra.mxu0 0.0
        %1876 = vmatprep.subr.mxu0 0.0
        %1877 = vmatpush1.msra.mxu0 0.0
        %1878 = vmatprep.subr.mxu0 0.0
        %1879 = vmatpush1.msra.mxu0 0.0
        %1880 = vmatprep.subr.mxu0 0.0
        %1881 = vmatpush1.msra.mxu0 0.0
        %1882 = vmatprep.subr.mxu0 0.0
        %1883 = vmatpush1.msra.mxu0 0.0
        %1884 = vmatprep.subr.mxu0 0.0
        %1885 = vmatpush1.msra.mxu0 0.0
        %1886 = vmatprep.subr.mxu0 0.0
        %1887 = vmatpush1.msra.mxu0 0.0
        %1888 = vmatprep.subr.mxu0 0.0
        %1889 = vmatpush1.msra.mxu0 0.0
        %1890 = vmatprep.subr.mxu0 0.0
        %1891 = vmatpush1.msra.mxu0 0.0
        %1892 = vmatprep.subr.mxu0 0.0
        %1893 = vmatpush1.msra.mxu0 0.0
        %1894 = vmatprep.subr.mxu0 0.0
        %1895 = vmatpush1.msra.mxu0 0.0
        %1896 = vmatprep.subr.mxu0 0.0
        %1897 = vmatpush1.msra.mxu0 0.0
        %1898 = vmatprep.subr.mxu0 0.0
        %1899 = vmatpush1.msra.mxu0 0.0
        %1900 = vmatprep.subr.mxu0 0.0
        %1901 = vmatpush1.msra.mxu0 0.0
        %1902 = vmatprep.subr.mxu0 0.0
        %1903 = vmatpush1.msra.mxu0 0.0
        %1904 = vmatprep.subr.mxu0 0.0
        %1905 = vmatpush1.msra.mxu0 0.0
        %1906 = vmatprep.subr.mxu0 0.0
        %1907 = vmatpush1.msra.mxu0 0.0
        %1908 = vmatprep.mubr.f32.mxu0 0.0
        %1909 = vmatmul.mubr.f32.gmra.mrb[0].mxu0 %v1842
        %v1910 = vpop.f32.mrb[0].mxu0
        %v1911 = vadd.f32 0.0, %v1910
        %v1912 = vpop.f32.mrb[0].mxu0
        %1913 = vdwg.mxu0
        %v1914 = vsel %vm669, %v1692, 0.0
        %v1915 = vsel %vm669, %v1765, 0.0
        %v1916 = vadd.f32 %v1914, %v1915
        %v1917 = vsel %vm669, %v1838, 0.0
        %v1918 = vadd.f32 %v1916, %v1917
        %v1919 = vsel %vm669, %v1911, 0.0
        %v1920 = vadd.f32 %v1918, %v1919
        %v1921 = vadd.f32 %v1920, %v649
        %v1922 = vld [vmem:[%s6] sm:$0x1]
        %v1923 = vld [vmem:[%s7] sm:$0x1]
        %v1924 = vsel %vm669, %v1921, 0.0
        %1925 = vadd.xlane.f32.xlu0 %v1924
        %v1926 = vpop.xlane.xlu0 %1925
        %v1927 = vrcp.pop 32.0
        %v1928 = vmul.f32 %v1926, %v1927
        %v1929 = vsub.f32 %v1921, %v1928
        %v1930 = vmul.f32 %v1929, %v1929
        %v1931 = vsel %vm669, %v1930, 0.0
        %1932 = vadd.xlane.f32.xlu0 %v1931
        %v1933 = vpop.xlane.xlu0 %1932
        %v1934 = vmul.f32 %v1933, %v1927
        %v1935 = vadd.f32 %v1934, 1e-05
        %v1936 = vrsqrt.pop %v1935
        %v1937 = vmul.f32 %v1929, %v1936
        %v1939 = vlaneseq
        %v1940 = vshrl.u32 %v1939, 7
        %v1941 = vsub.s32 0, %v1940
        %v1942 = vrot.slane %v1922, %v1941
        %v1944 = vmul.f32 %v1937, %v1942
        %v1946 = vlaneseq
        %v1947 = vshrl.u32 %v1946, 7
        %v1948 = vsub.s32 0, %v1947
        %v1949 = vrot.slane %v1923, %v1948
        %v1951 = vadd.f32 %v1944, %v1949
        %v1952 = vld [vmem:[%s8] sm:$0xff]
        %v1953 = vld [vmem:[%s8 + $0x8] sm:$0xff]
        %v1954 = vld [vmem:[%s8 + $0x10] sm:$0xff]
        %v1955 = vld [vmem:[%s8 + $0x18] sm:$0xff]
        %v1956 = vld [vmem:[%s8 + $0x20] sm:$0xff]
        %v1957 = vld [vmem:[%s8 + $0x28] sm:$0xff]
        %v1958 = vld [vmem:[%s8 + $0x30] sm:$0xff]
        %v1959 = vld [vmem:[%s8 + $0x38] sm:$0xff]
        %v1960 = vld [vmem:[%s8 + $0x40] sm:$0xff]
        %v1961 = vld [vmem:[%s8 + $0x48] sm:$0xff]
        %v1962 = vld [vmem:[%s8 + $0x50] sm:$0xff]
        %v1963 = vld [vmem:[%s8 + $0x58] sm:$0xff]
        %v1964 = vld [vmem:[%s8 + $0x60] sm:$0xff]
        %v1965 = vld [vmem:[%s8 + $0x68] sm:$0xff]
        %v1966 = vld [vmem:[%s8 + $0x70] sm:$0xff]
        %v1967 = vld [vmem:[%s8 + $0x78] sm:$0xff]
        %v1969 = vsel %vm669, %v1951, 0
        %1971 = vmatprep.subr.mxu0 0.0
        %1972 = vmatpush1.msra.mxu0 %v1952
        %1973 = vmatprep.subr.mxu0 0.0
        %1974 = vmatpush1.msra.mxu0 %v1953
        %1975 = vmatprep.subr.mxu0 0.0
        %1976 = vmatpush1.msra.mxu0 %v1954
        %1977 = vmatprep.subr.mxu0 0.0
        %1978 = vmatpush1.msra.mxu0 %v1955
        %1979 = vmatprep.subr.mxu0 0.0
        %1980 = vmatpush1.msra.mxu0 0.0
        %1981 = vmatprep.subr.mxu0 0.0
        %1982 = vmatpush1.msra.mxu0 0.0
        %1983 = vmatprep.subr.mxu0 0.0
        %1984 = vmatpush1.msra.mxu0 0.0
        %1985 = vmatprep.subr.mxu0 0.0
        %1986 = vmatpush1.msra.mxu0 0.0
        %1987 = vmatprep.subr.mxu0 0.0
        %1988 = vmatpush1.msra.mxu0 0.0
        %1989 = vmatprep.subr.mxu0 0.0
        %1990 = vmatpush1.msra.mxu0 0.0
        %1991 = vmatprep.subr.mxu0 0.0
        %1992 = vmatpush1.msra.mxu0 0.0
        %1993 = vmatprep.subr.mxu0 0.0
        %1994 = vmatpush1.msra.mxu0 0.0
        %1995 = vmatprep.subr.mxu0 0.0
        %1996 = vmatpush1.msra.mxu0 0.0
        %1997 = vmatprep.subr.mxu0 0.0
        %1998 = vmatpush1.msra.mxu0 0.0
        %1999 = vmatprep.subr.mxu0 0.0
        %2000 = vmatpush1.msra.mxu0 0.0
        %2001 = vmatprep.subr.mxu0 0.0
        %2002 = vmatpush1.msra.mxu0 0.0
        %2003 = vmatprep.subr.mxu0 0.0
        %2004 = vmatpush1.msra.mxu0 0.0
        %2005 = vmatprep.subr.mxu0 0.0
        %2006 = vmatpush1.msra.mxu0 0.0
        %2007 = vmatprep.subr.mxu0 0.0
        %2008 = vmatpush1.msra.mxu0 0.0
        %2009 = vmatprep.subr.mxu0 0.0
        %2010 = vmatpush1.msra.mxu0 0.0
        %2011 = vmatprep.subr.mxu0 0.0
        %2012 = vmatpush1.msra.mxu0 0.0
        %2013 = vmatprep.subr.mxu0 0.0
        %2014 = vmatpush1.msra.mxu0 0.0
        %2015 = vmatprep.subr.mxu0 0.0
        %2016 = vmatpush1.msra.mxu0 0.0
        %2017 = vmatprep.subr.mxu0 0.0
        %2018 = vmatpush1.msra.mxu0 0.0
        %2019 = vmatprep.subr.mxu0 0.0
        %2020 = vmatpush1.msra.mxu0 0.0
        %2021 = vmatprep.subr.mxu0 0.0
        %2022 = vmatpush1.msra.mxu0 0.0
        %2023 = vmatprep.subr.mxu0 0.0
        %2024 = vmatpush1.msra.mxu0 0.0
        %2025 = vmatprep.subr.mxu0 0.0
        %2026 = vmatpush1.msra.mxu0 0.0
        %2027 = vmatprep.subr.mxu0 0.0
        %2028 = vmatpush1.msra.mxu0 0.0
        %2029 = vmatprep.subr.mxu0 0.0
        %2030 = vmatpush1.msra.mxu0 0.0
        %2031 = vmatprep.subr.mxu0 0.0
        %2032 = vmatpush1.msra.mxu0 0.0
        %2033 = vmatprep.subr.mxu0 0.0
        %2034 = vmatpush1.msra.mxu0 0.0
        %2035 = vmatprep.mubr.f32.mxu0 0.0
        %2036 = vmatmul.mubr.f32.gmra.mrb[0].mxu0 %v1969
        %v2037 = vpop.f32.mrb[0].mxu0
        %v2038 = vadd.f32 0.0, %v2037
        %v2039 = vpop.f32.mrb[0].mxu0
        %2040 = vdwg.mxu0
        %2041 = vmatprep.subr.mxu0 0.0
        %2042 = vmatpush1.msra.mxu0 %v1956
        %2043 = vmatprep.subr.mxu0 0.0
        %2044 = vmatpush1.msra.mxu0 %v1957
        %2045 = vmatprep.subr.mxu0 0.0
        %2046 = vmatpush1.msra.mxu0 %v1958
        %2047 = vmatprep.subr.mxu0 0.0
        %2048 = vmatpush1.msra.mxu0 %v1959
        %2049 = vmatprep.subr.mxu0 0.0
        %2050 = vmatpush1.msra.mxu0 0.0
        %2051 = vmatprep.subr.mxu0 0.0
        %2052 = vmatpush1.msra.mxu0 0.0
        %2053 = vmatprep.subr.mxu0 0.0
        %2054 = vmatpush1.msra.mxu0 0.0
        %2055 = vmatprep.subr.mxu0 0.0
        %2056 = vmatpush1.msra.mxu0 0.0
        %2057 = vmatprep.subr.mxu0 0.0
        %2058 = vmatpush1.msra.mxu0 0.0
        %2059 = vmatprep.subr.mxu0 0.0
        %2060 = vmatpush1.msra.mxu0 0.0
        %2061 = vmatprep.subr.mxu0 0.0
        %2062 = vmatpush1.msra.mxu0 0.0
        %2063 = vmatprep.subr.mxu0 0.0
        %2064 = vmatpush1.msra.mxu0 0.0
        %2065 = vmatprep.subr.mxu0 0.0
        %2066 = vmatpush1.msra.mxu0 0.0
        %2067 = vmatprep.subr.mxu0 0.0
        %2068 = vmatpush1.msra.mxu0 0.0
        %2069 = vmatprep.subr.mxu0 0.0
        %2070 = vmatpush1.msra.mxu0 0.0
        %2071 = vmatprep.subr.mxu0 0.0
        %2072 = vmatpush1.msra.mxu0 0.0
        %2073 = vmatprep.subr.mxu0 0.0
        %2074 = vmatpush1.msra.mxu0 0.0
        %2075 = vmatprep.subr.mxu0 0.0
        %2076 = vmatpush1.msra.mxu0 0.0
        %2077 = vmatprep.subr.mxu0 0.0
        %2078 = vmatpush1.msra.mxu0 0.0
        %2079 = vmatprep.subr.mxu0 0.0
        %2080 = vmatpush1.msra.mxu0 0.0
        %2081 = vmatprep.subr.mxu0 0.0
        %2082 = vmatpush1.msra.mxu0 0.0
        %2083 = vmatprep.subr.mxu0 0.0
        %2084 = vmatpush1.msra.mxu0 0.0
        %2085 = vmatprep.subr.mxu0 0.0
        %2086 = vmatpush1.msra.mxu0 0.0
        %2087 = vmatprep.subr.mxu0 0.0
        %2088 = vmatpush1.msra.mxu0 0.0
        %2089 = vmatprep.subr.mxu0 0.0
        %2090 = vmatpush1.msra.mxu0 0.0
        %2091 = vmatprep.subr.mxu0 0.0
        %2092 = vmatpush1.msra.mxu0 0.0
        %2093 = vmatprep.subr.mxu0 0.0
        %2094 = vmatpush1.msra.mxu0 0.0
        %2095 = vmatprep.subr.mxu0 0.0
        %2096 = vmatpush1.msra.mxu0 0.0
        %2097 = vmatprep.subr.mxu0 0.0
        %2098 = vmatpush1.msra.mxu0 0.0
        %2099 = vmatprep.subr.mxu0 0.0
        %2100 = vmatpush1.msra.mxu0 0.0
        %2101 = vmatprep.subr.mxu0 0.0
        %2102 = vmatpush1.msra.mxu0 0.0
        %2103 = vmatprep.subr.mxu0 0.0
        %2104 = vmatpush1.msra.mxu0 0.0
        %2105 = vmatprep.mubr.f32.mxu0 0.0
        %2106 = vmatmul.mubr.f32.gmra.mrb[0].mxu0 %v1969
        %v2107 = vpop.f32.mrb[0].mxu0
        %v2108 = vadd.f32 0.0, %v2107
        %v2109 = vpop.f32.mrb[0].mxu0
        %2110 = vdwg.mxu0
        %2111 = vmatprep.subr.mxu0 0.0
        %2112 = vmatpush1.msra.mxu0 %v1960
        %2113 = vmatprep.subr.mxu0 0.0
        %2114 = vmatpush1.msra.mxu0 %v1961
        %2115 = vmatprep.subr.mxu0 0.0
        %2116 = vmatpush1.msra.mxu0 %v1962
        %2117 = vmatprep.subr.mxu0 0.0
        %2118 = vmatpush1.msra.mxu0 %v1963
        %2119 = vmatprep.subr.mxu0 0.0
        %2120 = vmatpush1.msra.mxu0 0.0
        %2121 = vmatprep.subr.mxu0 0.0
        %2122 = vmatpush1.msra.mxu0 0.0
        %2123 = vmatprep.subr.mxu0 0.0
        %2124 = vmatpush1.msra.mxu0 0.0
        %2125 = vmatprep.subr.mxu0 0.0
        %2126 = vmatpush1.msra.mxu0 0.0
        %2127 = vmatprep.subr.mxu0 0.0
        %2128 = vmatpush1.msra.mxu0 0.0
        %2129 = vmatprep.subr.mxu0 0.0
        %2130 = vmatpush1.msra.mxu0 0.0
        %2131 = vmatprep.subr.mxu0 0.0
        %2132 = vmatpush1.msra.mxu0 0.0
        %2133 = vmatprep.subr.mxu0 0.0
        %2134 = vmatpush1.msra.mxu0 0.0
        %2135 = vmatprep.subr.mxu0 0.0
        %2136 = vmatpush1.msra.mxu0 0.0
        %2137 = vmatprep.subr.mxu0 0.0
        %2138 = vmatpush1.msra.mxu0 0.0
        %2139 = vmatprep.subr.mxu0 0.0
        %2140 = vmatpush1.msra.mxu0 0.0
        %2141 = vmatprep.subr.mxu0 0.0
        %2142 = vmatpush1.msra.mxu0 0.0
        %2143 = vmatprep.subr.mxu0 0.0
        %2144 = vmatpush1.msra.mxu0 0.0
        %2145 = vmatprep.subr.mxu0 0.0
        %2146 = vmatpush1.msra.mxu0 0.0
        %2147 = vmatprep.subr.mxu0 0.0
        %2148 = vmatpush1.msra.mxu0 0.0
        %2149 = vmatprep.subr.mxu0 0.0
        %2150 = vmatpush1.msra.mxu0 0.0
        %2151 = vmatprep.subr.mxu0 0.0
        %2152 = vmatpush1.msra.mxu0 0.0
        %2153 = vmatprep.subr.mxu0 0.0
        %2154 = vmatpush1.msra.mxu0 0.0
        %2155 = vmatprep.subr.mxu0 0.0
        %2156 = vmatpush1.msra.mxu0 0.0
        %2157 = vmatprep.subr.mxu0 0.0
        %2158 = vmatpush1.msra.mxu0 0.0
        %2159 = vmatprep.subr.mxu0 0.0
        %2160 = vmatpush1.msra.mxu0 0.0
        %2161 = vmatprep.subr.mxu0 0.0
        %2162 = vmatpush1.msra.mxu0 0.0
        %2163 = vmatprep.subr.mxu0 0.0
        %2164 = vmatpush1.msra.mxu0 0.0
        %2165 = vmatprep.subr.mxu0 0.0
        %2166 = vmatpush1.msra.mxu0 0.0
        %2167 = vmatprep.subr.mxu0 0.0
        %2168 = vmatpush1.msra.mxu0 0.0
        %2169 = vmatprep.subr.mxu0 0.0
        %2170 = vmatpush1.msra.mxu0 0.0
        %2171 = vmatprep.subr.mxu0 0.0
        %2172 = vmatpush1.msra.mxu0 0.0
        %2173 = vmatprep.subr.mxu0 0.0
        %2174 = vmatpush1.msra.mxu0 0.0
        %2175 = vmatprep.mubr.f32.mxu0 0.0
        %2176 = vmatmul.mubr.f32.gmra.mrb[0].mxu0 %v1969
        %v2177 = vpop.f32.mrb[0].mxu0
        %v2178 = vadd.f32 0.0, %v2177
        %v2179 = vpop.f32.mrb[0].mxu0
        %2180 = vdwg.mxu0
        %2181 = vmatprep.subr.mxu0 0.0
        %2182 = vmatpush1.msra.mxu0 %v1964
        %2183 = vmatprep.subr.mxu0 0.0
        %2184 = vmatpush1.msra.mxu0 %v1965
        %2185 = vmatprep.subr.mxu0 0.0
        %2186 = vmatpush1.msra.mxu0 %v1966
        %2187 = vmatprep.subr.mxu0 0.0
        %2188 = vmatpush1.msra.mxu0 %v1967
        %2189 = vmatprep.subr.mxu0 0.0
        %2190 = vmatpush1.msra.mxu0 0.0
        %2191 = vmatprep.subr.mxu0 0.0
        %2192 = vmatpush1.msra.mxu0 0.0
        %2193 = vmatprep.subr.mxu0 0.0
        %2194 = vmatpush1.msra.mxu0 0.0
        %2195 = vmatprep.subr.mxu0 0.0
        %2196 = vmatpush1.msra.mxu0 0.0
        %2197 = vmatprep.subr.mxu0 0.0
        %2198 = vmatpush1.msra.mxu0 0.0
        %2199 = vmatprep.subr.mxu0 0.0
        %2200 = vmatpush1.msra.mxu0 0.0
        %2201 = vmatprep.subr.mxu0 0.0
        %2202 = vmatpush1.msra.mxu0 0.0
        %2203 = vmatprep.subr.mxu0 0.0
        %2204 = vmatpush1.msra.mxu0 0.0
        %2205 = vmatprep.subr.mxu0 0.0
        %2206 = vmatpush1.msra.mxu0 0.0
        %2207 = vmatprep.subr.mxu0 0.0
        %2208 = vmatpush1.msra.mxu0 0.0
        %2209 = vmatprep.subr.mxu0 0.0
        %2210 = vmatpush1.msra.mxu0 0.0
        %2211 = vmatprep.subr.mxu0 0.0
        %2212 = vmatpush1.msra.mxu0 0.0
        %2213 = vmatprep.subr.mxu0 0.0
        %2214 = vmatpush1.msra.mxu0 0.0
        %2215 = vmatprep.subr.mxu0 0.0
        %2216 = vmatpush1.msra.mxu0 0.0
        %2217 = vmatprep.subr.mxu0 0.0
        %2218 = vmatpush1.msra.mxu0 0.0
        %2219 = vmatprep.subr.mxu0 0.0
        %2220 = vmatpush1.msra.mxu0 0.0
        %2221 = vmatprep.subr.mxu0 0.0
        %2222 = vmatpush1.msra.mxu0 0.0
        %2223 = vmatprep.subr.mxu0 0.0
        %2224 = vmatpush1.msra.mxu0 0.0
        %2225 = vmatprep.subr.mxu0 0.0
        %2226 = vmatpush1.msra.mxu0 0.0
        %2227 = vmatprep.subr.mxu0 0.0
        %2228 = vmatpush1.msra.mxu0 0.0
        %2229 = vmatprep.subr.mxu0 0.0
        %2230 = vmatpush1.msra.mxu0 0.0
        %2231 = vmatprep.subr.mxu0 0.0
        %2232 = vmatpush1.msra.mxu0 0.0
        %2233 = vmatprep.subr.mxu0 0.0
        %2234 = vmatpush1.msra.mxu0 0.0
        %2235 = vmatprep.subr.mxu0 0.0
        %2236 = vmatpush1.msra.mxu0 0.0
        %2237 = vmatprep.subr.mxu0 0.0
        %2238 = vmatpush1.msra.mxu0 0.0
        %2239 = vmatprep.subr.mxu0 0.0
        %2240 = vmatpush1.msra.mxu0 0.0
        %2241 = vmatprep.subr.mxu0 0.0
        %2242 = vmatpush1.msra.mxu0 0.0
        %2243 = vmatprep.subr.mxu0 0.0
        %2244 = vmatpush1.msra.mxu0 0.0
        %2245 = vmatprep.mubr.f32.mxu0 0.0
        %2246 = vmatmul.mubr.f32.gmra.mrb[0].mxu0 %v1969
        %v2247 = vpop.f32.mrb[0].mxu0
        %v2248 = vadd.f32 0.0, %v2247
        %v2249 = vpop.f32.mrb[0].mxu0
        %2250 = vdwg.mxu0
        %v2251 = vld [vmem:[%s9] sm:$0xff]
        %v2252 = vld [vmem:[%s9 + $0x8] sm:$0xff]
        %v2253 = vld [vmem:[%s9 + $0x10] sm:$0xff]
        %v2254 = vld [vmem:[%s9 + $0x18] sm:$0xff]
        %v2255 = vld [vmem:[%s9 + $0x20] sm:$0xff]
        %v2256 = vld [vmem:[%s9 + $0x28] sm:$0xff]
        %v2257 = vld [vmem:[%s9 + $0x30] sm:$0xff]
        %v2258 = vld [vmem:[%s9 + $0x38] sm:$0xff]
        %v2259 = vld [vmem:[%s9 + $0x40] sm:$0xff]
        %v2260 = vld [vmem:[%s9 + $0x48] sm:$0xff]
        %v2261 = vld [vmem:[%s9 + $0x50] sm:$0xff]
        %v2262 = vld [vmem:[%s9 + $0x58] sm:$0xff]
        %v2263 = vld [vmem:[%s9 + $0x60] sm:$0xff]
        %v2264 = vld [vmem:[%s9 + $0x68] sm:$0xff]
        %v2265 = vld [vmem:[%s9 + $0x70] sm:$0xff]
        %v2266 = vld [vmem:[%s9 + $0x78] sm:$0xff]
        %v2268 = vsel %vm669, %v650, 0
        %2270 = vmatprep.subr.mxu0 0.0
        %2271 = vmatpush1.msra.mxu0 %v2251
        %2272 = vmatprep.subr.mxu0 0.0
        %2273 = vmatpush1.msra.mxu0 %v2252
        %2274 = vmatprep.subr.mxu0 0.0
        %2275 = vmatpush1.msra.mxu0 %v2253
        %2276 = vmatprep.subr.mxu0 0.0
        %2277 = vmatpush1.msra.mxu0 %v2254
        %2278 = vmatprep.subr.mxu0 0.0
        %2279 = vmatpush1.msra.mxu0 0.0
        %2280 = vmatprep.subr.mxu0 0.0
        %2281 = vmatpush1.msra.mxu0 0.0
        %2282 = vmatprep.subr.mxu0 0.0
        %2283 = vmatpush1.msra.mxu0 0.0
        %2284 = vmatprep.subr.mxu0 0.0
        %2285 = vmatpush1.msra.mxu0 0.0
        %2286 = vmatprep.subr.mxu0 0.0
        %2287 = vmatpush1.msra.mxu0 0.0
        %2288 = vmatprep.subr.mxu0 0.0
        %2289 = vmatpush1.msra.mxu0 0.0
        %2290 = vmatprep.subr.mxu0 0.0
        %2291 = vmatpush1.msra.mxu0 0.0
        %2292 = vmatprep.subr.mxu0 0.0
        %2293 = vmatpush1.msra.mxu0 0.0
        %2294 = vmatprep.subr.mxu0 0.0
        %2295 = vmatpush1.msra.mxu0 0.0
        %2296 = vmatprep.subr.mxu0 0.0
        %2297 = vmatpush1.msra.mxu0 0.0
        %2298 = vmatprep.subr.mxu0 0.0
        %2299 = vmatpush1.msra.mxu0 0.0
        %2300 = vmatprep.subr.mxu0 0.0
        %2301 = vmatpush1.msra.mxu0 0.0
        %2302 = vmatprep.subr.mxu0 0.0
        %2303 = vmatpush1.msra.mxu0 0.0
        %2304 = vmatprep.subr.mxu0 0.0
        %2305 = vmatpush1.msra.mxu0 0.0
        %2306 = vmatprep.subr.mxu0 0.0
        %2307 = vmatpush1.msra.mxu0 0.0
        %2308 = vmatprep.subr.mxu0 0.0
        %2309 = vmatpush1.msra.mxu0 0.0
        %2310 = vmatprep.subr.mxu0 0.0
        %2311 = vmatpush1.msra.mxu0 0.0
        %2312 = vmatprep.subr.mxu0 0.0
        %2313 = vmatpush1.msra.mxu0 0.0
        %2314 = vmatprep.subr.mxu0 0.0
        %2315 = vmatpush1.msra.mxu0 0.0
        %2316 = vmatprep.subr.mxu0 0.0
        %2317 = vmatpush1.msra.mxu0 0.0
        %2318 = vmatprep.subr.mxu0 0.0
        %2319 = vmatpush1.msra.mxu0 0.0
        %2320 = vmatprep.subr.mxu0 0.0
        %2321 = vmatpush1.msra.mxu0 0.0
        %2322 = vmatprep.subr.mxu0 0.0
        %2323 = vmatpush1.msra.mxu0 0.0
        %2324 = vmatprep.subr.mxu0 0.0
        %2325 = vmatpush1.msra.mxu0 0.0
        %2326 = vmatprep.subr.mxu0 0.0
        %2327 = vmatpush1.msra.mxu0 0.0
        %2328 = vmatprep.subr.mxu0 0.0
        %2329 = vmatpush1.msra.mxu0 0.0
        %2330 = vmatprep.subr.mxu0 0.0
        %2331 = vmatpush1.msra.mxu0 0.0
        %2332 = vmatprep.subr.mxu0 0.0
        %2333 = vmatpush1.msra.mxu0 0.0
        %2334 = vmatprep.mubr.f32.mxu0 0.0
        %2335 = vmatmul.mubr.f32.gmra.mrb[0].mxu0 %v2268
        %v2336 = vpop.f32.mrb[0].mxu0
        %v2337 = vadd.f32 0.0, %v2336
        %v2338 = vpop.f32.mrb[0].mxu0
        %2339 = vdwg.mxu0
        %2340 = vmatprep.subr.mxu0 0.0
        %2341 = vmatpush1.msra.mxu0 %v2255
        %2342 = vmatprep.subr.mxu0 0.0
        %2343 = vmatpush1.msra.mxu0 %v2256
        %2344 = vmatprep.subr.mxu0 0.0
        %2345 = vmatpush1.msra.mxu0 %v2257
        %2346 = vmatprep.subr.mxu0 0.0
        %2347 = vmatpush1.msra.mxu0 %v2258
        %2348 = vmatprep.subr.mxu0 0.0
        %2349 = vmatpush1.msra.mxu0 0.0
        %2350 = vmatprep.subr.mxu0 0.0
        %2351 = vmatpush1.msra.mxu0 0.0
        %2352 = vmatprep.subr.mxu0 0.0
        %2353 = vmatpush1.msra.mxu0 0.0
        %2354 = vmatprep.subr.mxu0 0.0
        %2355 = vmatpush1.msra.mxu0 0.0
        %2356 = vmatprep.subr.mxu0 0.0
        %2357 = vmatpush1.msra.mxu0 0.0
        %2358 = vmatprep.subr.mxu0 0.0
        %2359 = vmatpush1.msra.mxu0 0.0
        %2360 = vmatprep.subr.mxu0 0.0
        %2361 = vmatpush1.msra.mxu0 0.0
        %2362 = vmatprep.subr.mxu0 0.0
        %2363 = vmatpush1.msra.mxu0 0.0
        %2364 = vmatprep.subr.mxu0 0.0
        %2365 = vmatpush1.msra.mxu0 0.0
        %2366 = vmatprep.subr.mxu0 0.0
        %2367 = vmatpush1.msra.mxu0 0.0
        %2368 = vmatprep.subr.mxu0 0.0
        %2369 = vmatpush1.msra.mxu0 0.0
        %2370 = vmatprep.subr.mxu0 0.0
        %2371 = vmatpush1.msra.mxu0 0.0
        %2372 = vmatprep.subr.mxu0 0.0
        %2373 = vmatpush1.msra.mxu0 0.0
        %2374 = vmatprep.subr.mxu0 0.0
        %2375 = vmatpush1.msra.mxu0 0.0
        %2376 = vmatprep.subr.mxu0 0.0
        %2377 = vmatpush1.msra.mxu0 0.0
        %2378 = vmatprep.subr.mxu0 0.0
        %2379 = vmatpush1.msra.mxu0 0.0
        %2380 = vmatprep.subr.mxu0 0.0
        %2381 = vmatpush1.msra.mxu0 0.0
        %2382 = vmatprep.subr.mxu0 0.0
        %2383 = vmatpush1.msra.mxu0 0.0
        %2384 = vmatprep.subr.mxu0 0.0
        %2385 = vmatpush1.msra.mxu0 0.0
        %2386 = vmatprep.subr.mxu0 0.0
        %2387 = vmatpush1.msra.mxu0 0.0
        %2388 = vmatprep.subr.mxu0 0.0
        %2389 = vmatpush1.msra.mxu0 0.0
        %2390 = vmatprep.subr.mxu0 0.0
        %2391 = vmatpush1.msra.mxu0 0.0
        %2392 = vmatprep.subr.mxu0 0.0
        %2393 = vmatpush1.msra.mxu0 0.0
        %2394 = vmatprep.subr.mxu0 0.0
        %2395 = vmatpush1.msra.mxu0 0.0
        %2396 = vmatprep.subr.mxu0 0.0
        %2397 = vmatpush1.msra.mxu0 0.0
        %2398 = vmatprep.subr.mxu0 0.0
        %2399 = vmatpush1.msra.mxu0 0.0
        %2400 = vmatprep.subr.mxu0 0.0
        %2401 = vmatpush1.msra.mxu0 0.0
        %2402 = vmatprep.subr.mxu0 0.0
        %2403 = vmatpush1.msra.mxu0 0.0
        %2404 = vmatprep.mubr.f32.mxu0 0.0
        %2405 = vmatmul.mubr.f32.gmra.mrb[0].mxu0 %v2268
        %v2406 = vpop.f32.mrb[0].mxu0
        %v2407 = vadd.f32 0.0, %v2406
        %v2408 = vpop.f32.mrb[0].mxu0
        %2409 = vdwg.mxu0
        %2410 = vmatprep.subr.mxu0 0.0
        %2411 = vmatpush1.msra.mxu0 %v2259
        %2412 = vmatprep.subr.mxu0 0.0
        %2413 = vmatpush1.msra.mxu0 %v2260
        %2414 = vmatprep.subr.mxu0 0.0
        %2415 = vmatpush1.msra.mxu0 %v2261
        %2416 = vmatprep.subr.mxu0 0.0
        %2417 = vmatpush1.msra.mxu0 %v2262
        %2418 = vmatprep.subr.mxu0 0.0
        %2419 = vmatpush1.msra.mxu0 0.0
        %2420 = vmatprep.subr.mxu0 0.0
        %2421 = vmatpush1.msra.mxu0 0.0
        %2422 = vmatprep.subr.mxu0 0.0
        %2423 = vmatpush1.msra.mxu0 0.0
        %2424 = vmatprep.subr.mxu0 0.0
        %2425 = vmatpush1.msra.mxu0 0.0
        %2426 = vmatprep.subr.mxu0 0.0
        %2427 = vmatpush1.msra.mxu0 0.0
        %2428 = vmatprep.subr.mxu0 0.0
        %2429 = vmatpush1.msra.mxu0 0.0
        %2430 = vmatprep.subr.mxu0 0.0
        %2431 = vmatpush1.msra.mxu0 0.0
        %2432 = vmatprep.subr.mxu0 0.0
        %2433 = vmatpush1.msra.mxu0 0.0
        %2434 = vmatprep.subr.mxu0 0.0
        %2435 = vmatpush1.msra.mxu0 0.0
        %2436 = vmatprep.subr.mxu0 0.0
        %2437 = vmatpush1.msra.mxu0 0.0
        %2438 = vmatprep.subr.mxu0 0.0
        %2439 = vmatpush1.msra.mxu0 0.0
        %2440 = vmatprep.subr.mxu0 0.0
        %2441 = vmatpush1.msra.mxu0 0.0
        %2442 = vmatprep.subr.mxu0 0.0
        %2443 = vmatpush1.msra.mxu0 0.0
        %2444 = vmatprep.subr.mxu0 0.0
        %2445 = vmatpush1.msra.mxu0 0.0
        %2446 = vmatprep.subr.mxu0 0.0
        %2447 = vmatpush1.msra.mxu0 0.0
        %2448 = vmatprep.subr.mxu0 0.0
        %2449 = vmatpush1.msra.mxu0 0.0
        %2450 = vmatprep.subr.mxu0 0.0
        %2451 = vmatpush1.msra.mxu0 0.0
        %2452 = vmatprep.subr.mxu0 0.0
        %2453 = vmatpush1.msra.mxu0 0.0
        %2454 = vmatprep.subr.mxu0 0.0
        %2455 = vmatpush1.msra.mxu0 0.0
        %2456 = vmatprep.subr.mxu0 0.0
        %2457 = vmatpush1.msra.mxu0 0.0
        %2458 = vmatprep.subr.mxu0 0.0
        %2459 = vmatpush1.msra.mxu0 0.0
        %2460 = vmatprep.subr.mxu0 0.0
        %2461 = vmatpush1.msra.mxu0 0.0
        %2462 = vmatprep.subr.mxu0 0.0
        %2463 = vmatpush1.msra.mxu0 0.0
        %2464 = vmatprep.subr.mxu0 0.0
        %2465 = vmatpush1.msra.mxu0 0.0
        %2466 = vmatprep.subr.mxu0 0.0
        %2467 = vmatpush1.msra.mxu0 0.0
        %2468 = vmatprep.subr.mxu0 0.0
        %2469 = vmatpush1.msra.mxu0 0.0
        %2470 = vmatprep.subr.mxu0 0.0
        %2471 = vmatpush1.msra.mxu0 0.0
        %2472 = vmatprep.subr.mxu0 0.0
        %2473 = vmatpush1.msra.mxu0 0.0
        %2474 = vmatprep.mubr.f32.mxu0 0.0
        %2475 = vmatmul.mubr.f32.gmra.mrb[0].mxu0 %v2268
        %v2476 = vpop.f32.mrb[0].mxu0
        %v2477 = vadd.f32 0.0, %v2476
        %v2478 = vpop.f32.mrb[0].mxu0
        %2479 = vdwg.mxu0
        %2480 = vmatprep.subr.mxu0 0.0
        %2481 = vmatpush1.msra.mxu0 %v2263
        %2482 = vmatprep.subr.mxu0 0.0
        %2483 = vmatpush1.msra.mxu0 %v2264
        %2484 = vmatprep.subr.mxu0 0.0
        %2485 = vmatpush1.msra.mxu0 %v2265
        %2486 = vmatprep.subr.mxu0 0.0
        %2487 = vmatpush1.msra.mxu0 %v2266
        %2488 = vmatprep.subr.mxu0 0.0
        %2489 = vmatpush1.msra.mxu0 0.0
        %2490 = vmatprep.subr.mxu0 0.0
        %2491 = vmatpush1.msra.mxu0 0.0
        %2492 = vmatprep.subr.mxu0 0.0
        %2493 = vmatpush1.msra.mxu0 0.0
        %2494 = vmatprep.subr.mxu0 0.0
        %2495 = vmatpush1.msra.mxu0 0.0
        %2496 = vmatprep.subr.mxu0 0.0
        %2497 = vmatpush1.msra.mxu0 0.0
        %2498 = vmatprep.subr.mxu0 0.0
        %2499 = vmatpush1.msra.mxu0 0.0
        %2500 = vmatprep.subr.mxu0 0.0
        %2501 = vmatpush1.msra.mxu0 0.0
        %2502 = vmatprep.subr.mxu0 0.0
        %2503 = vmatpush1.msra.mxu0 0.0
        %2504 = vmatprep.subr.mxu0 0.0
        %2505 = vmatpush1.msra.mxu0 0.0
        %2506 = vmatprep.subr.mxu0 0.0
        %2507 = vmatpush1.msra.mxu0 0.0
        %2508 = vmatprep.subr.mxu0 0.0
        %2509 = vmatpush1.msra.mxu0 0.0
        %2510 = vmatprep.subr.mxu0 0.0
        %2511 = vmatpush1.msra.mxu0 0.0
        %2512 = vmatprep.subr.mxu0 0.0
        %2513 = vmatpush1.msra.mxu0 0.0
        %2514 = vmatprep.subr.mxu0 0.0
        %2515 = vmatpush1.msra.mxu0 0.0
        %2516 = vmatprep.subr.mxu0 0.0
        %2517 = vmatpush1.msra.mxu0 0.0
        %2518 = vmatprep.subr.mxu0 0.0
        %2519 = vmatpush1.msra.mxu0 0.0
        %2520 = vmatprep.subr.mxu0 0.0
        %2521 = vmatpush1.msra.mxu0 0.0
        %2522 = vmatprep.subr.mxu0 0.0
        %2523 = vmatpush1.msra.mxu0 0.0
        %2524 = vmatprep.subr.mxu0 0.0
        %2525 = vmatpush1.msra.mxu0 0.0
        %2526 = vmatprep.subr.mxu0 0.0
        %2527 = vmatpush1.msra.mxu0 0.0
        %2528 = vmatprep.subr.mxu0 0.0
        %2529 = vmatpush1.msra.mxu0 0.0
        %2530 = vmatprep.subr.mxu0 0.0
        %2531 = vmatpush1.msra.mxu0 0.0
        %2532 = vmatprep.subr.mxu0 0.0
        %2533 = vmatpush1.msra.mxu0 0.0
        %2534 = vmatprep.subr.mxu0 0.0
        %2535 = vmatpush1.msra.mxu0 0.0
        %2536 = vmatprep.subr.mxu0 0.0
        %2537 = vmatpush1.msra.mxu0 0.0
        %2538 = vmatprep.subr.mxu0 0.0
        %2539 = vmatpush1.msra.mxu0 0.0
        %2540 = vmatprep.subr.mxu0 0.0
        %2541 = vmatpush1.msra.mxu0 0.0
        %2542 = vmatprep.subr.mxu0 0.0
        %2543 = vmatpush1.msra.mxu0 0.0
        %2544 = vmatprep.mubr.f32.mxu0 0.0
        %2545 = vmatmul.mubr.f32.gmra.mrb[0].mxu0 %v2268
        %v2546 = vpop.f32.mrb[0].mxu0
        %v2547 = vadd.f32 0.0, %v2546
        %v2548 = vpop.f32.mrb[0].mxu0
        %2549 = vdwg.mxu0
        %v2550 = vld [vmem:[%s10] sm:$0xff]
        %v2551 = vld [vmem:[%s10 + $0x8] sm:$0xff]
        %v2552 = vld [vmem:[%s10 + $0x10] sm:$0xff]
        %v2553 = vld [vmem:[%s10 + $0x18] sm:$0xff]
        %v2555 = vsel %vm960, %v2038, 0
        %v2558 = vsel %vm960, %v2337, 0
        %2560 = vmatprep.subr.mxu0 0.0
        %2561 = vmatpush1.xpose.msra.mxu0 %v2558
        %2562 = vmatprep.subr.mxu0 0.0
        %2563 = vmatpush1.xpose.msra.mxu0 0.0
        %2564 = vmatprep.subr.mxu0 0.0
        %2565 = vmatpush1.xpose.msra.mxu0 0.0
        %2566 = vmatprep.subr.mxu0 0.0
        %2567 = vmatpush1.xpose.msra.mxu0 0.0
        %2568 = vmatprep.subr.mxu0 0.0
        %2569 = vmatpush1.xpose.msra.mxu0 0.0
        %2570 = vmatprep.subr.mxu0 0.0
        %2571 = vmatpush1.xpose.msra.mxu0 0.0
        %2572 = vmatprep.subr.mxu0 0.0
        %2573 = vmatpush1.xpose.msra.mxu0 0.0
        %2574 = vmatprep.subr.mxu0 0.0
        %2575 = vmatpush1.xpose.msra.mxu0 0.0
        %2576 = vmatprep.subr.mxu0 0.0
        %2577 = vmatpush1.xpose.msra.mxu0 0.0
        %2578 = vmatprep.subr.mxu0 0.0
        %2579 = vmatpush1.xpose.msra.mxu0 0.0
        %2580 = vmatprep.subr.mxu0 0.0
        %2581 = vmatpush1.xpose.msra.mxu0 0.0
        %2582 = vmatprep.subr.mxu0 0.0
        %2583 = vmatpush1.xpose.msra.mxu0 0.0
        %2584 = vmatprep.subr.mxu0 0.0
        %2585 = vmatpush1.xpose.msra.mxu0 0.0
        %2586 = vmatprep.subr.mxu0 0.0
        %2587 = vmatpush1.xpose.msra.mxu0 0.0
        %2588 = vmatprep.subr.mxu0 0.0
        %2589 = vmatpush1.xpose.msra.mxu0 0.0
        %2590 = vmatprep.subr.mxu0 0.0
        %2591 = vmatpush1.xpose.msra.mxu0 0.0
        %2592 = vmatprep.subr.mxu0 0.0
        %2593 = vmatpush1.xpose.msra.mxu0 0.0
        %2594 = vmatprep.subr.mxu0 0.0
        %2595 = vmatpush1.xpose.msra.mxu0 0.0
        %2596 = vmatprep.subr.mxu0 0.0
        %2597 = vmatpush1.xpose.msra.mxu0 0.0
        %2598 = vmatprep.subr.mxu0 0.0
        %2599 = vmatpush1.xpose.msra.mxu0 0.0
        %2600 = vmatprep.subr.mxu0 0.0
        %2601 = vmatpush1.xpose.msra.mxu0 0.0
        %2602 = vmatprep.subr.mxu0 0.0
        %2603 = vmatpush1.xpose.msra.mxu0 0.0
        %2604 = vmatprep.subr.mxu0 0.0
        %2605 = vmatpush1.xpose.msra.mxu0 0.0
        %2606 = vmatprep.subr.mxu0 0.0
        %2607 = vmatpush1.xpose.msra.mxu0 0.0
        %2608 = vmatprep.subr.mxu0 0.0
        %2609 = vmatpush1.xpose.msra.mxu0 0.0
        %2610 = vmatprep.subr.mxu0 0.0
        %2611 = vmatpush1.xpose.msra.mxu0 0.0
        %2612 = vmatprep.subr.mxu0 0.0
        %2613 = vmatpush1.xpose.msra.mxu0 0.0
        %2614 = vmatprep.subr.mxu0 0.0
        %2615 = vmatpush1.xpose.msra.mxu0 0.0
        %2616 = vmatprep.subr.mxu0 0.0
        %2617 = vmatpush1.xpose.msra.mxu0 0.0
        %2618 = vmatprep.subr.mxu0 0.0
        %2619 = vmatpush1.xpose.msra.mxu0 0.0
        %2620 = vmatprep.subr.mxu0 0.0
        %2621 = vmatpush1.xpose.msra.mxu0 0.0
        %2622 = vmatprep.subr.mxu0 0.0
        %2623 = vmatpush1.xpose.msra.mxu0 0.0
        %2624 = vmatprep.mubr.f32.mxu0 0.0
        %2625 = vmatmul.mubr.f32.gmra.mrb[0].mxu0 %v2555
        %v2626 = vpop.f32.mrb[0].mxu0
        %v2627 = vadd.f32 0.0, %v2626
        %v2628 = vpop.f32.mrb[0].mxu0
        %2629 = vdwg.mxu0
        %v2631 = vsel %vm960, %v2108, 0
        %v2634 = vsel %vm960, %v2407, 0
        %2636 = vmatprep.subr.mxu0 0.0
        %2637 = vmatpush1.xpose.msra.mxu0 %v2634
        %2638 = vmatprep.subr.mxu0 0.0
        %2639 = vmatpush1.xpose.msra.mxu0 0.0
        %2640 = vmatprep.subr.mxu0 0.0
        %2641 = vmatpush1.xpose.msra.mxu0 0.0
        %2642 = vmatprep.subr.mxu0 0.0
        %2643 = vmatpush1.xpose.msra.mxu0 0.0
        %2644 = vmatprep.subr.mxu0 0.0
        %2645 = vmatpush1.xpose.msra.mxu0 0.0
        %2646 = vmatprep.subr.mxu0 0.0
        %2647 = vmatpush1.xpose.msra.mxu0 0.0
        %2648 = vmatprep.subr.mxu0 0.0
        %2649 = vmatpush1.xpose.msra.mxu0 0.0
        %2650 = vmatprep.subr.mxu0 0.0
        %2651 = vmatpush1.xpose.msra.mxu0 0.0
        %2652 = vmatprep.subr.mxu0 0.0
        %2653 = vmatpush1.xpose.msra.mxu0 0.0
        %2654 = vmatprep.subr.mxu0 0.0
        %2655 = vmatpush1.xpose.msra.mxu0 0.0
        %2656 = vmatprep.subr.mxu0 0.0
        %2657 = vmatpush1.xpose.msra.mxu0 0.0
        %2658 = vmatprep.subr.mxu0 0.0
        %2659 = vmatpush1.xpose.msra.mxu0 0.0
        %2660 = vmatprep.subr.mxu0 0.0
        %2661 = vmatpush1.xpose.msra.mxu0 0.0
        %2662 = vmatprep.subr.mxu0 0.0
        %2663 = vmatpush1.xpose.msra.mxu0 0.0
        %2664 = vmatprep.subr.mxu0 0.0
        %2665 = vmatpush1.xpose.msra.mxu0 0.0
        %2666 = vmatprep.subr.mxu0 0.0
        %2667 = vmatpush1.xpose.msra.mxu0 0.0
        %2668 = vmatprep.subr.mxu0 0.0
        %2669 = vmatpush1.xpose.msra.mxu0 0.0
        %2670 = vmatprep.subr.mxu0 0.0
        %2671 = vmatpush1.xpose.msra.mxu0 0.0
        %2672 = vmatprep.subr.mxu0 0.0
        %2673 = vmatpush1.xpose.msra.mxu0 0.0
        %2674 = vmatprep.subr.mxu0 0.0
        %2675 = vmatpush1.xpose.msra.mxu0 0.0
        %2676 = vmatprep.subr.mxu0 0.0
        %2677 = vmatpush1.xpose.msra.mxu0 0.0
        %2678 = vmatprep.subr.mxu0 0.0
        %2679 = vmatpush1.xpose.msra.mxu0 0.0
        %2680 = vmatprep.subr.mxu0 0.0
        %2681 = vmatpush1.xpose.msra.mxu0 0.0
        %2682 = vmatprep.subr.mxu0 0.0
        %2683 = vmatpush1.xpose.msra.mxu0 0.0
        %2684 = vmatprep.subr.mxu0 0.0
        %2685 = vmatpush1.xpose.msra.mxu0 0.0
        %2686 = vmatprep.subr.mxu0 0.0
        %2687 = vmatpush1.xpose.msra.mxu0 0.0
        %2688 = vmatprep.subr.mxu0 0.0
        %2689 = vmatpush1.xpose.msra.mxu0 0.0
        %2690 = vmatprep.subr.mxu0 0.0
        %2691 = vmatpush1.xpose.msra.mxu0 0.0
        %2692 = vmatprep.subr.mxu0 0.0
        %2693 = vmatpush1.xpose.msra.mxu0 0.0
        %2694 = vmatprep.subr.mxu0 0.0
        %2695 = vmatpush1.xpose.msra.mxu0 0.0
        %2696 = vmatprep.subr.mxu0 0.0
        %2697 = vmatpush1.xpose.msra.mxu0 0.0
        %2698 = vmatprep.subr.mxu0 0.0
        %2699 = vmatpush1.xpose.msra.mxu0 0.0
        %2700 = vmatprep.mubr.f32.mxu0 0.0
        %2701 = vmatmul.mubr.f32.gmra.mrb[0].mxu0 %v2631
        %v2702 = vpop.f32.mrb[0].mxu0
        %v2703 = vadd.f32 0.0, %v2702
        %v2704 = vpop.f32.mrb[0].mxu0
        %2705 = vdwg.mxu0
        %v2707 = vsel %vm960, %v2178, 0
        %v2710 = vsel %vm960, %v2477, 0
        %2712 = vmatprep.subr.mxu0 0.0
        %2713 = vmatpush1.xpose.msra.mxu0 %v2710
        %2714 = vmatprep.subr.mxu0 0.0
        %2715 = vmatpush1.xpose.msra.mxu0 0.0
        %2716 = vmatprep.subr.mxu0 0.0
        %2717 = vmatpush1.xpose.msra.mxu0 0.0
        %2718 = vmatprep.subr.mxu0 0.0
        %2719 = vmatpush1.xpose.msra.mxu0 0.0
        %2720 = vmatprep.subr.mxu0 0.0
        %2721 = vmatpush1.xpose.msra.mxu0 0.0
        %2722 = vmatprep.subr.mxu0 0.0
        %2723 = vmatpush1.xpose.msra.mxu0 0.0
        %2724 = vmatprep.subr.mxu0 0.0
        %2725 = vmatpush1.xpose.msra.mxu0 0.0
        %2726 = vmatprep.subr.mxu0 0.0
        %2727 = vmatpush1.xpose.msra.mxu0 0.0
        %2728 = vmatprep.subr.mxu0 0.0
        %2729 = vmatpush1.xpose.msra.mxu0 0.0
        %2730 = vmatprep.subr.mxu0 0.0
        %2731 = vmatpush1.xpose.msra.mxu0 0.0
        %2732 = vmatprep.subr.mxu0 0.0
        %2733 = vmatpush1.xpose.msra.mxu0 0.0
        %2734 = vmatprep.subr.mxu0 0.0
        %2735 = vmatpush1.xpose.msra.mxu0 0.0
        %2736 = vmatprep.subr.mxu0 0.0
        %2737 = vmatpush1.xpose.msra.mxu0 0.0
        %2738 = vmatprep.subr.mxu0 0.0
        %2739 = vmatpush1.xpose.msra.mxu0 0.0
        %2740 = vmatprep.subr.mxu0 0.0
        %2741 = vmatpush1.xpose.msra.mxu0 0.0
        %2742 = vmatprep.subr.mxu0 0.0
        %2743 = vmatpush1.xpose.msra.mxu0 0.0
        %2744 = vmatprep.subr.mxu0 0.0
        %2745 = vmatpush1.xpose.msra.mxu0 0.0
        %2746 = vmatprep.subr.mxu0 0.0
        %2747 = vmatpush1.xpose.msra.mxu0 0.0
        %2748 = vmatprep.subr.mxu0 0.0
        %2749 = vmatpush1.xpose.msra.mxu0 0.0
        %2750 = vmatprep.subr.mxu0 0.0
        %2751 = vmatpush1.xpose.msra.mxu0 0.0
        %2752 = vmatprep.subr.mxu0 0.0
        %2753 = vmatpush1.xpose.msra.mxu0 0.0
        %2754 = vmatprep.subr.mxu0 0.0
        %2755 = vmatpush1.xpose.msra.mxu0 0.0
        %2756 = vmatprep.subr.mxu0 0.0
        %2757 = vmatpush1.xpose.msra.mxu0 0.0
        %2758 = vmatprep.subr.mxu0 0.0
        %2759 = vmatpush1.xpose.msra.mxu0 0.0
        %2760 = vmatprep.subr.mxu0 0.0
        %2761 = vmatpush1.xpose.msra.mxu0 0.0
        %2762 = vmatprep.subr.mxu0 0.0
        %2763 = vmatpush1.xpose.msra.mxu0 0.0
        %2764 = vmatprep.subr.mxu0 0.0
        %2765 = vmatpush1.xpose.msra.mxu0 0.0
        %2766 = vmatprep.subr.mxu0 0.0
        %2767 = vmatpush1.xpose.msra.mxu0 0.0
        %2768 = vmatprep.subr.mxu0 0.0
        %2769 = vmatpush1.xpose.msra.mxu0 0.0
        %2770 = vmatprep.subr.mxu0 0.0
        %2771 = vmatpush1.xpose.msra.mxu0 0.0
        %2772 = vmatprep.subr.mxu0 0.0
        %2773 = vmatpush1.xpose.msra.mxu0 0.0
        %2774 = vmatprep.subr.mxu0 0.0
        %2775 = vmatpush1.xpose.msra.mxu0 0.0
        %2776 = vmatprep.mubr.f32.mxu0 0.0
        %2777 = vmatmul.mubr.f32.gmra.mrb[0].mxu0 %v2707
        %v2778 = vpop.f32.mrb[0].mxu0
        %v2779 = vadd.f32 0.0, %v2778
        %v2780 = vpop.f32.mrb[0].mxu0
        %2781 = vdwg.mxu0
        %v2783 = vsel %vm960, %v2248, 0
        %v2786 = vsel %vm960, %v2547, 0
        %2788 = vmatprep.subr.mxu0 0.0
        %2789 = vmatpush1.xpose.msra.mxu0 %v2786
        %2790 = vmatprep.subr.mxu0 0.0
        %2791 = vmatpush1.xpose.msra.mxu0 0.0
        %2792 = vmatprep.subr.mxu0 0.0
        %2793 = vmatpush1.xpose.msra.mxu0 0.0
        %2794 = vmatprep.subr.mxu0 0.0
        %2795 = vmatpush1.xpose.msra.mxu0 0.0
        %2796 = vmatprep.subr.mxu0 0.0
        %2797 = vmatpush1.xpose.msra.mxu0 0.0
        %2798 = vmatprep.subr.mxu0 0.0
        %2799 = vmatpush1.xpose.msra.mxu0 0.0
        %2800 = vmatprep.subr.mxu0 0.0
        %2801 = vmatpush1.xpose.msra.mxu0 0.0
        %2802 = vmatprep.subr.mxu0 0.0
        %2803 = vmatpush1.xpose.msra.mxu0 0.0
        %2804 = vmatprep.subr.mxu0 0.0
        %2805 = vmatpush1.xpose.msra.mxu0 0.0
        %2806 = vmatprep.subr.mxu0 0.0
        %2807 = vmatpush1.xpose.msra.mxu0 0.0
        %2808 = vmatprep.subr.mxu0 0.0
        %2809 = vmatpush1.xpose.msra.mxu0 0.0
        %2810 = vmatprep.subr.mxu0 0.0
        %2811 = vmatpush1.xpose.msra.mxu0 0.0
        %2812 = vmatprep.subr.mxu0 0.0
        %2813 = vmatpush1.xpose.msra.mxu0 0.0
        %2814 = vmatprep.subr.mxu0 0.0
        %2815 = vmatpush1.xpose.msra.mxu0 0.0
        %2816 = vmatprep.subr.mxu0 0.0
        %2817 = vmatpush1.xpose.msra.mxu0 0.0
        %2818 = vmatprep.subr.mxu0 0.0
        %2819 = vmatpush1.xpose.msra.mxu0 0.0
        %2820 = vmatprep.subr.mxu0 0.0
        %2821 = vmatpush1.xpose.msra.mxu0 0.0
        %2822 = vmatprep.subr.mxu0 0.0
        %2823 = vmatpush1.xpose.msra.mxu0 0.0
        %2824 = vmatprep.subr.mxu0 0.0
        %2825 = vmatpush1.xpose.msra.mxu0 0.0
        %2826 = vmatprep.subr.mxu0 0.0
        %2827 = vmatpush1.xpose.msra.mxu0 0.0
        %2828 = vmatprep.subr.mxu0 0.0
        %2829 = vmatpush1.xpose.msra.mxu0 0.0
        %2830 = vmatprep.subr.mxu0 0.0
        %2831 = vmatpush1.xpose.msra.mxu0 0.0
        %2832 = vmatprep.subr.mxu0 0.0
        %2833 = vmatpush1.xpose.msra.mxu0 0.0
        %2834 = vmatprep.subr.mxu0 0.0
        %2835 = vmatpush1.xpose.msra.mxu0 0.0
        %2836 = vmatprep.subr.mxu0 0.0
        %2837 = vmatpush1.xpose.msra.mxu0 0.0
        %2838 = vmatprep.subr.mxu0 0.0
        %2839 = vmatpush1.xpose.msra.mxu0 0.0
        %2840 = vmatprep.subr.mxu0 0.0
        %2841 = vmatpush1.xpose.msra.mxu0 0.0
        %2842 = vmatprep.subr.mxu0 0.0
        %2843 = vmatpush1.xpose.msra.mxu0 0.0
        %2844 = vmatprep.subr.mxu0 0.0
        %2845 = vmatpush1.xpose.msra.mxu0 0.0
        %2846 = vmatprep.subr.mxu0 0.0
        %2847 = vmatpush1.xpose.msra.mxu0 0.0
        %2848 = vmatprep.subr.mxu0 0.0
        %2849 = vmatpush1.xpose.msra.mxu0 0.0
        %2850 = vmatprep.subr.mxu0 0.0
        %2851 = vmatpush1.xpose.msra.mxu0 0.0
        %2852 = vmatprep.mubr.f32.mxu0 0.0
        %2853 = vmatmul.mubr.f32.gmra.mrb[0].mxu0 %v2783
        %v2854 = vpop.f32.mrb[0].mxu0
        %v2855 = vadd.f32 0.0, %v2854
        %v2856 = vpop.f32.mrb[0].mxu0
        %2857 = vdwg.mxu0
        %v2858 = vmul.f32 %v2627, 0.35355338
        %v2859 = vmul.f32 %v2703, 0.35355338
        %v2860 = vmul.f32 %v2779, 0.35355338
        %v2861 = vmul.f32 %v2855, 0.35355338
        %v2862 = vadd.f32 %v2858, %v652
        %v2863 = vadd.f32 %v2859, %v652
        %v2864 = vadd.f32 %v2860, %v652
        %v2865 = vadd.f32 %v2861, %v652
        %v2866 = vsel %vm960, %v2862, -inf
        %2867 = vmax.xlane.f32.xlu0 %v2866
        %v2868 = vpop.xlane.xlu0 %2867
        %v2869 = vsel %vm960, %v2863, -inf
        %2870 = vmax.xlane.f32.xlu0 %v2869
        %v2871 = vpop.xlane.xlu0 %2870
        %v2872 = vsel %vm960, %v2864, -inf
        %2873 = vmax.xlane.f32.xlu0 %v2872
        %v2874 = vpop.xlane.xlu0 %2873
        %v2875 = vsel %vm960, %v2865, -inf
        %2876 = vmax.xlane.f32.xlu0 %v2875
        %v2877 = vpop.xlane.xlu0 %2876
        %v2878 = vsub.f32 %v2862, %v2868
        %v2879 = vsub.f32 %v2863, %v2871
        %v2880 = vsub.f32 %v2864, %v2874
        %v2881 = vsub.f32 %v2865, %v2877
        %v2882 = vmul.f32 %v2878, 1.442695
        %v2883 = vpow.pop %v2882
        %v2884 = vmul.f32 %v2879, 1.442695
        %v2885 = vpow.pop %v2884
        %v2886 = vmul.f32 %v2880, 1.442695
        %v2887 = vpow.pop %v2886
        %v2888 = vmul.f32 %v2881, 1.442695
        %v2889 = vpow.pop %v2888
        %v2890 = vsel %vm960, %v2883, 0.0
        %2891 = vadd.xlane.f32.xlu0 %v2890
        %v2892 = vpop.xlane.xlu0 %2891
        %v2893 = vsel %vm960, %v2885, 0.0
        %2894 = vadd.xlane.f32.xlu0 %v2893
        %v2895 = vpop.xlane.xlu0 %2894
        %v2896 = vsel %vm960, %v2887, 0.0
        %2897 = vadd.xlane.f32.xlu0 %v2896
        %v2898 = vpop.xlane.xlu0 %2897
        %v2899 = vsel %vm960, %v2889, 0.0
        %2900 = vadd.xlane.f32.xlu0 %v2899
        %v2901 = vpop.xlane.xlu0 %2900
        %v2902 = vrcp.pop %v2892
        %v2903 = vmul.f32 %v2883, %v2902
        %v2904 = vrcp.pop %v2895
        %v2905 = vmul.f32 %v2885, %v2904
        %v2906 = vrcp.pop %v2898
        %v2907 = vmul.f32 %v2887, %v2906
        %v2908 = vrcp.pop %v2901
        %v2909 = vmul.f32 %v2889, %v2908
        %2910 = vrot.lane.b32.xlu0 %v2337, 120
        %v2911 = vpop.permute.xlu0 %2910
        %v2914 = vsel %vm960, %v2903, 0
        %2916 = vmatprep.subr.mxu0 0.0
        %2917 = vmatpush1.msra.mxu0 %v2911
        %2918 = vmatprep.subr.mxu0 0.0
        %2919 = vmatpush1.msra.mxu0 0.0
        %2920 = vmatprep.subr.mxu0 0.0
        %2921 = vmatpush1.msra.mxu0 0.0
        %2922 = vmatprep.subr.mxu0 0.0
        %2923 = vmatpush1.msra.mxu0 0.0
        %2924 = vmatprep.subr.mxu0 0.0
        %2925 = vmatpush1.msra.mxu0 0.0
        %2926 = vmatprep.subr.mxu0 0.0
        %2927 = vmatpush1.msra.mxu0 0.0
        %2928 = vmatprep.subr.mxu0 0.0
        %2929 = vmatpush1.msra.mxu0 0.0
        %2930 = vmatprep.subr.mxu0 0.0
        %2931 = vmatpush1.msra.mxu0 0.0
        %2932 = vmatprep.subr.mxu0 0.0
        %2933 = vmatpush1.msra.mxu0 0.0
        %2934 = vmatprep.subr.mxu0 0.0
        %2935 = vmatpush1.msra.mxu0 0.0
        %2936 = vmatprep.subr.mxu0 0.0
        %2937 = vmatpush1.msra.mxu0 0.0
        %2938 = vmatprep.subr.mxu0 0.0
        %2939 = vmatpush1.msra.mxu0 0.0
        %2940 = vmatprep.subr.mxu0 0.0
        %2941 = vmatpush1.msra.mxu0 0.0
        %2942 = vmatprep.subr.mxu0 0.0
        %2943 = vmatpush1.msra.mxu0 0.0
        %2944 = vmatprep.subr.mxu0 0.0
        %2945 = vmatpush1.msra.mxu0 0.0
        %2946 = vmatprep.subr.mxu0 0.0
        %2947 = vmatpush1.msra.mxu0 0.0
        %2948 = vmatprep.subr.mxu0 0.0
        %2949 = vmatpush1.msra.mxu0 0.0
        %2950 = vmatprep.subr.mxu0 0.0
        %2951 = vmatpush1.msra.mxu0 0.0
        %2952 = vmatprep.subr.mxu0 0.0
        %2953 = vmatpush1.msra.mxu0 0.0
        %2954 = vmatprep.subr.mxu0 0.0
        %2955 = vmatpush1.msra.mxu0 0.0
        %2956 = vmatprep.subr.mxu0 0.0
        %2957 = vmatpush1.msra.mxu0 0.0
        %2958 = vmatprep.subr.mxu0 0.0
        %2959 = vmatpush1.msra.mxu0 0.0
        %2960 = vmatprep.subr.mxu0 0.0
        %2961 = vmatpush1.msra.mxu0 0.0
        %2962 = vmatprep.subr.mxu0 0.0
        %2963 = vmatpush1.msra.mxu0 0.0
        %2964 = vmatprep.subr.mxu0 0.0
        %2965 = vmatpush1.msra.mxu0 0.0
        %2966 = vmatprep.subr.mxu0 0.0
        %2967 = vmatpush1.msra.mxu0 0.0
        %2968 = vmatprep.subr.mxu0 0.0
        %2969 = vmatpush1.msra.mxu0 0.0
        %2970 = vmatprep.subr.mxu0 0.0
        %2971 = vmatpush1.msra.mxu0 0.0
        %2972 = vmatprep.subr.mxu0 0.0
        %2973 = vmatpush1.msra.mxu0 0.0
        %2974 = vmatprep.subr.mxu0 0.0
        %2975 = vmatpush1.msra.mxu0 0.0
        %2976 = vmatprep.subr.mxu0 0.0
        %2977 = vmatpush1.msra.mxu0 0.0
        %2978 = vmatprep.subr.mxu0 0.0
        %2979 = vmatpush1.msra.mxu0 0.0
        %2980 = vmatprep.mubr.f32.mxu0 0.0
        %2981 = vmatmul.mubr.f32.gmra.mrb[0].mxu0 %v2914
        %v2982 = vpop.f32.mrb[0].mxu0
        %v2983 = vadd.f32 0.0, %v2982
        %v2984 = vpop.f32.mrb[0].mxu0
        %2985 = vdwg.mxu0
        %2986 = vrot.lane.b32.xlu0 %v2407, 120
        %v2987 = vpop.permute.xlu0 %2986
        %v2990 = vsel %vm960, %v2905, 0
        %2992 = vmatprep.subr.mxu0 0.0
        %2993 = vmatpush1.msra.mxu0 %v2987
        %2994 = vmatprep.subr.mxu0 0.0
        %2995 = vmatpush1.msra.mxu0 0.0
        %2996 = vmatprep.subr.mxu0 0.0
        %2997 = vmatpush1.msra.mxu0 0.0
        %2998 = vmatprep.subr.mxu0 0.0
        %2999 = vmatpush1.msra.mxu0 0.0
        %3000 = vmatprep.subr.mxu0 0.0
        %3001 = vmatpush1.msra.mxu0 0.0
        %3002 = vmatprep.subr.mxu0 0.0
        %3003 = vmatpush1.msra.mxu0 0.0
        %3004 = vmatprep.subr.mxu0 0.0
        %3005 = vmatpush1.msra.mxu0 0.0
        %3006 = vmatprep.subr.mxu0 0.0
        %3007 = vmatpush1.msra.mxu0 0.0
        %3008 = vmatprep.subr.mxu0 0.0
        %3009 = vmatpush1.msra.mxu0 0.0
        %3010 = vmatprep.subr.mxu0 0.0
        %3011 = vmatpush1.msra.mxu0 0.0
        %3012 = vmatprep.subr.mxu0 0.0
        %3013 = vmatpush1.msra.mxu0 0.0
        %3014 = vmatprep.subr.mxu0 0.0
        %3015 = vmatpush1.msra.mxu0 0.0
        %3016 = vmatprep.subr.mxu0 0.0
        %3017 = vmatpush1.msra.mxu0 0.0
        %3018 = vmatprep.subr.mxu0 0.0
        %3019 = vmatpush1.msra.mxu0 0.0
        %3020 = vmatprep.subr.mxu0 0.0
        %3021 = vmatpush1.msra.mxu0 0.0
        %3022 = vmatprep.subr.mxu0 0.0
        %3023 = vmatpush1.msra.mxu0 0.0
        %3024 = vmatprep.subr.mxu0 0.0
        %3025 = vmatpush1.msra.mxu0 0.0
        %3026 = vmatprep.subr.mxu0 0.0
        %3027 = vmatpush1.msra.mxu0 0.0
        %3028 = vmatprep.subr.mxu0 0.0
        %3029 = vmatpush1.msra.mxu0 0.0
        %3030 = vmatprep.subr.mxu0 0.0
        %3031 = vmatpush1.msra.mxu0 0.0
        %3032 = vmatprep.subr.mxu0 0.0
        %3033 = vmatpush1.msra.mxu0 0.0
        %3034 = vmatprep.subr.mxu0 0.0
        %3035 = vmatpush1.msra.mxu0 0.0
        %3036 = vmatprep.subr.mxu0 0.0
        %3037 = vmatpush1.msra.mxu0 0.0
        %3038 = vmatprep.subr.mxu0 0.0
        %3039 = vmatpush1.msra.mxu0 0.0
        %3040 = vmatprep.subr.mxu0 0.0
        %3041 = vmatpush1.msra.mxu0 0.0
        %3042 = vmatprep.subr.mxu0 0.0
        %3043 = vmatpush1.msra.mxu0 0.0
        %3044 = vmatprep.subr.mxu0 0.0
        %3045 = vmatpush1.msra.mxu0 0.0
        %3046 = vmatprep.subr.mxu0 0.0
        %3047 = vmatpush1.msra.mxu0 0.0
        %3048 = vmatprep.subr.mxu0 0.0
        %3049 = vmatpush1.msra.mxu0 0.0
        %3050 = vmatprep.subr.mxu0 0.0
        %3051 = vmatpush1.msra.mxu0 0.0
        %3052 = vmatprep.subr.mxu0 0.0
        %3053 = vmatpush1.msra.mxu0 0.0
        %3054 = vmatprep.subr.mxu0 0.0
        %3055 = vmatpush1.msra.mxu0 0.0
        %3056 = vmatprep.mubr.f32.mxu0 0.0
        %3057 = vmatmul.mubr.f32.gmra.mrb[0].mxu0 %v2990
        %v3058 = vpop.f32.mrb[0].mxu0
        %v3059 = vadd.f32 0.0, %v3058
        %v3060 = vpop.f32.mrb[0].mxu0
        %3061 = vdwg.mxu0
        %3062 = vrot.lane.b32.xlu0 %v2477, 120
        %v3063 = vpop.permute.xlu0 %3062
        %v3066 = vsel %vm960, %v2907, 0
        %3068 = vmatprep.subr.mxu0 0.0
        %3069 = vmatpush1.msra.mxu0 %v3063
        %3070 = vmatprep.subr.mxu0 0.0
        %3071 = vmatpush1.msra.mxu0 0.0
        %3072 = vmatprep.subr.mxu0 0.0
        %3073 = vmatpush1.msra.mxu0 0.0
        %3074 = vmatprep.subr.mxu0 0.0
        %3075 = vmatpush1.msra.mxu0 0.0
        %3076 = vmatprep.subr.mxu0 0.0
        %3077 = vmatpush1.msra.mxu0 0.0
        %3078 = vmatprep.subr.mxu0 0.0
        %3079 = vmatpush1.msra.mxu0 0.0
        %3080 = vmatprep.subr.mxu0 0.0
        %3081 = vmatpush1.msra.mxu0 0.0
        %3082 = vmatprep.subr.mxu0 0.0
        %3083 = vmatpush1.msra.mxu0 0.0
        %3084 = vmatprep.subr.mxu0 0.0
        %3085 = vmatpush1.msra.mxu0 0.0
        %3086 = vmatprep.subr.mxu0 0.0
        %3087 = vmatpush1.msra.mxu0 0.0
        %3088 = vmatprep.subr.mxu0 0.0
        %3089 = vmatpush1.msra.mxu0 0.0
        %3090 = vmatprep.subr.mxu0 0.0
        %3091 = vmatpush1.msra.mxu0 0.0
        %3092 = vmatprep.subr.mxu0 0.0
        %3093 = vmatpush1.msra.mxu0 0.0
        %3094 = vmatprep.subr.mxu0 0.0
        %3095 = vmatpush1.msra.mxu0 0.0
        %3096 = vmatprep.subr.mxu0 0.0
        %3097 = vmatpush1.msra.mxu0 0.0
        %3098 = vmatprep.subr.mxu0 0.0
        %3099 = vmatpush1.msra.mxu0 0.0
        %3100 = vmatprep.subr.mxu0 0.0
        %3101 = vmatpush1.msra.mxu0 0.0
        %3102 = vmatprep.subr.mxu0 0.0
        %3103 = vmatpush1.msra.mxu0 0.0
        %3104 = vmatprep.subr.mxu0 0.0
        %3105 = vmatpush1.msra.mxu0 0.0
        %3106 = vmatprep.subr.mxu0 0.0
        %3107 = vmatpush1.msra.mxu0 0.0
        %3108 = vmatprep.subr.mxu0 0.0
        %3109 = vmatpush1.msra.mxu0 0.0
        %3110 = vmatprep.subr.mxu0 0.0
        %3111 = vmatpush1.msra.mxu0 0.0
        %3112 = vmatprep.subr.mxu0 0.0
        %3113 = vmatpush1.msra.mxu0 0.0
        %3114 = vmatprep.subr.mxu0 0.0
        %3115 = vmatpush1.msra.mxu0 0.0
        %3116 = vmatprep.subr.mxu0 0.0
        %3117 = vmatpush1.msra.mxu0 0.0
        %3118 = vmatprep.subr.mxu0 0.0
        %3119 = vmatpush1.msra.mxu0 0.0
        %3120 = vmatprep.subr.mxu0 0.0
        %3121 = vmatpush1.msra.mxu0 0.0
        %3122 = vmatprep.subr.mxu0 0.0
        %3123 = vmatpush1.msra.mxu0 0.0
        %3124 = vmatprep.subr.mxu0 0.0
        %3125 = vmatpush1.msra.mxu0 0.0
        %3126 = vmatprep.subr.mxu0 0.0
        %3127 = vmatpush1.msra.mxu0 0.0
        %3128 = vmatprep.subr.mxu0 0.0
        %3129 = vmatpush1.msra.mxu0 0.0
        %3130 = vmatprep.subr.mxu0 0.0
        %3131 = vmatpush1.msra.mxu0 0.0
        %3132 = vmatprep.mubr.f32.mxu0 0.0
        %3133 = vmatmul.mubr.f32.gmra.mrb[0].mxu0 %v3066
        %v3134 = vpop.f32.mrb[0].mxu0
        %v3135 = vadd.f32 0.0, %v3134
        %v3136 = vpop.f32.mrb[0].mxu0
        %3137 = vdwg.mxu0
        %3138 = vrot.lane.b32.xlu0 %v2547, 120
        %v3139 = vpop.permute.xlu0 %3138
        %v3142 = vsel %vm960, %v2909, 0
        %3144 = vmatprep.subr.mxu0 0.0
        %3145 = vmatpush1.msra.mxu0 %v3139
        %3146 = vmatprep.subr.mxu0 0.0
        %3147 = vmatpush1.msra.mxu0 0.0
        %3148 = vmatprep.subr.mxu0 0.0
        %3149 = vmatpush1.msra.mxu0 0.0
        %3150 = vmatprep.subr.mxu0 0.0
        %3151 = vmatpush1.msra.mxu0 0.0
        %3152 = vmatprep.subr.mxu0 0.0
        %3153 = vmatpush1.msra.mxu0 0.0
        %3154 = vmatprep.subr.mxu0 0.0
        %3155 = vmatpush1.msra.mxu0 0.0
        %3156 = vmatprep.subr.mxu0 0.0
        %3157 = vmatpush1.msra.mxu0 0.0
        %3158 = vmatprep.subr.mxu0 0.0
        %3159 = vmatpush1.msra.mxu0 0.0
        %3160 = vmatprep.subr.mxu0 0.0
        %3161 = vmatpush1.msra.mxu0 0.0
        %3162 = vmatprep.subr.mxu0 0.0
        %3163 = vmatpush1.msra.mxu0 0.0
        %3164 = vmatprep.subr.mxu0 0.0
        %3165 = vmatpush1.msra.mxu0 0.0
        %3166 = vmatprep.subr.mxu0 0.0
        %3167 = vmatpush1.msra.mxu0 0.0
        %3168 = vmatprep.subr.mxu0 0.0
        %3169 = vmatpush1.msra.mxu0 0.0
        %3170 = vmatprep.subr.mxu0 0.0
        %3171 = vmatpush1.msra.mxu0 0.0
        %3172 = vmatprep.subr.mxu0 0.0
        %3173 = vmatpush1.msra.mxu0 0.0
        %3174 = vmatprep.subr.mxu0 0.0
        %3175 = vmatpush1.msra.mxu0 0.0
        %3176 = vmatprep.subr.mxu0 0.0
        %3177 = vmatpush1.msra.mxu0 0.0
        %3178 = vmatprep.subr.mxu0 0.0
        %3179 = vmatpush1.msra.mxu0 0.0
        %3180 = vmatprep.subr.mxu0 0.0
        %3181 = vmatpush1.msra.mxu0 0.0
        %3182 = vmatprep.subr.mxu0 0.0
        %3183 = vmatpush1.msra.mxu0 0.0
        %3184 = vmatprep.subr.mxu0 0.0
        %3185 = vmatpush1.msra.mxu0 0.0
        %3186 = vmatprep.subr.mxu0 0.0
        %3187 = vmatpush1.msra.mxu0 0.0
        %3188 = vmatprep.subr.mxu0 0.0
        %3189 = vmatpush1.msra.mxu0 0.0
        %3190 = vmatprep.subr.mxu0 0.0
        %3191 = vmatpush1.msra.mxu0 0.0
        %3192 = vmatprep.subr.mxu0 0.0
        %3193 = vmatpush1.msra.mxu0 0.0
        %3194 = vmatprep.subr.mxu0 0.0
        %3195 = vmatpush1.msra.mxu0 0.0
        %3196 = vmatprep.subr.mxu0 0.0
        %3197 = vmatpush1.msra.mxu0 0.0
        %3198 = vmatprep.subr.mxu0 0.0
        %3199 = vmatpush1.msra.mxu0 0.0
        %3200 = vmatprep.subr.mxu0 0.0
        %3201 = vmatpush1.msra.mxu0 0.0
        %3202 = vmatprep.subr.mxu0 0.0
        %3203 = vmatpush1.msra.mxu0 0.0
        %3204 = vmatprep.subr.mxu0 0.0
        %3205 = vmatpush1.msra.mxu0 0.0
        %3206 = vmatprep.subr.mxu0 0.0
        %3207 = vmatpush1.msra.mxu0 0.0
        %3208 = vmatprep.mubr.f32.mxu0 0.0
        %3209 = vmatmul.mubr.f32.gmra.mrb[0].mxu0 %v3142
        %v3210 = vpop.f32.mrb[0].mxu0
        %v3211 = vadd.f32 0.0, %v3210
        %v3212 = vpop.f32.mrb[0].mxu0
        %3213 = vdwg.mxu0
        %v3215 = vsel %vm960, %v2983, 0
        %3217 = vmatprep.subr.mxu0 0.0
        %3218 = vmatpush1.msra.mxu0 %v2550
        %3219 = vmatprep.subr.mxu0 0.0
        %3220 = vmatpush1.msra.mxu0 0.0
        %3221 = vmatprep.subr.mxu0 0.0
        %3222 = vmatpush1.msra.mxu0 0.0
        %3223 = vmatprep.subr.mxu0 0.0
        %3224 = vmatpush1.msra.mxu0 0.0
        %3225 = vmatprep.subr.mxu0 0.0
        %3226 = vmatpush1.msra.mxu0 0.0
        %3227 = vmatprep.subr.mxu0 0.0
        %3228 = vmatpush1.msra.mxu0 0.0
        %3229 = vmatprep.subr.mxu0 0.0
        %3230 = vmatpush1.msra.mxu0 0.0
        %3231 = vmatprep.subr.mxu0 0.0
        %3232 = vmatpush1.msra.mxu0 0.0
        %3233 = vmatprep.subr.mxu0 0.0
        %3234 = vmatpush1.msra.mxu0 0.0
        %3235 = vmatprep.subr.mxu0 0.0
        %3236 = vmatpush1.msra.mxu0 0.0
        %3237 = vmatprep.subr.mxu0 0.0
        %3238 = vmatpush1.msra.mxu0 0.0
        %3239 = vmatprep.subr.mxu0 0.0
        %3240 = vmatpush1.msra.mxu0 0.0
        %3241 = vmatprep.subr.mxu0 0.0
        %3242 = vmatpush1.msra.mxu0 0.0
        %3243 = vmatprep.subr.mxu0 0.0
        %3244 = vmatpush1.msra.mxu0 0.0
        %3245 = vmatprep.subr.mxu0 0.0
        %3246 = vmatpush1.msra.mxu0 0.0
        %3247 = vmatprep.subr.mxu0 0.0
        %3248 = vmatpush1.msra.mxu0 0.0
        %3249 = vmatprep.subr.mxu0 0.0
        %3250 = vmatpush1.msra.mxu0 0.0
        %3251 = vmatprep.subr.mxu0 0.0
        %3252 = vmatpush1.msra.mxu0 0.0
        %3253 = vmatprep.subr.mxu0 0.0
        %3254 = vmatpush1.msra.mxu0 0.0
        %3255 = vmatprep.subr.mxu0 0.0
        %3256 = vmatpush1.msra.mxu0 0.0
        %3257 = vmatprep.subr.mxu0 0.0
        %3258 = vmatpush1.msra.mxu0 0.0
        %3259 = vmatprep.subr.mxu0 0.0
        %3260 = vmatpush1.msra.mxu0 0.0
        %3261 = vmatprep.subr.mxu0 0.0
        %3262 = vmatpush1.msra.mxu0 0.0
        %3263 = vmatprep.subr.mxu0 0.0
        %3264 = vmatpush1.msra.mxu0 0.0
        %3265 = vmatprep.subr.mxu0 0.0
        %3266 = vmatpush1.msra.mxu0 0.0
        %3267 = vmatprep.subr.mxu0 0.0
        %3268 = vmatpush1.msra.mxu0 0.0
        %3269 = vmatprep.subr.mxu0 0.0
        %3270 = vmatpush1.msra.mxu0 0.0
        %3271 = vmatprep.subr.mxu0 0.0
        %3272 = vmatpush1.msra.mxu0 0.0
        %3273 = vmatprep.subr.mxu0 0.0
        %3274 = vmatpush1.msra.mxu0 0.0
        %3275 = vmatprep.subr.mxu0 0.0
        %3276 = vmatpush1.msra.mxu0 0.0
        %3277 = vmatprep.subr.mxu0 0.0
        %3278 = vmatpush1.msra.mxu0 0.0
        %3279 = vmatprep.subr.mxu0 0.0
        %3280 = vmatpush1.msra.mxu0 0.0
        %3281 = vmatprep.mubr.f32.mxu0 0.0
        %3282 = vmatmul.mubr.f32.gmra.mrb[0].mxu0 %v3215
        %v3283 = vpop.f32.mrb[0].mxu0
        %v3284 = vadd.f32 0.0, %v3283
        %v3285 = vpop.f32.mrb[0].mxu0
        %3286 = vdwg.mxu0
        %v3288 = vsel %vm960, %v3059, 0
        %3290 = vmatprep.subr.mxu0 0.0
        %3291 = vmatpush1.msra.mxu0 %v2551
        %3292 = vmatprep.subr.mxu0 0.0
        %3293 = vmatpush1.msra.mxu0 0.0
        %3294 = vmatprep.subr.mxu0 0.0
        %3295 = vmatpush1.msra.mxu0 0.0
        %3296 = vmatprep.subr.mxu0 0.0
        %3297 = vmatpush1.msra.mxu0 0.0
        %3298 = vmatprep.subr.mxu0 0.0
        %3299 = vmatpush1.msra.mxu0 0.0
        %3300 = vmatprep.subr.mxu0 0.0
        %3301 = vmatpush1.msra.mxu0 0.0
        %3302 = vmatprep.subr.mxu0 0.0
        %3303 = vmatpush1.msra.mxu0 0.0
        %3304 = vmatprep.subr.mxu0 0.0
        %3305 = vmatpush1.msra.mxu0 0.0
        %3306 = vmatprep.subr.mxu0 0.0
        %3307 = vmatpush1.msra.mxu0 0.0
        %3308 = vmatprep.subr.mxu0 0.0
        %3309 = vmatpush1.msra.mxu0 0.0
        %3310 = vmatprep.subr.mxu0 0.0
        %3311 = vmatpush1.msra.mxu0 0.0
        %3312 = vmatprep.subr.mxu0 0.0
        %3313 = vmatpush1.msra.mxu0 0.0
        %3314 = vmatprep.subr.mxu0 0.0
        %3315 = vmatpush1.msra.mxu0 0.0
        %3316 = vmatprep.subr.mxu0 0.0
        %3317 = vmatpush1.msra.mxu0 0.0
        %3318 = vmatprep.subr.mxu0 0.0
        %3319 = vmatpush1.msra.mxu0 0.0
        %3320 = vmatprep.subr.mxu0 0.0
        %3321 = vmatpush1.msra.mxu0 0.0
        %3322 = vmatprep.subr.mxu0 0.0
        %3323 = vmatpush1.msra.mxu0 0.0
        %3324 = vmatprep.subr.mxu0 0.0
        %3325 = vmatpush1.msra.mxu0 0.0
        %3326 = vmatprep.subr.mxu0 0.0
        %3327 = vmatpush1.msra.mxu0 0.0
        %3328 = vmatprep.subr.mxu0 0.0
        %3329 = vmatpush1.msra.mxu0 0.0
        %3330 = vmatprep.subr.mxu0 0.0
        %3331 = vmatpush1.msra.mxu0 0.0
        %3332 = vmatprep.subr.mxu0 0.0
        %3333 = vmatpush1.msra.mxu0 0.0
        %3334 = vmatprep.subr.mxu0 0.0
        %3335 = vmatpush1.msra.mxu0 0.0
        %3336 = vmatprep.subr.mxu0 0.0
        %3337 = vmatpush1.msra.mxu0 0.0
        %3338 = vmatprep.subr.mxu0 0.0
        %3339 = vmatpush1.msra.mxu0 0.0
        %3340 = vmatprep.subr.mxu0 0.0
        %3341 = vmatpush1.msra.mxu0 0.0
        %3342 = vmatprep.subr.mxu0 0.0
        %3343 = vmatpush1.msra.mxu0 0.0
        %3344 = vmatprep.subr.mxu0 0.0
        %3345 = vmatpush1.msra.mxu0 0.0
        %3346 = vmatprep.subr.mxu0 0.0
        %3347 = vmatpush1.msra.mxu0 0.0
        %3348 = vmatprep.subr.mxu0 0.0
        %3349 = vmatpush1.msra.mxu0 0.0
        %3350 = vmatprep.subr.mxu0 0.0
        %3351 = vmatpush1.msra.mxu0 0.0
        %3352 = vmatprep.subr.mxu0 0.0
        %3353 = vmatpush1.msra.mxu0 0.0
        %3354 = vmatprep.mubr.f32.mxu0 0.0
        %3355 = vmatmul.mubr.f32.gmra.mrb[0].mxu0 %v3288
        %v3356 = vpop.f32.mrb[0].mxu0
        %v3357 = vadd.f32 0.0, %v3356
        %v3358 = vpop.f32.mrb[0].mxu0
        %3359 = vdwg.mxu0
        %v3361 = vsel %vm960, %v3135, 0
        %3363 = vmatprep.subr.mxu0 0.0
        %3364 = vmatpush1.msra.mxu0 %v2552
        %3365 = vmatprep.subr.mxu0 0.0
        %3366 = vmatpush1.msra.mxu0 0.0
        %3367 = vmatprep.subr.mxu0 0.0
        %3368 = vmatpush1.msra.mxu0 0.0
        %3369 = vmatprep.subr.mxu0 0.0
        %3370 = vmatpush1.msra.mxu0 0.0
        %3371 = vmatprep.subr.mxu0 0.0
        %3372 = vmatpush1.msra.mxu0 0.0
        %3373 = vmatprep.subr.mxu0 0.0
        %3374 = vmatpush1.msra.mxu0 0.0
        %3375 = vmatprep.subr.mxu0 0.0
        %3376 = vmatpush1.msra.mxu0 0.0
        %3377 = vmatprep.subr.mxu0 0.0
        %3378 = vmatpush1.msra.mxu0 0.0
        %3379 = vmatprep.subr.mxu0 0.0
        %3380 = vmatpush1.msra.mxu0 0.0
        %3381 = vmatprep.subr.mxu0 0.0
        %3382 = vmatpush1.msra.mxu0 0.0
        %3383 = vmatprep.subr.mxu0 0.0
        %3384 = vmatpush1.msra.mxu0 0.0
        %3385 = vmatprep.subr.mxu0 0.0
        %3386 = vmatpush1.msra.mxu0 0.0
        %3387 = vmatprep.subr.mxu0 0.0
        %3388 = vmatpush1.msra.mxu0 0.0
        %3389 = vmatprep.subr.mxu0 0.0
        %3390 = vmatpush1.msra.mxu0 0.0
        %3391 = vmatprep.subr.mxu0 0.0
        %3392 = vmatpush1.msra.mxu0 0.0
        %3393 = vmatprep.subr.mxu0 0.0
        %3394 = vmatpush1.msra.mxu0 0.0
        %3395 = vmatprep.subr.mxu0 0.0
        %3396 = vmatpush1.msra.mxu0 0.0
        %3397 = vmatprep.subr.mxu0 0.0
        %3398 = vmatpush1.msra.mxu0 0.0
        %3399 = vmatprep.subr.mxu0 0.0
        %3400 = vmatpush1.msra.mxu0 0.0
        %3401 = vmatprep.subr.mxu0 0.0
        %3402 = vmatpush1.msra.mxu0 0.0
        %3403 = vmatprep.subr.mxu0 0.0
        %3404 = vmatpush1.msra.mxu0 0.0
        %3405 = vmatprep.subr.mxu0 0.0
        %3406 = vmatpush1.msra.mxu0 0.0
        %3407 = vmatprep.subr.mxu0 0.0
        %3408 = vmatpush1.msra.mxu0 0.0
        %3409 = vmatprep.subr.mxu0 0.0
        %3410 = vmatpush1.msra.mxu0 0.0
        %3411 = vmatprep.subr.mxu0 0.0
        %3412 = vmatpush1.msra.mxu0 0.0
        %3413 = vmatprep.subr.mxu0 0.0
        %3414 = vmatpush1.msra.mxu0 0.0
        %3415 = vmatprep.subr.mxu0 0.0
        %3416 = vmatpush1.msra.mxu0 0.0
        %3417 = vmatprep.subr.mxu0 0.0
        %3418 = vmatpush1.msra.mxu0 0.0
        %3419 = vmatprep.subr.mxu0 0.0
        %3420 = vmatpush1.msra.mxu0 0.0
        %3421 = vmatprep.subr.mxu0 0.0
        %3422 = vmatpush1.msra.mxu0 0.0
        %3423 = vmatprep.subr.mxu0 0.0
        %3424 = vmatpush1.msra.mxu0 0.0
        %3425 = vmatprep.subr.mxu0 0.0
        %3426 = vmatpush1.msra.mxu0 0.0
        %3427 = vmatprep.mubr.f32.mxu0 0.0
        %3428 = vmatmul.mubr.f32.gmra.mrb[0].mxu0 %v3361
        %v3429 = vpop.f32.mrb[0].mxu0
        %v3430 = vadd.f32 0.0, %v3429
        %v3431 = vpop.f32.mrb[0].mxu0
        %3432 = vdwg.mxu0
        %v3434 = vsel %vm960, %v3211, 0
        %3436 = vmatprep.subr.mxu0 0.0
        %3437 = vmatpush1.msra.mxu0 %v2553
        %3438 = vmatprep.subr.mxu0 0.0
        %3439 = vmatpush1.msra.mxu0 0.0
        %3440 = vmatprep.subr.mxu0 0.0
        %3441 = vmatpush1.msra.mxu0 0.0
        %3442 = vmatprep.subr.mxu0 0.0
        %3443 = vmatpush1.msra.mxu0 0.0
        %3444 = vmatprep.subr.mxu0 0.0
        %3445 = vmatpush1.msra.mxu0 0.0
        %3446 = vmatprep.subr.mxu0 0.0
        %3447 = vmatpush1.msra.mxu0 0.0
        %3448 = vmatprep.subr.mxu0 0.0
        %3449 = vmatpush1.msra.mxu0 0.0
        %3450 = vmatprep.subr.mxu0 0.0
        %3451 = vmatpush1.msra.mxu0 0.0
        %3452 = vmatprep.subr.mxu0 0.0
        %3453 = vmatpush1.msra.mxu0 0.0
        %3454 = vmatprep.subr.mxu0 0.0
        %3455 = vmatpush1.msra.mxu0 0.0
        %3456 = vmatprep.subr.mxu0 0.0
        %3457 = vmatpush1.msra.mxu0 0.0
        %3458 = vmatprep.subr.mxu0 0.0
        %3459 = vmatpush1.msra.mxu0 0.0
        %3460 = vmatprep.subr.mxu0 0.0
        %3461 = vmatpush1.msra.mxu0 0.0
        %3462 = vmatprep.subr.mxu0 0.0
        %3463 = vmatpush1.msra.mxu0 0.0
        %3464 = vmatprep.subr.mxu0 0.0
        %3465 = vmatpush1.msra.mxu0 0.0
        %3466 = vmatprep.subr.mxu0 0.0
        %3467 = vmatpush1.msra.mxu0 0.0
        %3468 = vmatprep.subr.mxu0 0.0
        %3469 = vmatpush1.msra.mxu0 0.0
        %3470 = vmatprep.subr.mxu0 0.0
        %3471 = vmatpush1.msra.mxu0 0.0
        %3472 = vmatprep.subr.mxu0 0.0
        %3473 = vmatpush1.msra.mxu0 0.0
        %3474 = vmatprep.subr.mxu0 0.0
        %3475 = vmatpush1.msra.mxu0 0.0
        %3476 = vmatprep.subr.mxu0 0.0
        %3477 = vmatpush1.msra.mxu0 0.0
        %3478 = vmatprep.subr.mxu0 0.0
        %3479 = vmatpush1.msra.mxu0 0.0
        %3480 = vmatprep.subr.mxu0 0.0
        %3481 = vmatpush1.msra.mxu0 0.0
        %3482 = vmatprep.subr.mxu0 0.0
        %3483 = vmatpush1.msra.mxu0 0.0
        %3484 = vmatprep.subr.mxu0 0.0
        %3485 = vmatpush1.msra.mxu0 0.0
        %3486 = vmatprep.subr.mxu0 0.0
        %3487 = vmatpush1.msra.mxu0 0.0
        %3488 = vmatprep.subr.mxu0 0.0
        %3489 = vmatpush1.msra.mxu0 0.0
        %3490 = vmatprep.subr.mxu0 0.0
        %3491 = vmatpush1.msra.mxu0 0.0
        %3492 = vmatprep.subr.mxu0 0.0
        %3493 = vmatpush1.msra.mxu0 0.0
        %3494 = vmatprep.subr.mxu0 0.0
        %3495 = vmatpush1.msra.mxu0 0.0
        %3496 = vmatprep.subr.mxu0 0.0
        %3497 = vmatpush1.msra.mxu0 0.0
        %3498 = vmatprep.subr.mxu0 0.0
        %3499 = vmatpush1.msra.mxu0 0.0
        %3500 = vmatprep.mubr.f32.mxu0 0.0
        %3501 = vmatmul.mubr.f32.gmra.mrb[0].mxu0 %v3434
        %v3502 = vpop.f32.mrb[0].mxu0
        %v3503 = vadd.f32 0.0, %v3502
        %v3504 = vpop.f32.mrb[0].mxu0
        %3505 = vdwg.mxu0
        %v3506 = vsel %vm669, %v3284, 0.0
        %v3507 = vsel %vm669, %v3357, 0.0
        %v3508 = vadd.f32 %v3506, %v3507
        %v3509 = vsel %vm669, %v3430, 0.0
        %v3510 = vadd.f32 %v3508, %v3509
        %v3511 = vsel %vm669, %v3503, 0.0
        %v3512 = vadd.f32 %v3510, %v3511
        %v3513 = vadd.f32 %v3512, %v1951
        %v3514 = vld [vmem:[%s11] sm:$0x1]
        %v3515 = vld [vmem:[%s12] sm:$0x1]
        %v3516 = vsel %vm669, %v3513, 0.0
        %3517 = vadd.xlane.f32.xlu0 %v3516
        %v3518 = vpop.xlane.xlu0 %3517
        %v3519 = vmul.f32 %v3518, %v1927
        %v3520 = vsub.f32 %v3513, %v3519
        %v3521 = vmul.f32 %v3520, %v3520
        %v3522 = vsel %vm669, %v3521, 0.0
        %3523 = vadd.xlane.f32.xlu0 %v3522
        %v3524 = vpop.xlane.xlu0 %3523
        %v3525 = vmul.f32 %v3524, %v1927
        %v3526 = vadd.f32 %v3525, 1e-05
        %v3527 = vrsqrt.pop %v3526
        %v3528 = vmul.f32 %v3520, %v3527
        %v3530 = vlaneseq
        %v3531 = vshrl.u32 %v3530, 7
        %v3532 = vsub.s32 0, %v3531
        %v3533 = vrot.slane %v3514, %v3532
        %v3535 = vmul.f32 %v3528, %v3533
        %v3537 = vlaneseq
        %v3538 = vshrl.u32 %v3537, 7
        %v3539 = vsub.s32 0, %v3538
        %v3540 = vrot.slane %v3515, %v3539
        %v3542 = vadd.f32 %v3535, %v3540
        %v3543 = vld [vmem:[%s13] sm:$0xff]
        %v3544 = vld [vmem:[%s13 + $0x8] sm:$0xff]
        %v3545 = vld [vmem:[%s13 + $0x10] sm:$0xff]
        %v3546 = vld [vmem:[%s13 + $0x18] sm:$0xff]
        %v3547 = vld [vmem:[%s14] sm:$0x1]
        %v3549 = vlaneseq
        %v3550 = vshrl.u32 %v3549, 7
        %v3551 = vsub.s32 0, %v3550
        %v3552 = vrot.slane %v3547, %v3551
        %v3555 = vsel %vm669, %v3542, 0
        %3557 = vmatprep.subr.mxu0 0.0
        %3558 = vmatpush1.msra.mxu0 %v3543
        %3559 = vmatprep.subr.mxu0 0.0
        %3560 = vmatpush1.msra.mxu0 %v3544
        %3561 = vmatprep.subr.mxu0 0.0
        %3562 = vmatpush1.msra.mxu0 %v3545
        %3563 = vmatprep.subr.mxu0 0.0
        %3564 = vmatpush1.msra.mxu0 %v3546
        %3565 = vmatprep.subr.mxu0 0.0
        %3566 = vmatpush1.msra.mxu0 0.0
        %3567 = vmatprep.subr.mxu0 0.0
        %3568 = vmatpush1.msra.mxu0 0.0
        %3569 = vmatprep.subr.mxu0 0.0
        %3570 = vmatpush1.msra.mxu0 0.0
        %3571 = vmatprep.subr.mxu0 0.0
        %3572 = vmatpush1.msra.mxu0 0.0
        %3573 = vmatprep.subr.mxu0 0.0
        %3574 = vmatpush1.msra.mxu0 0.0
        %3575 = vmatprep.subr.mxu0 0.0
        %3576 = vmatpush1.msra.mxu0 0.0
        %3577 = vmatprep.subr.mxu0 0.0
        %3578 = vmatpush1.msra.mxu0 0.0
        %3579 = vmatprep.subr.mxu0 0.0
        %3580 = vmatpush1.msra.mxu0 0.0
        %3581 = vmatprep.subr.mxu0 0.0
        %3582 = vmatpush1.msra.mxu0 0.0
        %3583 = vmatprep.subr.mxu0 0.0
        %3584 = vmatpush1.msra.mxu0 0.0
        %3585 = vmatprep.subr.mxu0 0.0
        %3586 = vmatpush1.msra.mxu0 0.0
        %3587 = vmatprep.subr.mxu0 0.0
        %3588 = vmatpush1.msra.mxu0 0.0
        %3589 = vmatprep.subr.mxu0 0.0
        %3590 = vmatpush1.msra.mxu0 0.0
        %3591 = vmatprep.subr.mxu0 0.0
        %3592 = vmatpush1.msra.mxu0 0.0
        %3593 = vmatprep.subr.mxu0 0.0
        %3594 = vmatpush1.msra.mxu0 0.0
        %3595 = vmatprep.subr.mxu0 0.0
        %3596 = vmatpush1.msra.mxu0 0.0
        %3597 = vmatprep.subr.mxu0 0.0
        %3598 = vmatpush1.msra.mxu0 0.0
        %3599 = vmatprep.subr.mxu0 0.0
        %3600 = vmatpush1.msra.mxu0 0.0
        %3601 = vmatprep.subr.mxu0 0.0
        %3602 = vmatpush1.msra.mxu0 0.0
        %3603 = vmatprep.subr.mxu0 0.0
        %3604 = vmatpush1.msra.mxu0 0.0
        %3605 = vmatprep.subr.mxu0 0.0
        %3606 = vmatpush1.msra.mxu0 0.0
        %3607 = vmatprep.subr.mxu0 0.0
        %3608 = vmatpush1.msra.mxu0 0.0
        %3609 = vmatprep.subr.mxu0 0.0
        %3610 = vmatpush1.msra.mxu0 0.0
        %3611 = vmatprep.subr.mxu0 0.0
        %3612 = vmatpush1.msra.mxu0 0.0
        %3613 = vmatprep.subr.mxu0 0.0
        %3614 = vmatpush1.msra.mxu0 0.0
        %3615 = vmatprep.subr.mxu0 0.0
        %3616 = vmatpush1.msra.mxu0 0.0
        %3617 = vmatprep.subr.mxu0 0.0
        %3618 = vmatpush1.msra.mxu0 0.0
        %3619 = vmatprep.subr.mxu0 0.0
        %3620 = vmatpush1.msra.mxu0 0.0
        %3621 = vmatprep.mubr.f32.mxu0 0.0
        %3622 = vmatmul.mubr.f32.gmra.mrb[0].mxu0 %v3555
        %v3623 = vpop.f32.mrb[0].mxu0
        %v3624 = vadd.f32 %v3552, %v3623
        %v3625 = vpop.f32.mrb[0].mxu0
        %3626 = vdwg.mxu0
        %v3627 = vmax.f32 %v3624, 0.0
        %v3628 = vld [vmem:[%s15] sm:$0xff]
        %v3629 = vld [vmem:[%s15 + $0x8] sm:$0xff]
        %v3630 = vld [vmem:[%s15 + $0x10] sm:$0xff]
        %v3631 = vld [vmem:[%s15 + $0x18] sm:$0xff]
        %v3632 = vld [vmem:[%s15 + $0x20] sm:$0xff]
        %v3633 = vld [vmem:[%s15 + $0x28] sm:$0xff]
        %v3634 = vld [vmem:[%s15 + $0x30] sm:$0xff]
        %v3635 = vld [vmem:[%s15 + $0x38] sm:$0xff]
        %v3636 = vld [vmem:[%s16] sm:$0x1]
        %v3638 = vlaneseq
        %v3639 = vshrl.u32 %v3638, 7
        %v3640 = vsub.s32 0, %v3639
        %v3641 = vrot.slane %v3636, %v3640
        %vm3643 = vcmask 523264
        %v3645 = vsel %vm3643, %v3627, 0
        %3647 = vmatprep.subr.mxu0 0.0
        %3648 = vmatpush1.msra.mxu0 %v3628
        %3649 = vmatprep.subr.mxu0 0.0
        %3650 = vmatpush1.msra.mxu0 %v3629
        %3651 = vmatprep.subr.mxu0 0.0
        %3652 = vmatpush1.msra.mxu0 %v3630
        %3653 = vmatprep.subr.mxu0 0.0
        %3654 = vmatpush1.msra.mxu0 %v3631
        %3655 = vmatprep.subr.mxu0 0.0
        %3656 = vmatpush1.msra.mxu0 %v3632
        %3657 = vmatprep.subr.mxu0 0.0
        %3658 = vmatpush1.msra.mxu0 %v3633
        %3659 = vmatprep.subr.mxu0 0.0
        %3660 = vmatpush1.msra.mxu0 %v3634
        %3661 = vmatprep.subr.mxu0 0.0
        %3662 = vmatpush1.msra.mxu0 %v3635
        %3663 = vmatprep.subr.mxu0 0.0
        %3664 = vmatpush1.msra.mxu0 0.0
        %3665 = vmatprep.subr.mxu0 0.0
        %3666 = vmatpush1.msra.mxu0 0.0
        %3667 = vmatprep.subr.mxu0 0.0
        %3668 = vmatpush1.msra.mxu0 0.0
        %3669 = vmatprep.subr.mxu0 0.0
        %3670 = vmatpush1.msra.mxu0 0.0
        %3671 = vmatprep.subr.mxu0 0.0
        %3672 = vmatpush1.msra.mxu0 0.0
        %3673 = vmatprep.subr.mxu0 0.0
        %3674 = vmatpush1.msra.mxu0 0.0
        %3675 = vmatprep.subr.mxu0 0.0
        %3676 = vmatpush1.msra.mxu0 0.0
        %3677 = vmatprep.subr.mxu0 0.0
        %3678 = vmatpush1.msra.mxu0 0.0
        %3679 = vmatprep.subr.mxu0 0.0
        %3680 = vmatpush1.msra.mxu0 0.0
        %3681 = vmatprep.subr.mxu0 0.0
        %3682 = vmatpush1.msra.mxu0 0.0
        %3683 = vmatprep.subr.mxu0 0.0
        %3684 = vmatpush1.msra.mxu0 0.0
        %3685 = vmatprep.subr.mxu0 0.0
        %3686 = vmatpush1.msra.mxu0 0.0
        %3687 = vmatprep.subr.mxu0 0.0
        %3688 = vmatpush1.msra.mxu0 0.0
        %3689 = vmatprep.subr.mxu0 0.0
        %3690 = vmatpush1.msra.mxu0 0.0
        %3691 = vmatprep.subr.mxu0 0.0
        %3692 = vmatpush1.msra.mxu0 0.0
        %3693 = vmatprep.subr.mxu0 0.0
        %3694 = vmatpush1.msra.mxu0 0.0
        %3695 = vmatprep.subr.mxu0 0.0
        %3696 = vmatpush1.msra.mxu0 0.0
        %3697 = vmatprep.subr.mxu0 0.0
        %3698 = vmatpush1.msra.mxu0 0.0
        %3699 = vmatprep.subr.mxu0 0.0
        %3700 = vmatpush1.msra.mxu0 0.0
        %3701 = vmatprep.subr.mxu0 0.0
        %3702 = vmatpush1.msra.mxu0 0.0
        %3703 = vmatprep.subr.mxu0 0.0
        %3704 = vmatpush1.msra.mxu0 0.0
        %3705 = vmatprep.subr.mxu0 0.0
        %3706 = vmatpush1.msra.mxu0 0.0
        %3707 = vmatprep.subr.mxu0 0.0
        %3708 = vmatpush1.msra.mxu0 0.0
        %3709 = vmatprep.subr.mxu0 0.0
        %3710 = vmatpush1.msra.mxu0 0.0
        %3711 = vmatprep.mubr.f32.mxu0 0.0
        %3712 = vmatmul.mubr.f32.gmra.mrb[0].mxu0 %v3645
        %v3713 = vpop.f32.mrb[0].mxu0
        %v3714 = vadd.f32 %v3641, %v3713
        %v3715 = vpop.f32.mrb[0].mxu0
        %3716 = vdwg.mxu0
        %v3717 = vadd.f32 %v3714, %v3542
        %v3718 = vld [vmem:[%s17] sm:$0x1]
        %v3719 = vld [vmem:[%s18] sm:$0x1]
        %v3720 = vsel %vm669, %v3717, 0.0
        %3721 = vadd.xlane.f32.xlu0 %v3720
        %v3722 = vpop.xlane.xlu0 %3721
        %v3723 = vmul.f32 %v3722, %v1927
        %v3724 = vsub.f32 %v3717, %v3723
        %v3725 = vmul.f32 %v3724, %v3724
        %v3726 = vsel %vm669, %v3725, 0.0
        %3727 = vadd.xlane.f32.xlu0 %v3726
        %v3728 = vpop.xlane.xlu0 %3727
        %v3729 = vmul.f32 %v3728, %v1927
        %v3730 = vadd.f32 %v3729, 1e-05
        %v3731 = vrsqrt.pop %v3730
        %v3732 = vmul.f32 %v3724, %v3731
        %v3734 = vlaneseq
        %v3735 = vshrl.u32 %v3734, 7
        %v3736 = vsub.s32 0, %v3735
        %v3737 = vrot.slane %v3718, %v3736
        %v3739 = vmul.f32 %v3732, %v3737
        %v3741 = vlaneseq
        %v3742 = vshrl.u32 %v3741, 7
        %v3743 = vsub.s32 0, %v3742
        %v3744 = vrot.slane %v3719, %v3743
        %v3746 = vadd.f32 %v3739, %v3744
        %s3747 = scalar_lea.vmem %s4, 128
        %v3748 = vld [vmem:[%s3747] sm:$0xff]
        %v3749 = vld [vmem:[%s3747 + $0x8] sm:$0xff]
        %v3750 = vld [vmem:[%s3747 + $0x10] sm:$0xff]
        %v3751 = vld [vmem:[%s3747 + $0x18] sm:$0xff]
        %v3752 = vld [vmem:[%s3747 + $0x20] sm:$0xff]
        %v3753 = vld [vmem:[%s3747 + $0x28] sm:$0xff]
        %v3754 = vld [vmem:[%s3747 + $0x30] sm:$0xff]
        %v3755 = vld [vmem:[%s3747 + $0x38] sm:$0xff]
        %v3756 = vld [vmem:[%s3747 + $0x40] sm:$0xff]
        %v3757 = vld [vmem:[%s3747 + $0x48] sm:$0xff]
        %v3758 = vld [vmem:[%s3747 + $0x50] sm:$0xff]
        %v3759 = vld [vmem:[%s3747 + $0x58] sm:$0xff]
        %v3760 = vld [vmem:[%s3747 + $0x60] sm:$0xff]
        %v3761 = vld [vmem:[%s3747 + $0x68] sm:$0xff]
        %v3762 = vld [vmem:[%s3747 + $0x70] sm:$0xff]
        %v3763 = vld [vmem:[%s3747 + $0x78] sm:$0xff]
        %v3765 = vsel %vm669, %v3746, 0
        %3767 = vmatprep.subr.mxu0 0.0
        %3768 = vmatpush1.msra.mxu0 %v3748
        %3769 = vmatprep.subr.mxu0 0.0
        %3770 = vmatpush1.msra.mxu0 %v3749
        %3771 = vmatprep.subr.mxu0 0.0
        %3772 = vmatpush1.msra.mxu0 %v3750
        %3773 = vmatprep.subr.mxu0 0.0
        %3774 = vmatpush1.msra.mxu0 %v3751
        %3775 = vmatprep.subr.mxu0 0.0
        %3776 = vmatpush1.msra.mxu0 0.0
        %3777 = vmatprep.subr.mxu0 0.0
        %3778 = vmatpush1.msra.mxu0 0.0
        %3779 = vmatprep.subr.mxu0 0.0
        %3780 = vmatpush1.msra.mxu0 0.0
        %3781 = vmatprep.subr.mxu0 0.0
        %3782 = vmatpush1.msra.mxu0 0.0
        %3783 = vmatprep.subr.mxu0 0.0
        %3784 = vmatpush1.msra.mxu0 0.0
        %3785 = vmatprep.subr.mxu0 0.0
        %3786 = vmatpush1.msra.mxu0 0.0
        %3787 = vmatprep.subr.mxu0 0.0
        %3788 = vmatpush1.msra.mxu0 0.0
        %3789 = vmatprep.subr.mxu0 0.0
        %3790 = vmatpush1.msra.mxu0 0.0
        %3791 = vmatprep.subr.mxu0 0.0
        %3792 = vmatpush1.msra.mxu0 0.0
        %3793 = vmatprep.subr.mxu0 0.0
        %3794 = vmatpush1.msra.mxu0 0.0
        %3795 = vmatprep.subr.mxu0 0.0
        %3796 = vmatpush1.msra.mxu0 0.0
        %3797 = vmatprep.subr.mxu0 0.0
        %3798 = vmatpush1.msra.mxu0 0.0
        %3799 = vmatprep.subr.mxu0 0.0
        %3800 = vmatpush1.msra.mxu0 0.0
        %3801 = vmatprep.subr.mxu0 0.0
        %3802 = vmatpush1.msra.mxu0 0.0
        %3803 = vmatprep.subr.mxu0 0.0
        %3804 = vmatpush1.msra.mxu0 0.0
        %3805 = vmatprep.subr.mxu0 0.0
        %3806 = vmatpush1.msra.mxu0 0.0
        %3807 = vmatprep.subr.mxu0 0.0
        %3808 = vmatpush1.msra.mxu0 0.0
        %3809 = vmatprep.subr.mxu0 0.0
        %3810 = vmatpush1.msra.mxu0 0.0
        %3811 = vmatprep.subr.mxu0 0.0
        %3812 = vmatpush1.msra.mxu0 0.0
        %3813 = vmatprep.subr.mxu0 0.0
        %3814 = vmatpush1.msra.mxu0 0.0
        %3815 = vmatprep.subr.mxu0 0.0
        %3816 = vmatpush1.msra.mxu0 0.0
        %3817 = vmatprep.subr.mxu0 0.0
        %3818 = vmatpush1.msra.mxu0 0.0
        %3819 = vmatprep.subr.mxu0 0.0
        %3820 = vmatpush1.msra.mxu0 0.0
        %3821 = vmatprep.subr.mxu0 0.0
        %3822 = vmatpush1.msra.mxu0 0.0
        %3823 = vmatprep.subr.mxu0 0.0
        %3824 = vmatpush1.msra.mxu0 0.0
        %3825 = vmatprep.subr.mxu0 0.0
        %3826 = vmatpush1.msra.mxu0 0.0
        %3827 = vmatprep.subr.mxu0 0.0
        %3828 = vmatpush1.msra.mxu0 0.0
        %3829 = vmatprep.subr.mxu0 0.0
        %3830 = vmatpush1.msra.mxu0 0.0
        %3831 = vmatprep.mubr.f32.mxu0 0.0
        %3832 = vmatmul.mubr.f32.gmra.mrb[0].mxu0 %v3765
        %v3833 = vpop.f32.mrb[0].mxu0
        %v3834 = vadd.f32 0.0, %v3833
        %v3835 = vpop.f32.mrb[0].mxu0
        %3836 = vdwg.mxu0
        %3837 = vmatprep.subr.mxu0 0.0
        %3838 = vmatpush1.msra.mxu0 %v3752
        %3839 = vmatprep.subr.mxu0 0.0
        %3840 = vmatpush1.msra.mxu0 %v3753
        %3841 = vmatprep.subr.mxu0 0.0
        %3842 = vmatpush1.msra.mxu0 %v3754
        %3843 = vmatprep.subr.mxu0 0.0
        %3844 = vmatpush1.msra.mxu0 %v3755
        %3845 = vmatprep.subr.mxu0 0.0
        %3846 = vmatpush1.msra.mxu0 0.0
        %3847 = vmatprep.subr.mxu0 0.0
        %3848 = vmatpush1.msra.mxu0 0.0
        %3849 = vmatprep.subr.mxu0 0.0
        %3850 = vmatpush1.msra.mxu0 0.0
        %3851 = vmatprep.subr.mxu0 0.0
        %3852 = vmatpush1.msra.mxu0 0.0
        %3853 = vmatprep.subr.mxu0 0.0
        %3854 = vmatpush1.msra.mxu0 0.0
        %3855 = vmatprep.subr.mxu0 0.0
        %3856 = vmatpush1.msra.mxu0 0.0
        %3857 = vmatprep.subr.mxu0 0.0
        %3858 = vmatpush1.msra.mxu0 0.0
        %3859 = vmatprep.subr.mxu0 0.0
        %3860 = vmatpush1.msra.mxu0 0.0
        %3861 = vmatprep.subr.mxu0 0.0
        %3862 = vmatpush1.msra.mxu0 0.0
        %3863 = vmatprep.subr.mxu0 0.0
        %3864 = vmatpush1.msra.mxu0 0.0
        %3865 = vmatprep.subr.mxu0 0.0
        %3866 = vmatpush1.msra.mxu0 0.0
        %3867 = vmatprep.subr.mxu0 0.0
        %3868 = vmatpush1.msra.mxu0 0.0
        %3869 = vmatprep.subr.mxu0 0.0
        %3870 = vmatpush1.msra.mxu0 0.0
        %3871 = vmatprep.subr.mxu0 0.0
        %3872 = vmatpush1.msra.mxu0 0.0
        %3873 = vmatprep.subr.mxu0 0.0
        %3874 = vmatpush1.msra.mxu0 0.0
        %3875 = vmatprep.subr.mxu0 0.0
        %3876 = vmatpush1.msra.mxu0 0.0
        %3877 = vmatprep.subr.mxu0 0.0
        %3878 = vmatpush1.msra.mxu0 0.0
        %3879 = vmatprep.subr.mxu0 0.0
        %3880 = vmatpush1.msra.mxu0 0.0
        %3881 = vmatprep.subr.mxu0 0.0
        %3882 = vmatpush1.msra.mxu0 0.0
        %3883 = vmatprep.subr.mxu0 0.0
        %3884 = vmatpush1.msra.mxu0 0.0
        %3885 = vmatprep.subr.mxu0 0.0
        %3886 = vmatpush1.msra.mxu0 0.0
        %3887 = vmatprep.subr.mxu0 0.0
        %3888 = vmatpush1.msra.mxu0 0.0
        %3889 = vmatprep.subr.mxu0 0.0
        %3890 = vmatpush1.msra.mxu0 0.0
        %3891 = vmatprep.subr.mxu0 0.0
        %3892 = vmatpush1.msra.mxu0 0.0
        %3893 = vmatprep.subr.mxu0 0.0
        %3894 = vmatpush1.msra.mxu0 0.0
        %3895 = vmatprep.subr.mxu0 0.0
        %3896 = vmatpush1.msra.mxu0 0.0
        %3897 = vmatprep.subr.mxu0 0.0
        %3898 = vmatpush1.msra.mxu0 0.0
        %3899 = vmatprep.subr.mxu0 0.0
        %3900 = vmatpush1.msra.mxu0 0.0
        %3901 = vmatprep.mubr.f32.mxu0 0.0
        %3902 = vmatmul.mubr.f32.gmra.mrb[0].mxu0 %v3765
        %v3903 = vpop.f32.mrb[0].mxu0
        %v3904 = vadd.f32 0.0, %v3903
        %v3905 = vpop.f32.mrb[0].mxu0
        %3906 = vdwg.mxu0
        %3907 = vmatprep.subr.mxu0 0.0
        %3908 = vmatpush1.msra.mxu0 %v3756
        %3909 = vmatprep.subr.mxu0 0.0
        %3910 = vmatpush1.msra.mxu0 %v3757
        %3911 = vmatprep.subr.mxu0 0.0
        %3912 = vmatpush1.msra.mxu0 %v3758
        %3913 = vmatprep.subr.mxu0 0.0
        %3914 = vmatpush1.msra.mxu0 %v3759
        %3915 = vmatprep.subr.mxu0 0.0
        %3916 = vmatpush1.msra.mxu0 0.0
        %3917 = vmatprep.subr.mxu0 0.0
        %3918 = vmatpush1.msra.mxu0 0.0
        %3919 = vmatprep.subr.mxu0 0.0
        %3920 = vmatpush1.msra.mxu0 0.0
        %3921 = vmatprep.subr.mxu0 0.0
        %3922 = vmatpush1.msra.mxu0 0.0
        %3923 = vmatprep.subr.mxu0 0.0
        %3924 = vmatpush1.msra.mxu0 0.0
        %3925 = vmatprep.subr.mxu0 0.0
        %3926 = vmatpush1.msra.mxu0 0.0
        %3927 = vmatprep.subr.mxu0 0.0
        %3928 = vmatpush1.msra.mxu0 0.0
        %3929 = vmatprep.subr.mxu0 0.0
        %3930 = vmatpush1.msra.mxu0 0.0
        %3931 = vmatprep.subr.mxu0 0.0
        %3932 = vmatpush1.msra.mxu0 0.0
        %3933 = vmatprep.subr.mxu0 0.0
        %3934 = vmatpush1.msra.mxu0 0.0
        %3935 = vmatprep.subr.mxu0 0.0
        %3936 = vmatpush1.msra.mxu0 0.0
        %3937 = vmatprep.subr.mxu0 0.0
        %3938 = vmatpush1.msra.mxu0 0.0
        %3939 = vmatprep.subr.mxu0 0.0
        %3940 = vmatpush1.msra.mxu0 0.0
        %3941 = vmatprep.subr.mxu0 0.0
        %3942 = vmatpush1.msra.mxu0 0.0
        %3943 = vmatprep.subr.mxu0 0.0
        %3944 = vmatpush1.msra.mxu0 0.0
        %3945 = vmatprep.subr.mxu0 0.0
        %3946 = vmatpush1.msra.mxu0 0.0
        %3947 = vmatprep.subr.mxu0 0.0
        %3948 = vmatpush1.msra.mxu0 0.0
        %3949 = vmatprep.subr.mxu0 0.0
        %3950 = vmatpush1.msra.mxu0 0.0
        %3951 = vmatprep.subr.mxu0 0.0
        %3952 = vmatpush1.msra.mxu0 0.0
        %3953 = vmatprep.subr.mxu0 0.0
        %3954 = vmatpush1.msra.mxu0 0.0
        %3955 = vmatprep.subr.mxu0 0.0
        %3956 = vmatpush1.msra.mxu0 0.0
        %3957 = vmatprep.subr.mxu0 0.0
        %3958 = vmatpush1.msra.mxu0 0.0
        %3959 = vmatprep.subr.mxu0 0.0
        %3960 = vmatpush1.msra.mxu0 0.0
        %3961 = vmatprep.subr.mxu0 0.0
        %3962 = vmatpush1.msra.mxu0 0.0
        %3963 = vmatprep.subr.mxu0 0.0
        %3964 = vmatpush1.msra.mxu0 0.0
        %3965 = vmatprep.subr.mxu0 0.0
        %3966 = vmatpush1.msra.mxu0 0.0
        %3967 = vmatprep.subr.mxu0 0.0
        %3968 = vmatpush1.msra.mxu0 0.0
        %3969 = vmatprep.subr.mxu0 0.0
        %3970 = vmatpush1.msra.mxu0 0.0
        %3971 = vmatprep.mubr.f32.mxu0 0.0
        %3972 = vmatmul.mubr.f32.gmra.mrb[0].mxu0 %v3765
        %v3973 = vpop.f32.mrb[0].mxu0
        %v3974 = vadd.f32 0.0, %v3973
        %v3975 = vpop.f32.mrb[0].mxu0
        %3976 = vdwg.mxu0
        %3977 = vmatprep.subr.mxu0 0.0
        %3978 = vmatpush1.msra.mxu0 %v3760
        %3979 = vmatprep.subr.mxu0 0.0
        %3980 = vmatpush1.msra.mxu0 %v3761
        %3981 = vmatprep.subr.mxu0 0.0
        %3982 = vmatpush1.msra.mxu0 %v3762
        %3983 = vmatprep.subr.mxu0 0.0
        %3984 = vmatpush1.msra.mxu0 %v3763
        %3985 = vmatprep.subr.mxu0 0.0
        %3986 = vmatpush1.msra.mxu0 0.0
        %3987 = vmatprep.subr.mxu0 0.0
        %3988 = vmatpush1.msra.mxu0 0.0
        %3989 = vmatprep.subr.mxu0 0.0
        %3990 = vmatpush1.msra.mxu0 0.0
        %3991 = vmatprep.subr.mxu0 0.0
        %3992 = vmatpush1.msra.mxu0 0.0
        %3993 = vmatprep.subr.mxu0 0.0
        %3994 = vmatpush1.msra.mxu0 0.0
        %3995 = vmatprep.subr.mxu0 0.0
        %3996 = vmatpush1.msra.mxu0 0.0
        %3997 = vmatprep.subr.mxu0 0.0
        %3998 = vmatpush1.msra.mxu0 0.0
        %3999 = vmatprep.subr.mxu0 0.0
        %4000 = vmatpush1.msra.mxu0 0.0
        %4001 = vmatprep.subr.mxu0 0.0
        %4002 = vmatpush1.msra.mxu0 0.0
        %4003 = vmatprep.subr.mxu0 0.0
        %4004 = vmatpush1.msra.mxu0 0.0
        %4005 = vmatprep.subr.mxu0 0.0
        %4006 = vmatpush1.msra.mxu0 0.0
        %4007 = vmatprep.subr.mxu0 0.0
        %4008 = vmatpush1.msra.mxu0 0.0
        %4009 = vmatprep.subr.mxu0 0.0
        %4010 = vmatpush1.msra.mxu0 0.0
        %4011 = vmatprep.subr.mxu0 0.0
        %4012 = vmatpush1.msra.mxu0 0.0
        %4013 = vmatprep.subr.mxu0 0.0
        %4014 = vmatpush1.msra.mxu0 0.0
        %4015 = vmatprep.subr.mxu0 0.0
        %4016 = vmatpush1.msra.mxu0 0.0
        %4017 = vmatprep.subr.mxu0 0.0
        %4018 = vmatpush1.msra.mxu0 0.0
        %4019 = vmatprep.subr.mxu0 0.0
        %4020 = vmatpush1.msra.mxu0 0.0
        %4021 = vmatprep.subr.mxu0 0.0
        %4022 = vmatpush1.msra.mxu0 0.0
        %4023 = vmatprep.subr.mxu0 0.0
        %4024 = vmatpush1.msra.mxu0 0.0
        %4025 = vmatprep.subr.mxu0 0.0
        %4026 = vmatpush1.msra.mxu0 0.0
        %4027 = vmatprep.subr.mxu0 0.0
        %4028 = vmatpush1.msra.mxu0 0.0
        %4029 = vmatprep.subr.mxu0 0.0
        %4030 = vmatpush1.msra.mxu0 0.0
        %4031 = vmatprep.subr.mxu0 0.0
        %4032 = vmatpush1.msra.mxu0 0.0
        %4033 = vmatprep.subr.mxu0 0.0
        %4034 = vmatpush1.msra.mxu0 0.0
        %4035 = vmatprep.subr.mxu0 0.0
        %4036 = vmatpush1.msra.mxu0 0.0
        %4037 = vmatprep.subr.mxu0 0.0
        %4038 = vmatpush1.msra.mxu0 0.0
        %4039 = vmatprep.subr.mxu0 0.0
        %4040 = vmatpush1.msra.mxu0 0.0
        %4041 = vmatprep.mubr.f32.mxu0 0.0
        %4042 = vmatmul.mubr.f32.gmra.mrb[0].mxu0 %v3765
        %v4043 = vpop.f32.mrb[0].mxu0
        %v4044 = vadd.f32 0.0, %v4043
        %v4045 = vpop.f32.mrb[0].mxu0
        %4046 = vdwg.mxu0
        %s4047 = scalar_lea.vmem %s5, 32
        %v4048 = vld [vmem:[%s4047] sm:$0xff]
        %v4049 = vld [vmem:[%s4047 + $0x8] sm:$0xff]
        %v4050 = vld [vmem:[%s4047 + $0x10] sm:$0xff]
        %v4051 = vld [vmem:[%s4047 + $0x18] sm:$0xff]
        %4053 = vrot.lane.b32.xlu0 %v3834, 120
        %v4054 = vpop.permute.xlu0 %4053
        %v4055 = vsel %vm960, %v3834, 0
        %v4057 = vsel %vm960, %v4054, 0
        %4059 = vmatprep.subr.mxu0 0.0
        %4060 = vmatpush1.xpose.msra.mxu0 %v4057
        %4061 = vmatprep.subr.mxu0 0.0
        %4062 = vmatpush1.xpose.msra.mxu0 0.0
        %4063 = vmatprep.subr.mxu0 0.0
        %4064 = vmatpush1.xpose.msra.mxu0 0.0
        %4065 = vmatprep.subr.mxu0 0.0
        %4066 = vmatpush1.xpose.msra.mxu0 0.0
        %4067 = vmatprep.subr.mxu0 0.0
        %4068 = vmatpush1.xpose.msra.mxu0 0.0
        %4069 = vmatprep.subr.mxu0 0.0
        %4070 = vmatpush1.xpose.msra.mxu0 0.0
        %4071 = vmatprep.subr.mxu0 0.0
        %4072 = vmatpush1.xpose.msra.mxu0 0.0
        %4073 = vmatprep.subr.mxu0 0.0
        %4074 = vmatpush1.xpose.msra.mxu0 0.0
        %4075 = vmatprep.subr.mxu0 0.0
        %4076 = vmatpush1.xpose.msra.mxu0 0.0
        %4077 = vmatprep.subr.mxu0 0.0
        %4078 = vmatpush1.xpose.msra.mxu0 0.0
        %4079 = vmatprep.subr.mxu0 0.0
        %4080 = vmatpush1.xpose.msra.mxu0 0.0
        %4081 = vmatprep.subr.mxu0 0.0
        %4082 = vmatpush1.xpose.msra.mxu0 0.0
        %4083 = vmatprep.subr.mxu0 0.0
        %4084 = vmatpush1.xpose.msra.mxu0 0.0
        %4085 = vmatprep.subr.mxu0 0.0
        %4086 = vmatpush1.xpose.msra.mxu0 0.0
        %4087 = vmatprep.subr.mxu0 0.0
        %4088 = vmatpush1.xpose.msra.mxu0 0.0
        %4089 = vmatprep.subr.mxu0 0.0
        %4090 = vmatpush1.xpose.msra.mxu0 0.0
        %4091 = vmatprep.subr.mxu0 0.0
        %4092 = vmatpush1.xpose.msra.mxu0 0.0
        %4093 = vmatprep.subr.mxu0 0.0
        %4094 = vmatpush1.xpose.msra.mxu0 0.0
        %4095 = vmatprep.subr.mxu0 0.0
        %4096 = vmatpush1.xpose.msra.mxu0 0.0
        %4097 = vmatprep.subr.mxu0 0.0
        %4098 = vmatpush1.xpose.msra.mxu0 0.0
        %4099 = vmatprep.subr.mxu0 0.0
        %4100 = vmatpush1.xpose.msra.mxu0 0.0
        %4101 = vmatprep.subr.mxu0 0.0
        %4102 = vmatpush1.xpose.msra.mxu0 0.0
        %4103 = vmatprep.subr.mxu0 0.0
        %4104 = vmatpush1.xpose.msra.mxu0 0.0
        %4105 = vmatprep.subr.mxu0 0.0
        %4106 = vmatpush1.xpose.msra.mxu0 0.0
        %4107 = vmatprep.subr.mxu0 0.0
        %4108 = vmatpush1.xpose.msra.mxu0 0.0
        %4109 = vmatprep.subr.mxu0 0.0
        %4110 = vmatpush1.xpose.msra.mxu0 0.0
        %4111 = vmatprep.subr.mxu0 0.0
        %4112 = vmatpush1.xpose.msra.mxu0 0.0
        %4113 = vmatprep.subr.mxu0 0.0
        %4114 = vmatpush1.xpose.msra.mxu0 0.0
        %4115 = vmatprep.subr.mxu0 0.0
        %4116 = vmatpush1.xpose.msra.mxu0 0.0
        %4117 = vmatprep.subr.mxu0 0.0
        %4118 = vmatpush1.xpose.msra.mxu0 0.0
        %4119 = vmatprep.subr.mxu0 0.0
        %4120 = vmatpush1.xpose.msra.mxu0 0.0
        %4121 = vmatprep.subr.mxu0 0.0
        %4122 = vmatpush1.xpose.msra.mxu0 0.0
        %4123 = vmatprep.mubr.f32.mxu0 0.0
        %4124 = vmatmul.mubr.f32.gmra.mrb[0].mxu0 %v4055
        %v4125 = vpop.f32.mrb[0].mxu0
        %v4126 = vadd.f32 0.0, %v4125
        %v4127 = vpop.f32.mrb[0].mxu0
        %4128 = vdwg.mxu0
        %4130 = vrot.lane.b32.xlu0 %v3904, 120
        %v4131 = vpop.permute.xlu0 %4130
        %v4132 = vsel %vm960, %v3904, 0
        %v4134 = vsel %vm960, %v4131, 0
        %4136 = vmatprep.subr.mxu0 0.0
        %4137 = vmatpush1.xpose.msra.mxu0 %v4134
        %4138 = vmatprep.subr.mxu0 0.0
        %4139 = vmatpush1.xpose.msra.mxu0 0.0
        %4140 = vmatprep.subr.mxu0 0.0
        %4141 = vmatpush1.xpose.msra.mxu0 0.0
        %4142 = vmatprep.subr.mxu0 0.0
        %4143 = vmatpush1.xpose.msra.mxu0 0.0
        %4144 = vmatprep.subr.mxu0 0.0
        %4145 = vmatpush1.xpose.msra.mxu0 0.0
        %4146 = vmatprep.subr.mxu0 0.0
        %4147 = vmatpush1.xpose.msra.mxu0 0.0
        %4148 = vmatprep.subr.mxu0 0.0
        %4149 = vmatpush1.xpose.msra.mxu0 0.0
        %4150 = vmatprep.subr.mxu0 0.0
        %4151 = vmatpush1.xpose.msra.mxu0 0.0
        %4152 = vmatprep.subr.mxu0 0.0
        %4153 = vmatpush1.xpose.msra.mxu0 0.0
        %4154 = vmatprep.subr.mxu0 0.0
        %4155 = vmatpush1.xpose.msra.mxu0 0.0
        %4156 = vmatprep.subr.mxu0 0.0
        %4157 = vmatpush1.xpose.msra.mxu0 0.0
        %4158 = vmatprep.subr.mxu0 0.0
        %4159 = vmatpush1.xpose.msra.mxu0 0.0
        %4160 = vmatprep.subr.mxu0 0.0
        %4161 = vmatpush1.xpose.msra.mxu0 0.0
        %4162 = vmatprep.subr.mxu0 0.0
        %4163 = vmatpush1.xpose.msra.mxu0 0.0
        %4164 = vmatprep.subr.mxu0 0.0
        %4165 = vmatpush1.xpose.msra.mxu0 0.0
        %4166 = vmatprep.subr.mxu0 0.0
        %4167 = vmatpush1.xpose.msra.mxu0 0.0
        %4168 = vmatprep.subr.mxu0 0.0
        %4169 = vmatpush1.xpose.msra.mxu0 0.0
        %4170 = vmatprep.subr.mxu0 0.0
        %4171 = vmatpush1.xpose.msra.mxu0 0.0
        %4172 = vmatprep.subr.mxu0 0.0
        %4173 = vmatpush1.xpose.msra.mxu0 0.0
        %4174 = vmatprep.subr.mxu0 0.0
        %4175 = vmatpush1.xpose.msra.mxu0 0.0
        %4176 = vmatprep.subr.mxu0 0.0
        %4177 = vmatpush1.xpose.msra.mxu0 0.0
        %4178 = vmatprep.subr.mxu0 0.0
        %4179 = vmatpush1.xpose.msra.mxu0 0.0
        %4180 = vmatprep.subr.mxu0 0.0
        %4181 = vmatpush1.xpose.msra.mxu0 0.0
        %4182 = vmatprep.subr.mxu0 0.0
        %4183 = vmatpush1.xpose.msra.mxu0 0.0
        %4184 = vmatprep.subr.mxu0 0.0
        %4185 = vmatpush1.xpose.msra.mxu0 0.0
        %4186 = vmatprep.subr.mxu0 0.0
        %4187 = vmatpush1.xpose.msra.mxu0 0.0
        %4188 = vmatprep.subr.mxu0 0.0
        %4189 = vmatpush1.xpose.msra.mxu0 0.0
        %4190 = vmatprep.subr.mxu0 0.0
        %4191 = vmatpush1.xpose.msra.mxu0 0.0
        %4192 = vmatprep.subr.mxu0 0.0
        %4193 = vmatpush1.xpose.msra.mxu0 0.0
        %4194 = vmatprep.subr.mxu0 0.0
        %4195 = vmatpush1.xpose.msra.mxu0 0.0
        %4196 = vmatprep.subr.mxu0 0.0
        %4197 = vmatpush1.xpose.msra.mxu0 0.0
        %4198 = vmatprep.subr.mxu0 0.0
        %4199 = vmatpush1.xpose.msra.mxu0 0.0
        %4200 = vmatprep.mubr.f32.mxu0 0.0
        %4201 = vmatmul.mubr.f32.gmra.mrb[0].mxu0 %v4132
        %v4202 = vpop.f32.mrb[0].mxu0
        %v4203 = vadd.f32 0.0, %v4202
        %v4204 = vpop.f32.mrb[0].mxu0
        %4205 = vdwg.mxu0
        %4207 = vrot.lane.b32.xlu0 %v3974, 120
        %v4208 = vpop.permute.xlu0 %4207
        %v4209 = vsel %vm960, %v3974, 0
        %v4211 = vsel %vm960, %v4208, 0
        %4213 = vmatprep.subr.mxu0 0.0
        %4214 = vmatpush1.xpose.msra.mxu0 %v4211
        %4215 = vmatprep.subr.mxu0 0.0
        %4216 = vmatpush1.xpose.msra.mxu0 0.0
        %4217 = vmatprep.subr.mxu0 0.0
        %4218 = vmatpush1.xpose.msra.mxu0 0.0
        %4219 = vmatprep.subr.mxu0 0.0
        %4220 = vmatpush1.xpose.msra.mxu0 0.0
        %4221 = vmatprep.subr.mxu0 0.0
        %4222 = vmatpush1.xpose.msra.mxu0 0.0
        %4223 = vmatprep.subr.mxu0 0.0
        %4224 = vmatpush1.xpose.msra.mxu0 0.0
        %4225 = vmatprep.subr.mxu0 0.0
        %4226 = vmatpush1.xpose.msra.mxu0 0.0
        %4227 = vmatprep.subr.mxu0 0.0
        %4228 = vmatpush1.xpose.msra.mxu0 0.0
        %4229 = vmatprep.subr.mxu0 0.0
        %4230 = vmatpush1.xpose.msra.mxu0 0.0
        %4231 = vmatprep.subr.mxu0 0.0
        %4232 = vmatpush1.xpose.msra.mxu0 0.0
        %4233 = vmatprep.subr.mxu0 0.0
        %4234 = vmatpush1.xpose.msra.mxu0 0.0
        %4235 = vmatprep.subr.mxu0 0.0
        %4236 = vmatpush1.xpose.msra.mxu0 0.0
        %4237 = vmatprep.subr.mxu0 0.0
        %4238 = vmatpush1.xpose.msra.mxu0 0.0
        %4239 = vmatprep.subr.mxu0 0.0
        %4240 = vmatpush1.xpose.msra.mxu0 0.0
        %4241 = vmatprep.subr.mxu0 0.0
        %4242 = vmatpush1.xpose.msra.mxu0 0.0
        %4243 = vmatprep.subr.mxu0 0.0
        %4244 = vmatpush1.xpose.msra.mxu0 0.0
        %4245 = vmatprep.subr.mxu0 0.0
        %4246 = vmatpush1.xpose.msra.mxu0 0.0
        %4247 = vmatprep.subr.mxu0 0.0
        %4248 = vmatpush1.xpose.msra.mxu0 0.0
        %4249 = vmatprep.subr.mxu0 0.0
        %4250 = vmatpush1.xpose.msra.mxu0 0.0
        %4251 = vmatprep.subr.mxu0 0.0
        %4252 = vmatpush1.xpose.msra.mxu0 0.0
        %4253 = vmatprep.subr.mxu0 0.0
        %4254 = vmatpush1.xpose.msra.mxu0 0.0
        %4255 = vmatprep.subr.mxu0 0.0
        %4256 = vmatpush1.xpose.msra.mxu0 0.0
        %4257 = vmatprep.subr.mxu0 0.0
        %4258 = vmatpush1.xpose.msra.mxu0 0.0
        %4259 = vmatprep.subr.mxu0 0.0
        %4260 = vmatpush1.xpose.msra.mxu0 0.0
        %4261 = vmatprep.subr.mxu0 0.0
        %4262 = vmatpush1.xpose.msra.mxu0 0.0
        %4263 = vmatprep.subr.mxu0 0.0
        %4264 = vmatpush1.xpose.msra.mxu0 0.0
        %4265 = vmatprep.subr.mxu0 0.0
        %4266 = vmatpush1.xpose.msra.mxu0 0.0
        %4267 = vmatprep.subr.mxu0 0.0
        %4268 = vmatpush1.xpose.msra.mxu0 0.0
        %4269 = vmatprep.subr.mxu0 0.0
        %4270 = vmatpush1.xpose.msra.mxu0 0.0
        %4271 = vmatprep.subr.mxu0 0.0
        %4272 = vmatpush1.xpose.msra.mxu0 0.0
        %4273 = vmatprep.subr.mxu0 0.0
        %4274 = vmatpush1.xpose.msra.mxu0 0.0
        %4275 = vmatprep.subr.mxu0 0.0
        %4276 = vmatpush1.xpose.msra.mxu0 0.0
        %4277 = vmatprep.mubr.f32.mxu0 0.0
        %4278 = vmatmul.mubr.f32.gmra.mrb[0].mxu0 %v4209
        %v4279 = vpop.f32.mrb[0].mxu0
        %v4280 = vadd.f32 0.0, %v4279
        %v4281 = vpop.f32.mrb[0].mxu0
        %4282 = vdwg.mxu0
        %4284 = vrot.lane.b32.xlu0 %v4044, 120
        %v4285 = vpop.permute.xlu0 %4284
        %v4286 = vsel %vm960, %v4044, 0
        %v4288 = vsel %vm960, %v4285, 0
        %4290 = vmatprep.subr.mxu0 0.0
        %4291 = vmatpush1.xpose.msra.mxu0 %v4288
        %4292 = vmatprep.subr.mxu0 0.0
        %4293 = vmatpush1.xpose.msra.mxu0 0.0
        %4294 = vmatprep.subr.mxu0 0.0
        %4295 = vmatpush1.xpose.msra.mxu0 0.0
        %4296 = vmatprep.subr.mxu0 0.0
        %4297 = vmatpush1.xpose.msra.mxu0 0.0
        %4298 = vmatprep.subr.mxu0 0.0
        %4299 = vmatpush1.xpose.msra.mxu0 0.0
        %4300 = vmatprep.subr.mxu0 0.0
        %4301 = vmatpush1.xpose.msra.mxu0 0.0
        %4302 = vmatprep.subr.mxu0 0.0
        %4303 = vmatpush1.xpose.msra.mxu0 0.0
        %4304 = vmatprep.subr.mxu0 0.0
        %4305 = vmatpush1.xpose.msra.mxu0 0.0
        %4306 = vmatprep.subr.mxu0 0.0
        %4307 = vmatpush1.xpose.msra.mxu0 0.0
        %4308 = vmatprep.subr.mxu0 0.0
        %4309 = vmatpush1.xpose.msra.mxu0 0.0
        %4310 = vmatprep.subr.mxu0 0.0
        %4311 = vmatpush1.xpose.msra.mxu0 0.0
        %4312 = vmatprep.subr.mxu0 0.0
        %4313 = vmatpush1.xpose.msra.mxu0 0.0
        %4314 = vmatprep.subr.mxu0 0.0
        %4315 = vmatpush1.xpose.msra.mxu0 0.0
        %4316 = vmatprep.subr.mxu0 0.0
        %4317 = vmatpush1.xpose.msra.mxu0 0.0
        %4318 = vmatprep.subr.mxu0 0.0
        %4319 = vmatpush1.xpose.msra.mxu0 0.0
        %4320 = vmatprep.subr.mxu0 0.0
        %4321 = vmatpush1.xpose.msra.mxu0 0.0
        %4322 = vmatprep.subr.mxu0 0.0
        %4323 = vmatpush1.xpose.msra.mxu0 0.0
        %4324 = vmatprep.subr.mxu0 0.0
        %4325 = vmatpush1.xpose.msra.mxu0 0.0
        %4326 = vmatprep.subr.mxu0 0.0
        %4327 = vmatpush1.xpose.msra.mxu0 0.0
        %4328 = vmatprep.subr.mxu0 0.0
        %4329 = vmatpush1.xpose.msra.mxu0 0.0
        %4330 = vmatprep.subr.mxu0 0.0
        %4331 = vmatpush1.xpose.msra.mxu0 0.0
        %4332 = vmatprep.subr.mxu0 0.0
        %4333 = vmatpush1.xpose.msra.mxu0 0.0
        %4334 = vmatprep.subr.mxu0 0.0
        %4335 = vmatpush1.xpose.msra.mxu0 0.0
        %4336 = vmatprep.subr.mxu0 0.0
        %4337 = vmatpush1.xpose.msra.mxu0 0.0
        %4338 = vmatprep.subr.mxu0 0.0
        %4339 = vmatpush1.xpose.msra.mxu0 0.0
        %4340 = vmatprep.subr.mxu0 0.0
        %4341 = vmatpush1.xpose.msra.mxu0 0.0
        %4342 = vmatprep.subr.mxu0 0.0
        %4343 = vmatpush1.xpose.msra.mxu0 0.0
        %4344 = vmatprep.subr.mxu0 0.0
        %4345 = vmatpush1.xpose.msra.mxu0 0.0
        %4346 = vmatprep.subr.mxu0 0.0
        %4347 = vmatpush1.xpose.msra.mxu0 0.0
        %4348 = vmatprep.subr.mxu0 0.0
        %4349 = vmatpush1.xpose.msra.mxu0 0.0
        %4350 = vmatprep.subr.mxu0 0.0
        %4351 = vmatpush1.xpose.msra.mxu0 0.0
        %4352 = vmatprep.subr.mxu0 0.0
        %4353 = vmatpush1.xpose.msra.mxu0 0.0
        %4354 = vmatprep.mubr.f32.mxu0 0.0
        %4355 = vmatmul.mubr.f32.gmra.mrb[0].mxu0 %v4286
        %v4356 = vpop.f32.mrb[0].mxu0
        %v4357 = vadd.f32 0.0, %v4356
        %v4358 = vpop.f32.mrb[0].mxu0
        %4359 = vdwg.mxu0
        %v4360 = vmul.f32 %v4126, 0.35355338
        %v4361 = vmul.f32 %v4203, 0.35355338
        %v4362 = vmul.f32 %v4280, 0.35355338
        %v4363 = vmul.f32 %v4357, 0.35355338
        %v4364 = vadd.f32 %v4360, %v651
        %v4365 = vadd.f32 %v4361, %v651
        %v4366 = vadd.f32 %v4362, %v651
        %v4367 = vadd.f32 %v4363, %v651
        %v4368 = vsel %vm960, %v4364, -inf
        %4369 = vmax.xlane.f32.xlu0 %v4368
        %v4370 = vpop.xlane.xlu0 %4369
        %v4371 = vsel %vm960, %v4365, -inf
        %4372 = vmax.xlane.f32.xlu0 %v4371
        %v4373 = vpop.xlane.xlu0 %4372
        %v4374 = vsel %vm960, %v4366, -inf
        %4375 = vmax.xlane.f32.xlu0 %v4374
        %v4376 = vpop.xlane.xlu0 %4375
        %v4377 = vsel %vm960, %v4367, -inf
        %4378 = vmax.xlane.f32.xlu0 %v4377
        %v4379 = vpop.xlane.xlu0 %4378
        %v4380 = vsub.f32 %v4364, %v4370
        %v4381 = vsub.f32 %v4365, %v4373
        %v4382 = vsub.f32 %v4366, %v4376
        %v4383 = vsub.f32 %v4367, %v4379
        %v4384 = vmul.f32 %v4380, 1.442695
        %v4385 = vpow.pop %v4384
        %v4386 = vmul.f32 %v4381, 1.442695
        %v4387 = vpow.pop %v4386
        %v4388 = vmul.f32 %v4382, 1.442695
        %v4389 = vpow.pop %v4388
        %v4390 = vmul.f32 %v4383, 1.442695
        %v4391 = vpow.pop %v4390
        %v4392 = vsel %vm960, %v4385, 0.0
        %4393 = vadd.xlane.f32.xlu0 %v4392
        %v4394 = vpop.xlane.xlu0 %4393
        %v4395 = vsel %vm960, %v4387, 0.0
        %4396 = vadd.xlane.f32.xlu0 %v4395
        %v4397 = vpop.xlane.xlu0 %4396
        %v4398 = vsel %vm960, %v4389, 0.0
        %4399 = vadd.xlane.f32.xlu0 %v4398
        %v4400 = vpop.xlane.xlu0 %4399
        %v4401 = vsel %vm960, %v4391, 0.0
        %4402 = vadd.xlane.f32.xlu0 %v4401
        %v4403 = vpop.xlane.xlu0 %4402
        %v4404 = vrcp.pop %v4394
        %v4405 = vmul.f32 %v4385, %v4404
        %v4406 = vrcp.pop %v4397
        %v4407 = vmul.f32 %v4387, %v4406
        %v4408 = vrcp.pop %v4400
        %v4409 = vmul.f32 %v4389, %v4408
        %v4410 = vrcp.pop %v4403
        %v4411 = vmul.f32 %v4391, %v4410
        %4412 = vrot.lane.b32.xlu0 %v3834, 112
        %v4413 = vpop.permute.xlu0 %4412
        %v4416 = vsel %vm960, %v4405, 0
        %4418 = vmatprep.subr.mxu0 0.0
        %4419 = vmatpush1.msra.mxu0 %v4413
        %4420 = vmatprep.subr.mxu0 0.0
        %4421 = vmatpush1.msra.mxu0 0.0
        %4422 = vmatprep.subr.mxu0 0.0
        %4423 = vmatpush1.msra.mxu0 0.0
        %4424 = vmatprep.subr.mxu0 0.0
        %4425 = vmatpush1.msra.mxu0 0.0
        %4426 = vmatprep.subr.mxu0 0.0
        %4427 = vmatpush1.msra.mxu0 0.0
        %4428 = vmatprep.subr.mxu0 0.0
        %4429 = vmatpush1.msra.mxu0 0.0
        %4430 = vmatprep.subr.mxu0 0.0
        %4431 = vmatpush1.msra.mxu0 0.0
        %4432 = vmatprep.subr.mxu0 0.0
        %4433 = vmatpush1.msra.mxu0 0.0
        %4434 = vmatprep.subr.mxu0 0.0
        %4435 = vmatpush1.msra.mxu0 0.0
        %4436 = vmatprep.subr.mxu0 0.0
        %4437 = vmatpush1.msra.mxu0 0.0
        %4438 = vmatprep.subr.mxu0 0.0
        %4439 = vmatpush1.msra.mxu0 0.0
        %4440 = vmatprep.subr.mxu0 0.0
        %4441 = vmatpush1.msra.mxu0 0.0
        %4442 = vmatprep.subr.mxu0 0.0
        %4443 = vmatpush1.msra.mxu0 0.0
        %4444 = vmatprep.subr.mxu0 0.0
        %4445 = vmatpush1.msra.mxu0 0.0
        %4446 = vmatprep.subr.mxu0 0.0
        %4447 = vmatpush1.msra.mxu0 0.0
        %4448 = vmatprep.subr.mxu0 0.0
        %4449 = vmatpush1.msra.mxu0 0.0
        %4450 = vmatprep.subr.mxu0 0.0
        %4451 = vmatpush1.msra.mxu0 0.0
        %4452 = vmatprep.subr.mxu0 0.0
        %4453 = vmatpush1.msra.mxu0 0.0
        %4454 = vmatprep.subr.mxu0 0.0
        %4455 = vmatpush1.msra.mxu0 0.0
        %4456 = vmatprep.subr.mxu0 0.0
        %4457 = vmatpush1.msra.mxu0 0.0
        %4458 = vmatprep.subr.mxu0 0.0
        %4459 = vmatpush1.msra.mxu0 0.0
        %4460 = vmatprep.subr.mxu0 0.0
        %4461 = vmatpush1.msra.mxu0 0.0
        %4462 = vmatprep.subr.mxu0 0.0
        %4463 = vmatpush1.msra.mxu0 0.0
        %4464 = vmatprep.subr.mxu0 0.0
        %4465 = vmatpush1.msra.mxu0 0.0
        %4466 = vmatprep.subr.mxu0 0.0
        %4467 = vmatpush1.msra.mxu0 0.0
        %4468 = vmatprep.subr.mxu0 0.0
        %4469 = vmatpush1.msra.mxu0 0.0
        %4470 = vmatprep.subr.mxu0 0.0
        %4471 = vmatpush1.msra.mxu0 0.0
        %4472 = vmatprep.subr.mxu0 0.0
        %4473 = vmatpush1.msra.mxu0 0.0
        %4474 = vmatprep.subr.mxu0 0.0
        %4475 = vmatpush1.msra.mxu0 0.0
        %4476 = vmatprep.subr.mxu0 0.0
        %4477 = vmatpush1.msra.mxu0 0.0
        %4478 = vmatprep.subr.mxu0 0.0
        %4479 = vmatpush1.msra.mxu0 0.0
        %4480 = vmatprep.subr.mxu0 0.0
        %4481 = vmatpush1.msra.mxu0 0.0
        %4482 = vmatprep.mubr.f32.mxu0 0.0
        %4483 = vmatmul.mubr.f32.gmra.mrb[0].mxu0 %v4416
        %v4484 = vpop.f32.mrb[0].mxu0
        %v4485 = vadd.f32 0.0, %v4484
        %v4486 = vpop.f32.mrb[0].mxu0
        %4487 = vdwg.mxu0
        %4488 = vrot.lane.b32.xlu0 %v3904, 112
        %v4489 = vpop.permute.xlu0 %4488
        %v4492 = vsel %vm960, %v4407, 0
        %4494 = vmatprep.subr.mxu0 0.0
        %4495 = vmatpush1.msra.mxu0 %v4489
        %4496 = vmatprep.subr.mxu0 0.0
        %4497 = vmatpush1.msra.mxu0 0.0
        %4498 = vmatprep.subr.mxu0 0.0
        %4499 = vmatpush1.msra.mxu0 0.0
        %4500 = vmatprep.subr.mxu0 0.0
        %4501 = vmatpush1.msra.mxu0 0.0
        %4502 = vmatprep.subr.mxu0 0.0
        %4503 = vmatpush1.msra.mxu0 0.0
        %4504 = vmatprep.subr.mxu0 0.0
        %4505 = vmatpush1.msra.mxu0 0.0
        %4506 = vmatprep.subr.mxu0 0.0
        %4507 = vmatpush1.msra.mxu0 0.0
        %4508 = vmatprep.subr.mxu0 0.0
        %4509 = vmatpush1.msra.mxu0 0.0
        %4510 = vmatprep.subr.mxu0 0.0
        %4511 = vmatpush1.msra.mxu0 0.0
        %4512 = vmatprep.subr.mxu0 0.0
        %4513 = vmatpush1.msra.mxu0 0.0
        %4514 = vmatprep.subr.mxu0 0.0
        %4515 = vmatpush1.msra.mxu0 0.0
        %4516 = vmatprep.subr.mxu0 0.0
        %4517 = vmatpush1.msra.mxu0 0.0
        %4518 = vmatprep.subr.mxu0 0.0
        %4519 = vmatpush1.msra.mxu0 0.0
        %4520 = vmatprep.subr.mxu0 0.0
        %4521 = vmatpush1.msra.mxu0 0.0
        %4522 = vmatprep.subr.mxu0 0.0
        %4523 = vmatpush1.msra.mxu0 0.0
        %4524 = vmatprep.subr.mxu0 0.0
        %4525 = vmatpush1.msra.mxu0 0.0
        %4526 = vmatprep.subr.mxu0 0.0
        %4527 = vmatpush1.msra.mxu0 0.0
        %4528 = vmatprep.subr.mxu0 0.0
        %4529 = vmatpush1.msra.mxu0 0.0
        %4530 = vmatprep.subr.mxu0 0.0
        %4531 = vmatpush1.msra.mxu0 0.0
        %4532 = vmatprep.subr.mxu0 0.0
        %4533 = vmatpush1.msra.mxu0 0.0
        %4534 = vmatprep.subr.mxu0 0.0
        %4535 = vmatpush1.msra.mxu0 0.0
        %4536 = vmatprep.subr.mxu0 0.0
        %4537 = vmatpush1.msra.mxu0 0.0
        %4538 = vmatprep.subr.mxu0 0.0
        %4539 = vmatpush1.msra.mxu0 0.0
        %4540 = vmatprep.subr.mxu0 0.0
        %4541 = vmatpush1.msra.mxu0 0.0
        %4542 = vmatprep.subr.mxu0 0.0
        %4543 = vmatpush1.msra.mxu0 0.0
        %4544 = vmatprep.subr.mxu0 0.0
        %4545 = vmatpush1.msra.mxu0 0.0
        %4546 = vmatprep.subr.mxu0 0.0
        %4547 = vmatpush1.msra.mxu0 0.0
        %4548 = vmatprep.subr.mxu0 0.0
        %4549 = vmatpush1.msra.mxu0 0.0
        %4550 = vmatprep.subr.mxu0 0.0
        %4551 = vmatpush1.msra.mxu0 0.0
        %4552 = vmatprep.subr.mxu0 0.0
        %4553 = vmatpush1.msra.mxu0 0.0
        %4554 = vmatprep.subr.mxu0 0.0
        %4555 = vmatpush1.msra.mxu0 0.0
        %4556 = vmatprep.subr.mxu0 0.0
        %4557 = vmatpush1.msra.mxu0 0.0
        %4558 = vmatprep.mubr.f32.mxu0 0.0
        %4559 = vmatmul.mubr.f32.gmra.mrb[0].mxu0 %v4492
        %v4560 = vpop.f32.mrb[0].mxu0
        %v4561 = vadd.f32 0.0, %v4560
        %v4562 = vpop.f32.mrb[0].mxu0
        %4563 = vdwg.mxu0
        %4564 = vrot.lane.b32.xlu0 %v3974, 112
        %v4565 = vpop.permute.xlu0 %4564
        %v4568 = vsel %vm960, %v4409, 0
        %4570 = vmatprep.subr.mxu0 0.0
        %4571 = vmatpush1.msra.mxu0 %v4565
        %4572 = vmatprep.subr.mxu0 0.0
        %4573 = vmatpush1.msra.mxu0 0.0
        %4574 = vmatprep.subr.mxu0 0.0
        %4575 = vmatpush1.msra.mxu0 0.0
        %4576 = vmatprep.subr.mxu0 0.0
        %4577 = vmatpush1.msra.mxu0 0.0
        %4578 = vmatprep.subr.mxu0 0.0
        %4579 = vmatpush1.msra.mxu0 0.0
        %4580 = vmatprep.subr.mxu0 0.0
        %4581 = vmatpush1.msra.mxu0 0.0
        %4582 = vmatprep.subr.mxu0 0.0
        %4583 = vmatpush1.msra.mxu0 0.0
        %4584 = vmatprep.subr.mxu0 0.0
        %4585 = vmatpush1.msra.mxu0 0.0
        %4586 = vmatprep.subr.mxu0 0.0
        %4587 = vmatpush1.msra.mxu0 0.0
        %4588 = vmatprep.subr.mxu0 0.0
        %4589 = vmatpush1.msra.mxu0 0.0
        %4590 = vmatprep.subr.mxu0 0.0
        %4591 = vmatpush1.msra.mxu0 0.0
        %4592 = vmatprep.subr.mxu0 0.0
        %4593 = vmatpush1.msra.mxu0 0.0
        %4594 = vmatprep.subr.mxu0 0.0
        %4595 = vmatpush1.msra.mxu0 0.0
        %4596 = vmatprep.subr.mxu0 0.0
        %4597 = vmatpush1.msra.mxu0 0.0
        %4598 = vmatprep.subr.mxu0 0.0
        %4599 = vmatpush1.msra.mxu0 0.0
        %4600 = vmatprep.subr.mxu0 0.0
        %4601 = vmatpush1.msra.mxu0 0.0
        %4602 = vmatprep.subr.mxu0 0.0
        %4603 = vmatpush1.msra.mxu0 0.0
        %4604 = vmatprep.subr.mxu0 0.0
        %4605 = vmatpush1.msra.mxu0 0.0
        %4606 = vmatprep.subr.mxu0 0.0
        %4607 = vmatpush1.msra.mxu0 0.0
        %4608 = vmatprep.subr.mxu0 0.0
        %4609 = vmatpush1.msra.mxu0 0.0
        %4610 = vmatprep.subr.mxu0 0.0
        %4611 = vmatpush1.msra.mxu0 0.0
        %4612 = vmatprep.subr.mxu0 0.0
        %4613 = vmatpush1.msra.mxu0 0.0
        %4614 = vmatprep.subr.mxu0 0.0
        %4615 = vmatpush1.msra.mxu0 0.0
        %4616 = vmatprep.subr.mxu0 0.0
        %4617 = vmatpush1.msra.mxu0 0.0
        %4618 = vmatprep.subr.mxu0 0.0
        %4619 = vmatpush1.msra.mxu0 0.0
        %4620 = vmatprep.subr.mxu0 0.0
        %4621 = vmatpush1.msra.mxu0 0.0
        %4622 = vmatprep.subr.mxu0 0.0
        %4623 = vmatpush1.msra.mxu0 0.0
        %4624 = vmatprep.subr.mxu0 0.0
        %4625 = vmatpush1.msra.mxu0 0.0
        %4626 = vmatprep.subr.mxu0 0.0
        %4627 = vmatpush1.msra.mxu0 0.0
        %4628 = vmatprep.subr.mxu0 0.0
        %4629 = vmatpush1.msra.mxu0 0.0
        %4630 = vmatprep.subr.mxu0 0.0
        %4631 = vmatpush1.msra.mxu0 0.0
        %4632 = vmatprep.subr.mxu0 0.0
        %4633 = vmatpush1.msra.mxu0 0.0
        %4634 = vmatprep.mubr.f32.mxu0 0.0
        %4635 = vmatmul.mubr.f32.gmra.mrb[0].mxu0 %v4568
        %v4636 = vpop.f32.mrb[0].mxu0
        %v4637 = vadd.f32 0.0, %v4636
        %v4638 = vpop.f32.mrb[0].mxu0
        %4639 = vdwg.mxu0
        %4640 = vrot.lane.b32.xlu0 %v4044, 112
        %v4641 = vpop.permute.xlu0 %4640
        %v4644 = vsel %vm960, %v4411, 0
        %4646 = vmatprep.subr.mxu0 0.0
        %4647 = vmatpush1.msra.mxu0 %v4641
        %4648 = vmatprep.subr.mxu0 0.0
        %4649 = vmatpush1.msra.mxu0 0.0
        %4650 = vmatprep.subr.mxu0 0.0
        %4651 = vmatpush1.msra.mxu0 0.0
        %4652 = vmatprep.subr.mxu0 0.0
        %4653 = vmatpush1.msra.mxu0 0.0
        %4654 = vmatprep.subr.mxu0 0.0
        %4655 = vmatpush1.msra.mxu0 0.0
        %4656 = vmatprep.subr.mxu0 0.0
        %4657 = vmatpush1.msra.mxu0 0.0
        %4658 = vmatprep.subr.mxu0 0.0
        %4659 = vmatpush1.msra.mxu0 0.0
        %4660 = vmatprep.subr.mxu0 0.0
        %4661 = vmatpush1.msra.mxu0 0.0
        %4662 = vmatprep.subr.mxu0 0.0
        %4663 = vmatpush1.msra.mxu0 0.0
        %4664 = vmatprep.subr.mxu0 0.0
        %4665 = vmatpush1.msra.mxu0 0.0
        %4666 = vmatprep.subr.mxu0 0.0
        %4667 = vmatpush1.msra.mxu0 0.0
        %4668 = vmatprep.subr.mxu0 0.0
        %4669 = vmatpush1.msra.mxu0 0.0
        %4670 = vmatprep.subr.mxu0 0.0
        %4671 = vmatpush1.msra.mxu0 0.0
        %4672 = vmatprep.subr.mxu0 0.0
        %4673 = vmatpush1.msra.mxu0 0.0
        %4674 = vmatprep.subr.mxu0 0.0
        %4675 = vmatpush1.msra.mxu0 0.0
        %4676 = vmatprep.subr.mxu0 0.0
        %4677 = vmatpush1.msra.mxu0 0.0
        %4678 = vmatprep.subr.mxu0 0.0
        %4679 = vmatpush1.msra.mxu0 0.0
        %4680 = vmatprep.subr.mxu0 0.0
        %4681 = vmatpush1.msra.mxu0 0.0
        %4682 = vmatprep.subr.mxu0 0.0
        %4683 = vmatpush1.msra.mxu0 0.0
        %4684 = vmatprep.subr.mxu0 0.0
        %4685 = vmatpush1.msra.mxu0 0.0
        %4686 = vmatprep.subr.mxu0 0.0
        %4687 = vmatpush1.msra.mxu0 0.0
        %4688 = vmatprep.subr.mxu0 0.0
        %4689 = vmatpush1.msra.mxu0 0.0
        %4690 = vmatprep.subr.mxu0 0.0
        %4691 = vmatpush1.msra.mxu0 0.0
        %4692 = vmatprep.subr.mxu0 0.0
        %4693 = vmatpush1.msra.mxu0 0.0
        %4694 = vmatprep.subr.mxu0 0.0
        %4695 = vmatpush1.msra.mxu0 0.0
        %4696 = vmatprep.subr.mxu0 0.0
        %4697 = vmatpush1.msra.mxu0 0.0
        %4698 = vmatprep.subr.mxu0 0.0
        %4699 = vmatpush1.msra.mxu0 0.0
        %4700 = vmatprep.subr.mxu0 0.0
        %4701 = vmatpush1.msra.mxu0 0.0
        %4702 = vmatprep.subr.mxu0 0.0
        %4703 = vmatpush1.msra.mxu0 0.0
        %4704 = vmatprep.subr.mxu0 0.0
        %4705 = vmatpush1.msra.mxu0 0.0
        %4706 = vmatprep.subr.mxu0 0.0
        %4707 = vmatpush1.msra.mxu0 0.0
        %4708 = vmatprep.subr.mxu0 0.0
        %4709 = vmatpush1.msra.mxu0 0.0
        %4710 = vmatprep.mubr.f32.mxu0 0.0
        %4711 = vmatmul.mubr.f32.gmra.mrb[0].mxu0 %v4644
        %v4712 = vpop.f32.mrb[0].mxu0
        %v4713 = vadd.f32 0.0, %v4712
        %v4714 = vpop.f32.mrb[0].mxu0
        %4715 = vdwg.mxu0
        %v4717 = vsel %vm960, %v4485, 0
        %4719 = vmatprep.subr.mxu0 0.0
        %4720 = vmatpush1.msra.mxu0 %v4048
        %4721 = vmatprep.subr.mxu0 0.0
        %4722 = vmatpush1.msra.mxu0 0.0
        %4723 = vmatprep.subr.mxu0 0.0
        %4724 = vmatpush1.msra.mxu0 0.0
        %4725 = vmatprep.subr.mxu0 0.0
        %4726 = vmatpush1.msra.mxu0 0.0
        %4727 = vmatprep.subr.mxu0 0.0
        %4728 = vmatpush1.msra.mxu0 0.0
        %4729 = vmatprep.subr.mxu0 0.0
        %4730 = vmatpush1.msra.mxu0 0.0
        %4731 = vmatprep.subr.mxu0 0.0
        %4732 = vmatpush1.msra.mxu0 0.0
        %4733 = vmatprep.subr.mxu0 0.0
        %4734 = vmatpush1.msra.mxu0 0.0
        %4735 = vmatprep.subr.mxu0 0.0
        %4736 = vmatpush1.msra.mxu0 0.0
        %4737 = vmatprep.subr.mxu0 0.0
        %4738 = vmatpush1.msra.mxu0 0.0
        %4739 = vmatprep.subr.mxu0 0.0
        %4740 = vmatpush1.msra.mxu0 0.0
        %4741 = vmatprep.subr.mxu0 0.0
        %4742 = vmatpush1.msra.mxu0 0.0
        %4743 = vmatprep.subr.mxu0 0.0
        %4744 = vmatpush1.msra.mxu0 0.0
        %4745 = vmatprep.subr.mxu0 0.0
        %4746 = vmatpush1.msra.mxu0 0.0
        %4747 = vmatprep.subr.mxu0 0.0
        %4748 = vmatpush1.msra.mxu0 0.0
        %4749 = vmatprep.subr.mxu0 0.0
        %4750 = vmatpush1.msra.mxu0 0.0
        %4751 = vmatprep.subr.mxu0 0.0
        %4752 = vmatpush1.msra.mxu0 0.0
        %4753 = vmatprep.subr.mxu0 0.0
        %4754 = vmatpush1.msra.mxu0 0.0
        %4755 = vmatprep.subr.mxu0 0.0
        %4756 = vmatpush1.msra.mxu0 0.0
        %4757 = vmatprep.subr.mxu0 0.0
        %4758 = vmatpush1.msra.mxu0 0.0
        %4759 = vmatprep.subr.mxu0 0.0
        %4760 = vmatpush1.msra.mxu0 0.0
        %4761 = vmatprep.subr.mxu0 0.0
        %4762 = vmatpush1.msra.mxu0 0.0
        %4763 = vmatprep.subr.mxu0 0.0
        %4764 = vmatpush1.msra.mxu0 0.0
        %4765 = vmatprep.subr.mxu0 0.0
        %4766 = vmatpush1.msra.mxu0 0.0
        %4767 = vmatprep.subr.mxu0 0.0
        %4768 = vmatpush1.msra.mxu0 0.0
        %4769 = vmatprep.subr.mxu0 0.0
        %4770 = vmatpush1.msra.mxu0 0.0
        %4771 = vmatprep.subr.mxu0 0.0
        %4772 = vmatpush1.msra.mxu0 0.0
        %4773 = vmatprep.subr.mxu0 0.0
        %4774 = vmatpush1.msra.mxu0 0.0
        %4775 = vmatprep.subr.mxu0 0.0
        %4776 = vmatpush1.msra.mxu0 0.0
        %4777 = vmatprep.subr.mxu0 0.0
        %4778 = vmatpush1.msra.mxu0 0.0
        %4779 = vmatprep.subr.mxu0 0.0
        %4780 = vmatpush1.msra.mxu0 0.0
        %4781 = vmatprep.subr.mxu0 0.0
        %4782 = vmatpush1.msra.mxu0 0.0
        %4783 = vmatprep.mubr.f32.mxu0 0.0
        %4784 = vmatmul.mubr.f32.gmra.mrb[0].mxu0 %v4717
        %v4785 = vpop.f32.mrb[0].mxu0
        %v4786 = vadd.f32 0.0, %v4785
        %v4787 = vpop.f32.mrb[0].mxu0
        %4788 = vdwg.mxu0
        %v4790 = vsel %vm960, %v4561, 0
        %4792 = vmatprep.subr.mxu0 0.0
        %4793 = vmatpush1.msra.mxu0 %v4049
        %4794 = vmatprep.subr.mxu0 0.0
        %4795 = vmatpush1.msra.mxu0 0.0
        %4796 = vmatprep.subr.mxu0 0.0
        %4797 = vmatpush1.msra.mxu0 0.0
        %4798 = vmatprep.subr.mxu0 0.0
        %4799 = vmatpush1.msra.mxu0 0.0
        %4800 = vmatprep.subr.mxu0 0.0
        %4801 = vmatpush1.msra.mxu0 0.0
        %4802 = vmatprep.subr.mxu0 0.0
        %4803 = vmatpush1.msra.mxu0 0.0
        %4804 = vmatprep.subr.mxu0 0.0
        %4805 = vmatpush1.msra.mxu0 0.0
        %4806 = vmatprep.subr.mxu0 0.0
        %4807 = vmatpush1.msra.mxu0 0.0
        %4808 = vmatprep.subr.mxu0 0.0
        %4809 = vmatpush1.msra.mxu0 0.0
        %4810 = vmatprep.subr.mxu0 0.0
        %4811 = vmatpush1.msra.mxu0 0.0
        %4812 = vmatprep.subr.mxu0 0.0
        %4813 = vmatpush1.msra.mxu0 0.0
        %4814 = vmatprep.subr.mxu0 0.0
        %4815 = vmatpush1.msra.mxu0 0.0
        %4816 = vmatprep.subr.mxu0 0.0
        %4817 = vmatpush1.msra.mxu0 0.0
        %4818 = vmatprep.subr.mxu0 0.0
        %4819 = vmatpush1.msra.mxu0 0.0
        %4820 = vmatprep.subr.mxu0 0.0
        %4821 = vmatpush1.msra.mxu0 0.0
        %4822 = vmatprep.subr.mxu0 0.0
        %4823 = vmatpush1.msra.mxu0 0.0
        %4824 = vmatprep.subr.mxu0 0.0
        %4825 = vmatpush1.msra.mxu0 0.0
        %4826 = vmatprep.subr.mxu0 0.0
        %4827 = vmatpush1.msra.mxu0 0.0
        %4828 = vmatprep.subr.mxu0 0.0
        %4829 = vmatpush1.msra.mxu0 0.0
        %4830 = vmatprep.subr.mxu0 0.0
        %4831 = vmatpush1.msra.mxu0 0.0
        %4832 = vmatprep.subr.mxu0 0.0
        %4833 = vmatpush1.msra.mxu0 0.0
        %4834 = vmatprep.subr.mxu0 0.0
        %4835 = vmatpush1.msra.mxu0 0.0
        %4836 = vmatprep.subr.mxu0 0.0
        %4837 = vmatpush1.msra.mxu0 0.0
        %4838 = vmatprep.subr.mxu0 0.0
        %4839 = vmatpush1.msra.mxu0 0.0
        %4840 = vmatprep.subr.mxu0 0.0
        %4841 = vmatpush1.msra.mxu0 0.0
        %4842 = vmatprep.subr.mxu0 0.0
        %4843 = vmatpush1.msra.mxu0 0.0
        %4844 = vmatprep.subr.mxu0 0.0
        %4845 = vmatpush1.msra.mxu0 0.0
        %4846 = vmatprep.subr.mxu0 0.0
        %4847 = vmatpush1.msra.mxu0 0.0
        %4848 = vmatprep.subr.mxu0 0.0
        %4849 = vmatpush1.msra.mxu0 0.0
        %4850 = vmatprep.subr.mxu0 0.0
        %4851 = vmatpush1.msra.mxu0 0.0
        %4852 = vmatprep.subr.mxu0 0.0
        %4853 = vmatpush1.msra.mxu0 0.0
        %4854 = vmatprep.subr.mxu0 0.0
        %4855 = vmatpush1.msra.mxu0 0.0
        %4856 = vmatprep.mubr.f32.mxu0 0.0
        %4857 = vmatmul.mubr.f32.gmra.mrb[0].mxu0 %v4790
        %v4858 = vpop.f32.mrb[0].mxu0
        %v4859 = vadd.f32 0.0, %v4858
        %v4860 = vpop.f32.mrb[0].mxu0
        %4861 = vdwg.mxu0
        %v4863 = vsel %vm960, %v4637, 0
        %4865 = vmatprep.subr.mxu0 0.0
        %4866 = vmatpush1.msra.mxu0 %v4050
        %4867 = vmatprep.subr.mxu0 0.0
        %4868 = vmatpush1.msra.mxu0 0.0
        %4869 = vmatprep.subr.mxu0 0.0
        %4870 = vmatpush1.msra.mxu0 0.0
        %4871 = vmatprep.subr.mxu0 0.0
        %4872 = vmatpush1.msra.mxu0 0.0
        %4873 = vmatprep.subr.mxu0 0.0
        %4874 = vmatpush1.msra.mxu0 0.0
        %4875 = vmatprep.subr.mxu0 0.0
        %4876 = vmatpush1.msra.mxu0 0.0
        %4877 = vmatprep.subr.mxu0 0.0
        %4878 = vmatpush1.msra.mxu0 0.0
        %4879 = vmatprep.subr.mxu0 0.0
        %4880 = vmatpush1.msra.mxu0 0.0
        %4881 = vmatprep.subr.mxu0 0.0
        %4882 = vmatpush1.msra.mxu0 0.0
        %4883 = vmatprep.subr.mxu0 0.0
        %4884 = vmatpush1.msra.mxu0 0.0
        %4885 = vmatprep.subr.mxu0 0.0
        %4886 = vmatpush1.msra.mxu0 0.0
        %4887 = vmatprep.subr.mxu0 0.0
        %4888 = vmatpush1.msra.mxu0 0.0
        %4889 = vmatprep.subr.mxu0 0.0
        %4890 = vmatpush1.msra.mxu0 0.0
        %4891 = vmatprep.subr.mxu0 0.0
        %4892 = vmatpush1.msra.mxu0 0.0
        %4893 = vmatprep.subr.mxu0 0.0
        %4894 = vmatpush1.msra.mxu0 0.0
        %4895 = vmatprep.subr.mxu0 0.0
        %4896 = vmatpush1.msra.mxu0 0.0
        %4897 = vmatprep.subr.mxu0 0.0
        %4898 = vmatpush1.msra.mxu0 0.0
        %4899 = vmatprep.subr.mxu0 0.0
        %4900 = vmatpush1.msra.mxu0 0.0
        %4901 = vmatprep.subr.mxu0 0.0
        %4902 = vmatpush1.msra.mxu0 0.0
        %4903 = vmatprep.subr.mxu0 0.0
        %4904 = vmatpush1.msra.mxu0 0.0
        %4905 = vmatprep.subr.mxu0 0.0
        %4906 = vmatpush1.msra.mxu0 0.0
        %4907 = vmatprep.subr.mxu0 0.0
        %4908 = vmatpush1.msra.mxu0 0.0
        %4909 = vmatprep.subr.mxu0 0.0
        %4910 = vmatpush1.msra.mxu0 0.0
        %4911 = vmatprep.subr.mxu0 0.0
        %4912 = vmatpush1.msra.mxu0 0.0
        %4913 = vmatprep.subr.mxu0 0.0
        %4914 = vmatpush1.msra.mxu0 0.0
        %4915 = vmatprep.subr.mxu0 0.0
        %4916 = vmatpush1.msra.mxu0 0.0
        %4917 = vmatprep.subr.mxu0 0.0
        %4918 = vmatpush1.msra.mxu0 0.0
        %4919 = vmatprep.subr.mxu0 0.0
        %4920 = vmatpush1.msra.mxu0 0.0
        %4921 = vmatprep.subr.mxu0 0.0
        %4922 = vmatpush1.msra.mxu0 0.0
        %4923 = vmatprep.subr.mxu0 0.0
        %4924 = vmatpush1.msra.mxu0 0.0
        %4925 = vmatprep.subr.mxu0 0.0
        %4926 = vmatpush1.msra.mxu0 0.0
        %4927 = vmatprep.subr.mxu0 0.0
        %4928 = vmatpush1.msra.mxu0 0.0
        %4929 = vmatprep.mubr.f32.mxu0 0.0
        %4930 = vmatmul.mubr.f32.gmra.mrb[0].mxu0 %v4863
        %v4931 = vpop.f32.mrb[0].mxu0
        %v4932 = vadd.f32 0.0, %v4931
        %v4933 = vpop.f32.mrb[0].mxu0
        %4934 = vdwg.mxu0
        %v4936 = vsel %vm960, %v4713, 0
        %4938 = vmatprep.subr.mxu0 0.0
        %4939 = vmatpush1.msra.mxu0 %v4051
        %4940 = vmatprep.subr.mxu0 0.0
        %4941 = vmatpush1.msra.mxu0 0.0
        %4942 = vmatprep.subr.mxu0 0.0
        %4943 = vmatpush1.msra.mxu0 0.0
        %4944 = vmatprep.subr.mxu0 0.0
        %4945 = vmatpush1.msra.mxu0 0.0
        %4946 = vmatprep.subr.mxu0 0.0
        %4947 = vmatpush1.msra.mxu0 0.0
        %4948 = vmatprep.subr.mxu0 0.0
        %4949 = vmatpush1.msra.mxu0 0.0
        %4950 = vmatprep.subr.mxu0 0.0
        %4951 = vmatpush1.msra.mxu0 0.0
        %4952 = vmatprep.subr.mxu0 0.0
        %4953 = vmatpush1.msra.mxu0 0.0
        %4954 = vmatprep.subr.mxu0 0.0
        %4955 = vmatpush1.msra.mxu0 0.0
        %4956 = vmatprep.subr.mxu0 0.0
        %4957 = vmatpush1.msra.mxu0 0.0
        %4958 = vmatprep.subr.mxu0 0.0
        %4959 = vmatpush1.msra.mxu0 0.0
        %4960 = vmatprep.subr.mxu0 0.0
        %4961 = vmatpush1.msra.mxu0 0.0
        %4962 = vmatprep.subr.mxu0 0.0
        %4963 = vmatpush1.msra.mxu0 0.0
        %4964 = vmatprep.subr.mxu0 0.0
        %4965 = vmatpush1.msra.mxu0 0.0
        %4966 = vmatprep.subr.mxu0 0.0
        %4967 = vmatpush1.msra.mxu0 0.0
        %4968 = vmatprep.subr.mxu0 0.0
        %4969 = vmatpush1.msra.mxu0 0.0
        %4970 = vmatprep.subr.mxu0 0.0
        %4971 = vmatpush1.msra.mxu0 0.0
        %4972 = vmatprep.subr.mxu0 0.0
        %4973 = vmatpush1.msra.mxu0 0.0
        %4974 = vmatprep.subr.mxu0 0.0
        %4975 = vmatpush1.msra.mxu0 0.0
        %4976 = vmatprep.subr.mxu0 0.0
        %4977 = vmatpush1.msra.mxu0 0.0
        %4978 = vmatprep.subr.mxu0 0.0
        %4979 = vmatpush1.msra.mxu0 0.0
        %4980 = vmatprep.subr.mxu0 0.0
        %4981 = vmatpush1.msra.mxu0 0.0
        %4982 = vmatprep.subr.mxu0 0.0
        %4983 = vmatpush1.msra.mxu0 0.0
        %4984 = vmatprep.subr.mxu0 0.0
        %4985 = vmatpush1.msra.mxu0 0.0
        %4986 = vmatprep.subr.mxu0 0.0
        %4987 = vmatpush1.msra.mxu0 0.0
        %4988 = vmatprep.subr.mxu0 0.0
        %4989 = vmatpush1.msra.mxu0 0.0
        %4990 = vmatprep.subr.mxu0 0.0
        %4991 = vmatpush1.msra.mxu0 0.0
        %4992 = vmatprep.subr.mxu0 0.0
        %4993 = vmatpush1.msra.mxu0 0.0
        %4994 = vmatprep.subr.mxu0 0.0
        %4995 = vmatpush1.msra.mxu0 0.0
        %4996 = vmatprep.subr.mxu0 0.0
        %4997 = vmatpush1.msra.mxu0 0.0
        %4998 = vmatprep.subr.mxu0 0.0
        %4999 = vmatpush1.msra.mxu0 0.0
        %5000 = vmatprep.subr.mxu0 0.0
        %5001 = vmatpush1.msra.mxu0 0.0
        %5002 = vmatprep.mubr.f32.mxu0 0.0
        %5003 = vmatmul.mubr.f32.gmra.mrb[0].mxu0 %v4936
        %v5004 = vpop.f32.mrb[0].mxu0
        %v5005 = vadd.f32 0.0, %v5004
        %v5006 = vpop.f32.mrb[0].mxu0
        %5007 = vdwg.mxu0
        %v5008 = vsel %vm669, %v4786, 0.0
        %v5009 = vsel %vm669, %v4859, 0.0
        %v5010 = vadd.f32 %v5008, %v5009
        %v5011 = vsel %vm669, %v4932, 0.0
        %v5012 = vadd.f32 %v5010, %v5011
        %v5013 = vsel %vm669, %v5005, 0.0
        %v5014 = vadd.f32 %v5012, %v5013
        %v5015 = vadd.f32 %v5014, %v3746
        %s5016 = scalar_lea.vmem %s6, 1
        %v5017 = vld [vmem:[%s5016] sm:$0x1]
        %s5018 = scalar_lea.vmem %s7, 1
        %v5019 = vld [vmem:[%s5018] sm:$0x1]
        %v5020 = vsel %vm669, %v5015, 0.0
        %5021 = vadd.xlane.f32.xlu0 %v5020
        %v5022 = vpop.xlane.xlu0 %5021
        %v5023 = vmul.f32 %v5022, %v1927
        %v5024 = vsub.f32 %v5015, %v5023
        %v5025 = vmul.f32 %v5024, %v5024
        %v5026 = vsel %vm669, %v5025, 0.0
        %5027 = vadd.xlane.f32.xlu0 %v5026
        %v5028 = vpop.xlane.xlu0 %5027
        %v5029 = vmul.f32 %v5028, %v1927
        %v5030 = vadd.f32 %v5029, 1e-05
        %v5031 = vrsqrt.pop %v5030
        %v5032 = vmul.f32 %v5024, %v5031
        %v5034 = vlaneseq
        %v5035 = vshrl.u32 %v5034, 7
        %v5036 = vsub.s32 0, %v5035
        %v5037 = vrot.slane %v5017, %v5036
        %v5039 = vmul.f32 %v5032, %v5037
        %v5041 = vlaneseq
        %v5042 = vshrl.u32 %v5041, 7
        %v5043 = vsub.s32 0, %v5042
        %v5044 = vrot.slane %v5019, %v5043
        %v5046 = vadd.f32 %v5039, %v5044
        %s5047 = scalar_lea.vmem %s8, 128
        %v5048 = vld [vmem:[%s5047] sm:$0xff]
        %v5049 = vld [vmem:[%s5047 + $0x8] sm:$0xff]
        %v5050 = vld [vmem:[%s5047 + $0x10] sm:$0xff]
        %v5051 = vld [vmem:[%s5047 + $0x18] sm:$0xff]
        %v5052 = vld [vmem:[%s5047 + $0x20] sm:$0xff]
        %v5053 = vld [vmem:[%s5047 + $0x28] sm:$0xff]
        %v5054 = vld [vmem:[%s5047 + $0x30] sm:$0xff]
        %v5055 = vld [vmem:[%s5047 + $0x38] sm:$0xff]
        %v5056 = vld [vmem:[%s5047 + $0x40] sm:$0xff]
        %v5057 = vld [vmem:[%s5047 + $0x48] sm:$0xff]
        %v5058 = vld [vmem:[%s5047 + $0x50] sm:$0xff]
        %v5059 = vld [vmem:[%s5047 + $0x58] sm:$0xff]
        %v5060 = vld [vmem:[%s5047 + $0x60] sm:$0xff]
        %v5061 = vld [vmem:[%s5047 + $0x68] sm:$0xff]
        %v5062 = vld [vmem:[%s5047 + $0x70] sm:$0xff]
        %v5063 = vld [vmem:[%s5047 + $0x78] sm:$0xff]
        %v5065 = vsel %vm669, %v5046, 0
        %5067 = vmatprep.subr.mxu0 0.0
        %5068 = vmatpush1.msra.mxu0 %v5048
        %5069 = vmatprep.subr.mxu0 0.0
        %5070 = vmatpush1.msra.mxu0 %v5049
        %5071 = vmatprep.subr.mxu0 0.0
        %5072 = vmatpush1.msra.mxu0 %v5050
        %5073 = vmatprep.subr.mxu0 0.0
        %5074 = vmatpush1.msra.mxu0 %v5051
        %5075 = vmatprep.subr.mxu0 0.0
        %5076 = vmatpush1.msra.mxu0 0.0
        %5077 = vmatprep.subr.mxu0 0.0
        %5078 = vmatpush1.msra.mxu0 0.0
        %5079 = vmatprep.subr.mxu0 0.0
        %5080 = vmatpush1.msra.mxu0 0.0
        %5081 = vmatprep.subr.mxu0 0.0
        %5082 = vmatpush1.msra.mxu0 0.0
        %5083 = vmatprep.subr.mxu0 0.0
        %5084 = vmatpush1.msra.mxu0 0.0
        %5085 = vmatprep.subr.mxu0 0.0
        %5086 = vmatpush1.msra.mxu0 0.0
        %5087 = vmatprep.subr.mxu0 0.0
        %5088 = vmatpush1.msra.mxu0 0.0
        %5089 = vmatprep.subr.mxu0 0.0
        %5090 = vmatpush1.msra.mxu0 0.0
        %5091 = vmatprep.subr.mxu0 0.0
        %5092 = vmatpush1.msra.mxu0 0.0
        %5093 = vmatprep.subr.mxu0 0.0
        %5094 = vmatpush1.msra.mxu0 0.0
        %5095 = vmatprep.subr.mxu0 0.0
        %5096 = vmatpush1.msra.mxu0 0.0
        %5097 = vmatprep.subr.mxu0 0.0
        %5098 = vmatpush1.msra.mxu0 0.0
        %5099 = vmatprep.subr.mxu0 0.0
        %5100 = vmatpush1.msra.mxu0 0.0
        %5101 = vmatprep.subr.mxu0 0.0
        %5102 = vmatpush1.msra.mxu0 0.0
        %5103 = vmatprep.subr.mxu0 0.0
        %5104 = vmatpush1.msra.mxu0 0.0
        %5105 = vmatprep.subr.mxu0 0.0
        %5106 = vmatpush1.msra.mxu0 0.0
        %5107 = vmatprep.subr.mxu0 0.0
        %5108 = vmatpush1.msra.mxu0 0.0
        %5109 = vmatprep.subr.mxu0 0.0
        %5110 = vmatpush1.msra.mxu0 0.0
        %5111 = vmatprep.subr.mxu0 0.0
        %5112 = vmatpush1.msra.mxu0 0.0
        %5113 = vmatprep.subr.mxu0 0.0
        %5114 = vmatpush1.msra.mxu0 0.0
        %5115 = vmatprep.subr.mxu0 0.0
        %5116 = vmatpush1.msra.mxu0 0.0
        %5117 = vmatprep.subr.mxu0 0.0
        %5118 = vmatpush1.msra.mxu0 0.0
        %5119 = vmatprep.subr.mxu0 0.0
        %5120 = vmatpush1.msra.mxu0 0.0
        %5121 = vmatprep.subr.mxu0 0.0
        %5122 = vmatpush1.msra.mxu0 0.0
        %5123 = vmatprep.subr.mxu0 0.0
        %5124 = vmatpush1.msra.mxu0 0.0
        %5125 = vmatprep.subr.mxu0 0.0
        %5126 = vmatpush1.msra.mxu0 0.0
        %5127 = vmatprep.subr.mxu0 0.0
        %5128 = vmatpush1.msra.mxu0 0.0
        %5129 = vmatprep.subr.mxu0 0.0
        %5130 = vmatpush1.msra.mxu0 0.0
        %5131 = vmatprep.mubr.f32.mxu0 0.0
        %5132 = vmatmul.mubr.f32.gmra.mrb[0].mxu0 %v5065
        %v5133 = vpop.f32.mrb[0].mxu0
        %v5134 = vadd.f32 0.0, %v5133
        %v5135 = vpop.f32.mrb[0].mxu0
        %5136 = vdwg.mxu0
        %5137 = vmatprep.subr.mxu0 0.0
        %5138 = vmatpush1.msra.mxu0 %v5052
        %5139 = vmatprep.subr.mxu0 0.0
        %5140 = vmatpush1.msra.mxu0 %v5053
        %5141 = vmatprep.subr.mxu0 0.0
        %5142 = vmatpush1.msra.mxu0 %v5054
        %5143 = vmatprep.subr.mxu0 0.0
        %5144 = vmatpush1.msra.mxu0 %v5055
        %5145 = vmatprep.subr.mxu0 0.0
        %5146 = vmatpush1.msra.mxu0 0.0
        %5147 = vmatprep.subr.mxu0 0.0
        %5148 = vmatpush1.msra.mxu0 0.0
        %5149 = vmatprep.subr.mxu0 0.0
        %5150 = vmatpush1.msra.mxu0 0.0
        %5151 = vmatprep.subr.mxu0 0.0
        %5152 = vmatpush1.msra.mxu0 0.0
        %5153 = vmatprep.subr.mxu0 0.0
        %5154 = vmatpush1.msra.mxu0 0.0
        %5155 = vmatprep.subr.mxu0 0.0
        %5156 = vmatpush1.msra.mxu0 0.0
        %5157 = vmatprep.subr.mxu0 0.0
        %5158 = vmatpush1.msra.mxu0 0.0
        %5159 = vmatprep.subr.mxu0 0.0
        %5160 = vmatpush1.msra.mxu0 0.0
        %5161 = vmatprep.subr.mxu0 0.0
        %5162 = vmatpush1.msra.mxu0 0.0
        %5163 = vmatprep.subr.mxu0 0.0
        %5164 = vmatpush1.msra.mxu0 0.0
        %5165 = vmatprep.subr.mxu0 0.0
        %5166 = vmatpush1.msra.mxu0 0.0
        %5167 = vmatprep.subr.mxu0 0.0
        %5168 = vmatpush1.msra.mxu0 0.0
        %5169 = vmatprep.subr.mxu0 0.0
        %5170 = vmatpush1.msra.mxu0 0.0
        %5171 = vmatprep.subr.mxu0 0.0
        %5172 = vmatpush1.msra.mxu0 0.0
        %5173 = vmatprep.subr.mxu0 0.0
        %5174 = vmatpush1.msra.mxu0 0.0
        %5175 = vmatprep.subr.mxu0 0.0
        %5176 = vmatpush1.msra.mxu0 0.0
        %5177 = vmatprep.subr.mxu0 0.0
        %5178 = vmatpush1.msra.mxu0 0.0
        %5179 = vmatprep.subr.mxu0 0.0
        %5180 = vmatpush1.msra.mxu0 0.0
        %5181 = vmatprep.subr.mxu0 0.0
        %5182 = vmatpush1.msra.mxu0 0.0
        %5183 = vmatprep.subr.mxu0 0.0
        %5184 = vmatpush1.msra.mxu0 0.0
        %5185 = vmatprep.subr.mxu0 0.0
        %5186 = vmatpush1.msra.mxu0 0.0
        %5187 = vmatprep.subr.mxu0 0.0
        %5188 = vmatpush1.msra.mxu0 0.0
        %5189 = vmatprep.subr.mxu0 0.0
        %5190 = vmatpush1.msra.mxu0 0.0
        %5191 = vmatprep.subr.mxu0 0.0
        %5192 = vmatpush1.msra.mxu0 0.0
        %5193 = vmatprep.subr.mxu0 0.0
        %5194 = vmatpush1.msra.mxu0 0.0
        %5195 = vmatprep.subr.mxu0 0.0
        %5196 = vmatpush1.msra.mxu0 0.0
        %5197 = vmatprep.subr.mxu0 0.0
        %5198 = vmatpush1.msra.mxu0 0.0
        %5199 = vmatprep.subr.mxu0 0.0
        %5200 = vmatpush1.msra.mxu0 0.0
        %5201 = vmatprep.mubr.f32.mxu0 0.0
        %5202 = vmatmul.mubr.f32.gmra.mrb[0].mxu0 %v5065
        %v5203 = vpop.f32.mrb[0].mxu0
        %v5204 = vadd.f32 0.0, %v5203
        %v5205 = vpop.f32.mrb[0].mxu0
        %5206 = vdwg.mxu0
        %5207 = vmatprep.subr.mxu0 0.0
        %5208 = vmatpush1.msra.mxu0 %v5056
        %5209 = vmatprep.subr.mxu0 0.0
        %5210 = vmatpush1.msra.mxu0 %v5057
        %5211 = vmatprep.subr.mxu0 0.0
        %5212 = vmatpush1.msra.mxu0 %v5058
        %5213 = vmatprep.subr.mxu0 0.0
        %5214 = vmatpush1.msra.mxu0 %v5059
        %5215 = vmatprep.subr.mxu0 0.0
        %5216 = vmatpush1.msra.mxu0 0.0
        %5217 = vmatprep.subr.mxu0 0.0
        %5218 = vmatpush1.msra.mxu0 0.0
        %5219 = vmatprep.subr.mxu0 0.0
        %5220 = vmatpush1.msra.mxu0 0.0
        %5221 = vmatprep.subr.mxu0 0.0
        %5222 = vmatpush1.msra.mxu0 0.0
        %5223 = vmatprep.subr.mxu0 0.0
        %5224 = vmatpush1.msra.mxu0 0.0
        %5225 = vmatprep.subr.mxu0 0.0
        %5226 = vmatpush1.msra.mxu0 0.0
        %5227 = vmatprep.subr.mxu0 0.0
        %5228 = vmatpush1.msra.mxu0 0.0
        %5229 = vmatprep.subr.mxu0 0.0
        %5230 = vmatpush1.msra.mxu0 0.0
        %5231 = vmatprep.subr.mxu0 0.0
        %5232 = vmatpush1.msra.mxu0 0.0
        %5233 = vmatprep.subr.mxu0 0.0
        %5234 = vmatpush1.msra.mxu0 0.0
        %5235 = vmatprep.subr.mxu0 0.0
        %5236 = vmatpush1.msra.mxu0 0.0
        %5237 = vmatprep.subr.mxu0 0.0
        %5238 = vmatpush1.msra.mxu0 0.0
        %5239 = vmatprep.subr.mxu0 0.0
        %5240 = vmatpush1.msra.mxu0 0.0
        %5241 = vmatprep.subr.mxu0 0.0
        %5242 = vmatpush1.msra.mxu0 0.0
        %5243 = vmatprep.subr.mxu0 0.0
        %5244 = vmatpush1.msra.mxu0 0.0
        %5245 = vmatprep.subr.mxu0 0.0
        %5246 = vmatpush1.msra.mxu0 0.0
        %5247 = vmatprep.subr.mxu0 0.0
        %5248 = vmatpush1.msra.mxu0 0.0
        %5249 = vmatprep.subr.mxu0 0.0
        %5250 = vmatpush1.msra.mxu0 0.0
        %5251 = vmatprep.subr.mxu0 0.0
        %5252 = vmatpush1.msra.mxu0 0.0
        %5253 = vmatprep.subr.mxu0 0.0
        %5254 = vmatpush1.msra.mxu0 0.0
        %5255 = vmatprep.subr.mxu0 0.0
        %5256 = vmatpush1.msra.mxu0 0.0
        %5257 = vmatprep.subr.mxu0 0.0
        %5258 = vmatpush1.msra.mxu0 0.0
        %5259 = vmatprep.subr.mxu0 0.0
        %5260 = vmatpush1.msra.mxu0 0.0
        %5261 = vmatprep.subr.mxu0 0.0
        %5262 = vmatpush1.msra.mxu0 0.0
        %5263 = vmatprep.subr.mxu0 0.0
        %5264 = vmatpush1.msra.mxu0 0.0
        %5265 = vmatprep.subr.mxu0 0.0
        %5266 = vmatpush1.msra.mxu0 0.0
        %5267 = vmatprep.subr.mxu0 0.0
        %5268 = vmatpush1.msra.mxu0 0.0
        %5269 = vmatprep.subr.mxu0 0.0
        %5270 = vmatpush1.msra.mxu0 0.0
        %5271 = vmatprep.mubr.f32.mxu0 0.0
        %5272 = vmatmul.mubr.f32.gmra.mrb[0].mxu0 %v5065
        %v5273 = vpop.f32.mrb[0].mxu0
        %v5274 = vadd.f32 0.0, %v5273
        %v5275 = vpop.f32.mrb[0].mxu0
        %5276 = vdwg.mxu0
        %5277 = vmatprep.subr.mxu0 0.0
        %5278 = vmatpush1.msra.mxu0 %v5060
        %5279 = vmatprep.subr.mxu0 0.0
        %5280 = vmatpush1.msra.mxu0 %v5061
        %5281 = vmatprep.subr.mxu0 0.0
        %5282 = vmatpush1.msra.mxu0 %v5062
        %5283 = vmatprep.subr.mxu0 0.0
        %5284 = vmatpush1.msra.mxu0 %v5063
        %5285 = vmatprep.subr.mxu0 0.0
        %5286 = vmatpush1.msra.mxu0 0.0
        %5287 = vmatprep.subr.mxu0 0.0
        %5288 = vmatpush1.msra.mxu0 0.0
        %5289 = vmatprep.subr.mxu0 0.0
        %5290 = vmatpush1.msra.mxu0 0.0
        %5291 = vmatprep.subr.mxu0 0.0
        %5292 = vmatpush1.msra.mxu0 0.0
        %5293 = vmatprep.subr.mxu0 0.0
        %5294 = vmatpush1.msra.mxu0 0.0
        %5295 = vmatprep.subr.mxu0 0.0
        %5296 = vmatpush1.msra.mxu0 0.0
        %5297 = vmatprep.subr.mxu0 0.0
        %5298 = vmatpush1.msra.mxu0 0.0
        %5299 = vmatprep.subr.mxu0 0.0
        %5300 = vmatpush1.msra.mxu0 0.0
        %5301 = vmatprep.subr.mxu0 0.0
        %5302 = vmatpush1.msra.mxu0 0.0
        %5303 = vmatprep.subr.mxu0 0.0
        %5304 = vmatpush1.msra.mxu0 0.0
        %5305 = vmatprep.subr.mxu0 0.0
        %5306 = vmatpush1.msra.mxu0 0.0
        %5307 = vmatprep.subr.mxu0 0.0
        %5308 = vmatpush1.msra.mxu0 0.0
        %5309 = vmatprep.subr.mxu0 0.0
        %5310 = vmatpush1.msra.mxu0 0.0
        %5311 = vmatprep.subr.mxu0 0.0
        %5312 = vmatpush1.msra.mxu0 0.0
        %5313 = vmatprep.subr.mxu0 0.0
        %5314 = vmatpush1.msra.mxu0 0.0
        %5315 = vmatprep.subr.mxu0 0.0
        %5316 = vmatpush1.msra.mxu0 0.0
        %5317 = vmatprep.subr.mxu0 0.0
        %5318 = vmatpush1.msra.mxu0 0.0
        %5319 = vmatprep.subr.mxu0 0.0
        %5320 = vmatpush1.msra.mxu0 0.0
        %5321 = vmatprep.subr.mxu0 0.0
        %5322 = vmatpush1.msra.mxu0 0.0
        %5323 = vmatprep.subr.mxu0 0.0
        %5324 = vmatpush1.msra.mxu0 0.0
        %5325 = vmatprep.subr.mxu0 0.0
        %5326 = vmatpush1.msra.mxu0 0.0
        %5327 = vmatprep.subr.mxu0 0.0
        %5328 = vmatpush1.msra.mxu0 0.0
        %5329 = vmatprep.subr.mxu0 0.0
        %5330 = vmatpush1.msra.mxu0 0.0
        %5331 = vmatprep.subr.mxu0 0.0
        %5332 = vmatpush1.msra.mxu0 0.0
        %5333 = vmatprep.subr.mxu0 0.0
        %5334 = vmatpush1.msra.mxu0 0.0
        %5335 = vmatprep.subr.mxu0 0.0
        %5336 = vmatpush1.msra.mxu0 0.0
        %5337 = vmatprep.subr.mxu0 0.0
        %5338 = vmatpush1.msra.mxu0 0.0
        %5339 = vmatprep.subr.mxu0 0.0
        %5340 = vmatpush1.msra.mxu0 0.0
        %5341 = vmatprep.mubr.f32.mxu0 0.0
        %5342 = vmatmul.mubr.f32.gmra.mrb[0].mxu0 %v5065
        %v5343 = vpop.f32.mrb[0].mxu0
        %v5344 = vadd.f32 0.0, %v5343
        %v5345 = vpop.f32.mrb[0].mxu0
        %5346 = vdwg.mxu0
        %s5347 = scalar_lea.vmem %s9, 128
        %v5348 = vld [vmem:[%s5347] sm:$0xff]
        %v5349 = vld [vmem:[%s5347 + $0x8] sm:$0xff]
        %v5350 = vld [vmem:[%s5347 + $0x10] sm:$0xff]
        %v5351 = vld [vmem:[%s5347 + $0x18] sm:$0xff]
        %v5352 = vld [vmem:[%s5347 + $0x20] sm:$0xff]
        %v5353 = vld [vmem:[%s5347 + $0x28] sm:$0xff]
        %v5354 = vld [vmem:[%s5347 + $0x30] sm:$0xff]
        %v5355 = vld [vmem:[%s5347 + $0x38] sm:$0xff]
        %v5356 = vld [vmem:[%s5347 + $0x40] sm:$0xff]
        %v5357 = vld [vmem:[%s5347 + $0x48] sm:$0xff]
        %v5358 = vld [vmem:[%s5347 + $0x50] sm:$0xff]
        %v5359 = vld [vmem:[%s5347 + $0x58] sm:$0xff]
        %v5360 = vld [vmem:[%s5347 + $0x60] sm:$0xff]
        %v5361 = vld [vmem:[%s5347 + $0x68] sm:$0xff]
        %v5362 = vld [vmem:[%s5347 + $0x70] sm:$0xff]
        %v5363 = vld [vmem:[%s5347 + $0x78] sm:$0xff]
        %5364 = vmatprep.subr.mxu0 0.0
        %5365 = vmatpush1.msra.mxu0 %v5348
        %5366 = vmatprep.subr.mxu0 0.0
        %5367 = vmatpush1.msra.mxu0 %v5349
        %5368 = vmatprep.subr.mxu0 0.0
        %5369 = vmatpush1.msra.mxu0 %v5350
        %5370 = vmatprep.subr.mxu0 0.0
        %5371 = vmatpush1.msra.mxu0 %v5351
        %5372 = vmatprep.subr.mxu0 0.0
        %5373 = vmatpush1.msra.mxu0 0.0
        %5374 = vmatprep.subr.mxu0 0.0
        %5375 = vmatpush1.msra.mxu0 0.0
        %5376 = vmatprep.subr.mxu0 0.0
        %5377 = vmatpush1.msra.mxu0 0.0
        %5378 = vmatprep.subr.mxu0 0.0
        %5379 = vmatpush1.msra.mxu0 0.0
        %5380 = vmatprep.subr.mxu0 0.0
        %5381 = vmatpush1.msra.mxu0 0.0
        %5382 = vmatprep.subr.mxu0 0.0
        %5383 = vmatpush1.msra.mxu0 0.0
        %5384 = vmatprep.subr.mxu0 0.0
        %5385 = vmatpush1.msra.mxu0 0.0
        %5386 = vmatprep.subr.mxu0 0.0
        %5387 = vmatpush1.msra.mxu0 0.0
        %5388 = vmatprep.subr.mxu0 0.0
        %5389 = vmatpush1.msra.mxu0 0.0
        %5390 = vmatprep.subr.mxu0 0.0
        %5391 = vmatpush1.msra.mxu0 0.0
        %5392 = vmatprep.subr.mxu0 0.0
        %5393 = vmatpush1.msra.mxu0 0.0
        %5394 = vmatprep.subr.mxu0 0.0
        %5395 = vmatpush1.msra.mxu0 0.0
        %5396 = vmatprep.subr.mxu0 0.0
        %5397 = vmatpush1.msra.mxu0 0.0
        %5398 = vmatprep.subr.mxu0 0.0
        %5399 = vmatpush1.msra.mxu0 0.0
        %5400 = vmatprep.subr.mxu0 0.0
        %5401 = vmatpush1.msra.mxu0 0.0
        %5402 = vmatprep.subr.mxu0 0.0
        %5403 = vmatpush1.msra.mxu0 0.0
        %5404 = vmatprep.subr.mxu0 0.0
        %5405 = vmatpush1.msra.mxu0 0.0
        %5406 = vmatprep.subr.mxu0 0.0
        %5407 = vmatpush1.msra.mxu0 0.0
        %5408 = vmatprep.subr.mxu0 0.0
        %5409 = vmatpush1.msra.mxu0 0.0
        %5410 = vmatprep.subr.mxu0 0.0
        %5411 = vmatpush1.msra.mxu0 0.0
        %5412 = vmatprep.subr.mxu0 0.0
        %5413 = vmatpush1.msra.mxu0 0.0
        %5414 = vmatprep.subr.mxu0 0.0
        %5415 = vmatpush1.msra.mxu0 0.0
        %5416 = vmatprep.subr.mxu0 0.0
        %5417 = vmatpush1.msra.mxu0 0.0
        %5418 = vmatprep.subr.mxu0 0.0
        %5419 = vmatpush1.msra.mxu0 0.0
        %5420 = vmatprep.subr.mxu0 0.0
        %5421 = vmatpush1.msra.mxu0 0.0
        %5422 = vmatprep.subr.mxu0 0.0
        %5423 = vmatpush1.msra.mxu0 0.0
        %5424 = vmatprep.subr.mxu0 0.0
        %5425 = vmatpush1.msra.mxu0 0.0
        %5426 = vmatprep.subr.mxu0 0.0
        %5427 = vmatpush1.msra.mxu0 0.0
        %5428 = vmatprep.mubr.f32.mxu0 0.0
        %5429 = vmatmul.mubr.f32.gmra.mrb[0].mxu0 %v2268
        %v5430 = vpop.f32.mrb[0].mxu0
        %v5431 = vadd.f32 0.0, %v5430
        %v5432 = vpop.f32.mrb[0].mxu0
        %5433 = vdwg.mxu0
        %5434 = vmatprep.subr.mxu0 0.0
        %5435 = vmatpush1.msra.mxu0 %v5352
        %5436 = vmatprep.subr.mxu0 0.0
        %5437 = vmatpush1.msra.mxu0 %v5353
        %5438 = vmatprep.subr.mxu0 0.0
        %5439 = vmatpush1.msra.mxu0 %v5354
        %5440 = vmatprep.subr.mxu0 0.0
        %5441 = vmatpush1.msra.mxu0 %v5355
        %5442 = vmatprep.subr.mxu0 0.0
        %5443 = vmatpush1.msra.mxu0 0.0
        %5444 = vmatprep.subr.mxu0 0.0
        %5445 = vmatpush1.msra.mxu0 0.0
        %5446 = vmatprep.subr.mxu0 0.0
        %5447 = vmatpush1.msra.mxu0 0.0
        %5448 = vmatprep.subr.mxu0 0.0
        %5449 = vmatpush1.msra.mxu0 0.0
        %5450 = vmatprep.subr.mxu0 0.0
        %5451 = vmatpush1.msra.mxu0 0.0
        %5452 = vmatprep.subr.mxu0 0.0
        %5453 = vmatpush1.msra.mxu0 0.0
        %5454 = vmatprep.subr.mxu0 0.0
        %5455 = vmatpush1.msra.mxu0 0.0
        %5456 = vmatprep.subr.mxu0 0.0
        %5457 = vmatpush1.msra.mxu0 0.0
        %5458 = vmatprep.subr.mxu0 0.0
        %5459 = vmatpush1.msra.mxu0 0.0
        %5460 = vmatprep.subr.mxu0 0.0
        %5461 = vmatpush1.msra.mxu0 0.0
        %5462 = vmatprep.subr.mxu0 0.0
        %5463 = vmatpush1.msra.mxu0 0.0
        %5464 = vmatprep.subr.mxu0 0.0
        %5465 = vmatpush1.msra.mxu0 0.0
        %5466 = vmatprep.subr.mxu0 0.0
        %5467 = vmatpush1.msra.mxu0 0.0
        %5468 = vmatprep.subr.mxu0 0.0
        %5469 = vmatpush1.msra.mxu0 0.0
        %5470 = vmatprep.subr.mxu0 0.0
        %5471 = vmatpush1.msra.mxu0 0.0
        %5472 = vmatprep.subr.mxu0 0.0
        %5473 = vmatpush1.msra.mxu0 0.0
        %5474 = vmatprep.subr.mxu0 0.0
        %5475 = vmatpush1.msra.mxu0 0.0
        %5476 = vmatprep.subr.mxu0 0.0
        %5477 = vmatpush1.msra.mxu0 0.0
        %5478 = vmatprep.subr.mxu0 0.0
        %5479 = vmatpush1.msra.mxu0 0.0
        %5480 = vmatprep.subr.mxu0 0.0
        %5481 = vmatpush1.msra.mxu0 0.0
        %5482 = vmatprep.subr.mxu0 0.0
        %5483 = vmatpush1.msra.mxu0 0.0
        %5484 = vmatprep.subr.mxu0 0.0
        %5485 = vmatpush1.msra.mxu0 0.0
        %5486 = vmatprep.subr.mxu0 0.0
        %5487 = vmatpush1.msra.mxu0 0.0
        %5488 = vmatprep.subr.mxu0 0.0
        %5489 = vmatpush1.msra.mxu0 0.0
        %5490 = vmatprep.subr.mxu0 0.0
        %5491 = vmatpush1.msra.mxu0 0.0
        %5492 = vmatprep.subr.mxu0 0.0
        %5493 = vmatpush1.msra.mxu0 0.0
        %5494 = vmatprep.subr.mxu0 0.0
        %5495 = vmatpush1.msra.mxu0 0.0
        %5496 = vmatprep.subr.mxu0 0.0
        %5497 = vmatpush1.msra.mxu0 0.0
        %5498 = vmatprep.mubr.f32.mxu0 0.0
        %5499 = vmatmul.mubr.f32.gmra.mrb[0].mxu0 %v2268
        %v5500 = vpop.f32.mrb[0].mxu0
        %v5501 = vadd.f32 0.0, %v5500
        %v5502 = vpop.f32.mrb[0].mxu0
        %5503 = vdwg.mxu0
        %5504 = vmatprep.subr.mxu0 0.0
        %5505 = vmatpush1.msra.mxu0 %v5356
        %5506 = vmatprep.subr.mxu0 0.0
        %5507 = vmatpush1.msra.mxu0 %v5357
        %5508 = vmatprep.subr.mxu0 0.0
        %5509 = vmatpush1.msra.mxu0 %v5358
        %5510 = vmatprep.subr.mxu0 0.0
        %5511 = vmatpush1.msra.mxu0 %v5359
        %5512 = vmatprep.subr.mxu0 0.0
        %5513 = vmatpush1.msra.mxu0 0.0
        %5514 = vmatprep.subr.mxu0 0.0
        %5515 = vmatpush1.msra.mxu0 0.0
        %5516 = vmatprep.subr.mxu0 0.0
        %5517 = vmatpush1.msra.mxu0 0.0
        %5518 = vmatprep.subr.mxu0 0.0
        %5519 = vmatpush1.msra.mxu0 0.0
        %5520 = vmatprep.subr.mxu0 0.0
        %5521 = vmatpush1.msra.mxu0 0.0
        %5522 = vmatprep.subr.mxu0 0.0
        %5523 = vmatpush1.msra.mxu0 0.0
        %5524 = vmatprep.subr.mxu0 0.0
        %5525 = vmatpush1.msra.mxu0 0.0
        %5526 = vmatprep.subr.mxu0 0.0
        %5527 = vmatpush1.msra.mxu0 0.0
        %5528 = vmatprep.subr.mxu0 0.0
        %5529 = vmatpush1.msra.mxu0 0.0
        %5530 = vmatprep.subr.mxu0 0.0
        %5531 = vmatpush1.msra.mxu0 0.0
        %5532 = vmatprep.subr.mxu0 0.0
        %5533 = vmatpush1.msra.mxu0 0.0
        %5534 = vmatprep.subr.mxu0 0.0
        %5535 = vmatpush1.msra.mxu0 0.0
        %5536 = vmatprep.subr.mxu0 0.0
        %5537 = vmatpush1.msra.mxu0 0.0
        %5538 = vmatprep.subr.mxu0 0.0
        %5539 = vmatpush1.msra.mxu0 0.0
        %5540 = vmatprep.subr.mxu0 0.0
        %5541 = vmatpush1.msra.mxu0 0.0
        %5542 = vmatprep.subr.mxu0 0.0
        %5543 = vmatpush1.msra.mxu0 0.0
        %5544 = vmatprep.subr.mxu0 0.0
        %5545 = vmatpush1.msra.mxu0 0.0
        %5546 = vmatprep.subr.mxu0 0.0
        %5547 = vmatpush1.msra.mxu0 0.0
        %5548 = vmatprep.subr.mxu0 0.0
        %5549 = vmatpush1.msra.mxu0 0.0
        %5550 = vmatprep.subr.mxu0 0.0
        %5551 = vmatpush1.msra.mxu0 0.0
        %5552 = vmatprep.subr.mxu0 0.0
        %5553 = vmatpush1.msra.mxu0 0.0
        %5554 = vmatprep.subr.mxu0 0.0
        %5555 = vmatpush1.msra.mxu0 0.0
        %5556 = vmatprep.subr.mxu0 0.0
        %5557 = vmatpush1.msra.mxu0 0.0
        %5558 = vmatprep.subr.mxu0 0.0
        %5559 = vmatpush1.msra.mxu0 0.0
        %5560 = vmatprep.subr.mxu0 0.0
        %5561 = vmatpush1.msra.mxu0 0.0
        %5562 = vmatprep.subr.mxu0 0.0
        %5563 = vmatpush1.msra.mxu0 0.0
        %5564 = vmatprep.subr.mxu0 0.0
        %5565 = vmatpush1.msra.mxu0 0.0
        %5566 = vmatprep.subr.mxu0 0.0
        %5567 = vmatpush1.msra.mxu0 0.0
        %5568 = vmatprep.mubr.f32.mxu0 0.0
        %5569 = vmatmul.mubr.f32.gmra.mrb[0].mxu0 %v2268
        %v5570 = vpop.f32.mrb[0].mxu0
        %v5571 = vadd.f32 0.0, %v5570
        %v5572 = vpop.f32.mrb[0].mxu0
        %5573 = vdwg.mxu0
        %5574 = vmatprep.subr.mxu0 0.0
        %5575 = vmatpush1.msra.mxu0 %v5360
        %5576 = vmatprep.subr.mxu0 0.0
        %5577 = vmatpush1.msra.mxu0 %v5361
        %5578 = vmatprep.subr.mxu0 0.0
        %5579 = vmatpush1.msra.mxu0 %v5362
        %5580 = vmatprep.subr.mxu0 0.0
        %5581 = vmatpush1.msra.mxu0 %v5363
        %5582 = vmatprep.subr.mxu0 0.0
        %5583 = vmatpush1.msra.mxu0 0.0
        %5584 = vmatprep.subr.mxu0 0.0
        %5585 = vmatpush1.msra.mxu0 0.0
        %5586 = vmatprep.subr.mxu0 0.0
        %5587 = vmatpush1.msra.mxu0 0.0
        %5588 = vmatprep.subr.mxu0 0.0
        %5589 = vmatpush1.msra.mxu0 0.0
        %5590 = vmatprep.subr.mxu0 0.0
        %5591 = vmatpush1.msra.mxu0 0.0
        %5592 = vmatprep.subr.mxu0 0.0
        %5593 = vmatpush1.msra.mxu0 0.0
        %5594 = vmatprep.subr.mxu0 0.0
        %5595 = vmatpush1.msra.mxu0 0.0
        %5596 = vmatprep.subr.mxu0 0.0
        %5597 = vmatpush1.msra.mxu0 0.0
        %5598 = vmatprep.subr.mxu0 0.0
        %5599 = vmatpush1.msra.mxu0 0.0
        %5600 = vmatprep.subr.mxu0 0.0
        %5601 = vmatpush1.msra.mxu0 0.0
        %5602 = vmatprep.subr.mxu0 0.0
        %5603 = vmatpush1.msra.mxu0 0.0
        %5604 = vmatprep.subr.mxu0 0.0
        %5605 = vmatpush1.msra.mxu0 0.0
        %5606 = vmatprep.subr.mxu0 0.0
        %5607 = vmatpush1.msra.mxu0 0.0
        %5608 = vmatprep.subr.mxu0 0.0
        %5609 = vmatpush1.msra.mxu0 0.0
        %5610 = vmatprep.subr.mxu0 0.0
        %5611 = vmatpush1.msra.mxu0 0.0
        %5612 = vmatprep.subr.mxu0 0.0
        %5613 = vmatpush1.msra.mxu0 0.0
        %5614 = vmatprep.subr.mxu0 0.0
        %5615 = vmatpush1.msra.mxu0 0.0
        %5616 = vmatprep.subr.mxu0 0.0
        %5617 = vmatpush1.msra.mxu0 0.0
        %5618 = vmatprep.subr.mxu0 0.0
        %5619 = vmatpush1.msra.mxu0 0.0
        %5620 = vmatprep.subr.mxu0 0.0
        %5621 = vmatpush1.msra.mxu0 0.0
        %5622 = vmatprep.subr.mxu0 0.0
        %5623 = vmatpush1.msra.mxu0 0.0
        %5624 = vmatprep.subr.mxu0 0.0
        %5625 = vmatpush1.msra.mxu0 0.0
        %5626 = vmatprep.subr.mxu0 0.0
        %5627 = vmatpush1.msra.mxu0 0.0
        %5628 = vmatprep.subr.mxu0 0.0
        %5629 = vmatpush1.msra.mxu0 0.0
        %5630 = vmatprep.subr.mxu0 0.0
        %5631 = vmatpush1.msra.mxu0 0.0
        %5632 = vmatprep.subr.mxu0 0.0
        %5633 = vmatpush1.msra.mxu0 0.0
        %5634 = vmatprep.subr.mxu0 0.0
        %5635 = vmatpush1.msra.mxu0 0.0
        %5636 = vmatprep.subr.mxu0 0.0
        %5637 = vmatpush1.msra.mxu0 0.0
        %5638 = vmatprep.mubr.f32.mxu0 0.0
        %5639 = vmatmul.mubr.f32.gmra.mrb[0].mxu0 %v2268
        %v5640 = vpop.f32.mrb[0].mxu0
        %v5641 = vadd.f32 0.0, %v5640
        %v5642 = vpop.f32.mrb[0].mxu0
        %5643 = vdwg.mxu0
        %s5644 = scalar_lea.vmem %s10, 32
        %v5645 = vld [vmem:[%s5644] sm:$0xff]
        %v5646 = vld [vmem:[%s5644 + $0x8] sm:$0xff]
        %v5647 = vld [vmem:[%s5644 + $0x10] sm:$0xff]
        %v5648 = vld [vmem:[%s5644 + $0x18] sm:$0xff]
        %v5650 = vsel %vm960, %v5134, 0
        %v5653 = vsel %vm960, %v5431, 0
        %5655 = vmatprep.subr.mxu0 0.0
        %5656 = vmatpush1.xpose.msra.mxu0 %v5653
        %5657 = vmatprep.subr.mxu0 0.0
        %5658 = vmatpush1.xpose.msra.mxu0 0.0
        %5659 = vmatprep.subr.mxu0 0.0
        %5660 = vmatpush1.xpose.msra.mxu0 0.0
        %5661 = vmatprep.subr.mxu0 0.0
        %5662 = vmatpush1.xpose.msra.mxu0 0.0
        %5663 = vmatprep.subr.mxu0 0.0
        %5664 = vmatpush1.xpose.msra.mxu0 0.0
        %5665 = vmatprep.subr.mxu0 0.0
        %5666 = vmatpush1.xpose.msra.mxu0 0.0
        %5667 = vmatprep.subr.mxu0 0.0
        %5668 = vmatpush1.xpose.msra.mxu0 0.0
        %5669 = vmatprep.subr.mxu0 0.0
        %5670 = vmatpush1.xpose.msra.mxu0 0.0
        %5671 = vmatprep.subr.mxu0 0.0
        %5672 = vmatpush1.xpose.msra.mxu0 0.0
        %5673 = vmatprep.subr.mxu0 0.0
        %5674 = vmatpush1.xpose.msra.mxu0 0.0
        %5675 = vmatprep.subr.mxu0 0.0
        %5676 = vmatpush1.xpose.msra.mxu0 0.0
        %5677 = vmatprep.subr.mxu0 0.0
        %5678 = vmatpush1.xpose.msra.mxu0 0.0
        %5679 = vmatprep.subr.mxu0 0.0
        %5680 = vmatpush1.xpose.msra.mxu0 0.0
        %5681 = vmatprep.subr.mxu0 0.0
        %5682 = vmatpush1.xpose.msra.mxu0 0.0
        %5683 = vmatprep.subr.mxu0 0.0
        %5684 = vmatpush1.xpose.msra.mxu0 0.0
        %5685 = vmatprep.subr.mxu0 0.0
        %5686 = vmatpush1.xpose.msra.mxu0 0.0
        %5687 = vmatprep.subr.mxu0 0.0
        %5688 = vmatpush1.xpose.msra.mxu0 0.0
        %5689 = vmatprep.subr.mxu0 0.0
        %5690 = vmatpush1.xpose.msra.mxu0 0.0
        %5691 = vmatprep.subr.mxu0 0.0
        %5692 = vmatpush1.xpose.msra.mxu0 0.0
        %5693 = vmatprep.subr.mxu0 0.0
        %5694 = vmatpush1.xpose.msra.mxu0 0.0
        %5695 = vmatprep.subr.mxu0 0.0
        %5696 = vmatpush1.xpose.msra.mxu0 0.0
        %5697 = vmatprep.subr.mxu0 0.0
        %5698 = vmatpush1.xpose.msra.mxu0 0.0
        %5699 = vmatprep.subr.mxu0 0.0
        %5700 = vmatpush1.xpose.msra.mxu0 0.0
        %5701 = vmatprep.subr.mxu0 0.0
        %5702 = vmatpush1.xpose.msra.mxu0 0.0
        %5703 = vmatprep.subr.mxu0 0.0
        %5704 = vmatpush1.xpose.msra.mxu0 0.0
        %5705 = vmatprep.subr.mxu0 0.0
        %5706 = vmatpush1.xpose.msra.mxu0 0.0
        %5707 = vmatprep.subr.mxu0 0.0
        %5708 = vmatpush1.xpose.msra.mxu0 0.0
        %5709 = vmatprep.subr.mxu0 0.0
        %5710 = vmatpush1.xpose.msra.mxu0 0.0
        %5711 = vmatprep.subr.mxu0 0.0
        %5712 = vmatpush1.xpose.msra.mxu0 0.0
        %5713 = vmatprep.subr.mxu0 0.0
        %5714 = vmatpush1.xpose.msra.mxu0 0.0
        %5715 = vmatprep.subr.mxu0 0.0
        %5716 = vmatpush1.xpose.msra.mxu0 0.0
        %5717 = vmatprep.subr.mxu0 0.0
        %5718 = vmatpush1.xpose.msra.mxu0 0.0
        %5719 = vmatprep.mubr.f32.mxu0 0.0
        %5720 = vmatmul.mubr.f32.gmra.mrb[0].mxu0 %v5650
        %v5721 = vpop.f32.mrb[0].mxu0
        %v5722 = vadd.f32 0.0, %v5721
        %v5723 = vpop.f32.mrb[0].mxu0
        %5724 = vdwg.mxu0
        %v5726 = vsel %vm960, %v5204, 0
        %v5729 = vsel %vm960, %v5501, 0
        %5731 = vmatprep.subr.mxu0 0.0
        %5732 = vmatpush1.xpose.msra.mxu0 %v5729
        %5733 = vmatprep.subr.mxu0 0.0
        %5734 = vmatpush1.xpose.msra.mxu0 0.0
        %5735 = vmatprep.subr.mxu0 0.0
        %5736 = vmatpush1.xpose.msra.mxu0 0.0
        %5737 = vmatprep.subr.mxu0 0.0
        %5738 = vmatpush1.xpose.msra.mxu0 0.0
        %5739 = vmatprep.subr.mxu0 0.0
        %5740 = vmatpush1.xpose.msra.mxu0 0.0
        %5741 = vmatprep.subr.mxu0 0.0
        %5742 = vmatpush1.xpose.msra.mxu0 0.0
        %5743 = vmatprep.subr.mxu0 0.0
        %5744 = vmatpush1.xpose.msra.mxu0 0.0
        %5745 = vmatprep.subr.mxu0 0.0
        %5746 = vmatpush1.xpose.msra.mxu0 0.0
        %5747 = vmatprep.subr.mxu0 0.0
        %5748 = vmatpush1.xpose.msra.mxu0 0.0
        %5749 = vmatprep.subr.mxu0 0.0
        %5750 = vmatpush1.xpose.msra.mxu0 0.0
        %5751 = vmatprep.subr.mxu0 0.0
        %5752 = vmatpush1.xpose.msra.mxu0 0.0
        %5753 = vmatprep.subr.mxu0 0.0
        %5754 = vmatpush1.xpose.msra.mxu0 0.0
        %5755 = vmatprep.subr.mxu0 0.0
        %5756 = vmatpush1.xpose.msra.mxu0 0.0
        %5757 = vmatprep.subr.mxu0 0.0
        %5758 = vmatpush1.xpose.msra.mxu0 0.0
        %5759 = vmatprep.subr.mxu0 0.0
        %5760 = vmatpush1.xpose.msra.mxu0 0.0
        %5761 = vmatprep.subr.mxu0 0.0
        %5762 = vmatpush1.xpose.msra.mxu0 0.0
        %5763 = vmatprep.subr.mxu0 0.0
        %5764 = vmatpush1.xpose.msra.mxu0 0.0
        %5765 = vmatprep.subr.mxu0 0.0
        %5766 = vmatpush1.xpose.msra.mxu0 0.0
        %5767 = vmatprep.subr.mxu0 0.0
        %5768 = vmatpush1.xpose.msra.mxu0 0.0
        %5769 = vmatprep.subr.mxu0 0.0
        %5770 = vmatpush1.xpose.msra.mxu0 0.0
        %5771 = vmatprep.subr.mxu0 0.0
        %5772 = vmatpush1.xpose.msra.mxu0 0.0
        %5773 = vmatprep.subr.mxu0 0.0
        %5774 = vmatpush1.xpose.msra.mxu0 0.0
        %5775 = vmatprep.subr.mxu0 0.0
        %5776 = vmatpush1.xpose.msra.mxu0 0.0
        %5777 = vmatprep.subr.mxu0 0.0
        %5778 = vmatpush1.xpose.msra.mxu0 0.0
        %5779 = vmatprep.subr.mxu0 0.0
        %5780 = vmatpush1.xpose.msra.mxu0 0.0
        %5781 = vmatprep.subr.mxu0 0.0
        %5782 = vmatpush1.xpose.msra.mxu0 0.0
        %5783 = vmatprep.subr.mxu0 0.0
        %5784 = vmatpush1.xpose.msra.mxu0 0.0
        %5785 = vmatprep.subr.mxu0 0.0
        %5786 = vmatpush1.xpose.msra.mxu0 0.0
        %5787 = vmatprep.subr.mxu0 0.0
        %5788 = vmatpush1.xpose.msra.mxu0 0.0
        %5789 = vmatprep.subr.mxu0 0.0
        %5790 = vmatpush1.xpose.msra.mxu0 0.0
        %5791 = vmatprep.subr.mxu0 0.0
        %5792 = vmatpush1.xpose.msra.mxu0 0.0
        %5793 = vmatprep.subr.mxu0 0.0
        %5794 = vmatpush1.xpose.msra.mxu0 0.0
        %5795 = vmatprep.mubr.f32.mxu0 0.0
        %5796 = vmatmul.mubr.f32.gmra.mrb[0].mxu0 %v5726
        %v5797 = vpop.f32.mrb[0].mxu0
        %v5798 = vadd.f32 0.0, %v5797
        %v5799 = vpop.f32.mrb[0].mxu0
        %5800 = vdwg.mxu0
        %v5802 = vsel %vm960, %v5274, 0
        %v5805 = vsel %vm960, %v5571, 0
        %5807 = vmatprep.subr.mxu0 0.0
        %5808 = vmatpush1.xpose.msra.mxu0 %v5805
        %5809 = vmatprep.subr.mxu0 0.0
        %5810 = vmatpush1.xpose.msra.mxu0 0.0
        %5811 = vmatprep.subr.mxu0 0.0
        %5812 = vmatpush1.xpose.msra.mxu0 0.0
        %5813 = vmatprep.subr.mxu0 0.0
        %5814 = vmatpush1.xpose.msra.mxu0 0.0
        %5815 = vmatprep.subr.mxu0 0.0
        %5816 = vmatpush1.xpose.msra.mxu0 0.0
        %5817 = vmatprep.subr.mxu0 0.0
        %5818 = vmatpush1.xpose.msra.mxu0 0.0
        %5819 = vmatprep.subr.mxu0 0.0
        %5820 = vmatpush1.xpose.msra.mxu0 0.0
        %5821 = vmatprep.subr.mxu0 0.0
        %5822 = vmatpush1.xpose.msra.mxu0 0.0
        %5823 = vmatprep.subr.mxu0 0.0
        %5824 = vmatpush1.xpose.msra.mxu0 0.0
        %5825 = vmatprep.subr.mxu0 0.0
        %5826 = vmatpush1.xpose.msra.mxu0 0.0
        %5827 = vmatprep.subr.mxu0 0.0
        %5828 = vmatpush1.xpose.msra.mxu0 0.0
        %5829 = vmatprep.subr.mxu0 0.0
        %5830 = vmatpush1.xpose.msra.mxu0 0.0
        %5831 = vmatprep.subr.mxu0 0.0
        %5832 = vmatpush1.xpose.msra.mxu0 0.0
        %5833 = vmatprep.subr.mxu0 0.0
        %5834 = vmatpush1.xpose.msra.mxu0 0.0
        %5835 = vmatprep.subr.mxu0 0.0
        %5836 = vmatpush1.xpose.msra.mxu0 0.0
        %5837 = vmatprep.subr.mxu0 0.0
        %5838 = vmatpush1.xpose.msra.mxu0 0.0
        %5839 = vmatprep.subr.mxu0 0.0
        %5840 = vmatpush1.xpose.msra.mxu0 0.0
        %5841 = vmatprep.subr.mxu0 0.0
        %5842 = vmatpush1.xpose.msra.mxu0 0.0
        %5843 = vmatprep.subr.mxu0 0.0
        %5844 = vmatpush1.xpose.msra.mxu0 0.0
        %5845 = vmatprep.subr.mxu0 0.0
        %5846 = vmatpush1.xpose.msra.mxu0 0.0
        %5847 = vmatprep.subr.mxu0 0.0
        %5848 = vmatpush1.xpose.msra.mxu0 0.0
        %5849 = vmatprep.subr.mxu0 0.0
        %5850 = vmatpush1.xpose.msra.mxu0 0.0
        %5851 = vmatprep.subr.mxu0 0.0
        %5852 = vmatpush1.xpose.msra.mxu0 0.0
        %5853 = vmatprep.subr.mxu0 0.0
        %5854 = vmatpush1.xpose.msra.mxu0 0.0
        %5855 = vmatprep.subr.mxu0 0.0
        %5856 = vmatpush1.xpose.msra.mxu0 0.0
        %5857 = vmatprep.subr.mxu0 0.0
        %5858 = vmatpush1.xpose.msra.mxu0 0.0
        %5859 = vmatprep.subr.mxu0 0.0
        %5860 = vmatpush1.xpose.msra.mxu0 0.0
        %5861 = vmatprep.subr.mxu0 0.0
        %5862 = vmatpush1.xpose.msra.mxu0 0.0
        %5863 = vmatprep.subr.mxu0 0.0
        %5864 = vmatpush1.xpose.msra.mxu0 0.0
        %5865 = vmatprep.subr.mxu0 0.0
        %5866 = vmatpush1.xpose.msra.mxu0 0.0
        %5867 = vmatprep.subr.mxu0 0.0
        %5868 = vmatpush1.xpose.msra.mxu0 0.0
        %5869 = vmatprep.subr.mxu0 0.0
        %5870 = vmatpush1.xpose.msra.mxu0 0.0
        %5871 = vmatprep.mubr.f32.mxu0 0.0
        %5872 = vmatmul.mubr.f32.gmra.mrb[0].mxu0 %v5802
        %v5873 = vpop.f32.mrb[0].mxu0
        %v5874 = vadd.f32 0.0, %v5873
        %v5875 = vpop.f32.mrb[0].mxu0
        %5876 = vdwg.mxu0
        %v5878 = vsel %vm960, %v5344, 0
        %v5881 = vsel %vm960, %v5641, 0
        %5883 = vmatprep.subr.mxu0 0.0
        %5884 = vmatpush1.xpose.msra.mxu0 %v5881
        %5885 = vmatprep.subr.mxu0 0.0
        %5886 = vmatpush1.xpose.msra.mxu0 0.0
        %5887 = vmatprep.subr.mxu0 0.0
        %5888 = vmatpush1.xpose.msra.mxu0 0.0
        %5889 = vmatprep.subr.mxu0 0.0
        %5890 = vmatpush1.xpose.msra.mxu0 0.0
        %5891 = vmatprep.subr.mxu0 0.0
        %5892 = vmatpush1.xpose.msra.mxu0 0.0
        %5893 = vmatprep.subr.mxu0 0.0
        %5894 = vmatpush1.xpose.msra.mxu0 0.0
        %5895 = vmatprep.subr.mxu0 0.0
        %5896 = vmatpush1.xpose.msra.mxu0 0.0
        %5897 = vmatprep.subr.mxu0 0.0
        %5898 = vmatpush1.xpose.msra.mxu0 0.0
        %5899 = vmatprep.subr.mxu0 0.0
        %5900 = vmatpush1.xpose.msra.mxu0 0.0
        %5901 = vmatprep.subr.mxu0 0.0
        %5902 = vmatpush1.xpose.msra.mxu0 0.0
        %5903 = vmatprep.subr.mxu0 0.0
        %5904 = vmatpush1.xpose.msra.mxu0 0.0
        %5905 = vmatprep.subr.mxu0 0.0
        %5906 = vmatpush1.xpose.msra.mxu0 0.0
        %5907 = vmatprep.subr.mxu0 0.0
        %5908 = vmatpush1.xpose.msra.mxu0 0.0
        %5909 = vmatprep.subr.mxu0 0.0
        %5910 = vmatpush1.xpose.msra.mxu0 0.0
        %5911 = vmatprep.subr.mxu0 0.0
        %5912 = vmatpush1.xpose.msra.mxu0 0.0
        %5913 = vmatprep.subr.mxu0 0.0
        %5914 = vmatpush1.xpose.msra.mxu0 0.0
        %5915 = vmatprep.subr.mxu0 0.0
        %5916 = vmatpush1.xpose.msra.mxu0 0.0
        %5917 = vmatprep.subr.mxu0 0.0
        %5918 = vmatpush1.xpose.msra.mxu0 0.0
        %5919 = vmatprep.subr.mxu0 0.0
        %5920 = vmatpush1.xpose.msra.mxu0 0.0
        %5921 = vmatprep.subr.mxu0 0.0
        %5922 = vmatpush1.xpose.msra.mxu0 0.0
        %5923 = vmatprep.subr.mxu0 0.0
        %5924 = vmatpush1.xpose.msra.mxu0 0.0
        %5925 = vmatprep.subr.mxu0 0.0
        %5926 = vmatpush1.xpose.msra.mxu0 0.0
        %5927 = vmatprep.subr.mxu0 0.0
        %5928 = vmatpush1.xpose.msra.mxu0 0.0
        %5929 = vmatprep.subr.mxu0 0.0
        %5930 = vmatpush1.xpose.msra.mxu0 0.0
        %5931 = vmatprep.subr.mxu0 0.0
        %5932 = vmatpush1.xpose.msra.mxu0 0.0
        %5933 = vmatprep.subr.mxu0 0.0
        %5934 = vmatpush1.xpose.msra.mxu0 0.0
        %5935 = vmatprep.subr.mxu0 0.0
        %5936 = vmatpush1.xpose.msra.mxu0 0.0
        %5937 = vmatprep.subr.mxu0 0.0
        %5938 = vmatpush1.xpose.msra.mxu0 0.0
        %5939 = vmatprep.subr.mxu0 0.0
        %5940 = vmatpush1.xpose.msra.mxu0 0.0
        %5941 = vmatprep.subr.mxu0 0.0
        %5942 = vmatpush1.xpose.msra.mxu0 0.0
        %5943 = vmatprep.subr.mxu0 0.0
        %5944 = vmatpush1.xpose.msra.mxu0 0.0
        %5945 = vmatprep.subr.mxu0 0.0
        %5946 = vmatpush1.xpose.msra.mxu0 0.0
        %5947 = vmatprep.mubr.f32.mxu0 0.0
        %5948 = vmatmul.mubr.f32.gmra.mrb[0].mxu0 %v5878
        %v5949 = vpop.f32.mrb[0].mxu0
        %v5950 = vadd.f32 0.0, %v5949
        %v5951 = vpop.f32.mrb[0].mxu0
        %5952 = vdwg.mxu0
        %v5953 = vmul.f32 %v5722, 0.35355338
        %v5954 = vmul.f32 %v5798, 0.35355338
        %v5955 = vmul.f32 %v5874, 0.35355338
        %v5956 = vmul.f32 %v5950, 0.35355338
        %v5957 = vadd.f32 %v5953, %v652
        %v5958 = vadd.f32 %v5954, %v652
        %v5959 = vadd.f32 %v5955, %v652
        %v5960 = vadd.f32 %v5956, %v652
        %v5961 = vsel %vm960, %v5957, -inf
        %5962 = vmax.xlane.f32.xlu0 %v5961
        %v5963 = vpop.xlane.xlu0 %5962
        %v5964 = vsel %vm960, %v5958, -inf
        %5965 = vmax.xlane.f32.xlu0 %v5964
        %v5966 = vpop.xlane.xlu0 %5965
        %v5967 = vsel %vm960, %v5959, -inf
        %5968 = vmax.xlane.f32.xlu0 %v5967
        %v5969 = vpop.xlane.xlu0 %5968
        %v5970 = vsel %vm960, %v5960, -inf
        %5971 = vmax.xlane.f32.xlu0 %v5970
        %v5972 = vpop.xlane.xlu0 %5971
        %v5973 = vsub.f32 %v5957, %v5963
        %v5974 = vsub.f32 %v5958, %v5966
        %v5975 = vsub.f32 %v5959, %v5969
        %v5976 = vsub.f32 %v5960, %v5972
        %v5977 = vmul.f32 %v5973, 1.442695
        %v5978 = vpow.pop %v5977
        %v5979 = vmul.f32 %v5974, 1.442695
        %v5980 = vpow.pop %v5979
        %v5981 = vmul.f32 %v5975, 1.442695
        %v5982 = vpow.pop %v5981
        %v5983 = vmul.f32 %v5976, 1.442695
        %v5984 = vpow.pop %v5983
        %v5985 = vsel %vm960, %v5978, 0.0
        %5986 = vadd.xlane.f32.xlu0 %v5985
        %v5987 = vpop.xlane.xlu0 %5986
        %v5988 = vsel %vm960, %v5980, 0.0
        %5989 = vadd.xlane.f32.xlu0 %v5988
        %v5990 = vpop.xlane.xlu0 %5989
        %v5991 = vsel %vm960, %v5982, 0.0
        %5992 = vadd.xlane.f32.xlu0 %v5991
        %v5993 = vpop.xlane.xlu0 %5992
        %v5994 = vsel %vm960, %v5984, 0.0
        %5995 = vadd.xlane.f32.xlu0 %v5994
        %v5996 = vpop.xlane.xlu0 %5995
        %v5997 = vrcp.pop %v5987
        %v5998 = vmul.f32 %v5978, %v5997
        %v5999 = vrcp.pop %v5990
        %v6000 = vmul.f32 %v5980, %v5999
        %v6001 = vrcp.pop %v5993
        %v6002 = vmul.f32 %v5982, %v6001
        %v6003 = vrcp.pop %v5996
        %v6004 = vmul.f32 %v5984, %v6003
        %6005 = vrot.lane.b32.xlu0 %v5431, 120
        %v6006 = vpop.permute.xlu0 %6005
        %v6009 = vsel %vm960, %v5998, 0
        %6011 = vmatprep.subr.mxu0 0.0
        %6012 = vmatpush1.msra.mxu0 %v6006
        %6013 = vmatprep.subr.mxu0 0.0
        %6014 = vmatpush1.msra.mxu0 0.0
        %6015 = vmatprep.subr.mxu0 0.0
        %6016 = vmatpush1.msra.mxu0 0.0
        %6017 = vmatprep.subr.mxu0 0.0
        %6018 = vmatpush1.msra.mxu0 0.0
        %6019 = vmatprep.subr.mxu0 0.0
        %6020 = vmatpush1.msra.mxu0 0.0
        %6021 = vmatprep.subr.mxu0 0.0
        %6022 = vmatpush1.msra.mxu0 0.0
        %6023 = vmatprep.subr.mxu0 0.0
        %6024 = vmatpush1.msra.mxu0 0.0
        %6025 = vmatprep.subr.mxu0 0.0
        %6026 = vmatpush1.msra.mxu0 0.0
        %6027 = vmatprep.subr.mxu0 0.0
        %6028 = vmatpush1.msra.mxu0 0.0
        %6029 = vmatprep.subr.mxu0 0.0
        %6030 = vmatpush1.msra.mxu0 0.0
        %6031 = vmatprep.subr.mxu0 0.0
        %6032 = vmatpush1.msra.mxu0 0.0
        %6033 = vmatprep.subr.mxu0 0.0
        %6034 = vmatpush1.msra.mxu0 0.0
        %6035 = vmatprep.subr.mxu0 0.0
        %6036 = vmatpush1.msra.mxu0 0.0
        %6037 = vmatprep.subr.mxu0 0.0
        %6038 = vmatpush1.msra.mxu0 0.0
        %6039 = vmatprep.subr.mxu0 0.0
        %6040 = vmatpush1.msra.mxu0 0.0
        %6041 = vmatprep.subr.mxu0 0.0
        %6042 = vmatpush1.msra.mxu0 0.0
        %6043 = vmatprep.subr.mxu0 0.0
        %6044 = vmatpush1.msra.mxu0 0.0
        %6045 = vmatprep.subr.mxu0 0.0
        %6046 = vmatpush1.msra.mxu0 0.0
        %6047 = vmatprep.subr.mxu0 0.0
        %6048 = vmatpush1.msra.mxu0 0.0
        %6049 = vmatprep.subr.mxu0 0.0
        %6050 = vmatpush1.msra.mxu0 0.0
        %6051 = vmatprep.subr.mxu0 0.0
        %6052 = vmatpush1.msra.mxu0 0.0
        %6053 = vmatprep.subr.mxu0 0.0
        %6054 = vmatpush1.msra.mxu0 0.0
        %6055 = vmatprep.subr.mxu0 0.0
        %6056 = vmatpush1.msra.mxu0 0.0
        %6057 = vmatprep.subr.mxu0 0.0
        %6058 = vmatpush1.msra.mxu0 0.0
        %6059 = vmatprep.subr.mxu0 0.0
        %6060 = vmatpush1.msra.mxu0 0.0
        %6061 = vmatprep.subr.mxu0 0.0
        %6062 = vmatpush1.msra.mxu0 0.0
        %6063 = vmatprep.subr.mxu0 0.0
        %6064 = vmatpush1.msra.mxu0 0.0
        %6065 = vmatprep.subr.mxu0 0.0
        %6066 = vmatpush1.msra.mxu0 0.0
        %6067 = vmatprep.subr.mxu0 0.0
        %6068 = vmatpush1.msra.mxu0 0.0
        %6069 = vmatprep.subr.mxu0 0.0
        %6070 = vmatpush1.msra.mxu0 0.0
        %6071 = vmatprep.subr.mxu0 0.0
        %6072 = vmatpush1.msra.mxu0 0.0
        %6073 = vmatprep.subr.mxu0 0.0
        %6074 = vmatpush1.msra.mxu0 0.0
        %6075 = vmatprep.mubr.f32.mxu0 0.0
        %6076 = vmatmul.mubr.f32.gmra.mrb[0].mxu0 %v6009
        %v6077 = vpop.f32.mrb[0].mxu0
        %v6078 = vadd.f32 0.0, %v6077
        %v6079 = vpop.f32.mrb[0].mxu0
        %6080 = vdwg.mxu0
        %6081 = vrot.lane.b32.xlu0 %v5501, 120
        %v6082 = vpop.permute.xlu0 %6081
        %v6085 = vsel %vm960, %v6000, 0
        %6087 = vmatprep.subr.mxu0 0.0
        %6088 = vmatpush1.msra.mxu0 %v6082
        %6089 = vmatprep.subr.mxu0 0.0
        %6090 = vmatpush1.msra.mxu0 0.0
        %6091 = vmatprep.subr.mxu0 0.0
        %6092 = vmatpush1.msra.mxu0 0.0
        %6093 = vmatprep.subr.mxu0 0.0
        %6094 = vmatpush1.msra.mxu0 0.0
        %6095 = vmatprep.subr.mxu0 0.0
        %6096 = vmatpush1.msra.mxu0 0.0
        %6097 = vmatprep.subr.mxu0 0.0
        %6098 = vmatpush1.msra.mxu0 0.0
        %6099 = vmatprep.subr.mxu0 0.0
        %6100 = vmatpush1.msra.mxu0 0.0
        %6101 = vmatprep.subr.mxu0 0.0
        %6102 = vmatpush1.msra.mxu0 0.0
        %6103 = vmatprep.subr.mxu0 0.0
        %6104 = vmatpush1.msra.mxu0 0.0
        %6105 = vmatprep.subr.mxu0 0.0
        %6106 = vmatpush1.msra.mxu0 0.0
        %6107 = vmatprep.subr.mxu0 0.0
        %6108 = vmatpush1.msra.mxu0 0.0
        %6109 = vmatprep.subr.mxu0 0.0
        %6110 = vmatpush1.msra.mxu0 0.0
        %6111 = vmatprep.subr.mxu0 0.0
        %6112 = vmatpush1.msra.mxu0 0.0
        %6113 = vmatprep.subr.mxu0 0.0
        %6114 = vmatpush1.msra.mxu0 0.0
        %6115 = vmatprep.subr.mxu0 0.0
        %6116 = vmatpush1.msra.mxu0 0.0
        %6117 = vmatprep.subr.mxu0 0.0
        %6118 = vmatpush1.msra.mxu0 0.0
        %6119 = vmatprep.subr.mxu0 0.0
        %6120 = vmatpush1.msra.mxu0 0.0
        %6121 = vmatprep.subr.mxu0 0.0
        %6122 = vmatpush1.msra.mxu0 0.0
        %6123 = vmatprep.subr.mxu0 0.0
        %6124 = vmatpush1.msra.mxu0 0.0
        %6125 = vmatprep.subr.mxu0 0.0
        %6126 = vmatpush1.msra.mxu0 0.0
        %6127 = vmatprep.subr.mxu0 0.0
        %6128 = vmatpush1.msra.mxu0 0.0
        %6129 = vmatprep.subr.mxu0 0.0
        %6130 = vmatpush1.msra.mxu0 0.0
        %6131 = vmatprep.subr.mxu0 0.0
        %6132 = vmatpush1.msra.mxu0 0.0
        %6133 = vmatprep.subr.mxu0 0.0
        %6134 = vmatpush1.msra.mxu0 0.0
        %6135 = vmatprep.subr.mxu0 0.0
        %6136 = vmatpush1.msra.mxu0 0.0
        %6137 = vmatprep.subr.mxu0 0.0
        %6138 = vmatpush1.msra.mxu0 0.0
        %6139 = vmatprep.subr.mxu0 0.0
        %6140 = vmatpush1.msra.mxu0 0.0
        %6141 = vmatprep.subr.mxu0 0.0
        %6142 = vmatpush1.msra.mxu0 0.0
        %6143 = vmatprep.subr.mxu0 0.0
        %6144 = vmatpush1.msra.mxu0 0.0
        %6145 = vmatprep.subr.mxu0 0.0
        %6146 = vmatpush1.msra.mxu0 0.0
        %6147 = vmatprep.subr.mxu0 0.0
        %6148 = vmatpush1.msra.mxu0 0.0
        %6149 = vmatprep.subr.mxu0 0.0
        %6150 = vmatpush1.msra.mxu0 0.0
        %6151 = vmatprep.mubr.f32.mxu0 0.0
        %6152 = vmatmul.mubr.f32.gmra.mrb[0].mxu0 %v6085
        %v6153 = vpop.f32.mrb[0].mxu0
        %v6154 = vadd.f32 0.0, %v6153
        %v6155 = vpop.f32.mrb[0].mxu0
        %6156 = vdwg.mxu0
        %6157 = vrot.lane.b32.xlu0 %v5571, 120
        %v6158 = vpop.permute.xlu0 %6157
        %v6161 = vsel %vm960, %v6002, 0
        %6163 = vmatprep.subr.mxu0 0.0
        %6164 = vmatpush1.msra.mxu0 %v6158
        %6165 = vmatprep.subr.mxu0 0.0
        %6166 = vmatpush1.msra.mxu0 0.0
        %6167 = vmatprep.subr.mxu0 0.0
        %6168 = vmatpush1.msra.mxu0 0.0
        %6169 = vmatprep.subr.mxu0 0.0
        %6170 = vmatpush1.msra.mxu0 0.0
        %6171 = vmatprep.subr.mxu0 0.0
        %6172 = vmatpush1.msra.mxu0 0.0
        %6173 = vmatprep.subr.mxu0 0.0
        %6174 = vmatpush1.msra.mxu0 0.0
        %6175 = vmatprep.subr.mxu0 0.0
        %6176 = vmatpush1.msra.mxu0 0.0
        %6177 = vmatprep.subr.mxu0 0.0
        %6178 = vmatpush1.msra.mxu0 0.0
        %6179 = vmatprep.subr.mxu0 0.0
        %6180 = vmatpush1.msra.mxu0 0.0
        %6181 = vmatprep.subr.mxu0 0.0
        %6182 = vmatpush1.msra.mxu0 0.0
        %6183 = vmatprep.subr.mxu0 0.0
        %6184 = vmatpush1.msra.mxu0 0.0
        %6185 = vmatprep.subr.mxu0 0.0
        %6186 = vmatpush1.msra.mxu0 0.0
        %6187 = vmatprep.subr.mxu0 0.0
        %6188 = vmatpush1.msra.mxu0 0.0
        %6189 = vmatprep.subr.mxu0 0.0
        %6190 = vmatpush1.msra.mxu0 0.0
        %6191 = vmatprep.subr.mxu0 0.0
        %6192 = vmatpush1.msra.mxu0 0.0
        %6193 = vmatprep.subr.mxu0 0.0
        %6194 = vmatpush1.msra.mxu0 0.0
        %6195 = vmatprep.subr.mxu0 0.0
        %6196 = vmatpush1.msra.mxu0 0.0
        %6197 = vmatprep.subr.mxu0 0.0
        %6198 = vmatpush1.msra.mxu0 0.0
        %6199 = vmatprep.subr.mxu0 0.0
        %6200 = vmatpush1.msra.mxu0 0.0
        %6201 = vmatprep.subr.mxu0 0.0
        %6202 = vmatpush1.msra.mxu0 0.0
        %6203 = vmatprep.subr.mxu0 0.0
        %6204 = vmatpush1.msra.mxu0 0.0
        %6205 = vmatprep.subr.mxu0 0.0
        %6206 = vmatpush1.msra.mxu0 0.0
        %6207 = vmatprep.subr.mxu0 0.0
        %6208 = vmatpush1.msra.mxu0 0.0
        %6209 = vmatprep.subr.mxu0 0.0
        %6210 = vmatpush1.msra.mxu0 0.0
        %6211 = vmatprep.subr.mxu0 0.0
        %6212 = vmatpush1.msra.mxu0 0.0
        %6213 = vmatprep.subr.mxu0 0.0
        %6214 = vmatpush1.msra.mxu0 0.0
        %6215 = vmatprep.subr.mxu0 0.0
        %6216 = vmatpush1.msra.mxu0 0.0
        %6217 = vmatprep.subr.mxu0 0.0
        %6218 = vmatpush1.msra.mxu0 0.0
        %6219 = vmatprep.subr.mxu0 0.0
        %6220 = vmatpush1.msra.mxu0 0.0
        %6221 = vmatprep.subr.mxu0 0.0
        %6222 = vmatpush1.msra.mxu0 0.0
        %6223 = vmatprep.subr.mxu0 0.0
        %6224 = vmatpush1.msra.mxu0 0.0
        %6225 = vmatprep.subr.mxu0 0.0
        %6226 = vmatpush1.msra.mxu0 0.0
        %6227 = vmatprep.mubr.f32.mxu0 0.0
        %6228 = vmatmul.mubr.f32.gmra.mrb[0].mxu0 %v6161
        %v6229 = vpop.f32.mrb[0].mxu0
        %v6230 = vadd.f32 0.0, %v6229
        %v6231 = vpop.f32.mrb[0].mxu0
        %6232 = vdwg.mxu0
        %6233 = vrot.lane.b32.xlu0 %v5641, 120
        %v6234 = vpop.permute.xlu0 %6233
        %v6237 = vsel %vm960, %v6004, 0
        %6239 = vmatprep.subr.mxu0 0.0
        %6240 = vmatpush1.msra.mxu0 %v6234
        %6241 = vmatprep.subr.mxu0 0.0
        %6242 = vmatpush1.msra.mxu0 0.0
        %6243 = vmatprep.subr.mxu0 0.0
        %6244 = vmatpush1.msra.mxu0 0.0
        %6245 = vmatprep.subr.mxu0 0.0
        %6246 = vmatpush1.msra.mxu0 0.0
        %6247 = vmatprep.subr.mxu0 0.0
        %6248 = vmatpush1.msra.mxu0 0.0
        %6249 = vmatprep.subr.mxu0 0.0
        %6250 = vmatpush1.msra.mxu0 0.0
        %6251 = vmatprep.subr.mxu0 0.0
        %6252 = vmatpush1.msra.mxu0 0.0
        %6253 = vmatprep.subr.mxu0 0.0
        %6254 = vmatpush1.msra.mxu0 0.0
        %6255 = vmatprep.subr.mxu0 0.0
        %6256 = vmatpush1.msra.mxu0 0.0
        %6257 = vmatprep.subr.mxu0 0.0
        %6258 = vmatpush1.msra.mxu0 0.0
        %6259 = vmatprep.subr.mxu0 0.0
        %6260 = vmatpush1.msra.mxu0 0.0
        %6261 = vmatprep.subr.mxu0 0.0
        %6262 = vmatpush1.msra.mxu0 0.0
        %6263 = vmatprep.subr.mxu0 0.0
        %6264 = vmatpush1.msra.mxu0 0.0
        %6265 = vmatprep.subr.mxu0 0.0
        %6266 = vmatpush1.msra.mxu0 0.0
        %6267 = vmatprep.subr.mxu0 0.0
        %6268 = vmatpush1.msra.mxu0 0.0
        %6269 = vmatprep.subr.mxu0 0.0
        %6270 = vmatpush1.msra.mxu0 0.0
        %6271 = vmatprep.subr.mxu0 0.0
        %6272 = vmatpush1.msra.mxu0 0.0
        %6273 = vmatprep.subr.mxu0 0.0
        %6274 = vmatpush1.msra.mxu0 0.0
        %6275 = vmatprep.subr.mxu0 0.0
        %6276 = vmatpush1.msra.mxu0 0.0
        %6277 = vmatprep.subr.mxu0 0.0
        %6278 = vmatpush1.msra.mxu0 0.0
        %6279 = vmatprep.subr.mxu0 0.0
        %6280 = vmatpush1.msra.mxu0 0.0
        %6281 = vmatprep.subr.mxu0 0.0
        %6282 = vmatpush1.msra.mxu0 0.0
        %6283 = vmatprep.subr.mxu0 0.0
        %6284 = vmatpush1.msra.mxu0 0.0
        %6285 = vmatprep.subr.mxu0 0.0
        %6286 = vmatpush1.msra.mxu0 0.0
        %6287 = vmatprep.subr.mxu0 0.0
        %6288 = vmatpush1.msra.mxu0 0.0
        %6289 = vmatprep.subr.mxu0 0.0
        %6290 = vmatpush1.msra.mxu0 0.0
        %6291 = vmatprep.subr.mxu0 0.0
        %6292 = vmatpush1.msra.mxu0 0.0
        %6293 = vmatprep.subr.mxu0 0.0
        %6294 = vmatpush1.msra.mxu0 0.0
        %6295 = vmatprep.subr.mxu0 0.0
        %6296 = vmatpush1.msra.mxu0 0.0
        %6297 = vmatprep.subr.mxu0 0.0
        %6298 = vmatpush1.msra.mxu0 0.0
        %6299 = vmatprep.subr.mxu0 0.0
        %6300 = vmatpush1.msra.mxu0 0.0
        %6301 = vmatprep.subr.mxu0 0.0
        %6302 = vmatpush1.msra.mxu0 0.0
        %6303 = vmatprep.mubr.f32.mxu0 0.0
        %6304 = vmatmul.mubr.f32.gmra.mrb[0].mxu0 %v6237
        %v6305 = vpop.f32.mrb[0].mxu0
        %v6306 = vadd.f32 0.0, %v6305
        %v6307 = vpop.f32.mrb[0].mxu0
        %6308 = vdwg.mxu0
        %v6310 = vsel %vm960, %v6078, 0
        %6312 = vmatprep.subr.mxu0 0.0
        %6313 = vmatpush1.msra.mxu0 %v5645
        %6314 = vmatprep.subr.mxu0 0.0
        %6315 = vmatpush1.msra.mxu0 0.0
        %6316 = vmatprep.subr.mxu0 0.0
        %6317 = vmatpush1.msra.mxu0 0.0
        %6318 = vmatprep.subr.mxu0 0.0
        %6319 = vmatpush1.msra.mxu0 0.0
        %6320 = vmatprep.subr.mxu0 0.0
        %6321 = vmatpush1.msra.mxu0 0.0
        %6322 = vmatprep.subr.mxu0 0.0
        %6323 = vmatpush1.msra.mxu0 0.0
        %6324 = vmatprep.subr.mxu0 0.0
        %6325 = vmatpush1.msra.mxu0 0.0
        %6326 = vmatprep.subr.mxu0 0.0
        %6327 = vmatpush1.msra.mxu0 0.0
        %6328 = vmatprep.subr.mxu0 0.0
        %6329 = vmatpush1.msra.mxu0 0.0
        %6330 = vmatprep.subr.mxu0 0.0
        %6331 = vmatpush1.msra.mxu0 0.0
        %6332 = vmatprep.subr.mxu0 0.0
        %6333 = vmatpush1.msra.mxu0 0.0
        %6334 = vmatprep.subr.mxu0 0.0
        %6335 = vmatpush1.msra.mxu0 0.0
        %6336 = vmatprep.subr.mxu0 0.0
        %6337 = vmatpush1.msra.mxu0 0.0
        %6338 = vmatprep.subr.mxu0 0.0
        %6339 = vmatpush1.msra.mxu0 0.0
        %6340 = vmatprep.subr.mxu0 0.0
        %6341 = vmatpush1.msra.mxu0 0.0
        %6342 = vmatprep.subr.mxu0 0.0
        %6343 = vmatpush1.msra.mxu0 0.0
        %6344 = vmatprep.subr.mxu0 0.0
        %6345 = vmatpush1.msra.mxu0 0.0
        %6346 = vmatprep.subr.mxu0 0.0
        %6347 = vmatpush1.msra.mxu0 0.0
        %6348 = vmatprep.subr.mxu0 0.0
        %6349 = vmatpush1.msra.mxu0 0.0
        %6350 = vmatprep.subr.mxu0 0.0
        %6351 = vmatpush1.msra.mxu0 0.0
        %6352 = vmatprep.subr.mxu0 0.0
        %6353 = vmatpush1.msra.mxu0 0.0
        %6354 = vmatprep.subr.mxu0 0.0
        %6355 = vmatpush1.msra.mxu0 0.0
        %6356 = vmatprep.subr.mxu0 0.0
        %6357 = vmatpush1.msra.mxu0 0.0
        %6358 = vmatprep.subr.mxu0 0.0
        %6359 = vmatpush1.msra.mxu0 0.0
        %6360 = vmatprep.subr.mxu0 0.0
        %6361 = vmatpush1.msra.mxu0 0.0
        %6362 = vmatprep.subr.mxu0 0.0
        %6363 = vmatpush1.msra.mxu0 0.0
        %6364 = vmatprep.subr.mxu0 0.0
        %6365 = vmatpush1.msra.mxu0 0.0
        %6366 = vmatprep.subr.mxu0 0.0
        %6367 = vmatpush1.msra.mxu0 0.0
        %6368 = vmatprep.subr.mxu0 0.0
        %6369 = vmatpush1.msra.mxu0 0.0
        %6370 = vmatprep.subr.mxu0 0.0
        %6371 = vmatpush1.msra.mxu0 0.0
        %6372 = vmatprep.subr.mxu0 0.0
        %6373 = vmatpush1.msra.mxu0 0.0
        %6374 = vmatprep.subr.mxu0 0.0
        %6375 = vmatpush1.msra.mxu0 0.0
        %6376 = vmatprep.mubr.f32.mxu0 0.0
        %6377 = vmatmul.mubr.f32.gmra.mrb[0].mxu0 %v6310
        %v6378 = vpop.f32.mrb[0].mxu0
        %v6379 = vadd.f32 0.0, %v6378
        %v6380 = vpop.f32.mrb[0].mxu0
        %6381 = vdwg.mxu0
        %v6383 = vsel %vm960, %v6154, 0
        %6385 = vmatprep.subr.mxu0 0.0
        %6386 = vmatpush1.msra.mxu0 %v5646
        %6387 = vmatprep.subr.mxu0 0.0
        %6388 = vmatpush1.msra.mxu0 0.0
        %6389 = vmatprep.subr.mxu0 0.0
        %6390 = vmatpush1.msra.mxu0 0.0
        %6391 = vmatprep.subr.mxu0 0.0
        %6392 = vmatpush1.msra.mxu0 0.0
        %6393 = vmatprep.subr.mxu0 0.0
        %6394 = vmatpush1.msra.mxu0 0.0
        %6395 = vmatprep.subr.mxu0 0.0
        %6396 = vmatpush1.msra.mxu0 0.0
        %6397 = vmatprep.subr.mxu0 0.0
        %6398 = vmatpush1.msra.mxu0 0.0
        %6399 = vmatprep.subr.mxu0 0.0
        %6400 = vmatpush1.msra.mxu0 0.0
        %6401 = vmatprep.subr.mxu0 0.0
        %6402 = vmatpush1.msra.mxu0 0.0
        %6403 = vmatprep.subr.mxu0 0.0
        %6404 = vmatpush1.msra.mxu0 0.0
        %6405 = vmatprep.subr.mxu0 0.0
        %6406 = vmatpush1.msra.mxu0 0.0
        %6407 = vmatprep.subr.mxu0 0.0
        %6408 = vmatpush1.msra.mxu0 0.0
        %6409 = vmatprep.subr.mxu0 0.0
        %6410 = vmatpush1.msra.mxu0 0.0
        %6411 = vmatprep.subr.mxu0 0.0
        %6412 = vmatpush1.msra.mxu0 0.0
        %6413 = vmatprep.subr.mxu0 0.0
        %6414 = vmatpush1.msra.mxu0 0.0
        %6415 = vmatprep.subr.mxu0 0.0
        %6416 = vmatpush1.msra.mxu0 0.0
        %6417 = vmatprep.subr.mxu0 0.0
        %6418 = vmatpush1.msra.mxu0 0.0
        %6419 = vmatprep.subr.mxu0 0.0
        %6420 = vmatpush1.msra.mxu0 0.0
        %6421 = vmatprep.subr.mxu0 0.0
        %6422 = vmatpush1.msra.mxu0 0.0
        %6423 = vmatprep.subr.mxu0 0.0
        %6424 = vmatpush1.msra.mxu0 0.0
        %6425 = vmatprep.subr.mxu0 0.0
        %6426 = vmatpush1.msra.mxu0 0.0
        %6427 = vmatprep.subr.mxu0 0.0
        %6428 = vmatpush1.msra.mxu0 0.0
        %6429 = vmatprep.subr.mxu0 0.0
        %6430 = vmatpush1.msra.mxu0 0.0
        %6431 = vmatprep.subr.mxu0 0.0
        %6432 = vmatpush1.msra.mxu0 0.0
        %6433 = vmatprep.subr.mxu0 0.0
        %6434 = vmatpush1.msra.mxu0 0.0
        %6435 = vmatprep.subr.mxu0 0.0
        %6436 = vmatpush1.msra.mxu0 0.0
        %6437 = vmatprep.subr.mxu0 0.0
        %6438 = vmatpush1.msra.mxu0 0.0
        %6439 = vmatprep.subr.mxu0 0.0
        %6440 = vmatpush1.msra.mxu0 0.0
        %6441 = vmatprep.subr.mxu0 0.0
        %6442 = vmatpush1.msra.mxu0 0.0
        %6443 = vmatprep.subr.mxu0 0.0
        %6444 = vmatpush1.msra.mxu0 0.0
        %6445 = vmatprep.subr.mxu0 0.0
        %6446 = vmatpush1.msra.mxu0 0.0
        %6447 = vmatprep.subr.mxu0 0.0
        %6448 = vmatpush1.msra.mxu0 0.0
        %6449 = vmatprep.mubr.f32.mxu0 0.0
        %6450 = vmatmul.mubr.f32.gmra.mrb[0].mxu0 %v6383
        %v6451 = vpop.f32.mrb[0].mxu0
        %v6452 = vadd.f32 0.0, %v6451
        %v6453 = vpop.f32.mrb[0].mxu0
        %6454 = vdwg.mxu0
        %v6456 = vsel %vm960, %v6230, 0
        %6458 = vmatprep.subr.mxu0 0.0
        %6459 = vmatpush1.msra.mxu0 %v5647
        %6460 = vmatprep.subr.mxu0 0.0
        %6461 = vmatpush1.msra.mxu0 0.0
        %6462 = vmatprep.subr.mxu0 0.0
        %6463 = vmatpush1.msra.mxu0 0.0
        %6464 = vmatprep.subr.mxu0 0.0
        %6465 = vmatpush1.msra.mxu0 0.0
        %6466 = vmatprep.subr.mxu0 0.0
        %6467 = vmatpush1.msra.mxu0 0.0
        %6468 = vmatprep.subr.mxu0 0.0
        %6469 = vmatpush1.msra.mxu0 0.0
        %6470 = vmatprep.subr.mxu0 0.0
        %6471 = vmatpush1.msra.mxu0 0.0
        %6472 = vmatprep.subr.mxu0 0.0
        %6473 = vmatpush1.msra.mxu0 0.0
        %6474 = vmatprep.subr.mxu0 0.0
        %6475 = vmatpush1.msra.mxu0 0.0
        %6476 = vmatprep.subr.mxu0 0.0
        %6477 = vmatpush1.msra.mxu0 0.0
        %6478 = vmatprep.subr.mxu0 0.0
        %6479 = vmatpush1.msra.mxu0 0.0
        %6480 = vmatprep.subr.mxu0 0.0
        %6481 = vmatpush1.msra.mxu0 0.0
        %6482 = vmatprep.subr.mxu0 0.0
        %6483 = vmatpush1.msra.mxu0 0.0
        %6484 = vmatprep.subr.mxu0 0.0
        %6485 = vmatpush1.msra.mxu0 0.0
        %6486 = vmatprep.subr.mxu0 0.0
        %6487 = vmatpush1.msra.mxu0 0.0
        %6488 = vmatprep.subr.mxu0 0.0
        %6489 = vmatpush1.msra.mxu0 0.0
        %6490 = vmatprep.subr.mxu0 0.0
        %6491 = vmatpush1.msra.mxu0 0.0
        %6492 = vmatprep.subr.mxu0 0.0
        %6493 = vmatpush1.msra.mxu0 0.0
        %6494 = vmatprep.subr.mxu0 0.0
        %6495 = vmatpush1.msra.mxu0 0.0
        %6496 = vmatprep.subr.mxu0 0.0
        %6497 = vmatpush1.msra.mxu0 0.0
        %6498 = vmatprep.subr.mxu0 0.0
        %6499 = vmatpush1.msra.mxu0 0.0
        %6500 = vmatprep.subr.mxu0 0.0
        %6501 = vmatpush1.msra.mxu0 0.0
        %6502 = vmatprep.subr.mxu0 0.0
        %6503 = vmatpush1.msra.mxu0 0.0
        %6504 = vmatprep.subr.mxu0 0.0
        %6505 = vmatpush1.msra.mxu0 0.0
        %6506 = vmatprep.subr.mxu0 0.0
        %6507 = vmatpush1.msra.mxu0 0.0
        %6508 = vmatprep.subr.mxu0 0.0
        %6509 = vmatpush1.msra.mxu0 0.0
        %6510 = vmatprep.subr.mxu0 0.0
        %6511 = vmatpush1.msra.mxu0 0.0
        %6512 = vmatprep.subr.mxu0 0.0
        %6513 = vmatpush1.msra.mxu0 0.0
        %6514 = vmatprep.subr.mxu0 0.0
        %6515 = vmatpush1.msra.mxu0 0.0
        %6516 = vmatprep.subr.mxu0 0.0
        %6517 = vmatpush1.msra.mxu0 0.0
        %6518 = vmatprep.subr.mxu0 0.0
        %6519 = vmatpush1.msra.mxu0 0.0
        %6520 = vmatprep.subr.mxu0 0.0
        %6521 = vmatpush1.msra.mxu0 0.0
        %6522 = vmatprep.mubr.f32.mxu0 0.0
        %6523 = vmatmul.mubr.f32.gmra.mrb[0].mxu0 %v6456
        %v6524 = vpop.f32.mrb[0].mxu0
        %v6525 = vadd.f32 0.0, %v6524
        %v6526 = vpop.f32.mrb[0].mxu0
        %6527 = vdwg.mxu0
        %v6529 = vsel %vm960, %v6306, 0
        %6531 = vmatprep.subr.mxu0 0.0
        %6532 = vmatpush1.msra.mxu0 %v5648
        %6533 = vmatprep.subr.mxu0 0.0
        %6534 = vmatpush1.msra.mxu0 0.0
        %6535 = vmatprep.subr.mxu0 0.0
        %6536 = vmatpush1.msra.mxu0 0.0
        %6537 = vmatprep.subr.mxu0 0.0
        %6538 = vmatpush1.msra.mxu0 0.0
        %6539 = vmatprep.subr.mxu0 0.0
        %6540 = vmatpush1.msra.mxu0 0.0
        %6541 = vmatprep.subr.mxu0 0.0
        %6542 = vmatpush1.msra.mxu0 0.0
        %6543 = vmatprep.subr.mxu0 0.0
        %6544 = vmatpush1.msra.mxu0 0.0
        %6545 = vmatprep.subr.mxu0 0.0
        %6546 = vmatpush1.msra.mxu0 0.0
        %6547 = vmatprep.subr.mxu0 0.0
        %6548 = vmatpush1.msra.mxu0 0.0
        %6549 = vmatprep.subr.mxu0 0.0
        %6550 = vmatpush1.msra.mxu0 0.0
        %6551 = vmatprep.subr.mxu0 0.0
        %6552 = vmatpush1.msra.mxu0 0.0
        %6553 = vmatprep.subr.mxu0 0.0
        %6554 = vmatpush1.msra.mxu0 0.0
        %6555 = vmatprep.subr.mxu0 0.0
        %6556 = vmatpush1.msra.mxu0 0.0
        %6557 = vmatprep.subr.mxu0 0.0
        %6558 = vmatpush1.msra.mxu0 0.0
        %6559 = vmatprep.subr.mxu0 0.0
        %6560 = vmatpush1.msra.mxu0 0.0
        %6561 = vmatprep.subr.mxu0 0.0
        %6562 = vmatpush1.msra.mxu0 0.0
        %6563 = vmatprep.subr.mxu0 0.0
        %6564 = vmatpush1.msra.mxu0 0.0
        %6565 = vmatprep.subr.mxu0 0.0
        %6566 = vmatpush1.msra.mxu0 0.0
        %6567 = vmatprep.subr.mxu0 0.0
        %6568 = vmatpush1.msra.mxu0 0.0
        %6569 = vmatprep.subr.mxu0 0.0
        %6570 = vmatpush1.msra.mxu0 0.0
        %6571 = vmatprep.subr.mxu0 0.0
        %6572 = vmatpush1.msra.mxu0 0.0
        %6573 = vmatprep.subr.mxu0 0.0
        %6574 = vmatpush1.msra.mxu0 0.0
        %6575 = vmatprep.subr.mxu0 0.0
        %6576 = vmatpush1.msra.mxu0 0.0
        %6577 = vmatprep.subr.mxu0 0.0
        %6578 = vmatpush1.msra.mxu0 0.0
        %6579 = vmatprep.subr.mxu0 0.0
        %6580 = vmatpush1.msra.mxu0 0.0
        %6581 = vmatprep.subr.mxu0 0.0
        %6582 = vmatpush1.msra.mxu0 0.0
        %6583 = vmatprep.subr.mxu0 0.0
        %6584 = vmatpush1.msra.mxu0 0.0
        %6585 = vmatprep.subr.mxu0 0.0
        %6586 = vmatpush1.msra.mxu0 0.0
        %6587 = vmatprep.subr.mxu0 0.0
        %6588 = vmatpush1.msra.mxu0 0.0
        %6589 = vmatprep.subr.mxu0 0.0
        %6590 = vmatpush1.msra.mxu0 0.0
        %6591 = vmatprep.subr.mxu0 0.0
        %6592 = vmatpush1.msra.mxu0 0.0
        %6593 = vmatprep.subr.mxu0 0.0
        %6594 = vmatpush1.msra.mxu0 0.0
        %6595 = vmatprep.mubr.f32.mxu0 0.0
        %6596 = vmatmul.mubr.f32.gmra.mrb[0].mxu0 %v6529
        %v6597 = vpop.f32.mrb[0].mxu0
        %v6598 = vadd.f32 0.0, %v6597
        %v6599 = vpop.f32.mrb[0].mxu0
        %6600 = vdwg.mxu0
        %v6601 = vsel %vm669, %v6379, 0.0
        %v6602 = vsel %vm669, %v6452, 0.0
        %v6603 = vadd.f32 %v6601, %v6602
        %v6604 = vsel %vm669, %v6525, 0.0
        %v6605 = vadd.f32 %v6603, %v6604
        %v6606 = vsel %vm669, %v6598, 0.0
        %v6607 = vadd.f32 %v6605, %v6606
        %v6608 = vadd.f32 %v6607, %v5046
        %s6609 = scalar_lea.vmem %s11, 1
        %v6610 = vld [vmem:[%s6609] sm:$0x1]
        %s6611 = scalar_lea.vmem %s12, 1
        %v6612 = vld [vmem:[%s6611] sm:$0x1]
        %v6613 = vsel %vm669, %v6608, 0.0
        %6614 = vadd.xlane.f32.xlu0 %v6613
        %v6615 = vpop.xlane.xlu0 %6614
        %v6616 = vmul.f32 %v6615, %v1927
        %v6617 = vsub.f32 %v6608, %v6616
        %v6618 = vmul.f32 %v6617, %v6617
        %v6619 = vsel %vm669, %v6618, 0.0
        %6620 = vadd.xlane.f32.xlu0 %v6619
        %v6621 = vpop.xlane.xlu0 %6620
        %v6622 = vmul.f32 %v6621, %v1927
        %v6623 = vadd.f32 %v6622, 1e-05
        %v6624 = vrsqrt.pop %v6623
        %v6625 = vmul.f32 %v6617, %v6624
        %v6627 = vlaneseq
        %v6628 = vshrl.u32 %v6627, 7
        %v6629 = vsub.s32 0, %v6628
        %v6630 = vrot.slane %v6610, %v6629
        %v6632 = vmul.f32 %v6625, %v6630
        %v6634 = vlaneseq
        %v6635 = vshrl.u32 %v6634, 7
        %v6636 = vsub.s32 0, %v6635
        %v6637 = vrot.slane %v6612, %v6636
        %v6639 = vadd.f32 %v6632, %v6637
        %s6640 = scalar_lea.vmem %s13, 32
        %v6641 = vld [vmem:[%s6640] sm:$0xff]
        %v6642 = vld [vmem:[%s6640 + $0x8] sm:$0xff]
        %v6643 = vld [vmem:[%s6640 + $0x10] sm:$0xff]
        %v6644 = vld [vmem:[%s6640 + $0x18] sm:$0xff]
        %s6645 = scalar_lea.vmem %s14, 1
        %v6646 = vld [vmem:[%s6645] sm:$0x1]
        %v6648 = vlaneseq
        %v6649 = vshrl.u32 %v6648, 7
        %v6650 = vsub.s32 0, %v6649
        %v6651 = vrot.slane %v6646, %v6650
        %v6654 = vsel %vm669, %v6639, 0
        %6656 = vmatprep.subr.mxu0 0.0
        %6657 = vmatpush1.msra.mxu0 %v6641
        %6658 = vmatprep.subr.mxu0 0.0
        %6659 = vmatpush1.msra.mxu0 %v6642
        %6660 = vmatprep.subr.mxu0 0.0
        %6661 = vmatpush1.msra.mxu0 %v6643
        %6662 = vmatprep.subr.mxu0 0.0
        %6663 = vmatpush1.msra.mxu0 %v6644
        %6664 = vmatprep.subr.mxu0 0.0
        %6665 = vmatpush1.msra.mxu0 0.0
        %6666 = vmatprep.subr.mxu0 0.0
        %6667 = vmatpush1.msra.mxu0 0.0
        %6668 = vmatprep.subr.mxu0 0.0
        %6669 = vmatpush1.msra.mxu0 0.0
        %6670 = vmatprep.subr.mxu0 0.0
        %6671 = vmatpush1.msra.mxu0 0.0
        %6672 = vmatprep.subr.mxu0 0.0
        %6673 = vmatpush1.msra.mxu0 0.0
        %6674 = vmatprep.subr.mxu0 0.0
        %6675 = vmatpush1.msra.mxu0 0.0
        %6676 = vmatprep.subr.mxu0 0.0
        %6677 = vmatpush1.msra.mxu0 0.0
        %6678 = vmatprep.subr.mxu0 0.0
        %6679 = vmatpush1.msra.mxu0 0.0
        %6680 = vmatprep.subr.mxu0 0.0
        %6681 = vmatpush1.msra.mxu0 0.0
        %6682 = vmatprep.subr.mxu0 0.0
        %6683 = vmatpush1.msra.mxu0 0.0
        %6684 = vmatprep.subr.mxu0 0.0
        %6685 = vmatpush1.msra.mxu0 0.0
        %6686 = vmatprep.subr.mxu0 0.0
        %6687 = vmatpush1.msra.mxu0 0.0
        %6688 = vmatprep.subr.mxu0 0.0
        %6689 = vmatpush1.msra.mxu0 0.0
        %6690 = vmatprep.subr.mxu0 0.0
        %6691 = vmatpush1.msra.mxu0 0.0
        %6692 = vmatprep.subr.mxu0 0.0
        %6693 = vmatpush1.msra.mxu0 0.0
        %6694 = vmatprep.subr.mxu0 0.0
        %6695 = vmatpush1.msra.mxu0 0.0
        %6696 = vmatprep.subr.mxu0 0.0
        %6697 = vmatpush1.msra.mxu0 0.0
        %6698 = vmatprep.subr.mxu0 0.0
        %6699 = vmatpush1.msra.mxu0 0.0
        %6700 = vmatprep.subr.mxu0 0.0
        %6701 = vmatpush1.msra.mxu0 0.0
        %6702 = vmatprep.subr.mxu0 0.0
        %6703 = vmatpush1.msra.mxu0 0.0
        %6704 = vmatprep.subr.mxu0 0.0
        %6705 = vmatpush1.msra.mxu0 0.0
        %6706 = vmatprep.subr.mxu0 0.0
        %6707 = vmatpush1.msra.mxu0 0.0
        %6708 = vmatprep.subr.mxu0 0.0
        %6709 = vmatpush1.msra.mxu0 0.0
        %6710 = vmatprep.subr.mxu0 0.0
        %6711 = vmatpush1.msra.mxu0 0.0
        %6712 = vmatprep.subr.mxu0 0.0
        %6713 = vmatpush1.msra.mxu0 0.0
        %6714 = vmatprep.subr.mxu0 0.0
        %6715 = vmatpush1.msra.mxu0 0.0
        %6716 = vmatprep.subr.mxu0 0.0
        %6717 = vmatpush1.msra.mxu0 0.0
        %6718 = vmatprep.subr.mxu0 0.0
        %6719 = vmatpush1.msra.mxu0 0.0
        %6720 = vmatprep.mubr.f32.mxu0 0.0
        %6721 = vmatmul.mubr.f32.gmra.mrb[0].mxu0 %v6654
        %v6722 = vpop.f32.mrb[0].mxu0
        %v6723 = vadd.f32 %v6651, %v6722
        %v6724 = vpop.f32.mrb[0].mxu0
        %6725 = vdwg.mxu0
        %v6726 = vmax.f32 %v6723, 0.0
        %s6727 = scalar_lea.vmem %s15, 64
        %v6728 = vld [vmem:[%s6727] sm:$0xff]
        %v6729 = vld [vmem:[%s6727 + $0x8] sm:$0xff]
        %v6730 = vld [vmem:[%s6727 + $0x10] sm:$0xff]
        %v6731 = vld [vmem:[%s6727 + $0x18] sm:$0xff]
        %v6732 = vld [vmem:[%s6727 + $0x20] sm:$0xff]
        %v6733 = vld [vmem:[%s6727 + $0x28] sm:$0xff]
        %v6734 = vld [vmem:[%s6727 + $0x30] sm:$0xff]
        %v6735 = vld [vmem:[%s6727 + $0x38] sm:$0xff]
        %s6736 = scalar_lea.vmem %s16, 1
        %v6737 = vld [vmem:[%s6736] sm:$0x1]
        %v6739 = vlaneseq
        %v6740 = vshrl.u32 %v6739, 7
        %v6741 = vsub.s32 0, %v6740
        %v6742 = vrot.slane %v6737, %v6741
        %v6745 = vsel %vm3643, %v6726, 0
        %6747 = vmatprep.subr.mxu0 0.0
        %6748 = vmatpush1.msra.mxu0 %v6728
        %6749 = vmatprep.subr.mxu0 0.0
        %6750 = vmatpush1.msra.mxu0 %v6729
        %6751 = vmatprep.subr.mxu0 0.0
        %6752 = vmatpush1.msra.mxu0 %v6730
        %6753 = vmatprep.subr.mxu0 0.0
        %6754 = vmatpush1.msra.mxu0 %v6731
        %6755 = vmatprep.subr.mxu0 0.0
        %6756 = vmatpush1.msra.mxu0 %v6732
        %6757 = vmatprep.subr.mxu0 0.0
        %6758 = vmatpush1.msra.mxu0 %v6733
        %6759 = vmatprep.subr.mxu0 0.0
        %6760 = vmatpush1.msra.mxu0 %v6734
        %6761 = vmatprep.subr.mxu0 0.0
        %6762 = vmatpush1.msra.mxu0 %v6735
        %6763 = vmatprep.subr.mxu0 0.0
        %6764 = vmatpush1.msra.mxu0 0.0
        %6765 = vmatprep.subr.mxu0 0.0
        %6766 = vmatpush1.msra.mxu0 0.0
        %6767 = vmatprep.subr.mxu0 0.0
        %6768 = vmatpush1.msra.mxu0 0.0
        %6769 = vmatprep.subr.mxu0 0.0
        %6770 = vmatpush1.msra.mxu0 0.0
        %6771 = vmatprep.subr.mxu0 0.0
        %6772 = vmatpush1.msra.mxu0 0.0
        %6773 = vmatprep.subr.mxu0 0.0
        %6774 = vmatpush1.msra.mxu0 0.0
        %6775 = vmatprep.subr.mxu0 0.0
        %6776 = vmatpush1.msra.mxu0 0.0
        %6777 = vmatprep.subr.mxu0 0.0
        %6778 = vmatpush1.msra.mxu0 0.0
        %6779 = vmatprep.subr.mxu0 0.0
        %6780 = vmatpush1.msra.mxu0 0.0
        %6781 = vmatprep.subr.mxu0 0.0
        %6782 = vmatpush1.msra.mxu0 0.0
        %6783 = vmatprep.subr.mxu0 0.0
        %6784 = vmatpush1.msra.mxu0 0.0
        %6785 = vmatprep.subr.mxu0 0.0
        %6786 = vmatpush1.msra.mxu0 0.0
        %6787 = vmatprep.subr.mxu0 0.0
        %6788 = vmatpush1.msra.mxu0 0.0
        %6789 = vmatprep.subr.mxu0 0.0
        %6790 = vmatpush1.msra.mxu0 0.0
        %6791 = vmatprep.subr.mxu0 0.0
        %6792 = vmatpush1.msra.mxu0 0.0
        %6793 = vmatprep.subr.mxu0 0.0
        %6794 = vmatpush1.msra.mxu0 0.0
        %6795 = vmatprep.subr.mxu0 0.0
        %6796 = vmatpush1.msra.mxu0 0.0
        %6797 = vmatprep.subr.mxu0 0.0
        %6798 = vmatpush1.msra.mxu0 0.0
        %6799 = vmatprep.subr.mxu0 0.0
        %6800 = vmatpush1.msra.mxu0 0.0
        %6801 = vmatprep.subr.mxu0 0.0
        %6802 = vmatpush1.msra.mxu0 0.0
        %6803 = vmatprep.subr.mxu0 0.0
        %6804 = vmatpush1.msra.mxu0 0.0
        %6805 = vmatprep.subr.mxu0 0.0
        %6806 = vmatpush1.msra.mxu0 0.0
        %6807 = vmatprep.subr.mxu0 0.0
        %6808 = vmatpush1.msra.mxu0 0.0
        %6809 = vmatprep.subr.mxu0 0.0
        %6810 = vmatpush1.msra.mxu0 0.0
        %6811 = vmatprep.mubr.f32.mxu0 0.0
        %6812 = vmatmul.mubr.f32.gmra.mrb[0].mxu0 %v6745
        %v6813 = vpop.f32.mrb[0].mxu0
        %v6814 = vadd.f32 %v6742, %v6813
        %v6815 = vpop.f32.mrb[0].mxu0
        %6816 = vdwg.mxu0
        %v6817 = vadd.f32 %v6814, %v6639
        %s6818 = scalar_lea.vmem %s17, 1
        %v6819 = vld [vmem:[%s6818] sm:$0x1]
        %s6820 = scalar_lea.vmem %s18, 1
        %v6821 = vld [vmem:[%s6820] sm:$0x1]
        %v6822 = vsel %vm669, %v6817, 0.0
        %6823 = vadd.xlane.f32.xlu0 %v6822
        %v6824 = vpop.xlane.xlu0 %6823
        %v6825 = vmul.f32 %v6824, %v1927
        %v6826 = vsub.f32 %v6817, %v6825
        %v6827 = vmul.f32 %v6826, %v6826
        %v6828 = vsel %vm669, %v6827, 0.0
        %6829 = vadd.xlane.f32.xlu0 %v6828
        %v6830 = vpop.xlane.xlu0 %6829
        %v6831 = vmul.f32 %v6830, %v1927
        %v6832 = vadd.f32 %v6831, 1e-05
        %v6833 = vrsqrt.pop %v6832
        %v6834 = vmul.f32 %v6826, %v6833
        %v6836 = vlaneseq
        %v6837 = vshrl.u32 %v6836, 7
        %v6838 = vsub.s32 0, %v6837
        %v6839 = vrot.slane %v6819, %v6838
        %v6841 = vmul.f32 %v6834, %v6839
        %v6843 = vlaneseq
        %v6844 = vshrl.u32 %v6843, 7
        %v6845 = vsub.s32 0, %v6844
        %v6846 = vrot.slane %v6821, %v6845
        %v6848 = vadd.f32 %v6841, %v6846
        %6849 = vst.msk [vmem:[%s632] sm:$0xff] %vm669, %v6848
        %s6850 = sand.u32 %s460, 1
        %s6851 = scalar_lea.sflag [#allocation3], %s6850
        %s6852 = sand.u32 %s460, 1
        %s6853 = smul.addr %s6852, 8
        %s6854 = scalar_lea.vmem [#allocation2], %s6853
        // Predicated region
        $region97: #{tpu_custom_call.1} parent=95 // pred_check
          %p6855 = pneg %p470
        $region98: #{tpu_custom_call.1} parent=95 // pred_check_branch
          %6857 = sbr.rel (%p6855) target = $region100
        $region99: #{tpu_custom_call.1} parent=95 // pred_region
          %s6859 = ssub.s32 128, 128
          %6860 = vsyncadd %s6851, %s6859
          %s6861 = smul.addr %s33, 128
          %s6862 = scalar_lea.hbm %s19, %s6861
          %s6864 = sshll.u32 %s6854, 4
          %s6865 = int_to_ptr.vmem [resolvable:$true] %s6864
          %6867 = dma.vmem_to_hbm [thread:$0]  %s6865, 128, %s6862, %s6851
        $region100: #{tpu_custom_call.1} parent=95 // pred_fallthru
          _
      $region96: #{tpu_custom_call.1} parent=5 // pred_fallthru
        _
      %p6868 = scmp.le.s32.totalorder 2, %s28
      // Predicated region
      $region101: #{tpu_custom_call.1} parent=5 // pred_check
        %p6869 = pneg %p6868
      $region102: #{tpu_custom_call.1} parent=5 // pred_check_branch
        %6871 = sbr.rel (%p6869) target = $region104
      $region103: #{tpu_custom_call.1} parent=5 // pred_region
        %s6872 = ssub.s32 %s28, 2
        // Predicated region
        $region105: #{tpu_custom_call.1} parent=103 // pred_check
          %p6873 = pneg %p476
        $region106: #{tpu_custom_call.1} parent=103 // pred_check_branch
          %6875 = sbr.rel (%p6873) target = $region108
        $region107: #{tpu_custom_call.1} parent=103 // pred_region
          %s6876 = sand.u32 %s461, 1
          %s6877 = scalar_lea.sflag [#allocation3], %s6876
          %s6878 = sand.u32 %s461, 1
          %s6879 = smul.addr %s6878, 8
          %s6880 = scalar_lea.vmem [#allocation2], %s6879
          %6881 = dma.done %s6877, 128
        $region108: #{tpu_custom_call.1} parent=103 // pred_fallthru
          _
      $region104: #{tpu_custom_call.1} parent=5 // pred_fallthru
        _
    $region6: #{tpu_custom_call.1} parent=1 // loop_footer
      %s32 = sadd.s32 1, %s28
    $region7: #{tpu_custom_call.1} parent=1 // loop_footer_branch
      %27 = sbr.rel target = $region3
    $region8: #{tpu_custom_call.1} parent=1 // loop_exit
      _
    %6882 = vsyncpa [#allocation3], 1
    %s6883 = scalar_lea.sflag [#allocation3], 1
    %6884 = vsyncpa %s6883, 1

</llo_original>
